<compile_context>
chip_gen: v7x
topology: tpu7x:2x2x1
jax: 0.10.0
libtpu: 0.0.40
codegen_flags: <defaults>
</compile_context>

<pallas_src>
import functools

import jax
import jax.numpy as jnp
from jax.experimental import pallas as pl
from jax.experimental.pallas import tpu as pltpu

_BF16 = jnp.bfloat16


# ----------------------------- in-kernel helpers ----------------------------

def _conv_bn_relu(x, w_ref, s_ref, b_ref, L):
    """Conv1d(k=3, pad=1) + folded BatchNorm(eval) + ReLU on a (Cin, Bblk*L) tile.

    The batch dimension is fused into the lane axis (batch-major); shifts that
    would cross a per-sample boundary are masked to zero (== conv zero padding).
    """
    Cin, N = x.shape
    col = jax.lax.broadcasted_iota(jnp.int32, (Cin, N), 1)
    if L & (L - 1) == 0:                      # L is a power of two here
        col = col & (L - 1)
    else:
        col = col % L
    x_prev = jnp.where(col >= 1, pltpu.roll(x, 1, axis=1), 0.0)        # x[:, l-1]
    x_next = jnp.where(col <= L - 2, pltpu.roll(x, N - 1, axis=1), 0.0)  # x[:, l+1]
    xs = jnp.concatenate([x_prev, x, x_next], axis=0).astype(_BF16)    # (3*Cin, N)
    y = jnp.dot(w_ref[...], xs, preferred_element_type=jnp.float32)    # (Cout, N)
    return jnp.maximum(y * s_ref[...] + b_ref[...], 0.0)


def _maxpool2(x):
    """MaxPool1d(kernel=2, stride=2) on a (C, Bblk*L) tile (L even)."""
    C, N = x.shape
    # m[:, p] = max(x[:, p], x[:, p+1]); only even p are selected below, so the
    # wrap at p = N-1 and batch boundaries (L even) are never read.
    m = jnp.maximum(x, pltpu.roll(x, N - 1, axis=1))
    rows = jax.lax.broadcasted_iota(jnp.int32, (N, N // 2), 0)
    cols = jax.lax.broadcasted_iota(jnp.int32, (N, N // 2), 1)
    sel = jnp.where(rows == 2 * cols, 1.0, 0.0).astype(_BF16)          # pick even cols
    return jnp.dot(m.astype(_BF16), sel, preferred_element_type=jnp.float32)


# ------------------------------- kernels -------------------------------------

def _shared_fe_kernel(x_ref, w1, s1, b1, w2, s2, b2, w3, s3, b3, w4, s4, b4,
                      o_ref, *, L0):
    # x_ref: (8, Bblk*L0) (in_channel zero-padded to 8); o_ref: (128, Bblk*L0//2)
    x = _conv_bn_relu(x_ref[...], w1, s1, b1, L0)      # (16,  Bblk*L0)
    x = _maxpool2(x)                                   # (16,  Bblk*L1)
    L1 = L0 // 2
    x = _conv_bn_relu(x, w2, s2, b2, L1)               # (32,  Bblk*L1)
    x = _conv_bn_relu(x, w3, s3, b3, L1)               # (64,  Bblk*L1)
    x = _conv_bn_relu(x, w4, s4, b4, L1)               # (128, Bblk*L1)
    o_ref[...] = x


def _specific_fe_kernel(x_ref, w1, s1, b1, w2, s2, b2, w3, s3, b3,
                        wk_ref, fb_ref, o_ref, *, L):
    # x_ref: (128, Bblk*L); wk_ref: (4, 128, 128); fb_ref: (128, 1)
    # o_ref: (1, 128, Bblk)  -- feature in (channels, batch) layout
    x = _conv_bn_relu(x_ref[...], w1, s1, b1, L)
    x = _conv_bn_relu(x, w2, s2, b2, L)
    x = _conv_bn_relu(x, w3, s3, b3, L)                # (128, Bblk*L)
    C, N = x.shape
    Bblk = N // L
    binsz = L // 4                                     # AdaptiveMaxPool1d(4) bin size
    # Running max so m[:, p] = max(x[:, p : p + binsz]); only p = b*L + k*binsz
    # are selected, so wrap-around / cross-sample positions are never read.
    m = x
    sh = 1
    while sh < binsz:
        m = jnp.maximum(m, pltpu.roll(m, N - sh, axis=1))
        sh *= 2
    rows = jax.lax.broadcasted_iota(jnp.int32, (N, Bblk), 0)
    cols = jax.lax.broadcasted_iota(jnp.int32, (N, Bblk), 1)
    mb = m.astype(_BF16)
    acc = jnp.zeros((wk_ref.shape[1], Bblk), jnp.float32)
    for k in range(4):                                 # static unroll over pool bins
        sel = jnp.where(rows == (L * cols + binsz * k), 1.0, 0.0).astype(_BF16)
        pool_k = jnp.dot(mb, sel, preferred_element_type=jnp.float32)    # (128, Bblk)
        acc = acc + jnp.dot(wk_ref[k], pool_k.astype(_BF16),
                            preferred_element_type=jnp.float32)
    o_ref[0] = jnp.maximum(acc + fb_ref[...], 0.0)     # Linear(4*128 -> 128) + ReLU


def _classifier_softmax_kernel(x_ref, w1_ref, b1_ref, w2_ref, b2_ref, o_ref):
    # x: (B, 128) -> Linear(128,64)+ReLU -> Linear(64,nc) -> softmax
    h = jnp.maximum(jnp.dot(x_ref[...], w1_ref[...],
                            preferred_element_type=jnp.float32) + b1_ref[...], 0.0)
    y = jnp.dot(h, w2_ref[...], preferred_element_type=jnp.float32) + b2_ref[...]
    y = y - jnp.max(y, axis=1, keepdims=True)
    e = jnp.exp(y)
    o_ref[...] = e / jnp.sum(e, axis=1, keepdims=True)


def _mkmmd_kernel(feat_ref, w_ref, idx_ref, o_ref, *, num_classes):
    # feat_ref: (2B, D) = [src; tgt]; w_ref: (nc, 2B, 1) per-class weights;
    # idx_ref: (2B, 2B) tllib index matrix; o_ref: (1, nc) per-class MMD sums.
    feats = feat_ref[...]
    idx = idx_ref[...]
    n = feats.shape[0]
    lane = jax.lax.broadcasted_iota(jnp.int32, (1, num_classes), 1)
    out = jnp.zeros((1, num_classes), jnp.float32)
    for j in range(num_classes):                       # static unroll over classes
        z = feats * w_ref[j]                           # (2B, D) class-weighted feats
        g = jnp.dot(z, z.T, preferred_element_type=jnp.float32)
        sq = jnp.sum(z * z, axis=1, keepdims=True)
        d2 = jnp.maximum(sq + sq.T - 2.0 * g, 0.0)     # pairwise ||zi - zj||^2
        mean_d2 = jnp.sum(d2) * (1.0 / float(n * n))
        # Gaussian kernels, alpha = 2^k for k in -3..1; sigma^2 = alpha * mean(d2).
        # Base kernel is alpha=2; the others are b^2, b^4, b^8, b^16 (one exp total).
        b = jnp.exp(d2 * (-1.0 / (4.0 * mean_d2)))
        b2 = b * b
        b4 = b2 * b2
        b8 = b4 * b4
        b16 = b8 * b8
        km = b + b2 + b4 + b8 + b16
        loss_j = jnp.sum(km * idx)
        out = out + jnp.where(lane == j, loss_j, 0.0)
    o_ref[...] = out


# ------------------------------ call wrappers --------------------------------

def _const_spec(arr):
    zeros = (0,) * arr.ndim
    return pl.BlockSpec(arr.shape, lambda *_: zeros)


def shared_fe(prep_shared, x_cols, B, L0):
    """x_cols: (8, NB*L0) f32 (all streams concatenated, in_channel padded to 8)."""
    cin_p, n_tot = x_cols.shape
    nblk = n_tot // (B * L0)
    L1 = L0 // 2
    w1, s1, b1 = prep_shared["conv1"]
    w2, s2, b2 = prep_shared["conv2"]
    w3, s3, b3 = prep_shared["conv3"]
    w4, s4, b4 = prep_shared["conv4"]
    consts = (w1, s1, b1, w2, s2, b2, w3, s3, b3, w4, s4, b4)
    return pl.pallas_call(
        functools.partial(_shared_fe_kernel, L0=L0),
        out_shape=jax.ShapeDtypeStruct((128, nblk * B * L1), jnp.float32),
        grid=(nblk,),
        in_specs=[pl.BlockSpec((cin_p, B * L0), lambda i: (0, i))]
                 + [_const_spec(a) for a in consts],
        out_specs=pl.BlockSpec((128, B * L1), lambda i: (0, i)),
        compiler_params=pltpu.CompilerParams(dimension_semantics=("parallel",)),
    )(x_cols, *consts)


def specific_fe(prep_spec, x_cols, B, L):
    """x_cols: (128, nblk*B*L) f32.  Returns (nblk*B, 128) features."""
    C, n_tot = x_cols.shape
    nblk = n_tot // (B * L)
    w1, s1, b1 = prep_spec["conv1"]
    w2, s2, b2 = prep_spec["conv2"]
    w3, s3, b3 = prep_spec["conv3"]
    wk, fb = prep_spec["wk"], prep_spec["fb"]
    consts = (w1, s1, b1, w2, s2, b2, w3, s3, b3, wk, fb)
    out = pl.pallas_call(
        functools.partial(_specific_fe_kernel, L=L),
        out_shape=jax.ShapeDtypeStruct((nblk, 128, B), jnp.float32),
        grid=(nblk,),
        in_specs=[pl.BlockSpec((C, B * L), lambda i: (0, i))]
                 + [_const_spec(a) for a in consts],
        out_specs=pl.BlockSpec((1, 128, B), lambda i: (i, 0, 0)),
        compiler_params=pltpu.CompilerParams(dimension_semantics=("parallel",)),
    )(x_cols, *consts)
    return jnp.transpose(out, (0, 2, 1)).reshape(nblk * B, 128)


def classifier(prep_clf, feat):
    """feat: (B, 128) -> softmax probs (B, num_classes)."""
    w1t, b1, w2t, b2 = prep_clf
    B = feat.shape[0]
    nc = w2t.shape[1]
    return pl.pallas_call(
        _classifier_softmax_kernel,
        out_shape=jax.ShapeDtypeStruct((B, nc), jnp.float32),
    )(feat, w1t, b1, w2t, b2)


def mkmmd_per_class(feat_src, feat_tgt, w_src, w_tgt):
    """tllib-style non-linear MK-MMD for every class in one pallas_call -> (nc,)."""
    B, _ = feat_src.shape
    nc = w_src.shape[1]
    feats = jnp.concatenate([feat_src, feat_tgt], axis=0)          # (2B, D)
    wts = jnp.concatenate([w_src, w_tgt], axis=0)                  # (2B, nc)
    wts3 = jnp.transpose(wts)[:, :, None].astype(jnp.float32)      # (nc, 2B, 1)
    ss = (jnp.ones((B, B), jnp.float32)
          - jnp.eye(B, dtype=jnp.float32)) / float(B * (B - 1))
    st = -jnp.ones((B, B), jnp.float32) / float(B * B)
    idx = jnp.concatenate(
        [jnp.concatenate([ss, st], axis=1),
         jnp.concatenate([st, ss], axis=1)], axis=0)
    out = pl.pallas_call(
        functools.partial(_mkmmd_kernel, num_classes=nc),
        out_shape=jax.ShapeDtypeStruct((1, nc), jnp.float32),
    )(feats, wts3, idx)
    # tllib adds the 2/(B-1) unbiased-estimator correction once per MK-MMD call.
    return out[0] + 2.0 / float(B - 1)


# --------------------------- parameter init / prep ---------------------------

def _init_conv_bn(key, cin, cout):
    k = jax.random.split(key, 6)
    w = jax.random.normal(k[0], (cout, cin, 3), jnp.float32) * 0.1
    b = jax.random.normal(k[1], (cout,), jnp.float32) * 0.1
    gamma = jax.random.uniform(k[2], (cout,), jnp.float32, 0.8, 1.2)
    beta = jax.random.normal(k[3], (cout,), jnp.float32) * 0.05
    mean = jax.random.normal(k[4], (cout,), jnp.float32) * 0.05
    var = jax.random.uniform(k[5], (cout,), jnp.float32, 0.5, 1.5)
    return (w, b, gamma, beta, mean, var)


def _init_linear(key, din, dout):
    k1, k2 = jax.random.split(key)
    w = jax.random.normal(k1, (dout, din), jnp.float32) / jnp.sqrt(float(din))
    b = jax.random.normal(k2, (dout,), jnp.float32) * 0.05
    return (w, b)


def init_params(key, num_classes=3, num_source=1):
    keys = jax.random.split(key, 4)
    shared = {
        "conv1": _init_conv_bn(jax.random.fold_in(keys[0], 0), 1, 16),
        "conv2": _init_conv_bn(jax.random.fold_in(keys[0], 1), 16, 32),
        "conv3": _init_conv_bn(jax.random.fold_in(keys[0], 2), 32, 64),
        "conv4": _init_conv_bn(jax.random.fold_in(keys[0], 3), 64, 128),
    }
    specific, clf = [], []
    for i in range(num_source):
        ks = jax.random.fold_in(keys[1], i)
        fc_w, fc_b = _init_linear(jax.random.fold_in(ks, 3), 4 * 128, 128)
        specific.append({
            "conv1": _init_conv_bn(jax.random.fold_in(ks, 0), 128, 128),
            "conv2": _init_conv_bn(jax.random.fold_in(ks, 1), 128, 128),
            "conv3": _init_conv_bn(jax.random.fold_in(ks, 2), 128, 128),
            "fc_w": fc_w, "fc_b": fc_b,
        })
        kc = jax.random.fold_in(keys[2], i)
        w1, b1 = _init_linear(jax.random.fold_in(kc, 0), 128, 64)
        w2, b2 = _init_linear(jax.random.fold_in(kc, 1), 64, num_classes)
        clf.append({"fc1_w": w1, "fc1_b": b1, "fc2_w": w2, "fc2_b": b2})
    return {"shared": shared, "specific": specific, "clf": clf}


def _fold_conv_bn(w, b, gamma, beta, mean, var, eps=1e-5, pad_cin_to=None):
    """Fold BN(eval) into conv; flatten taps to (Cout, 3*Cin) bf16; bias/scale f32."""
    cout, cin, _ = w.shape
    if pad_cin_to is not None and cin < pad_cin_to:
        w = jnp.pad(w, ((0, 0), (0, pad_cin_to - cin), (0, 0)))
        cin = pad_cin_to
    # stacked rows are [x_prev(Cin); x(Cin); x_next(Cin)] -> weight index (o, tap, c)
    w_flat = jnp.transpose(w, (0, 2, 1)).reshape(cout, 3 * cin).astype(_BF16)
    scale = (gamma / jnp.sqrt(var + eps)).astype(jnp.float32)
    bias = ((b - mean) * scale + beta).astype(jnp.float32)
    return w_flat, scale.reshape(cout, 1), bias.reshape(cout, 1)


def prepare_params(params, eps=1e-5):
    """One-time parameter massaging (folding, transposes, casts) hoisted out of fwd."""
    sh = params["shared"]
    prep_shared = {
        "conv1": _fold_conv_bn(*sh["conv1"], eps=eps, pad_cin_to=8),
        "conv2": _fold_conv_bn(*sh["conv2"], eps=eps),
        "conv3": _fold_conv_bn(*sh["conv3"], eps=eps),
        "conv4": _fold_conv_bn(*sh["conv4"], eps=eps),
    }
    prep_specific = []
    for sp in params["specific"]:
        # Linear(4*C -> 128): flatten index is c*4+k, so W_k = W[:, k::4]
        wk = jnp.stack([sp["fc_w"][:, k::4] for k in range(4)], axis=0).astype(_BF16)
        prep_specific.append({
            "conv1": _fold_conv_bn(*sp["conv1"], eps=eps),
            "conv2": _fold_conv_bn(*sp["conv2"], eps=eps),
            "conv3": _fold_conv_bn(*sp["conv3"], eps=eps),
            "wk": wk,
            "fb": sp["fc_b"].reshape(-1, 1).astype(jnp.float32),
        })
    prep_clf = []
    for c in params["clf"]:
        prep_clf.append((c["fc1_w"].T.astype(jnp.float32),
                         c["fc1_b"].reshape(1, -1).astype(jnp.float32),
                         c["fc2_w"].T.astype(jnp.float32),
                         c["fc2_b"].reshape(1, -1).astype(jnp.float32)))
    return {"shared": prep_shared, "specific": prep_specific, "clf": prep_clf}


# ------------------------------ model forward ---------------------------------

@functools.partial(jax.jit, static_argnames=("num_classes",))
def mssa_forward(prep, target_data, source_data, source_label, num_classes=3):
    """Eval-mode MSSA.forward: returns pred (B, num_classes)."""
    # TODO(synk): training-mode branch (cross-entropy loss_cls) not implemented.
    B, Cin, L0 = target_data.shape
    L1 = L0 // 2
    assert (B * L0) % 128 == 0 and (B * L1) % 128 == 0, "need lane-dense batch*length"
    num_source = len(source_data)

    # ---- shared feature extractor: all streams (target first) in one call ----
    x_all = jnp.concatenate([target_data] + list(source_data), axis=0)   # (NB, Cin, L0)
    NB = x_all.shape[0]
    x_cols = jnp.transpose(x_all, (1, 0, 2)).reshape(Cin, NB * L0).astype(jnp.float32)
    if Cin < 8:
        x_cols = jnp.pad(x_cols, ((0, 8 - Cin), (0, 0)))
    shared_cols = shared_fe(prep["shared"], x_cols, B, L0)               # (128, NB*L1)

    W = B * L1
    tgt_cols = shared_cols[:, :W]

    loss_mmd, logits_tgt = [], []
    for i in range(num_source):
        src_cols = shared_cols[:, (1 + i) * W:(2 + i) * W]
        sp_in = jnp.concatenate([src_cols, tgt_cols], axis=1)            # (128, 2*W)
        feats = specific_fe(prep["specific"][i], sp_in, B, L1)           # (2B, 128)
        feat_src, feat_tgt = feats[:B], feats[B:]
        probs = classifier(prep["clf"][i], feat_tgt)                     # (B, nc)
        logits_tgt.append(probs)
        oh = jax.nn.one_hot(source_label[i], num_classes, dtype=jnp.float32)
        per_class = mkmmd_per_class(feat_src, feat_tgt, oh, probs)       # (nc,)
        loss_mmd.append(jnp.mean(per_class))                            # /num_classes

    sum_mmd = sum(loss_mmd)
    pred = jnp.zeros_like(logits_tgt[0])
    for i in range(num_source):
        pred = pred + (loss_mmd[i] / sum_mmd) * logits_tgt[i]
    return pred


# --------------------------------- main ----------------------------------------

if __name__ == "__main__":
    B, L = 8, 64
    num_classes, num_source = 3, 1

    key = jax.random.PRNGKey(0)
    k_par, k_tgt, k_src, k_lbl = jax.random.split(key, 4)

    params = init_params(k_par, num_classes=num_classes, num_source=num_source)
    prep = prepare_params(params)

    target_data = jax.random.normal(k_tgt, (B, 1, L), jnp.float32)
    source_data = [jax.random.normal(jax.random.fold_in(k_src, i),
                                     (B, 1, L), jnp.float32)
                   for i in range(num_source)]
    source_label = [jax.random.randint(jax.random.fold_in(k_lbl, i),
                                       (B,), 0, num_classes)
                    for i in range(num_source)]

    pred = mssa_forward(prep, target_data, source_data, source_label,
                        num_classes=num_classes)
    pred = jax.block_until_ready(pred)
    assert pred.shape == (B, num_classes)
    assert bool(jnp.all(jnp.isfinite(pred)))
    print("KERNEL_OK")
</pallas_src>

<mosaic_0001>
module attributes {stable_mosaic.version = 11 : i64} {
  func.func @_shared_fe_kernel(%arg0: i32, %arg1: memref<8x512xf32, #tpu.memory_space<vmem>>, %arg2: memref<16x24xbf16, #tpu.memory_space<vmem>>, %arg3: memref<16x1xf32, #tpu.memory_space<vmem>>, %arg4: memref<16x1xf32, #tpu.memory_space<vmem>>, %arg5: memref<32x48xbf16, #tpu.memory_space<vmem>>, %arg6: memref<32x1xf32, #tpu.memory_space<vmem>>, %arg7: memref<32x1xf32, #tpu.memory_space<vmem>>, %arg8: memref<64x96xbf16, #tpu.memory_space<vmem>>, %arg9: memref<64x1xf32, #tpu.memory_space<vmem>>, %arg10: memref<64x1xf32, #tpu.memory_space<vmem>>, %arg11: memref<128x192xbf16, #tpu.memory_space<vmem>>, %arg12: memref<128x1xf32, #tpu.memory_space<vmem>>, %arg13: memref<128x1xf32, #tpu.memory_space<vmem>>, %arg14: memref<128x256xf32, #tpu.memory_space<vmem>>) attributes {dimension_semantics = [#tpu.dimension_semantics<parallel>], iteration_bounds = array<i64: 2>, scalar_prefetch = 0 : i64, scratch_operands = 0 : i64, tpu.core_type = #tpu.core_type<tc>, window_params = [{transform_indices = @transform_0, window_bounds = array<i64: 8, 512>}, {pipeline_mode = #tpu.pipeline_mode<synchronous>, transform_indices = @transform_1, window_bounds = array<i64: 16, 24>}, {pipeline_mode = #tpu.pipeline_mode<synchronous>, transform_indices = @transform_2, window_bounds = array<i64: 16, 1>}, {pipeline_mode = #tpu.pipeline_mode<synchronous>, transform_indices = @transform_3, window_bounds = array<i64: 16, 1>}, {pipeline_mode = #tpu.pipeline_mode<synchronous>, transform_indices = @transform_4, window_bounds = array<i64: 32, 48>}, {pipeline_mode = #tpu.pipeline_mode<synchronous>, transform_indices = @transform_5, window_bounds = array<i64: 32, 1>}, {pipeline_mode = #tpu.pipeline_mode<synchronous>, transform_indices = @transform_6, window_bounds = array<i64: 32, 1>}, {pipeline_mode = #tpu.pipeline_mode<synchronous>, transform_indices = @transform_7, window_bounds = array<i64: 64, 96>}, {pipeline_mode = #tpu.pipeline_mode<synchronous>, transform_indices = @transform_8, window_bounds = array<i64: 64, 1>}, {pipeline_mode = #tpu.pipeline_mode<synchronous>, transform_indices = @transform_9, window_bounds = array<i64: 64, 1>}, {pipeline_mode = #tpu.pipeline_mode<synchronous>, transform_indices = @transform_10, window_bounds = array<i64: 128, 192>}, {pipeline_mode = #tpu.pipeline_mode<synchronous>, transform_indices = @transform_11, window_bounds = array<i64: 128, 1>}, {pipeline_mode = #tpu.pipeline_mode<synchronous>, transform_indices = @transform_12, window_bounds = array<i64: 128, 1>}, {transform_indices = @transform_13, window_bounds = array<i64: 128, 256>}]} {
    %c0 = arith.constant 0 : index
    %c0_0 = arith.constant 0 : index
    %0 = vector.load %arg1[%c0, %c0_0] : memref<8x512xf32, #tpu.memory_space<vmem>>, vector<8x512xf32>
    %1 = tpu.iota {dimensions = array<i32: 1>} : vector<8x512xi32>
    %c63_i32 = arith.constant 63 : i32
    %2 = vector.broadcast %c63_i32 : i32 to vector<8x512xi32>
    %3 = arith.andi %1, %2 : vector<8x512xi32>
    %c1_i32 = arith.constant 1 : i32
    %4 = vector.broadcast %c1_i32 : i32 to vector<8x512xi32>
    %5 = arith.cmpi sge, %3, %4 : vector<8x512xi32>
    %c1_i32_1 = arith.constant 1 : i32
    %6 = tpu.dynamic_rotate %0 by %c1_i32_1 dim 1 : vector<8x512xf32>, i32 -> vector<8x512xf32>
    %cst = arith.constant 0.000000e+00 : f32
    %7 = vector.broadcast %cst : f32 to vector<8x512xf32>
    %8 = arith.select %5, %6, %7 : vector<8x512xi1>, vector<8x512xf32>
    %c62_i32 = arith.constant 62 : i32
    %9 = vector.broadcast %c62_i32 : i32 to vector<8x512xi32>
    %10 = arith.cmpi sle, %3, %9 : vector<8x512xi32>
    %c511_i32 = arith.constant 511 : i32
    %11 = tpu.dynamic_rotate %0 by %c511_i32 dim 1 : vector<8x512xf32>, i32 -> vector<8x512xf32>
    %cst_2 = arith.constant 0.000000e+00 : f32
    %12 = vector.broadcast %cst_2 : f32 to vector<8x512xf32>
    %13 = arith.select %10, %11, %12 : vector<8x512xi1>, vector<8x512xf32>
    %14 = tpu.concatenate %8, %0, %13 in 0 : vector<8x512xf32>, vector<8x512xf32>, vector<8x512xf32> -> vector<24x512xf32>
    %15 = arith.truncf %14 : vector<24x512xf32> to vector<24x512xbf16>
    %c0_3 = arith.constant 0 : index
    %c0_4 = arith.constant 0 : index
    %16 = vector.load %arg2[%c0_3, %c0_4] : memref<16x24xbf16, #tpu.memory_space<vmem>>, vector<16x24xbf16>
    %cst_5 = arith.constant dense<0.000000e+00> : vector<16x512xf32>
    %17 = tpu.matmul %16, %15, %cst_5 {dimension_numbers = #tpu.dot_dimension_numbers<[1], [0], [0], [1], [0, 0, 1, 1], [], []>} : vector<16x24xbf16>, vector<24x512xbf16>, vector<16x512xf32> -> vector<16x512xf32>
    %c0_6 = arith.constant 0 : index
    %c0_7 = arith.constant 0 : index
    %18 = vector.load %arg3[%c0_6, %c0_7] : memref<16x1xf32, #tpu.memory_space<vmem>>, vector<16x1xf32>
    %19 = vector.broadcast %18 : vector<16x1xf32> to vector<16x512xf32>
    %20 = arith.mulf %17, %19 : vector<16x512xf32>
    %c0_8 = arith.constant 0 : index
    %c0_9 = arith.constant 0 : index
    %21 = vector.load %arg4[%c0_8, %c0_9] : memref<16x1xf32, #tpu.memory_space<vmem>>, vector<16x1xf32>
    %22 = vector.broadcast %21 : vector<16x1xf32> to vector<16x512xf32>
    %23 = arith.addf %20, %22 : vector<16x512xf32>
    %cst_10 = arith.constant 0.000000e+00 : f32
    %24 = vector.broadcast %cst_10 : f32 to vector<16x512xf32>
    %25 = arith.maximumf %23, %24 : vector<16x512xf32>
    %c511_i32_11 = arith.constant 511 : i32
    %26 = tpu.dynamic_rotate %25 by %c511_i32_11 dim 1 : vector<16x512xf32>, i32 -> vector<16x512xf32>
    %27 = arith.maximumf %25, %26 : vector<16x512xf32>
    %28 = tpu.iota {dimensions = array<i32: 0>} : vector<512x256xi32>
    %29 = tpu.iota {dimensions = array<i32: 1>} : vector<512x256xi32>
    %c2_i32 = arith.constant 2 : i32
    %30 = vector.broadcast %c2_i32 : i32 to vector<512x256xi32>
    %31 = arith.muli %30, %29 : vector<512x256xi32>
    %32 = arith.cmpi eq, %28, %31 : vector<512x256xi32>
    %cst_12 = arith.constant 1.000000e+00 : f32
    %cst_13 = arith.constant 0.000000e+00 : f32
    %33 = vector.broadcast %cst_12 : f32 to vector<512x256xf32>
    %34 = vector.broadcast %cst_13 : f32 to vector<512x256xf32>
    %35 = arith.select %32, %33, %34 : vector<512x256xi1>, vector<512x256xf32>
    %36 = arith.truncf %35 : vector<512x256xf32> to vector<512x256xbf16>
    %37 = arith.truncf %27 : vector<16x512xf32> to vector<16x512xbf16>
    %cst_14 = arith.constant dense<0.000000e+00> : vector<16x256xf32>
    %38 = tpu.matmul %37, %36, %cst_14 {dimension_numbers = #tpu.dot_dimension_numbers<[1], [0], [0], [1], [0, 0, 1, 1], [], []>} : vector<16x512xbf16>, vector<512x256xbf16>, vector<16x256xf32> -> vector<16x256xf32>
    %39 = tpu.iota {dimensions = array<i32: 1>} : vector<16x256xi32>
    %c31_i32 = arith.constant 31 : i32
    %40 = vector.broadcast %c31_i32 : i32 to vector<16x256xi32>
    %41 = arith.andi %39, %40 : vector<16x256xi32>
    %c1_i32_15 = arith.constant 1 : i32
    %42 = vector.broadcast %c1_i32_15 : i32 to vector<16x256xi32>
    %43 = arith.cmpi sge, %41, %42 : vector<16x256xi32>
    %c1_i32_16 = arith.constant 1 : i32
    %44 = tpu.dynamic_rotate %38 by %c1_i32_16 dim 1 : vector<16x256xf32>, i32 -> vector<16x256xf32>
    %cst_17 = arith.constant 0.000000e+00 : f32
    %45 = vector.broadcast %cst_17 : f32 to vector<16x256xf32>
    %46 = arith.select %43, %44, %45 : vector<16x256xi1>, vector<16x256xf32>
    %c30_i32 = arith.constant 30 : i32
    %47 = vector.broadcast %c30_i32 : i32 to vector<16x256xi32>
    %48 = arith.cmpi sle, %41, %47 : vector<16x256xi32>
    %c255_i32 = arith.constant 255 : i32
    %49 = tpu.dynamic_rotate %38 by %c255_i32 dim 1 : vector<16x256xf32>, i32 -> vector<16x256xf32>
    %cst_18 = arith.constant 0.000000e+00 : f32
    %50 = vector.broadcast %cst_18 : f32 to vector<16x256xf32>
    %51 = arith.select %48, %49, %50 : vector<16x256xi1>, vector<16x256xf32>
    %52 = tpu.concatenate %46, %38, %51 in 0 : vector<16x256xf32>, vector<16x256xf32>, vector<16x256xf32> -> vector<48x256xf32>
    %53 = arith.truncf %52 : vector<48x256xf32> to vector<48x256xbf16>
    %c0_19 = arith.constant 0 : index
    %c0_20 = arith.constant 0 : index
    %54 = vector.load %arg5[%c0_19, %c0_20] : memref<32x48xbf16, #tpu.memory_space<vmem>>, vector<32x48xbf16>
    %cst_21 = arith.constant dense<0.000000e+00> : vector<32x256xf32>
    %55 = tpu.matmul %54, %53, %cst_21 {dimension_numbers = #tpu.dot_dimension_numbers<[1], [0], [0], [1], [0, 0, 1, 1], [], []>} : vector<32x48xbf16>, vector<48x256xbf16>, vector<32x256xf32> -> vector<32x256xf32>
    %c0_22 = arith.constant 0 : index
    %c0_23 = arith.constant 0 : index
    %56 = vector.load %arg6[%c0_22, %c0_23] : memref<32x1xf32, #tpu.memory_space<vmem>>, vector<32x1xf32>
    %57 = vector.broadcast %56 : vector<32x1xf32> to vector<32x256xf32>
    %58 = arith.mulf %55, %57 : vector<32x256xf32>
    %c0_24 = arith.constant 0 : index
    %c0_25 = arith.constant 0 : index
    %59 = vector.load %arg7[%c0_24, %c0_25] : memref<32x1xf32, #tpu.memory_space<vmem>>, vector<32x1xf32>
    %60 = vector.broadcast %59 : vector<32x1xf32> to vector<32x256xf32>
    %61 = arith.addf %58, %60 : vector<32x256xf32>
    %cst_26 = arith.constant 0.000000e+00 : f32
    %62 = vector.broadcast %cst_26 : f32 to vector<32x256xf32>
    %63 = arith.maximumf %61, %62 : vector<32x256xf32>
    %64 = tpu.iota {dimensions = array<i32: 1>} : vector<32x256xi32>
    %c31_i32_27 = arith.constant 31 : i32
    %65 = vector.broadcast %c31_i32_27 : i32 to vector<32x256xi32>
    %66 = arith.andi %64, %65 : vector<32x256xi32>
    %c1_i32_28 = arith.constant 1 : i32
    %67 = vector.broadcast %c1_i32_28 : i32 to vector<32x256xi32>
    %68 = arith.cmpi sge, %66, %67 : vector<32x256xi32>
    %c1_i32_29 = arith.constant 1 : i32
    %69 = tpu.dynamic_rotate %63 by %c1_i32_29 dim 1 : vector<32x256xf32>, i32 -> vector<32x256xf32>
    %cst_30 = arith.constant 0.000000e+00 : f32
    %70 = vector.broadcast %cst_30 : f32 to vector<32x256xf32>
    %71 = arith.select %68, %69, %70 : vector<32x256xi1>, vector<32x256xf32>
    %c30_i32_31 = arith.constant 30 : i32
    %72 = vector.broadcast %c30_i32_31 : i32 to vector<32x256xi32>
    %73 = arith.cmpi sle, %66, %72 : vector<32x256xi32>
    %c255_i32_32 = arith.constant 255 : i32
    %74 = tpu.dynamic_rotate %63 by %c255_i32_32 dim 1 : vector<32x256xf32>, i32 -> vector<32x256xf32>
    %cst_33 = arith.constant 0.000000e+00 : f32
    %75 = vector.broadcast %cst_33 : f32 to vector<32x256xf32>
    %76 = arith.select %73, %74, %75 : vector<32x256xi1>, vector<32x256xf32>
    %77 = tpu.concatenate %71, %63, %76 in 0 : vector<32x256xf32>, vector<32x256xf32>, vector<32x256xf32> -> vector<96x256xf32>
    %78 = arith.truncf %77 : vector<96x256xf32> to vector<96x256xbf16>
    %c0_34 = arith.constant 0 : index
    %c0_35 = arith.constant 0 : index
    %79 = vector.load %arg8[%c0_34, %c0_35] : memref<64x96xbf16, #tpu.memory_space<vmem>>, vector<64x96xbf16>
    %cst_36 = arith.constant dense<0.000000e+00> : vector<64x256xf32>
    %80 = tpu.matmul %79, %78, %cst_36 {dimension_numbers = #tpu.dot_dimension_numbers<[1], [0], [0], [1], [0, 0, 1, 1], [], []>} : vector<64x96xbf16>, vector<96x256xbf16>, vector<64x256xf32> -> vector<64x256xf32>
    %c0_37 = arith.constant 0 : index
    %c0_38 = arith.constant 0 : index
    %81 = vector.load %arg9[%c0_37, %c0_38] : memref<64x1xf32, #tpu.memory_space<vmem>>, vector<64x1xf32>
    %82 = vector.broadcast %81 : vector<64x1xf32> to vector<64x256xf32>
    %83 = arith.mulf %80, %82 : vector<64x256xf32>
    %c0_39 = arith.constant 0 : index
    %c0_40 = arith.constant 0 : index
    %84 = vector.load %arg10[%c0_39, %c0_40] : memref<64x1xf32, #tpu.memory_space<vmem>>, vector<64x1xf32>
    %85 = vector.broadcast %84 : vector<64x1xf32> to vector<64x256xf32>
    %86 = arith.addf %83, %85 : vector<64x256xf32>
    %cst_41 = arith.constant 0.000000e+00 : f32
    %87 = vector.broadcast %cst_41 : f32 to vector<64x256xf32>
    %88 = arith.maximumf %86, %87 : vector<64x256xf32>
    %89 = tpu.iota {dimensions = array<i32: 1>} : vector<64x256xi32>
    %c31_i32_42 = arith.constant 31 : i32
    %90 = vector.broadcast %c31_i32_42 : i32 to vector<64x256xi32>
    %91 = arith.andi %89, %90 : vector<64x256xi32>
    %c1_i32_43 = arith.constant 1 : i32
    %92 = vector.broadcast %c1_i32_43 : i32 to vector<64x256xi32>
    %93 = arith.cmpi sge, %91, %92 : vector<64x256xi32>
    %c1_i32_44 = arith.constant 1 : i32
    %94 = tpu.dynamic_rotate %88 by %c1_i32_44 dim 1 : vector<64x256xf32>, i32 -> vector<64x256xf32>
    %cst_45 = arith.constant 0.000000e+00 : f32
    %95 = vector.broadcast %cst_45 : f32 to vector<64x256xf32>
    %96 = arith.select %93, %94, %95 : vector<64x256xi1>, vector<64x256xf32>
    %c30_i32_46 = arith.constant 30 : i32
    %97 = vector.broadcast %c30_i32_46 : i32 to vector<64x256xi32>
    %98 = arith.cmpi sle, %91, %97 : vector<64x256xi32>
    %c255_i32_47 = arith.constant 255 : i32
    %99 = tpu.dynamic_rotate %88 by %c255_i32_47 dim 1 : vector<64x256xf32>, i32 -> vector<64x256xf32>
    %cst_48 = arith.constant 0.000000e+00 : f32
    %100 = vector.broadcast %cst_48 : f32 to vector<64x256xf32>
    %101 = arith.select %98, %99, %100 : vector<64x256xi1>, vector<64x256xf32>
    %102 = tpu.concatenate %96, %88, %101 in 0 : vector<64x256xf32>, vector<64x256xf32>, vector<64x256xf32> -> vector<192x256xf32>
    %103 = arith.truncf %102 : vector<192x256xf32> to vector<192x256xbf16>
    %c0_49 = arith.constant 0 : index
    %c0_50 = arith.constant 0 : index
    %104 = vector.load %arg11[%c0_49, %c0_50] : memref<128x192xbf16, #tpu.memory_space<vmem>>, vector<128x192xbf16>
    %cst_51 = arith.constant dense<0.000000e+00> : vector<128x256xf32>
    %105 = tpu.matmul %104, %103, %cst_51 {dimension_numbers = #tpu.dot_dimension_numbers<[1], [0], [0], [1], [0, 0, 1, 1], [], []>} : vector<128x192xbf16>, vector<192x256xbf16>, vector<128x256xf32> -> vector<128x256xf32>
    %c0_52 = arith.constant 0 : index
    %c0_53 = arith.constant 0 : index
    %106 = vector.load %arg12[%c0_52, %c0_53] : memref<128x1xf32, #tpu.memory_space<vmem>>, vector<128x1xf32>
    %107 = vector.broadcast %106 : vector<128x1xf32> to vector<128x256xf32>
    %108 = arith.mulf %105, %107 : vector<128x256xf32>
    %c0_54 = arith.constant 0 : index
    %c0_55 = arith.constant 0 : index
    %109 = vector.load %arg13[%c0_54, %c0_55] : memref<128x1xf32, #tpu.memory_space<vmem>>, vector<128x1xf32>
    %110 = vector.broadcast %109 : vector<128x1xf32> to vector<128x256xf32>
    %111 = arith.addf %108, %110 : vector<128x256xf32>
    %cst_56 = arith.constant 0.000000e+00 : f32
    %112 = vector.broadcast %cst_56 : f32 to vector<128x256xf32>
    %113 = arith.maximumf %111, %112 : vector<128x256xf32>
    %c0_57 = arith.constant 0 : index
    %c0_58 = arith.constant 0 : index
    %114 = vector.load %arg14[%c0_57, %c0_58] : memref<128x256xf32, #tpu.memory_space<vmem>>, vector<128x256xf32>
    tpu.vector_store %arg14[%c0_57, %c0_58], %113 {strides = array<i32>} : memref<128x256xf32, #tpu.memory_space<vmem>>, vector<128x256xf32>,
    return
  }
  func.func @transform_0(%arg0: i32) -> (i32, i32) {
    %c0_i32 = arith.constant 0 : i32
    %c0_i32_0 = arith.constant 0 : i32
    return %c0_i32, %arg0 : i32, i32
  }
  func.func @transform_1(%arg0: i32) -> (i32, i32) {
    %c0_i32 = arith.constant 0 : i32
    %c0_i32_0 = arith.constant 0 : i32
    %c0_i32_1 = arith.constant 0 : i32
    return %c0_i32, %c0_i32_0 : i32, i32
  }
  func.func @transform_2(%arg0: i32) -> (i32, i32) {
    %c0_i32 = arith.constant 0 : i32
    %c0_i32_0 = arith.constant 0 : i32
    %c0_i32_1 = arith.constant 0 : i32
    return %c0_i32, %c0_i32_0 : i32, i32
  }
  func.func @transform_3(%arg0: i32) -> (i32, i32) {
    %c0_i32 = arith.constant 0 : i32
    %c0_i32_0 = arith.constant 0 : i32
    %c0_i32_1 = arith.constant 0 : i32
    return %c0_i32, %c0_i32_0 : i32, i32
  }
  func.func @transform_4(%arg0: i32) -> (i32, i32) {
    %c0_i32 = arith.constant 0 : i32
    %c0_i32_0 = arith.constant 0 : i32
    %c0_i32_1 = arith.constant 0 : i32
    return %c0_i32, %c0_i32_0 : i32, i32
  }
  func.func @transform_5(%arg0: i32) -> (i32, i32) {
    %c0_i32 = arith.constant 0 : i32
    %c0_i32_0 = arith.constant 0 : i32
    %c0_i32_1 = arith.constant 0 : i32
    return %c0_i32, %c0_i32_0 : i32, i32
  }
  func.func @transform_6(%arg0: i32) -> (i32, i32) {
    %c0_i32 = arith.constant 0 : i32
    %c0_i32_0 = arith.constant 0 : i32
    %c0_i32_1 = arith.constant 0 : i32
    return %c0_i32, %c0_i32_0 : i32, i32
  }
  func.func @transform_7(%arg0: i32) -> (i32, i32) {
    %c0_i32 = arith.constant 0 : i32
    %c0_i32_0 = arith.constant 0 : i32
    %c0_i32_1 = arith.constant 0 : i32
    return %c0_i32, %c0_i32_0 : i32, i32
  }
  func.func @transform_8(%arg0: i32) -> (i32, i32) {
    %c0_i32 = arith.constant 0 : i32
    %c0_i32_0 = arith.constant 0 : i32
    %c0_i32_1 = arith.constant 0 : i32
    return %c0_i32, %c0_i32_0 : i32, i32
  }
  func.func @transform_9(%arg0: i32) -> (i32, i32) {
    %c0_i32 = arith.constant 0 : i32
    %c0_i32_0 = arith.constant 0 : i32
    %c0_i32_1 = arith.constant 0 : i32
    return %c0_i32, %c0_i32_0 : i32, i32
  }
  func.func @transform_10(%arg0: i32) -> (i32, i32) {
    %c0_i32 = arith.constant 0 : i32
    %c0_i32_0 = arith.constant 0 : i32
    %c0_i32_1 = arith.constant 0 : i32
    return %c0_i32, %c0_i32_0 : i32, i32
  }
  func.func @transform_11(%arg0: i32) -> (i32, i32) {
    %c0_i32 = arith.constant 0 : i32
    %c0_i32_0 = arith.constant 0 : i32
    %c0_i32_1 = arith.constant 0 : i32
    return %c0_i32, %c0_i32_0 : i32, i32
  }
  func.func @transform_12(%arg0: i32) -> (i32, i32) {
    %c0_i32 = arith.constant 0 : i32
    %c0_i32_0 = arith.constant 0 : i32
    %c0_i32_1 = arith.constant 0 : i32
    return %c0_i32, %c0_i32_0 : i32, i32
  }
  func.func @transform_13(%arg0: i32) -> (i32, i32) {
    %c0_i32 = arith.constant 0 : i32
    %c0_i32_0 = arith.constant 0 : i32
    return %c0_i32, %arg0 : i32, i32
  }
}

module attributes {stable_mosaic.version = 11 : i64} {
  func.func @_classifier_softmax_kernel(%arg0: memref<8x128xf32, #tpu.memory_space<vmem>>, %arg1: memref<128x64xf32, #tpu.memory_space<vmem>>, %arg2: memref<1x64xf32, #tpu.memory_space<vmem>>, %arg3: memref<64x3xf32, #tpu.memory_space<vmem>>, %arg4: memref<1x3xf32, #tpu.memory_space<vmem>>, %arg5: memref<8x3xf32, #tpu.memory_space<vmem>>) attributes {dimension_semantics = [], scalar_prefetch = 0 : i64, scratch_operands = 0 : i64, tpu.core_type = #tpu.core_type<tc>} {
    %c0 = arith.constant 0 : index
    %c0_0 = arith.constant 0 : index
    %0 = vector.load %arg0[%c0, %c0_0] : memref<8x128xf32, #tpu.memory_space<vmem>>, vector<8x128xf32>
    %c0_1 = arith.constant 0 : index
    %c0_2 = arith.constant 0 : index
    %1 = vector.load %arg1[%c0_1, %c0_2] : memref<128x64xf32, #tpu.memory_space<vmem>>, vector<128x64xf32>
    %cst = arith.constant dense<0.000000e+00> : vector<8x64xf32>
    %2 = tpu.matmul %0, %1, %cst {dimension_numbers = #tpu.dot_dimension_numbers<[1], [0], [0], [1], [0, 0, 1, 1], [], []>} : vector<8x128xf32>, vector<128x64xf32>, vector<8x64xf32> -> vector<8x64xf32>
    %c0_3 = arith.constant 0 : index
    %c0_4 = arith.constant 0 : index
    %3 = vector.load %arg2[%c0_3, %c0_4] : memref<1x64xf32, #tpu.memory_space<vmem>>, vector<1x64xf32>
    %4 = vector.broadcast %3 : vector<1x64xf32> to vector<8x64xf32>
    %5 = arith.addf %2, %4 : vector<8x64xf32>
    %cst_5 = arith.constant 0.000000e+00 : f32
    %6 = vector.broadcast %cst_5 : f32 to vector<8x64xf32>
    %7 = arith.maximumf %5, %6 : vector<8x64xf32>
    %c0_6 = arith.constant 0 : index
    %c0_7 = arith.constant 0 : index
    %8 = vector.load %arg3[%c0_6, %c0_7] : memref<64x3xf32, #tpu.memory_space<vmem>>, vector<64x3xf32>
    %cst_8 = arith.constant dense<0.000000e+00> : vector<8x3xf32>
    %9 = tpu.matmul %7, %8, %cst_8 {dimension_numbers = #tpu.dot_dimension_numbers<[1], [0], [0], [1], [0, 0, 1, 1], [], []>} : vector<8x64xf32>, vector<64x3xf32>, vector<8x3xf32> -> vector<8x3xf32>
    %c0_9 = arith.constant 0 : index
    %c0_10 = arith.constant 0 : index
    %10 = vector.load %arg4[%c0_9, %c0_10] : memref<1x3xf32, #tpu.memory_space<vmem>>, vector<1x3xf32>
    %11 = vector.broadcast %10 : vector<1x3xf32> to vector<8x3xf32>
    %12 = arith.addf %9, %11 : vector<8x3xf32>
    %cst_11 = arith.constant dense<0xFF800000> : vector<8xf32>
    %13 = vector.multi_reduction <maximumf>, %12, %cst_11 [1] : vector<8x3xf32> to vector<8xf32>
    %14 = vector.shape_cast %13 : vector<8xf32> to vector<8x1xf32>
    %15 = vector.broadcast %14 : vector<8x1xf32> to vector<8x3xf32>
    %16 = arith.subf %12, %15 : vector<8x3xf32>
    %17 = math.exp %16 : vector<8x3xf32>
    %cst_12 = arith.constant dense<0.000000e+00> : vector<8xf32>
    %18 = vector.multi_reduction <add>, %17, %cst_12 [1] : vector<8x3xf32> to vector<8xf32>
    %19 = vector.shape_cast %18 : vector<8xf32> to vector<8x1xf32>
    %20 = vector.broadcast %19 : vector<8x1xf32> to vector<8x3xf32>
    %21 = arith.divf %17, %20 : vector<8x3xf32>
    %c0_13 = arith.constant 0 : index
    %c0_14 = arith.constant 0 : index
    %22 = vector.load %arg5[%c0_13, %c0_14] : memref<8x3xf32, #tpu.memory_space<vmem>>, vector<8x3xf32>
    tpu.vector_store %arg5[%c0_13, %c0_14], %21 {strides = array<i32>} : memref<8x3xf32, #tpu.memory_space<vmem>>, vector<8x3xf32>,
    return
  }
}

module attributes {stable_mosaic.version = 11 : i64} {
  func.func @_specific_fe_kernel(%arg0: i32, %arg1: memref<128x256xf32, #tpu.memory_space<vmem>>, %arg2: memref<128x384xbf16, #tpu.memory_space<vmem>>, %arg3: memref<128x1xf32, #tpu.memory_space<vmem>>, %arg4: memref<128x1xf32, #tpu.memory_space<vmem>>, %arg5: memref<128x384xbf16, #tpu.memory_space<vmem>>, %arg6: memref<128x1xf32, #tpu.memory_space<vmem>>, %arg7: memref<128x1xf32, #tpu.memory_space<vmem>>, %arg8: memref<128x384xbf16, #tpu.memory_space<vmem>>, %arg9: memref<128x1xf32, #tpu.memory_space<vmem>>, %arg10: memref<128x1xf32, #tpu.memory_space<vmem>>, %arg11: memref<4x128x128xbf16, #tpu.memory_space<vmem>>, %arg12: memref<128x1xf32, #tpu.memory_space<vmem>>, %arg13: memref<1x128x8xf32, #tpu.memory_space<vmem>>) attributes {dimension_semantics = [#tpu.dimension_semantics<parallel>], iteration_bounds = array<i64: 2>, scalar_prefetch = 0 : i64, scratch_operands = 0 : i64, tpu.core_type = #tpu.core_type<tc>, window_params = [{transform_indices = @transform_0, window_bounds = array<i64: 128, 256>}, {pipeline_mode = #tpu.pipeline_mode<synchronous>, transform_indices = @transform_1, window_bounds = array<i64: 128, 384>}, {pipeline_mode = #tpu.pipeline_mode<synchronous>, transform_indices = @transform_2, window_bounds = array<i64: 128, 1>}, {pipeline_mode = #tpu.pipeline_mode<synchronous>, transform_indices = @transform_3, window_bounds = array<i64: 128, 1>}, {pipeline_mode = #tpu.pipeline_mode<synchronous>, transform_indices = @transform_4, window_bounds = array<i64: 128, 384>}, {pipeline_mode = #tpu.pipeline_mode<synchronous>, transform_indices = @transform_5, window_bounds = array<i64: 128, 1>}, {pipeline_mode = #tpu.pipeline_mode<synchronous>, transform_indices = @transform_6, window_bounds = array<i64: 128, 1>}, {pipeline_mode = #tpu.pipeline_mode<synchronous>, transform_indices = @transform_7, window_bounds = array<i64: 128, 384>}, {pipeline_mode = #tpu.pipeline_mode<synchronous>, transform_indices = @transform_8, window_bounds = array<i64: 128, 1>}, {pipeline_mode = #tpu.pipeline_mode<synchronous>, transform_indices = @transform_9, window_bounds = array<i64: 128, 1>}, {pipeline_mode = #tpu.pipeline_mode<synchronous>, transform_indices = @transform_10, window_bounds = array<i64: 4, 128, 128>}, {pipeline_mode = #tpu.pipeline_mode<synchronous>, transform_indices = @transform_11, window_bounds = array<i64: 128, 1>}, {transform_indices = @transform_12, window_bounds = array<i64: 1, 128, 8>}]} {
    %c0 = arith.constant 0 : index
    %c0_0 = arith.constant 0 : index
    %0 = vector.load %arg1[%c0, %c0_0] : memref<128x256xf32, #tpu.memory_space<vmem>>, vector<128x256xf32>
    %1 = tpu.iota {dimensions = array<i32: 1>} : vector<128x256xi32>
    %c31_i32 = arith.constant 31 : i32
    %2 = vector.broadcast %c31_i32 : i32 to vector<128x256xi32>
    %3 = arith.andi %1, %2 : vector<128x256xi32>
    %c1_i32 = arith.constant 1 : i32
    %4 = vector.broadcast %c1_i32 : i32 to vector<128x256xi32>
    %5 = arith.cmpi sge, %3, %4 : vector<128x256xi32>
    %c1_i32_1 = arith.constant 1 : i32
    %6 = tpu.dynamic_rotate %0 by %c1_i32_1 dim 1 : vector<128x256xf32>, i32 -> vector<128x256xf32>
    %cst = arith.constant 0.000000e+00 : f32
    %7 = vector.broadcast %cst : f32 to vector<128x256xf32>
    %8 = arith.select %5, %6, %7 : vector<128x256xi1>, vector<128x256xf32>
    %c30_i32 = arith.constant 30 : i32
    %9 = vector.broadcast %c30_i32 : i32 to vector<128x256xi32>
    %10 = arith.cmpi sle, %3, %9 : vector<128x256xi32>
    %c255_i32 = arith.constant 255 : i32
    %11 = tpu.dynamic_rotate %0 by %c255_i32 dim 1 : vector<128x256xf32>, i32 -> vector<128x256xf32>
    %cst_2 = arith.constant 0.000000e+00 : f32
    %12 = vector.broadcast %cst_2 : f32 to vector<128x256xf32>
    %13 = arith.select %10, %11, %12 : vector<128x256xi1>, vector<128x256xf32>
    %14 = tpu.concatenate %8, %0, %13 in 0 : vector<128x256xf32>, vector<128x256xf32>, vector<128x256xf32> -> vector<384x256xf32>
    %15 = arith.truncf %14 : vector<384x256xf32> to vector<384x256xbf16>
    %c0_3 = arith.constant 0 : index
    %c0_4 = arith.constant 0 : index
    %16 = vector.load %arg2[%c0_3, %c0_4] : memref<128x384xbf16, #tpu.memory_space<vmem>>, vector<128x384xbf16>
    %cst_5 = arith.constant dense<0.000000e+00> : vector<128x256xf32>
    %17 = tpu.matmul %16, %15, %cst_5 {dimension_numbers = #tpu.dot_dimension_numbers<[1], [0], [0], [1], [0, 0, 1, 1], [], []>} : vector<128x384xbf16>, vector<384x256xbf16>, vector<128x256xf32> -> vector<128x256xf32>
    %c0_6 = arith.constant 0 : index
    %c0_7 = arith.constant 0 : index
    %18 = vector.load %arg3[%c0_6, %c0_7] : memref<128x1xf32, #tpu.memory_space<vmem>>, vector<128x1xf32>
    %19 = vector.broadcast %18 : vector<128x1xf32> to vector<128x256xf32>
    %20 = arith.mulf %17, %19 : vector<128x256xf32>
    %c0_8 = arith.constant 0 : index
    %c0_9 = arith.constant 0 : index
    %21 = vector.load %arg4[%c0_8, %c0_9] : memref<128x1xf32, #tpu.memory_space<vmem>>, vector<128x1xf32>
    %22 = vector.broadcast %21 : vector<128x1xf32> to vector<128x256xf32>
    %23 = arith.addf %20, %22 : vector<128x256xf32>
    %cst_10 = arith.constant 0.000000e+00 : f32
    %24 = vector.broadcast %cst_10 : f32 to vector<128x256xf32>
    %25 = arith.maximumf %23, %24 : vector<128x256xf32>
    %26 = tpu.iota {dimensions = array<i32: 1>} : vector<128x256xi32>
    %c31_i32_11 = arith.constant 31 : i32
    %27 = vector.broadcast %c31_i32_11 : i32 to vector<128x256xi32>
    %28 = arith.andi %26, %27 : vector<128x256xi32>
    %c1_i32_12 = arith.constant 1 : i32
    %29 = vector.broadcast %c1_i32_12 : i32 to vector<128x256xi32>
    %30 = arith.cmpi sge, %28, %29 : vector<128x256xi32>
    %c1_i32_13 = arith.constant 1 : i32
    %31 = tpu.dynamic_rotate %25 by %c1_i32_13 dim 1 : vector<128x256xf32>, i32 -> vector<128x256xf32>
    %cst_14 = arith.constant 0.000000e+00 : f32
    %32 = vector.broadcast %cst_14 : f32 to vector<128x256xf32>
    %33 = arith.select %30, %31, %32 : vector<128x256xi1>, vector<128x256xf32>
    %c30_i32_15 = arith.constant 30 : i32
    %34 = vector.broadcast %c30_i32_15 : i32 to vector<128x256xi32>
    %35 = arith.cmpi sle, %28, %34 : vector<128x256xi32>
    %c255_i32_16 = arith.constant 255 : i32
    %36 = tpu.dynamic_rotate %25 by %c255_i32_16 dim 1 : vector<128x256xf32>, i32 -> vector<128x256xf32>
    %cst_17 = arith.constant 0.000000e+00 : f32
    %37 = vector.broadcast %cst_17 : f32 to vector<128x256xf32>
    %38 = arith.select %35, %36, %37 : vector<128x256xi1>, vector<128x256xf32>
    %39 = tpu.concatenate %33, %25, %38 in 0 : vector<128x256xf32>, vector<128x256xf32>, vector<128x256xf32> -> vector<384x256xf32>
    %40 = arith.truncf %39 : vector<384x256xf32> to vector<384x256xbf16>
    %c0_18 = arith.constant 0 : index
    %c0_19 = arith.constant 0 : index
    %41 = vector.load %arg5[%c0_18, %c0_19] : memref<128x384xbf16, #tpu.memory_space<vmem>>, vector<128x384xbf16>
    %cst_20 = arith.constant dense<0.000000e+00> : vector<128x256xf32>
    %42 = tpu.matmul %41, %40, %cst_20 {dimension_numbers = #tpu.dot_dimension_numbers<[1], [0], [0], [1], [0, 0, 1, 1], [], []>} : vector<128x384xbf16>, vector<384x256xbf16>, vector<128x256xf32> -> vector<128x256xf32>
    %c0_21 = arith.constant 0 : index
    %c0_22 = arith.constant 0 : index
    %43 = vector.load %arg6[%c0_21, %c0_22] : memref<128x1xf32, #tpu.memory_space<vmem>>, vector<128x1xf32>
    %44 = vector.broadcast %43 : vector<128x1xf32> to vector<128x256xf32>
    %45 = arith.mulf %42, %44 : vector<128x256xf32>
    %c0_23 = arith.constant 0 : index
    %c0_24 = arith.constant 0 : index
    %46 = vector.load %arg7[%c0_23, %c0_24] : memref<128x1xf32, #tpu.memory_space<vmem>>, vector<128x1xf32>
    %47 = vector.broadcast %46 : vector<128x1xf32> to vector<128x256xf32>
    %48 = arith.addf %45, %47 : vector<128x256xf32>
    %cst_25 = arith.constant 0.000000e+00 : f32
    %49 = vector.broadcast %cst_25 : f32 to vector<128x256xf32>
    %50 = arith.maximumf %48, %49 : vector<128x256xf32>
    %51 = tpu.iota {dimensions = array<i32: 1>} : vector<128x256xi32>
    %c31_i32_26 = arith.constant 31 : i32
    %52 = vector.broadcast %c31_i32_26 : i32 to vector<128x256xi32>
    %53 = arith.andi %51, %52 : vector<128x256xi32>
    %c1_i32_27 = arith.constant 1 : i32
    %54 = vector.broadcast %c1_i32_27 : i32 to vector<128x256xi32>
    %55 = arith.cmpi sge, %53, %54 : vector<128x256xi32>
    %c1_i32_28 = arith.constant 1 : i32
    %56 = tpu.dynamic_rotate %50 by %c1_i32_28 dim 1 : vector<128x256xf32>, i32 -> vector<128x256xf32>
    %cst_29 = arith.constant 0.000000e+00 : f32
    %57 = vector.broadcast %cst_29 : f32 to vector<128x256xf32>
    %58 = arith.select %55, %56, %57 : vector<128x256xi1>, vector<128x256xf32>
    %c30_i32_30 = arith.constant 30 : i32
    %59 = vector.broadcast %c30_i32_30 : i32 to vector<128x256xi32>
    %60 = arith.cmpi sle, %53, %59 : vector<128x256xi32>
    %c255_i32_31 = arith.constant 255 : i32
    %61 = tpu.dynamic_rotate %50 by %c255_i32_31 dim 1 : vector<128x256xf32>, i32 -> vector<128x256xf32>
    %cst_32 = arith.constant 0.000000e+00 : f32
    %62 = vector.broadcast %cst_32 : f32 to vector<128x256xf32>
    %63 = arith.select %60, %61, %62 : vector<128x256xi1>, vector<128x256xf32>
    %64 = tpu.concatenate %58, %50, %63 in 0 : vector<128x256xf32>, vector<128x256xf32>, vector<128x256xf32> -> vector<384x256xf32>
    %65 = arith.truncf %64 : vector<384x256xf32> to vector<384x256xbf16>
    %c0_33 = arith.constant 0 : index
    %c0_34 = arith.constant 0 : index
    %66 = vector.load %arg8[%c0_33, %c0_34] : memref<128x384xbf16, #tpu.memory_space<vmem>>, vector<128x384xbf16>
    %cst_35 = arith.constant dense<0.000000e+00> : vector<128x256xf32>
    %67 = tpu.matmul %66, %65, %cst_35 {dimension_numbers = #tpu.dot_dimension_numbers<[1], [0], [0], [1], [0, 0, 1, 1], [], []>} : vector<128x384xbf16>, vector<384x256xbf16>, vector<128x256xf32> -> vector<128x256xf32>
    %c0_36 = arith.constant 0 : index
    %c0_37 = arith.constant 0 : index
    %68 = vector.load %arg9[%c0_36, %c0_37] : memref<128x1xf32, #tpu.memory_space<vmem>>, vector<128x1xf32>
    %69 = vector.broadcast %68 : vector<128x1xf32> to vector<128x256xf32>
    %70 = arith.mulf %67, %69 : vector<128x256xf32>
    %c0_38 = arith.constant 0 : index
    %c0_39 = arith.constant 0 : index
    %71 = vector.load %arg10[%c0_38, %c0_39] : memref<128x1xf32, #tpu.memory_space<vmem>>, vector<128x1xf32>
    %72 = vector.broadcast %71 : vector<128x1xf32> to vector<128x256xf32>
    %73 = arith.addf %70, %72 : vector<128x256xf32>
    %cst_40 = arith.constant 0.000000e+00 : f32
    %74 = vector.broadcast %cst_40 : f32 to vector<128x256xf32>
    %75 = arith.maximumf %73, %74 : vector<128x256xf32>
    %c255_i32_41 = arith.constant 255 : i32
    %76 = tpu.dynamic_rotate %75 by %c255_i32_41 dim 1 : vector<128x256xf32>, i32 -> vector<128x256xf32>
    %77 = arith.maximumf %75, %76 : vector<128x256xf32>
    %c254_i32 = arith.constant 254 : i32
    %78 = tpu.dynamic_rotate %77 by %c254_i32 dim 1 : vector<128x256xf32>, i32 -> vector<128x256xf32>
    %79 = arith.maximumf %77, %78 : vector<128x256xf32>
    %c252_i32 = arith.constant 252 : i32
    %80 = tpu.dynamic_rotate %79 by %c252_i32 dim 1 : vector<128x256xf32>, i32 -> vector<128x256xf32>
    %81 = arith.maximumf %79, %80 : vector<128x256xf32>
    %82 = tpu.iota {dimensions = array<i32: 0>} : vector<256x8xi32>
    %83 = tpu.iota {dimensions = array<i32: 1>} : vector<256x8xi32>
    %84 = arith.truncf %81 : vector<128x256xf32> to vector<128x256xbf16>
    %cst_42 = arith.constant 0.000000e+00 : f32
    %85 = vector.broadcast %cst_42 : f32 to vector<128x8xf32>
    %c32_i32 = arith.constant 32 : i32
    %86 = vector.broadcast %c32_i32 : i32 to vector<256x8xi32>
    %87 = arith.muli %86, %83 : vector<256x8xi32>
    %c0_i32 = arith.constant 0 : i32
    %88 = vector.broadcast %c0_i32 : i32 to vector<256x8xi32>
    %89 = arith.addi %87, %88 : vector<256x8xi32>
    %90 = arith.cmpi eq, %82, %89 : vector<256x8xi32>
    %cst_43 = arith.constant 1.000000e+00 : f32
    %cst_44 = arith.constant 0.000000e+00 : f32
    %91 = vector.broadcast %cst_43 : f32 to vector<256x8xf32>
    %92 = vector.broadcast %cst_44 : f32 to vector<256x8xf32>
    %93 = arith.select %90, %91, %92 : vector<256x8xi1>, vector<256x8xf32>
    %94 = arith.truncf %93 : vector<256x8xf32> to vector<256x8xbf16>
    %cst_45 = arith.constant dense<0.000000e+00> : vector<128x8xf32>
    %95 = tpu.matmul %84, %94, %cst_45 {dimension_numbers = #tpu.dot_dimension_numbers<[1], [0], [0], [1], [0, 0, 1, 1], [], []>} : vector<128x256xbf16>, vector<256x8xbf16>, vector<128x8xf32> -> vector<128x8xf32>
    %c0_46 = arith.constant 0 : index
    %c0_47 = arith.constant 0 : index
    %c0_48 = arith.constant 0 : index
    %96 = vector.load %arg11[%c0_46, %c0_47, %c0_48] : memref<4x128x128xbf16, #tpu.memory_space<vmem>>, vector<1x128x128xbf16>
    %97 = vector.shape_cast %96 : vector<1x128x128xbf16> to vector<128x128xbf16>
    %98 = arith.truncf %95 : vector<128x8xf32> to vector<128x8xbf16>
    %cst_49 = arith.constant dense<0.000000e+00> : vector<128x8xf32>
    %99 = tpu.matmul %97, %98, %cst_49 {dimension_numbers = #tpu.dot_dimension_numbers<[1], [0], [0], [1], [0, 0, 1, 1], [], []>} : vector<128x128xbf16>, vector<128x8xbf16>, vector<128x8xf32> -> vector<128x8xf32>
    %100 = arith.addf %85, %99 : vector<128x8xf32>
    %c32_i32_50 = arith.constant 32 : i32
    %101 = vector.broadcast %c32_i32_50 : i32 to vector<256x8xi32>
    %102 = arith.muli %101, %83 : vector<256x8xi32>
    %c8_i32 = arith.constant 8 : i32
    %103 = vector.broadcast %c8_i32 : i32 to vector<256x8xi32>
    %104 = arith.addi %102, %103 : vector<256x8xi32>
    %105 = arith.cmpi eq, %82, %104 : vector<256x8xi32>
    %cst_51 = arith.constant 1.000000e+00 : f32
    %cst_52 = arith.constant 0.000000e+00 : f32
    %106 = vector.broadcast %cst_51 : f32 to vector<256x8xf32>
    %107 = vector.broadcast %cst_52 : f32 to vector<256x8xf32>
    %108 = arith.select %105, %106, %107 : vector<256x8xi1>, vector<256x8xf32>
    %109 = arith.truncf %108 : vector<256x8xf32> to vector<256x8xbf16>
    %cst_53 = arith.constant dense<0.000000e+00> : vector<128x8xf32>
    %110 = tpu.matmul %84, %109, %cst_53 {dimension_numbers = #tpu.dot_dimension_numbers<[1], [0], [0], [1], [0, 0, 1, 1], [], []>} : vector<128x256xbf16>, vector<256x8xbf16>, vector<128x8xf32> -> vector<128x8xf32>
    %c1 = arith.constant 1 : index
    %c0_54 = arith.constant 0 : index
    %c0_55 = arith.constant 0 : index
    %111 = vector.load %arg11[%c1, %c0_54, %c0_55] : memref<4x128x128xbf16, #tpu.memory_space<vmem>>, vector<1x128x128xbf16>
    %112 = vector.shape_cast %111 : vector<1x128x128xbf16> to vector<128x128xbf16>
    %113 = arith.truncf %110 : vector<128x8xf32> to vector<128x8xbf16>
    %cst_56 = arith.constant dense<0.000000e+00> : vector<128x8xf32>
    %114 = tpu.matmul %112, %113, %cst_56 {dimension_numbers = #tpu.dot_dimension_numbers<[1], [0], [0], [1], [0, 0, 1, 1], [], []>} : vector<128x128xbf16>, vector<128x8xbf16>, vector<128x8xf32> -> vector<128x8xf32>
    %115 = arith.addf %100, %114 : vector<128x8xf32>
    %c32_i32_57 = arith.constant 32 : i32
    %116 = vector.broadcast %c32_i32_57 : i32 to vector<256x8xi32>
    %117 = arith.muli %116, %83 : vector<256x8xi32>
    %c16_i32 = arith.constant 16 : i32
    %118 = vector.broadcast %c16_i32 : i32 to vector<256x8xi32>
    %119 = arith.addi %117, %118 : vector<256x8xi32>
    %120 = arith.cmpi eq, %82, %119 : vector<256x8xi32>
    %cst_58 = arith.constant 1.000000e+00 : f32
    %cst_59 = arith.constant 0.000000e+00 : f32
    %121 = vector.broadcast %cst_58 : f32 to vector<256x8xf32>
    %122 = vector.broadcast %cst_59 : f32 to vector<256x8xf32>
    %123 = arith.select %120, %121, %122 : vector<256x8xi1>, vector<256x8xf32>
    %124 = arith.truncf %123 : vector<256x8xf32> to vector<256x8xbf16>
    %cst_60 = arith.constant dense<0.000000e+00> : vector<128x8xf32>
    %125 = tpu.matmul %84, %124, %cst_60 {dimension_numbers = #tpu.dot_dimension_numbers<[1], [0], [0], [1], [0, 0, 1, 1], [], []>} : vector<128x256xbf16>, vector<256x8xbf16>, vector<128x8xf32> -> vector<128x8xf32>
    %c2 = arith.constant 2 : index
    %c0_61 = arith.constant 0 : index
    %c0_62 = arith.constant 0 : index
    %126 = vector.load %arg11[%c2, %c0_61, %c0_62] : memref<4x128x128xbf16, #tpu.memory_space<vmem>>, vector<1x128x128xbf16>
    %127 = vector.shape_cast %126 : vector<1x128x128xbf16> to vector<128x128xbf16>
    %128 = arith.truncf %125 : vector<128x8xf32> to vector<128x8xbf16>
    %cst_63 = arith.constant dense<0.000000e+00> : vector<128x8xf32>
    %129 = tpu.matmul %127, %128, %cst_63 {dimension_numbers = #tpu.dot_dimension_numbers<[1], [0], [0], [1], [0, 0, 1, 1], [], []>} : vector<128x128xbf16>, vector<128x8xbf16>, vector<128x8xf32> -> vector<128x8xf32>
    %130 = arith.addf %115, %129 : vector<128x8xf32>
    %c32_i32_64 = arith.constant 32 : i32
    %131 = vector.broadcast %c32_i32_64 : i32 to vector<256x8xi32>
    %132 = arith.muli %131, %83 : vector<256x8xi32>
    %c24_i32 = arith.constant 24 : i32
    %133 = vector.broadcast %c24_i32 : i32 to vector<256x8xi32>
    %134 = arith.addi %132, %133 : vector<256x8xi32>
    %135 = arith.cmpi eq, %82, %134 : vector<256x8xi32>
    %cst_65 = arith.constant 1.000000e+00 : f32
    %cst_66 = arith.constant 0.000000e+00 : f32
    %136 = vector.broadcast %cst_65 : f32 to vector<256x8xf32>
    %137 = vector.broadcast %cst_66 : f32 to vector<256x8xf32>
    %138 = arith.select %135, %136, %137 : vector<256x8xi1>, vector<256x8xf32>
    %139 = arith.truncf %138 : vector<256x8xf32> to vector<256x8xbf16>
    %cst_67 = arith.constant dense<0.000000e+00> : vector<128x8xf32>
    %140 = tpu.matmul %84, %139, %cst_67 {dimension_numbers = #tpu.dot_dimension_numbers<[1], [0], [0], [1], [0, 0, 1, 1], [], []>} : vector<128x256xbf16>, vector<256x8xbf16>, vector<128x8xf32> -> vector<128x8xf32>
    %c3 = arith.constant 3 : index
    %c0_68 = arith.constant 0 : index
    %c0_69 = arith.constant 0 : index
    %141 = vector.load %arg11[%c3, %c0_68, %c0_69] : memref<4x128x128xbf16, #tpu.memory_space<vmem>>, vector<1x128x128xbf16>
    %142 = vector.shape_cast %141 : vector<1x128x128xbf16> to vector<128x128xbf16>
    %143 = arith.truncf %140 : vector<128x8xf32> to vector<128x8xbf16>
    %cst_70 = arith.constant dense<0.000000e+00> : vector<128x8xf32>
    %144 = tpu.matmul %142, %143, %cst_70 {dimension_numbers = #tpu.dot_dimension_numbers<[1], [0], [0], [1], [0, 0, 1, 1], [], []>} : vector<128x128xbf16>, vector<128x8xbf16>, vector<128x8xf32> -> vector<128x8xf32>
    %145 = arith.addf %130, %144 : vector<128x8xf32>
    %c0_71 = arith.constant 0 : index
    %c0_72 = arith.constant 0 : index
    %146 = vector.load %arg12[%c0_71, %c0_72] : memref<128x1xf32, #tpu.memory_space<vmem>>, vector<128x1xf32>
    %147 = vector.broadcast %146 : vector<128x1xf32> to vector<128x8xf32>
    %148 = arith.addf %145, %147 : vector<128x8xf32>
    %cst_73 = arith.constant 0.000000e+00 : f32
    %149 = vector.broadcast %cst_73 : f32 to vector<128x8xf32>
    %150 = arith.maximumf %148, %149 : vector<128x8xf32>
    %c0_74 = arith.constant 0 : index
    %c0_75 = arith.constant 0 : index
    %c0_76 = arith.constant 0 : index
    %151 = vector.load %arg13[%c0_74, %c0_75, %c0_76] : memref<1x128x8xf32, #tpu.memory_space<vmem>>, vector<1x128x8xf32>
    %152 = vector.shape_cast %151 : vector<1x128x8xf32> to vector<128x8xf32>
    %153 = vector.shape_cast %150 : vector<128x8xf32> to vector<1x128x8xf32>
    tpu.vector_store %arg13[%c0_74, %c0_75, %c0_76], %153 {strides = array<i32>} : memref<1x128x8xf32, #tpu.memory_space<vmem>>, vector<1x128x8xf32>,
    return
  }
  func.func @transform_0(%arg0: i32) -> (i32, i32) {
    %c0_i32 = arith.constant 0 : i32
    %c0_i32_0 = arith.constant 0 : i32
    return %c0_i32, %arg0 : i32, i32
  }
  func.func @transform_1(%arg0: i32) -> (i32, i32) {
    %c0_i32 = arith.constant 0 : i32
    %c0_i32_0 = arith.constant 0 : i32
    %c0_i32_1 = arith.constant 0 : i32
    return %c0_i32, %c0_i32_0 : i32, i32
  }
  func.func @transform_2(%arg0: i32) -> (i32, i32) {
    %c0_i32 = arith.constant 0 : i32
    %c0_i32_0 = arith.constant 0 : i32
    %c0_i32_1 = arith.constant 0 : i32
    return %c0_i32, %c0_i32_0 : i32, i32
  }
  func.func @transform_3(%arg0: i32) -> (i32, i32) {
    %c0_i32 = arith.constant 0 : i32
    %c0_i32_0 = arith.constant 0 : i32
    %c0_i32_1 = arith.constant 0 : i32
    return %c0_i32, %c0_i32_0 : i32, i32
  }
  func.func @transform_4(%arg0: i32) -> (i32, i32) {
    %c0_i32 = arith.constant 0 : i32
    %c0_i32_0 = arith.constant 0 : i32
    %c0_i32_1 = arith.constant 0 : i32
    return %c0_i32, %c0_i32_0 : i32, i32
  }
  func.func @transform_5(%arg0: i32) -> (i32, i32) {
    %c0_i32 = arith.constant 0 : i32
    %c0_i32_0 = arith.constant 0 : i32
    %c0_i32_1 = arith.constant 0 : i32
    return %c0_i32, %c0_i32_0 : i32, i32
  }
  func.func @transform_6(%arg0: i32) -> (i32, i32) {
    %c0_i32 = arith.constant 0 : i32
    %c0_i32_0 = arith.constant 0 : i32
    %c0_i32_1 = arith.constant 0 : i32
    return %c0_i32, %c0_i32_0 : i32, i32
  }
  func.func @transform_7(%arg0: i32) -> (i32, i32) {
    %c0_i32 = arith.constant 0 : i32
    %c0_i32_0 = arith.constant 0 : i32
    %c0_i32_1 = arith.constant 0 : i32
    return %c0_i32, %c0_i32_0 : i32, i32
  }
  func.func @transform_8(%arg0: i32) -> (i32, i32) {
    %c0_i32 = arith.constant 0 : i32
    %c0_i32_0 = arith.constant 0 : i32
    %c0_i32_1 = arith.constant 0 : i32
    return %c0_i32, %c0_i32_0 : i32, i32
  }
  func.func @transform_9(%arg0: i32) -> (i32, i32) {
    %c0_i32 = arith.constant 0 : i32
    %c0_i32_0 = arith.constant 0 : i32
    %c0_i32_1 = arith.constant 0 : i32
    return %c0_i32, %c0_i32_0 : i32, i32
  }
  func.func @transform_10(%arg0: i32) -> (i32, i32, i32) {
    %c0_i32 = arith.constant 0 : i32
    %c0_i32_0 = arith.constant 0 : i32
    %c0_i32_1 = arith.constant 0 : i32
    %c0_i32_2 = arith.constant 0 : i32
    return %c0_i32, %c0_i32_0, %c0_i32_1 : i32, i32, i32
  }
  func.func @transform_11(%arg0: i32) -> (i32, i32) {
    %c0_i32 = arith.constant 0 : i32
    %c0_i32_0 = arith.constant 0 : i32
    %c0_i32_1 = arith.constant 0 : i32
    return %c0_i32, %c0_i32_0 : i32, i32
  }
  func.func @transform_12(%arg0: i32) -> (i32, i32, i32) {
    %c0_i32 = arith.constant 0 : i32
    %c0_i32_0 = arith.constant 0 : i32
    %c0_i32_1 = arith.constant 0 : i32
    return %arg0, %c0_i32, %c0_i32_0 : i32, i32, i32
  }
}

module attributes {stable_mosaic.version = 11 : i64} {
  func.func @_mkmmd_kernel(%arg0: memref<16x128xf32, #tpu.memory_space<vmem>>, %arg1: memref<3x16x1xf32, #tpu.memory_space<vmem>>, %arg2: memref<16x16xf32, #tpu.memory_space<vmem>>, %arg3: memref<1x3xf32, #tpu.memory_space<vmem>>) attributes {dimension_semantics = [], scalar_prefetch = 0 : i64, scratch_operands = 0 : i64, tpu.core_type = #tpu.core_type<tc>} {
    %c0 = arith.constant 0 : index
    %c0_0 = arith.constant 0 : index
    %0 = vector.load %arg0[%c0, %c0_0] : memref<16x128xf32, #tpu.memory_space<vmem>>, vector<16x128xf32>
    %c0_1 = arith.constant 0 : index
    %c0_2 = arith.constant 0 : index
    %1 = vector.load %arg2[%c0_1, %c0_2] : memref<16x16xf32, #tpu.memory_space<vmem>>, vector<16x16xf32>
    %2 = tpu.iota {dimensions = array<i32: 1>} : vector<1x3xi32>
    %cst = arith.constant 0.000000e+00 : f32
    %3 = vector.broadcast %cst : f32 to vector<1x3xf32>
    %c0_3 = arith.constant 0 : index
    %c0_4 = arith.constant 0 : index
    %c0_5 = arith.constant 0 : index
    %4 = vector.load %arg1[%c0_3, %c0_4, %c0_5] : memref<3x16x1xf32, #tpu.memory_space<vmem>>, vector<1x16x1xf32>
    %5 = vector.shape_cast %4 : vector<1x16x1xf32> to vector<16x1xf32>
    %6 = vector.broadcast %5 : vector<16x1xf32> to vector<16x128xf32>
    %7 = arith.mulf %0, %6 : vector<16x128xf32>
    %8 = tpu.transpose %7, [1, 0] : vector<16x128xf32> -> vector<128x16xf32>
    %cst_6 = arith.constant dense<0.000000e+00> : vector<16x16xf32>
    %9 = tpu.matmul %7, %8, %cst_6 {dimension_numbers = #tpu.dot_dimension_numbers<[1], [0], [0], [1], [0, 0, 1, 1], [], []>} : vector<16x128xf32>, vector<128x16xf32>, vector<16x16xf32> -> vector<16x16xf32>
    %10 = arith.mulf %7, %7 : vector<16x128xf32>
    %cst_7 = arith.constant dense<0.000000e+00> : vector<16xf32>
    %11 = vector.multi_reduction <add>, %10, %cst_7 [1] : vector<16x128xf32> to vector<16xf32>
    %12 = vector.shape_cast %11 : vector<16xf32> to vector<16x1xf32>
    %13 = tpu.transpose %12, [1, 0] : vector<16x1xf32> -> vector<1x16xf32>
    %14 = vector.broadcast %12 : vector<16x1xf32> to vector<16x16xf32>
    %15 = vector.broadcast %13 : vector<1x16xf32> to vector<16x16xf32>
    %16 = arith.addf %14, %15 : vector<16x16xf32>
    %cst_8 = arith.constant 2.000000e+00 : f32
    %17 = vector.broadcast %cst_8 : f32 to vector<16x16xf32>
    %18 = arith.mulf %17, %9 : vector<16x16xf32>
    %19 = arith.subf %16, %18 : vector<16x16xf32>
    %cst_9 = arith.constant 0.000000e+00 : f32
    %20 = vector.broadcast %cst_9 : f32 to vector<16x16xf32>
    %21 = arith.maximumf %19, %20 : vector<16x16xf32>
    %22 = vector.shape_cast %21 : vector<16x16xf32> to vector<1x16x16xf32>
    %cst_10 = arith.constant dense<0.000000e+00> : vector<1xf32>
    %23 = vector.multi_reduction <add>, %22, %cst_10 [1, 2] : vector<1x16x16xf32> to vector<1xf32>
    %24 = vector.shape_cast %23 : vector<1xf32> to vector<1x1x1xf32>
    %25 = vector.extract %24[0, 0, 0] : f32 from vector<1x1x1xf32>
    %cst_11 = arith.constant 3.906250e-03 : f32
    %26 = arith.mulf %25, %cst_11 : f32
    %cst_12 = arith.constant 4.000000e+00 : f32
    %27 = arith.mulf %cst_12, %26 : f32
    %cst_13 = arith.constant -1.000000e+00 : f32
    %28 = arith.divf %cst_13, %27 : f32
    %29 = vector.broadcast %28 : f32 to vector<16x16xf32>
    %30 = arith.mulf %21, %29 : vector<16x16xf32>
    %31 = math.exp %30 : vector<16x16xf32>
    %32 = arith.mulf %31, %31 : vector<16x16xf32>
    %33 = arith.mulf %32, %32 : vector<16x16xf32>
    %34 = arith.mulf %33, %33 : vector<16x16xf32>
    %35 = arith.mulf %34, %34 : vector<16x16xf32>
    %36 = arith.addf %31, %32 : vector<16x16xf32>
    %37 = arith.addf %36, %33 : vector<16x16xf32>
    %38 = arith.addf %37, %34 : vector<16x16xf32>
    %39 = arith.addf %38, %35 : vector<16x16xf32>
    %40 = arith.mulf %39, %1 : vector<16x16xf32>
    %41 = vector.shape_cast %40 : vector<16x16xf32> to vector<1x16x16xf32>
    %cst_14 = arith.constant dense<0.000000e+00> : vector<1xf32>
    %42 = vector.multi_reduction <add>, %41, %cst_14 [1, 2] : vector<1x16x16xf32> to vector<1xf32>
    %43 = vector.shape_cast %42 : vector<1xf32> to vector<1x1x1xf32>
    %44 = vector.extract %43[0, 0, 0] : f32 from vector<1x1x1xf32>
    %c0_i32 = arith.constant 0 : i32
    %45 = vector.broadcast %c0_i32 : i32 to vector<1x3xi32>
    %46 = arith.cmpi eq, %2, %45 : vector<1x3xi32>
    %cst_15 = arith.constant 0.000000e+00 : f32
    %47 = vector.broadcast %44 : f32 to vector<1x3xf32>
    %48 = vector.broadcast %cst_15 : f32 to vector<1x3xf32>
    %49 = arith.select %46, %47, %48 : vector<1x3xi1>, vector<1x3xf32>
    %50 = arith.addf %3, %49 : vector<1x3xf32>
    %c1 = arith.constant 1 : index
    %c0_16 = arith.constant 0 : index
    %c0_17 = arith.constant 0 : index
    %51 = vector.load %arg1[%c1, %c0_16, %c0_17] : memref<3x16x1xf32, #tpu.memory_space<vmem>>, vector<1x16x1xf32>
    %52 = vector.shape_cast %51 : vector<1x16x1xf32> to vector<16x1xf32>
    %53 = vector.broadcast %52 : vector<16x1xf32> to vector<16x128xf32>
    %54 = arith.mulf %0, %53 : vector<16x128xf32>
    %55 = tpu.transpose %54, [1, 0] : vector<16x128xf32> -> vector<128x16xf32>
    %cst_18 = arith.constant dense<0.000000e+00> : vector<16x16xf32>
    %56 = tpu.matmul %54, %55, %cst_18 {dimension_numbers = #tpu.dot_dimension_numbers<[1], [0], [0], [1], [0, 0, 1, 1], [], []>} : vector<16x128xf32>, vector<128x16xf32>, vector<16x16xf32> -> vector<16x16xf32>
    %57 = arith.mulf %54, %54 : vector<16x128xf32>
    %cst_19 = arith.constant dense<0.000000e+00> : vector<16xf32>
    %58 = vector.multi_reduction <add>, %57, %cst_19 [1] : vector<16x128xf32> to vector<16xf32>
    %59 = vector.shape_cast %58 : vector<16xf32> to vector<16x1xf32>
    %60 = tpu.transpose %59, [1, 0] : vector<16x1xf32> -> vector<1x16xf32>
    %61 = vector.broadcast %59 : vector<16x1xf32> to vector<16x16xf32>
    %62 = vector.broadcast %60 : vector<1x16xf32> to vector<16x16xf32>
    %63 = arith.addf %61, %62 : vector<16x16xf32>
    %cst_20 = arith.constant 2.000000e+00 : f32
    %64 = vector.broadcast %cst_20 : f32 to vector<16x16xf32>
    %65 = arith.mulf %64, %56 : vector<16x16xf32>
    %66 = arith.subf %63, %65 : vector<16x16xf32>
    %cst_21 = arith.constant 0.000000e+00 : f32
    %67 = vector.broadcast %cst_21 : f32 to vector<16x16xf32>
    %68 = arith.maximumf %66, %67 : vector<16x16xf32>
    %69 = vector.shape_cast %68 : vector<16x16xf32> to vector<1x16x16xf32>
    %cst_22 = arith.constant dense<0.000000e+00> : vector<1xf32>
    %70 = vector.multi_reduction <add>, %69, %cst_22 [1, 2] : vector<1x16x16xf32> to vector<1xf32>
    %71 = vector.shape_cast %70 : vector<1xf32> to vector<1x1x1xf32>
    %72 = vector.extract %71[0, 0, 0] : f32 from vector<1x1x1xf32>
    %cst_23 = arith.constant 3.906250e-03 : f32
    %73 = arith.mulf %72, %cst_23 : f32
    %cst_24 = arith.constant 4.000000e+00 : f32
    %74 = arith.mulf %cst_24, %73 : f32
    %cst_25 = arith.constant -1.000000e+00 : f32
    %75 = arith.divf %cst_25, %74 : f32
    %76 = vector.broadcast %75 : f32 to vector<16x16xf32>
    %77 = arith.mulf %68, %76 : vector<16x16xf32>
    %78 = math.exp %77 : vector<16x16xf32>
    %79 = arith.mulf %78, %78 : vector<16x16xf32>
    %80 = arith.mulf %79, %79 : vector<16x16xf32>
    %81 = arith.mulf %80, %80 : vector<16x16xf32>
    %82 = arith.mulf %81, %81 : vector<16x16xf32>
    %83 = arith.addf %78, %79 : vector<16x16xf32>
    %84 = arith.addf %83, %80 : vector<16x16xf32>
    %85 = arith.addf %84, %81 : vector<16x16xf32>
    %86 = arith.addf %85, %82 : vector<16x16xf32>
    %87 = arith.mulf %86, %1 : vector<16x16xf32>
    %88 = vector.shape_cast %87 : vector<16x16xf32> to vector<1x16x16xf32>
    %cst_26 = arith.constant dense<0.000000e+00> : vector<1xf32>
    %89 = vector.multi_reduction <add>, %88, %cst_26 [1, 2] : vector<1x16x16xf32> to vector<1xf32>
    %90 = vector.shape_cast %89 : vector<1xf32> to vector<1x1x1xf32>
    %91 = vector.extract %90[0, 0, 0] : f32 from vector<1x1x1xf32>
    %c1_i32 = arith.constant 1 : i32
    %92 = vector.broadcast %c1_i32 : i32 to vector<1x3xi32>
    %93 = arith.cmpi eq, %2, %92 : vector<1x3xi32>
    %cst_27 = arith.constant 0.000000e+00 : f32
    %94 = vector.broadcast %91 : f32 to vector<1x3xf32>
    %95 = vector.broadcast %cst_27 : f32 to vector<1x3xf32>
    %96 = arith.select %93, %94, %95 : vector<1x3xi1>, vector<1x3xf32>
    %97 = arith.addf %50, %96 : vector<1x3xf32>
    %c2 = arith.constant 2 : index
    %c0_28 = arith.constant 0 : index
    %c0_29 = arith.constant 0 : index
    %98 = vector.load %arg1[%c2, %c0_28, %c0_29] : memref<3x16x1xf32, #tpu.memory_space<vmem>>, vector<1x16x1xf32>
    %99 = vector.shape_cast %98 : vector<1x16x1xf32> to vector<16x1xf32>
    %100 = vector.broadcast %99 : vector<16x1xf32> to vector<16x128xf32>
    %101 = arith.mulf %0, %100 : vector<16x128xf32>
    %102 = tpu.transpose %101, [1, 0] : vector<16x128xf32> -> vector<128x16xf32>
    %cst_30 = arith.constant dense<0.000000e+00> : vector<16x16xf32>
    %103 = tpu.matmul %101, %102, %cst_30 {dimension_numbers = #tpu.dot_dimension_numbers<[1], [0], [0], [1], [0, 0, 1, 1], [], []>} : vector<16x128xf32>, vector<128x16xf32>, vector<16x16xf32> -> vector<16x16xf32>
    %104 = arith.mulf %101, %101 : vector<16x128xf32>
    %cst_31 = arith.constant dense<0.000000e+00> : vector<16xf32>
    %105 = vector.multi_reduction <add>, %104, %cst_31 [1] : vector<16x128xf32> to vector<16xf32>
    %106 = vector.shape_cast %105 : vector<16xf32> to vector<16x1xf32>
    %107 = tpu.transpose %106, [1, 0] : vector<16x1xf32> -> vector<1x16xf32>
    %108 = vector.broadcast %106 : vector<16x1xf32> to vector<16x16xf32>
    %109 = vector.broadcast %107 : vector<1x16xf32> to vector<16x16xf32>
    %110 = arith.addf %108, %109 : vector<16x16xf32>
    %cst_32 = arith.constant 2.000000e+00 : f32
    %111 = vector.broadcast %cst_32 : f32 to vector<16x16xf32>
    %112 = arith.mulf %111, %103 : vector<16x16xf32>
    %113 = arith.subf %110, %112 : vector<16x16xf32>
    %cst_33 = arith.constant 0.000000e+00 : f32
    %114 = vector.broadcast %cst_33 : f32 to vector<16x16xf32>
    %115 = arith.maximumf %113, %114 : vector<16x16xf32>
    %116 = vector.shape_cast %115 : vector<16x16xf32> to vector<1x16x16xf32>
    %cst_34 = arith.constant dense<0.000000e+00> : vector<1xf32>
    %117 = vector.multi_reduction <add>, %116, %cst_34 [1, 2] : vector<1x16x16xf32> to vector<1xf32>
    %118 = vector.shape_cast %117 : vector<1xf32> to vector<1x1x1xf32>
    %119 = vector.extract %118[0, 0, 0] : f32 from vector<1x1x1xf32>
    %cst_35 = arith.constant 3.906250e-03 : f32
    %120 = arith.mulf %119, %cst_35 : f32
    %cst_36 = arith.constant 4.000000e+00 : f32
    %121 = arith.mulf %cst_36, %120 : f32
    %cst_37 = arith.constant -1.000000e+00 : f32
    %122 = arith.divf %cst_37, %121 : f32
    %123 = vector.broadcast %122 : f32 to vector<16x16xf32>
    %124 = arith.mulf %115, %123 : vector<16x16xf32>
    %125 = math.exp %124 : vector<16x16xf32>
    %126 = arith.mulf %125, %125 : vector<16x16xf32>
    %127 = arith.mulf %126, %126 : vector<16x16xf32>
    %128 = arith.mulf %127, %127 : vector<16x16xf32>
    %129 = arith.mulf %128, %128 : vector<16x16xf32>
    %130 = arith.addf %125, %126 : vector<16x16xf32>
    %131 = arith.addf %130, %127 : vector<16x16xf32>
    %132 = arith.addf %131, %128 : vector<16x16xf32>
    %133 = arith.addf %132, %129 : vector<16x16xf32>
    %134 = arith.mulf %133, %1 : vector<16x16xf32>
    %135 = vector.shape_cast %134 : vector<16x16xf32> to vector<1x16x16xf32>
    %cst_38 = arith.constant dense<0.000000e+00> : vector<1xf32>
    %136 = vector.multi_reduction <add>, %135, %cst_38 [1, 2] : vector<1x16x16xf32> to vector<1xf32>
    %137 = vector.shape_cast %136 : vector<1xf32> to vector<1x1x1xf32>
    %138 = vector.extract %137[0, 0, 0] : f32 from vector<1x1x1xf32>
    %c2_i32 = arith.constant 2 : i32
    %139 = vector.broadcast %c2_i32 : i32 to vector<1x3xi32>
    %140 = arith.cmpi eq, %2, %139 : vector<1x3xi32>
    %cst_39 = arith.constant 0.000000e+00 : f32
    %141 = vector.broadcast %138 : f32 to vector<1x3xf32>
    %142 = vector.broadcast %cst_39 : f32 to vector<1x3xf32>
    %143 = arith.select %140, %141, %142 : vector<1x3xi1>, vector<1x3xf32>
    %144 = arith.addf %97, %143 : vector<1x3xf32>
    %c0_40 = arith.constant 0 : index
    %c0_41 = arith.constant 0 : index
    %145 = vector.load %arg3[%c0_40, %c0_41] : memref<1x3xf32, #tpu.memory_space<vmem>>, vector<1x3xf32>
    tpu.vector_store %arg3[%c0_40, %c0_41], %144 {strides = array<i32>} : memref<1x3xf32, #tpu.memory_space<vmem>>, vector<1x3xf32>,
    return
  }
}

</mosaic_0001>

<llo_original>
// kernel: mssa_forward.6
$region0: #{mssa_forward.6}
  #allocation0 [shape = 'u32[]', space=smem, size = 0x4, offset = 0x4, fixed_abs, tag = 'smem constant byte address 0x4 - core index']
  #allocation1 [shape = 'u32[144,128]{1,0:T(1,128)}', space=vmem, size = 0x12000, scoped, tag = 'internal scratch']
  %s0 = inlined_call_operand.vmem [shape: f32[8,128], index: 0, kind: input, shape index: {}]
  %s1 = inlined_call_operand.vmem [shape: f32[128,64], index: 1, kind: input, shape index: {}]
  %s2 = inlined_call_operand.vmem [shape: f32[1,64], index: 2, kind: input, shape index: {}]
  %s3 = inlined_call_operand.vmem [shape: f32[64,3], index: 3, kind: input, shape index: {}]
  %s4 = inlined_call_operand.vmem [shape: f32[1,3], index: 4, kind: input, shape index: {}]
  %s5 = inlined_call_operand.vmem [shape: f32[8,3], index: 5, kind: output, shape index: {}]
  %s6 = sld [smem:[#allocation0]]
  $region30: #{mssa_forward.6} parent=0
    _
  %s8 = ssub.s32 1, %s6
  %s9 = scalar_select 0, %s8, %s6
  // Predicated region
  $region2: #{mssa_forward.6} parent=0 // pred_check
    _
  $region3: #{mssa_forward.6} parent=0 // pred_check_branch
    %11 = sbr.rel (0) target = $region5
  $region4: #{mssa_forward.6} parent=0 // pred_region
    _
  $region5: #{mssa_forward.6} parent=0 // pred_fallthru
    _
  // Predicated region
  $region6: #{mssa_forward.6} parent=0 // pred_check
    _
  $region7: #{mssa_forward.6} parent=0 // pred_check_branch
    %13 = sbr.rel (0) target = $region9
  $region8: #{mssa_forward.6} parent=0 // pred_region
    _
  $region9: #{mssa_forward.6} parent=0 // pred_fallthru
    _
  // Predicated region
  $region10: #{mssa_forward.6} parent=0 // pred_check
    _
  $region11: #{mssa_forward.6} parent=0 // pred_check_branch
    %15 = sbr.rel (0) target = $region13
  $region12: #{mssa_forward.6} parent=0 // pred_region
    _
  $region13: #{mssa_forward.6} parent=0 // pred_fallthru
    _
  // Predicated region
  $region14: #{mssa_forward.6} parent=0 // pred_check
    _
  $region15: #{mssa_forward.6} parent=0 // pred_check_branch
    %17 = sbr.rel (0) target = $region17
  $region16: #{mssa_forward.6} parent=0 // pred_region
    _
  $region17: #{mssa_forward.6} parent=0 // pred_fallthru
    _
  // Predicated region
  $region18: #{mssa_forward.6} parent=0 // pred_check
    _
  $region19: #{mssa_forward.6} parent=0 // pred_check_branch
    %19 = sbr.rel (0) target = $region21
  $region20: #{mssa_forward.6} parent=0 // pred_region
    _
  $region21: #{mssa_forward.6} parent=0 // pred_fallthru
    _
  %v20 = vld [vmem:[%s0] sm:$0xff]
  %v21 = vld [vmem:[%s1] sm:$0xff]
  %v22 = vld [vmem:[%s1 + $0x8] sm:$0xff]
  %v23 = vld [vmem:[%s1 + $0x10] sm:$0xff]
  %v24 = vld [vmem:[%s1 + $0x18] sm:$0xff]
  %v25 = vld [vmem:[%s1 + $0x20] sm:$0xff]
  %v26 = vld [vmem:[%s1 + $0x28] sm:$0xff]
  %v27 = vld [vmem:[%s1 + $0x30] sm:$0xff]
  %v28 = vld [vmem:[%s1 + $0x38] sm:$0xff]
  %v29 = vld [vmem:[%s1 + $0x40] sm:$0xff]
  %v30 = vld [vmem:[%s1 + $0x48] sm:$0xff]
  %v31 = vld [vmem:[%s1 + $0x50] sm:$0xff]
  %v32 = vld [vmem:[%s1 + $0x58] sm:$0xff]
  %v33 = vld [vmem:[%s1 + $0x60] sm:$0xff]
  %v34 = vld [vmem:[%s1 + $0x68] sm:$0xff]
  %v35 = vld [vmem:[%s1 + $0x70] sm:$0xff]
  %v36 = vld [vmem:[%s1 + $0x78] sm:$0xff]
  %v37 = vld [vmem:[%s2] sm:$0x1]
  %v39 = vlaneseq
  %v40 = vshrl.u32 %v39, 7
  %v41 = vsub.s32 0, %v40
  %v42 = vrot.slane %v37, %v41
  %44 = vmatprep.subr.mxu0 0.0
  %45 = vmatpush1.msra.mxu0 %v21
  %46 = vmatprep.subr.mxu0 0.0
  %47 = vmatpush1.msra.mxu0 %v22
  %48 = vmatprep.subr.mxu0 0.0
  %49 = vmatpush1.msra.mxu0 %v23
  %50 = vmatprep.subr.mxu0 0.0
  %51 = vmatpush1.msra.mxu0 %v24
  %52 = vmatprep.subr.mxu0 0.0
  %53 = vmatpush1.msra.mxu0 %v25
  %54 = vmatprep.subr.mxu0 0.0
  %55 = vmatpush1.msra.mxu0 %v26
  %56 = vmatprep.subr.mxu0 0.0
  %57 = vmatpush1.msra.mxu0 %v27
  %58 = vmatprep.subr.mxu0 0.0
  %59 = vmatpush1.msra.mxu0 %v28
  %60 = vmatprep.subr.mxu0 0.0
  %61 = vmatpush1.msra.mxu0 %v29
  %62 = vmatprep.subr.mxu0 0.0
  %63 = vmatpush1.msra.mxu0 %v30
  %64 = vmatprep.subr.mxu0 0.0
  %65 = vmatpush1.msra.mxu0 %v31
  %66 = vmatprep.subr.mxu0 0.0
  %67 = vmatpush1.msra.mxu0 %v32
  %68 = vmatprep.subr.mxu0 0.0
  %69 = vmatpush1.msra.mxu0 %v33
  %70 = vmatprep.subr.mxu0 0.0
  %71 = vmatpush1.msra.mxu0 %v34
  %72 = vmatprep.subr.mxu0 0.0
  %73 = vmatpush1.msra.mxu0 %v35
  %74 = vmatprep.subr.mxu0 0.0
  %75 = vmatpush1.msra.mxu0 %v36
  %76 = vmatprep.subr.mxu0 0.0
  %77 = vmatpush1.msra.mxu0 0.0
  %78 = vmatprep.subr.mxu0 0.0
  %79 = vmatpush1.msra.mxu0 0.0
  %80 = vmatprep.subr.mxu0 0.0
  %81 = vmatpush1.msra.mxu0 0.0
  %82 = vmatprep.subr.mxu0 0.0
  %83 = vmatpush1.msra.mxu0 0.0
  %84 = vmatprep.subr.mxu0 0.0
  %85 = vmatpush1.msra.mxu0 0.0
  %86 = vmatprep.subr.mxu0 0.0
  %87 = vmatpush1.msra.mxu0 0.0
  %88 = vmatprep.subr.mxu0 0.0
  %89 = vmatpush1.msra.mxu0 0.0
  %90 = vmatprep.subr.mxu0 0.0
  %91 = vmatpush1.msra.mxu0 0.0
  %92 = vmatprep.subr.mxu0 0.0
  %93 = vmatpush1.msra.mxu0 0.0
  %94 = vmatprep.subr.mxu0 0.0
  %95 = vmatpush1.msra.mxu0 0.0
  %96 = vmatprep.subr.mxu0 0.0
  %97 = vmatpush1.msra.mxu0 0.0
  %98 = vmatprep.subr.mxu0 0.0
  %99 = vmatpush1.msra.mxu0 0.0
  %100 = vmatprep.subr.mxu0 0.0
  %101 = vmatpush1.msra.mxu0 0.0
  %102 = vmatprep.subr.mxu0 0.0
  %103 = vmatpush1.msra.mxu0 0.0
  %104 = vmatprep.subr.mxu0 0.0
  %105 = vmatpush1.msra.mxu0 0.0
  %106 = vmatprep.subr.mxu0 0.0
  %107 = vmatpush1.msra.mxu0 0.0
  %108 = vmatprep.mubr.f32.mxu0 0.0
  %109 = vmatmul.mubr.f32.gmra.mrb[0].mxu0 %v20
  %v110 = vpop.f32.mrb[0].mxu0
  %v111 = vadd.f32 %v42, %v110
  %v112 = vpop.f32.mrb[0].mxu0
  %113 = vdwg.mxu0
  %v114 = vmax.f32 %v111, 0.0
  %v115 = vld [vmem:[%s3] sm:$0xff]
  %v116 = vld [vmem:[%s3 + $0x8] sm:$0xff]
  %v117 = vld [vmem:[%s3 + $0x10] sm:$0xff]
  %v118 = vld [vmem:[%s3 + $0x18] sm:$0xff]
  %v119 = vld [vmem:[%s3 + $0x20] sm:$0xff]
  %v120 = vld [vmem:[%s3 + $0x28] sm:$0xff]
  %v121 = vld [vmem:[%s3 + $0x30] sm:$0xff]
  %v122 = vld [vmem:[%s3 + $0x38] sm:$0xff]
  %v123 = vld [vmem:[%s4] sm:$0x1]
  %v125 = vlaneseq
  %v126 = vshrl.u32 %v125, 7
  %v127 = vsub.s32 0, %v126
  %v128 = vrot.slane %v123, %v127
  %vm130 = vcmask 523264
  %v132 = vsel %vm130, %v114, 0
  %134 = vmatprep.subr.mxu0 0.0
  %135 = vmatpush1.msra.mxu0 %v115
  %136 = vmatprep.subr.mxu0 0.0
  %137 = vmatpush1.msra.mxu0 %v116
  %138 = vmatprep.subr.mxu0 0.0
  %139 = vmatpush1.msra.mxu0 %v117
  %140 = vmatprep.subr.mxu0 0.0
  %141 = vmatpush1.msra.mxu0 %v118
  %142 = vmatprep.subr.mxu0 0.0
  %143 = vmatpush1.msra.mxu0 %v119
  %144 = vmatprep.subr.mxu0 0.0
  %145 = vmatpush1.msra.mxu0 %v120
  %146 = vmatprep.subr.mxu0 0.0
  %147 = vmatpush1.msra.mxu0 %v121
  %148 = vmatprep.subr.mxu0 0.0
  %149 = vmatpush1.msra.mxu0 %v122
  %150 = vmatprep.subr.mxu0 0.0
  %151 = vmatpush1.msra.mxu0 0.0
  %152 = vmatprep.subr.mxu0 0.0
  %153 = vmatpush1.msra.mxu0 0.0
  %154 = vmatprep.subr.mxu0 0.0
  %155 = vmatpush1.msra.mxu0 0.0
  %156 = vmatprep.subr.mxu0 0.0
  %157 = vmatpush1.msra.mxu0 0.0
  %158 = vmatprep.subr.mxu0 0.0
  %159 = vmatpush1.msra.mxu0 0.0
  %160 = vmatprep.subr.mxu0 0.0
  %161 = vmatpush1.msra.mxu0 0.0
  %162 = vmatprep.subr.mxu0 0.0
  %163 = vmatpush1.msra.mxu0 0.0
  %164 = vmatprep.subr.mxu0 0.0
  %165 = vmatpush1.msra.mxu0 0.0
  %166 = vmatprep.subr.mxu0 0.0
  %167 = vmatpush1.msra.mxu0 0.0
  %168 = vmatprep.subr.mxu0 0.0
  %169 = vmatpush1.msra.mxu0 0.0
  %170 = vmatprep.subr.mxu0 0.0
  %171 = vmatpush1.msra.mxu0 0.0
  %172 = vmatprep.subr.mxu0 0.0
  %173 = vmatpush1.msra.mxu0 0.0
  %174 = vmatprep.subr.mxu0 0.0
  %175 = vmatpush1.msra.mxu0 0.0
  %176 = vmatprep.subr.mxu0 0.0
  %177 = vmatpush1.msra.mxu0 0.0
  %178 = vmatprep.subr.mxu0 0.0
  %179 = vmatpush1.msra.mxu0 0.0
  %180 = vmatprep.subr.mxu0 0.0
  %181 = vmatpush1.msra.mxu0 0.0
  %182 = vmatprep.subr.mxu0 0.0
  %183 = vmatpush1.msra.mxu0 0.0
  %184 = vmatprep.subr.mxu0 0.0
  %185 = vmatpush1.msra.mxu0 0.0
  %186 = vmatprep.subr.mxu0 0.0
  %187 = vmatpush1.msra.mxu0 0.0
  %188 = vmatprep.subr.mxu0 0.0
  %189 = vmatpush1.msra.mxu0 0.0
  %190 = vmatprep.subr.mxu0 0.0
  %191 = vmatpush1.msra.mxu0 0.0
  %192 = vmatprep.subr.mxu0 0.0
  %193 = vmatpush1.msra.mxu0 0.0
  %194 = vmatprep.subr.mxu0 0.0
  %195 = vmatpush1.msra.mxu0 0.0
  %196 = vmatprep.subr.mxu0 0.0
  %197 = vmatpush1.msra.mxu0 0.0
  %198 = vmatprep.mubr.f32.mxu0 0.0
  %199 = vmatmul.mubr.f32.gmra.mrb[0].mxu0 %v132
  %v200 = vpop.f32.mrb[0].mxu0
  %v201 = vadd.f32 %v128, %v200
  %v202 = vpop.f32.mrb[0].mxu0
  %203 = vdwg.mxu0
  %vm204 = vcmask 23552
  %v205 = vsel %vm204, %v201, -inf
  %206 = vmax.xlane.f32.xlu0 %v205
  %v207 = vpop.xlane.xlu0 %206
  %v208 = vsub.f32 %v201, %v207
  %v209 = vmul.f32 %v208, 1.442695
  %v210 = vpow.pop %v209
  %v211 = vsel %vm204, %v210, 0.0
  %212 = vadd.xlane.f32.xlu0 %v211
  %v213 = vpop.xlane.xlu0 %212
  %v214 = vrcp.pop %v213
  %v215 = vmul.f32 %v210, %v214
  %216 = vst.msk [vmem:[%s5] sm:$0xff] %vm204, %v215
  // Predicated region
  $region22: #{mssa_forward.6} parent=0 // pred_check
    _
  $region23: #{mssa_forward.6} parent=0 // pred_check_branch
    %218 = sbr.rel (0) target = $region25
  $region24: #{mssa_forward.6} parent=0 // pred_region
    _
  $region25: #{mssa_forward.6} parent=0 // pred_fallthru
    _
  // Predicated region
  $region26: #{mssa_forward.6} parent=0 // pred_check
    _
  $region27: #{mssa_forward.6} parent=0 // pred_check_branch
    %220 = sbr.rel (0) target = $region29
  $region28: #{mssa_forward.6} parent=0 // pred_region
    _
  $region29: #{mssa_forward.6} parent=0 // pred_fallthru
    _

// kernel: mssa_forward.7
$region0: #{mssa_forward.7}
  #allocation0 [shape = 'u32[]', space=smem, size = 0x4, offset = 0x4, fixed_abs, tag = 'smem constant byte address 0x4 - core index']
  #allocation1 [shape = 'u32[144,128]{1,0:T(1,128)}', space=vmem, size = 0x12000, scoped, tag = 'internal scratch']
  %s0 = inlined_call_operand.vmem [shape: f32[16,128], index: 0, kind: input, shape index: {}]
  %s1 = inlined_call_operand.vmem [shape: f32[3,16,1], index: 1, kind: input, shape index: {}]
  %s2 = inlined_call_operand.vmem [shape: f32[16,16], index: 2, kind: input, shape index: {}]
  %s3 = inlined_call_operand.vmem [shape: f32[1,3], index: 3, kind: output, shape index: {}]
  %s4 = sld [smem:[#allocation0]]
  $region22: #{mssa_forward.7} parent=0
    _
  %s6 = ssub.s32 1, %s4
  %s7 = scalar_select 0, %s6, %s4
  // Predicated region
  $region2: #{mssa_forward.7} parent=0 // pred_check
    _
  $region3: #{mssa_forward.7} parent=0 // pred_check_branch
    %9 = sbr.rel (0) target = $region5
  $region4: #{mssa_forward.7} parent=0 // pred_region
    _
  $region5: #{mssa_forward.7} parent=0 // pred_fallthru
    _
  // Predicated region
  $region6: #{mssa_forward.7} parent=0 // pred_check
    _
  $region7: #{mssa_forward.7} parent=0 // pred_check_branch
    %11 = sbr.rel (0) target = $region9
  $region8: #{mssa_forward.7} parent=0 // pred_region
    _
  $region9: #{mssa_forward.7} parent=0 // pred_fallthru
    _
  // Predicated region
  $region10: #{mssa_forward.7} parent=0 // pred_check
    _
  $region11: #{mssa_forward.7} parent=0 // pred_check_branch
    %13 = sbr.rel (0) target = $region13
  $region12: #{mssa_forward.7} parent=0 // pred_region
    _
  $region13: #{mssa_forward.7} parent=0 // pred_fallthru
    _
  %v14 = vld [vmem:[%s0] sm:$0xff]
  %v15 = vld [vmem:[%s0 + $0x8] sm:$0xff]
  %v16 = vld [vmem:[%s2] sm:$0xff]
  %v17 = vld [vmem:[%s2 + $0x8] sm:$0xff]
  %v18 = vlaneseq
  %v19 = vand.u32 %v18, 127
  %v20 = vld [vmem:[%s1] sm:$0xff]
  %v21 = vld [vmem:[%s1 + $0x8] sm:$0xff]
  %23 = vset.pattern.permute.xlu0 0
  %24 = vperm.xlu0 %23, %v20
  %v25 = vpop.permute.xlu0 %24
  %28 = vset.pattern.permute.xlu0 0
  %29 = vperm.xlu0 %28, %v21
  %v30 = vpop.permute.xlu0 %29
  %v32 = vmul.f32 %v14, %v25
  %v33 = vmul.f32 %v15, %v30
  %34 = vmatprep.subr.mxu0 0.0
  %35 = vmatpush1.xpose.msra.mxu0 %v32
  %36 = vmatprep.subr.mxu0 0.0
  %37 = vmatpush1.xpose.msra.mxu0 %v33
  %38 = vmatprep.subr.mxu0 0.0
  %39 = vmatpush1.xpose.msra.mxu0 0.0
  %40 = vmatprep.subr.mxu0 0.0
  %41 = vmatpush1.xpose.msra.mxu0 0.0
  %42 = vmatprep.subr.mxu0 0.0
  %43 = vmatpush1.xpose.msra.mxu0 0.0
  %44 = vmatprep.subr.mxu0 0.0
  %45 = vmatpush1.xpose.msra.mxu0 0.0
  %46 = vmatprep.subr.mxu0 0.0
  %47 = vmatpush1.xpose.msra.mxu0 0.0
  %48 = vmatprep.subr.mxu0 0.0
  %49 = vmatpush1.xpose.msra.mxu0 0.0
  %50 = vmatprep.subr.mxu0 0.0
  %51 = vmatpush1.xpose.msra.mxu0 0.0
  %52 = vmatprep.subr.mxu0 0.0
  %53 = vmatpush1.xpose.msra.mxu0 0.0
  %54 = vmatprep.subr.mxu0 0.0
  %55 = vmatpush1.xpose.msra.mxu0 0.0
  %56 = vmatprep.subr.mxu0 0.0
  %57 = vmatpush1.xpose.msra.mxu0 0.0
  %58 = vmatprep.subr.mxu0 0.0
  %59 = vmatpush1.xpose.msra.mxu0 0.0
  %60 = vmatprep.subr.mxu0 0.0
  %61 = vmatpush1.xpose.msra.mxu0 0.0
  %62 = vmatprep.subr.mxu0 0.0
  %63 = vmatpush1.xpose.msra.mxu0 0.0
  %64 = vmatprep.subr.mxu0 0.0
  %65 = vmatpush1.xpose.msra.mxu0 0.0
  %66 = vmatprep.subr.mxu0 0.0
  %67 = vmatpush1.xpose.msra.mxu0 0.0
  %68 = vmatprep.subr.mxu0 0.0
  %69 = vmatpush1.xpose.msra.mxu0 0.0
  %70 = vmatprep.subr.mxu0 0.0
  %71 = vmatpush1.xpose.msra.mxu0 0.0
  %72 = vmatprep.subr.mxu0 0.0
  %73 = vmatpush1.xpose.msra.mxu0 0.0
  %74 = vmatprep.subr.mxu0 0.0
  %75 = vmatpush1.xpose.msra.mxu0 0.0
  %76 = vmatprep.subr.mxu0 0.0
  %77 = vmatpush1.xpose.msra.mxu0 0.0
  %78 = vmatprep.subr.mxu0 0.0
  %79 = vmatpush1.xpose.msra.mxu0 0.0
  %80 = vmatprep.subr.mxu0 0.0
  %81 = vmatpush1.xpose.msra.mxu0 0.0
  %82 = vmatprep.subr.mxu0 0.0
  %83 = vmatpush1.xpose.msra.mxu0 0.0
  %84 = vmatprep.subr.mxu0 0.0
  %85 = vmatpush1.xpose.msra.mxu0 0.0
  %86 = vmatprep.subr.mxu0 0.0
  %87 = vmatpush1.xpose.msra.mxu0 0.0
  %88 = vmatprep.subr.mxu0 0.0
  %89 = vmatpush1.xpose.msra.mxu0 0.0
  %90 = vmatprep.subr.mxu0 0.0
  %91 = vmatpush1.xpose.msra.mxu0 0.0
  %92 = vmatprep.subr.mxu0 0.0
  %93 = vmatpush1.xpose.msra.mxu0 0.0
  %94 = vmatprep.subr.mxu0 0.0
  %95 = vmatpush1.xpose.msra.mxu0 0.0
  %96 = vmatprep.subr.mxu0 0.0
  %97 = vmatpush1.xpose.msra.mxu0 0.0
  %98 = vmatprep.mubr.f32.mxu0 0.0
  %99 = vmatmul.mubr.f32.gmra.mrb[0].mxu0 %v32
  %v100 = vpop.f32.mrb[0].mxu0
  %v101 = vadd.f32 0.0, %v100
  %v102 = vpop.f32.mrb[0].mxu0
  %103 = vmatprep.mubr.f32.mxu0 0.0
  %104 = vmatmul.mubr.f32.gmra.mrb[0].mxu0 %v33
  %v105 = vpop.f32.mrb[0].mxu0
  %v106 = vadd.f32 0.0, %v105
  %v107 = vpop.f32.mrb[0].mxu0
  %108 = vdwg.mxu0
  %v109 = vmul.f32 %v32, %v32
  %v110 = vmul.f32 %v33, %v33
  %111 = vadd.xlane.f32.xlu0 %v109
  %v112 = vpop.xlane.xlu0 %111
  %113 = vadd.xlane.f32.xlu0 %v110
  %v114 = vpop.xlane.xlu0 %113
  %115 = vxpose.xlu0.b32.start [1/16] %v112, 128
  %116 = vxpose.xlu0.b32.cont [2/16] %v114, 128
  %117 = vxpose.xlu0.b32.cont [3/16] 0.0, 128
  %118 = vxpose.xlu0.b32.cont [4/16] 0.0, 128
  %119 = vxpose.xlu0.b32.cont [5/16] 0.0, 128
  %120 = vxpose.xlu0.b32.cont [6/16] 0.0, 128
  %121 = vxpose.xlu0.b32.cont [7/16] 0.0, 128
  %122 = vxpose.xlu0.b32.cont [8/16] 0.0, 128
  %123 = vxpose.xlu0.b32.cont [9/16] 0.0, 128
  %124 = vxpose.xlu0.b32.cont [10/16] 0.0, 128
  %125 = vxpose.xlu0.b32.cont [11/16] 0.0, 128
  %126 = vxpose.xlu0.b32.cont [12/16] 0.0, 128
  %127 = vxpose.xlu0.b32.cont [13/16] 0.0, 128
  %128 = vxpose.xlu0.b32.cont [14/16] 0.0, 128
  %129 = vxpose.xlu0.b32.cont [15/16] 0.0, 128
  %130 = vxpose.xlu0.b32.end [16/16] 0.0, 128
  %v131 = vpop.trf.xlu0
  %v132 = vpop.trf.xlu0
  %v133 = vpop.trf.xlu0
  %v134 = vpop.trf.xlu0
  %v135 = vpop.trf.xlu0
  %v136 = vpop.trf.xlu0
  %v137 = vpop.trf.xlu0
  %v138 = vpop.trf.xlu0
  %v139 = vpop.trf.xlu0
  %v140 = vpop.trf.xlu0
  %v141 = vpop.trf.xlu0
  %v142 = vpop.trf.xlu0
  %v143 = vpop.trf.xlu0
  %v144 = vpop.trf.xlu0
  %v145 = vpop.trf.xlu0
  %v146 = vpop.trf.xlu0
  %v147 = vlaneseq
  %v148 = vshrl.u32 %v147, 7
  %v149 = vsub.s32 0, %v148
  %v150 = vrot.slane %v131, %v149
  %v151 = vadd.f32 %v112, %v150
  %v152 = vadd.f32 %v114, %v150
  %v153 = vmul.f32 %v101, 2.0
  %v154 = vmul.f32 %v106, 2.0
  %v155 = vsub.f32 %v151, %v153
  %v156 = vsub.f32 %v152, %v154
  %v157 = vmax.f32 %v155, 0.0
  %v158 = vmax.f32 %v156, 0.0
  %vm159 = vcmask 130048
  %v160 = vsel %vm159, %v157, 0.0
  %v161 = vsel %vm159, %v158, 0.0
  %v162 = vadd.f32 %v160, %v161
  %163 = vadd.xlane.f32.xlu0 %v162
  %v164 = vpop.xlane.xlu0 %163
  %v165 = vrot.slane %v164, 4
  %v166 = vadd.f32 %v164, %v165
  %v167 = vrot.slane %v166, 2
  %v168 = vadd.f32 %v166, %v167
  %v169 = vrot.slane %v168, 1
  %v170 = vadd.f32 %v168, %v169
  %s171 = vtos %v170
  %s172 = smul.f32 %s171, 0.00390625
  %s173 = smul.f32 %s172, 4.0
  %v174 = vstv %s173
  %v175 = vrcp.pop %v174
  %s176 = vtos %v175
  %s177 = smul.f32 -1.0, %s176
  %v178 = vstv %s177
  %v179 = vmul.f32 %v157, %v178
  %v180 = vmul.f32 %v158, %v178
  %v181 = vmul.f32 %v179, 1.442695
  %v182 = vpow.pop %v181
  %v183 = vmul.f32 %v180, 1.442695
  %v184 = vpow.pop %v183
  %v185 = vmul.f32 %v182, %v182
  %v186 = vmul.f32 %v184, %v184
  %v187 = vmul.f32 %v185, %v185
  %v188 = vmul.f32 %v186, %v186
  %v189 = vmul.f32 %v187, %v187
  %v190 = vmul.f32 %v188, %v188
  %v191 = vmul.f32 %v189, %v189
  %v192 = vmul.f32 %v190, %v190
  %v193 = vadd.f32 %v182, %v185
  %v194 = vadd.f32 %v184, %v186
  %v195 = vadd.f32 %v193, %v187
  %v196 = vadd.f32 %v194, %v188
  %v197 = vadd.f32 %v195, %v189
  %v198 = vadd.f32 %v196, %v190
  %v199 = vadd.f32 %v197, %v191
  %v200 = vadd.f32 %v198, %v192
  %v201 = vmul.f32 %v199, %v16
  %v202 = vmul.f32 %v200, %v17
  %v203 = vsel %vm159, %v201, 0.0
  %v204 = vsel %vm159, %v202, 0.0
  %v205 = vadd.f32 %v203, %v204
  %206 = vadd.xlane.f32.xlu0 %v205
  %v207 = vpop.xlane.xlu0 %206
  %v208 = vrot.slane %v207, 4
  %v209 = vadd.f32 %v207, %v208
  %v210 = vrot.slane %v209, 2
  %v211 = vadd.f32 %v209, %v210
  %v212 = vrot.slane %v211, 1
  %v213 = vadd.f32 %v211, %v212
  %s214 = vtos %v213
  %vm215 = vcmp.eq.s32.totalorder %v19, 0
  %v216 = vstv %s214
  %v217 = vsel %vm215, %v216, 0.0
  %v218 = vadd.f32 %v217, 0.0
  %s219 = scalar_lea.vmem %s1, 16
  %v220 = vld [vmem:[%s219] sm:$0xff]
  %v221 = vld [vmem:[%s219 + $0x8] sm:$0xff]
  %223 = vset.pattern.permute.xlu0 0
  %224 = vperm.xlu0 %223, %v220
  %v225 = vpop.permute.xlu0 %224
  %228 = vset.pattern.permute.xlu0 0
  %229 = vperm.xlu0 %228, %v221
  %v230 = vpop.permute.xlu0 %229
  %v232 = vmul.f32 %v14, %v225
  %v233 = vmul.f32 %v15, %v230
  %234 = vmatprep.subr.mxu0 0.0
  %235 = vmatpush1.xpose.msra.mxu0 %v232
  %236 = vmatprep.subr.mxu0 0.0
  %237 = vmatpush1.xpose.msra.mxu0 %v233
  %238 = vmatprep.subr.mxu0 0.0
  %239 = vmatpush1.xpose.msra.mxu0 0.0
  %240 = vmatprep.subr.mxu0 0.0
  %241 = vmatpush1.xpose.msra.mxu0 0.0
  %242 = vmatprep.subr.mxu0 0.0
  %243 = vmatpush1.xpose.msra.mxu0 0.0
  %244 = vmatprep.subr.mxu0 0.0
  %245 = vmatpush1.xpose.msra.mxu0 0.0
  %246 = vmatprep.subr.mxu0 0.0
  %247 = vmatpush1.xpose.msra.mxu0 0.0
  %248 = vmatprep.subr.mxu0 0.0
  %249 = vmatpush1.xpose.msra.mxu0 0.0
  %250 = vmatprep.subr.mxu0 0.0
  %251 = vmatpush1.xpose.msra.mxu0 0.0
  %252 = vmatprep.subr.mxu0 0.0
  %253 = vmatpush1.xpose.msra.mxu0 0.0
  %254 = vmatprep.subr.mxu0 0.0
  %255 = vmatpush1.xpose.msra.mxu0 0.0
  %256 = vmatprep.subr.mxu0 0.0
  %257 = vmatpush1.xpose.msra.mxu0 0.0
  %258 = vmatprep.subr.mxu0 0.0
  %259 = vmatpush1.xpose.msra.mxu0 0.0
  %260 = vmatprep.subr.mxu0 0.0
  %261 = vmatpush1.xpose.msra.mxu0 0.0
  %262 = vmatprep.subr.mxu0 0.0
  %263 = vmatpush1.xpose.msra.mxu0 0.0
  %264 = vmatprep.subr.mxu0 0.0
  %265 = vmatpush1.xpose.msra.mxu0 0.0
  %266 = vmatprep.subr.mxu0 0.0
  %267 = vmatpush1.xpose.msra.mxu0 0.0
  %268 = vmatprep.subr.mxu0 0.0
  %269 = vmatpush1.xpose.msra.mxu0 0.0
  %270 = vmatprep.subr.mxu0 0.0
  %271 = vmatpush1.xpose.msra.mxu0 0.0
  %272 = vmatprep.subr.mxu0 0.0
  %273 = vmatpush1.xpose.msra.mxu0 0.0
  %274 = vmatprep.subr.mxu0 0.0
  %275 = vmatpush1.xpose.msra.mxu0 0.0
  %276 = vmatprep.subr.mxu0 0.0
  %277 = vmatpush1.xpose.msra.mxu0 0.0
  %278 = vmatprep.subr.mxu0 0.0
  %279 = vmatpush1.xpose.msra.mxu0 0.0
  %280 = vmatprep.subr.mxu0 0.0
  %281 = vmatpush1.xpose.msra.mxu0 0.0
  %282 = vmatprep.subr.mxu0 0.0
  %283 = vmatpush1.xpose.msra.mxu0 0.0
  %284 = vmatprep.subr.mxu0 0.0
  %285 = vmatpush1.xpose.msra.mxu0 0.0
  %286 = vmatprep.subr.mxu0 0.0
  %287 = vmatpush1.xpose.msra.mxu0 0.0
  %288 = vmatprep.subr.mxu0 0.0
  %289 = vmatpush1.xpose.msra.mxu0 0.0
  %290 = vmatprep.subr.mxu0 0.0
  %291 = vmatpush1.xpose.msra.mxu0 0.0
  %292 = vmatprep.subr.mxu0 0.0
  %293 = vmatpush1.xpose.msra.mxu0 0.0
  %294 = vmatprep.subr.mxu0 0.0
  %295 = vmatpush1.xpose.msra.mxu0 0.0
  %296 = vmatprep.subr.mxu0 0.0
  %297 = vmatpush1.xpose.msra.mxu0 0.0
  %298 = vmatprep.mubr.f32.mxu0 0.0
  %299 = vmatmul.mubr.f32.gmra.mrb[0].mxu0 %v232
  %v300 = vpop.f32.mrb[0].mxu0
  %v301 = vadd.f32 0.0, %v300
  %v302 = vpop.f32.mrb[0].mxu0
  %303 = vmatprep.mubr.f32.mxu0 0.0
  %304 = vmatmul.mubr.f32.gmra.mrb[0].mxu0 %v233
  %v305 = vpop.f32.mrb[0].mxu0
  %v306 = vadd.f32 0.0, %v305
  %v307 = vpop.f32.mrb[0].mxu0
  %308 = vdwg.mxu0
  %v309 = vmul.f32 %v232, %v232
  %v310 = vmul.f32 %v233, %v233
  %311 = vadd.xlane.f32.xlu0 %v309
  %v312 = vpop.xlane.xlu0 %311
  %313 = vadd.xlane.f32.xlu0 %v310
  %v314 = vpop.xlane.xlu0 %313
  %315 = vxpose.xlu0.b32.start [1/16] %v312, 128
  %316 = vxpose.xlu0.b32.cont [2/16] %v314, 128
  %317 = vxpose.xlu0.b32.cont [3/16] 0.0, 128
  %318 = vxpose.xlu0.b32.cont [4/16] 0.0, 128
  %319 = vxpose.xlu0.b32.cont [5/16] 0.0, 128
  %320 = vxpose.xlu0.b32.cont [6/16] 0.0, 128
  %321 = vxpose.xlu0.b32.cont [7/16] 0.0, 128
  %322 = vxpose.xlu0.b32.cont [8/16] 0.0, 128
  %323 = vxpose.xlu0.b32.cont [9/16] 0.0, 128
  %324 = vxpose.xlu0.b32.cont [10/16] 0.0, 128
  %325 = vxpose.xlu0.b32.cont [11/16] 0.0, 128
  %326 = vxpose.xlu0.b32.cont [12/16] 0.0, 128
  %327 = vxpose.xlu0.b32.cont [13/16] 0.0, 128
  %328 = vxpose.xlu0.b32.cont [14/16] 0.0, 128
  %329 = vxpose.xlu0.b32.cont [15/16] 0.0, 128
  %330 = vxpose.xlu0.b32.end [16/16] 0.0, 128
  %v331 = vpop.trf.xlu0
  %v332 = vpop.trf.xlu0
  %v333 = vpop.trf.xlu0
  %v334 = vpop.trf.xlu0
  %v335 = vpop.trf.xlu0
  %v336 = vpop.trf.xlu0
  %v337 = vpop.trf.xlu0
  %v338 = vpop.trf.xlu0
  %v339 = vpop.trf.xlu0
  %v340 = vpop.trf.xlu0
  %v341 = vpop.trf.xlu0
  %v342 = vpop.trf.xlu0
  %v343 = vpop.trf.xlu0
  %v344 = vpop.trf.xlu0
  %v345 = vpop.trf.xlu0
  %v346 = vpop.trf.xlu0
  %v347 = vlaneseq
  %v348 = vshrl.u32 %v347, 7
  %v349 = vsub.s32 0, %v348
  %v350 = vrot.slane %v331, %v349
  %v351 = vadd.f32 %v312, %v350
  %v352 = vadd.f32 %v314, %v350
  %v353 = vmul.f32 %v301, 2.0
  %v354 = vmul.f32 %v306, 2.0
  %v355 = vsub.f32 %v351, %v353
  %v356 = vsub.f32 %v352, %v354
  %v357 = vmax.f32 %v355, 0.0
  %v358 = vmax.f32 %v356, 0.0
  %v359 = vsel %vm159, %v357, 0.0
  %v360 = vsel %vm159, %v358, 0.0
  %v361 = vadd.f32 %v359, %v360
  %362 = vadd.xlane.f32.xlu0 %v361
  %v363 = vpop.xlane.xlu0 %362
  %v364 = vrot.slane %v363, 4
  %v365 = vadd.f32 %v363, %v364
  %v366 = vrot.slane %v365, 2
  %v367 = vadd.f32 %v365, %v366
  %v368 = vrot.slane %v367, 1
  %v369 = vadd.f32 %v367, %v368
  %s370 = vtos %v369
  %s371 = smul.f32 %s370, 0.00390625
  %s372 = smul.f32 %s371, 4.0
  %v373 = vstv %s372
  %v374 = vrcp.pop %v373
  %s375 = vtos %v374
  %s376 = smul.f32 -1.0, %s375
  %v377 = vstv %s376
  %v378 = vmul.f32 %v357, %v377
  %v379 = vmul.f32 %v358, %v377
  %v380 = vmul.f32 %v378, 1.442695
  %v381 = vpow.pop %v380
  %v382 = vmul.f32 %v379, 1.442695
  %v383 = vpow.pop %v382
  %v384 = vmul.f32 %v381, %v381
  %v385 = vmul.f32 %v383, %v383
  %v386 = vmul.f32 %v384, %v384
  %v387 = vmul.f32 %v385, %v385
  %v388 = vmul.f32 %v386, %v386
  %v389 = vmul.f32 %v387, %v387
  %v390 = vmul.f32 %v388, %v388
  %v391 = vmul.f32 %v389, %v389
  %v392 = vadd.f32 %v381, %v384
  %v393 = vadd.f32 %v383, %v385
  %v394 = vadd.f32 %v392, %v386
  %v395 = vadd.f32 %v393, %v387
  %v396 = vadd.f32 %v394, %v388
  %v397 = vadd.f32 %v395, %v389
  %v398 = vadd.f32 %v396, %v390
  %v399 = vadd.f32 %v397, %v391
  %v400 = vmul.f32 %v398, %v16
  %v401 = vmul.f32 %v399, %v17
  %v402 = vsel %vm159, %v400, 0.0
  %v403 = vsel %vm159, %v401, 0.0
  %v404 = vadd.f32 %v402, %v403
  %405 = vadd.xlane.f32.xlu0 %v404
  %v406 = vpop.xlane.xlu0 %405
  %v407 = vrot.slane %v406, 4
  %v408 = vadd.f32 %v406, %v407
  %v409 = vrot.slane %v408, 2
  %v410 = vadd.f32 %v408, %v409
  %v411 = vrot.slane %v410, 1
  %v412 = vadd.f32 %v410, %v411
  %s413 = vtos %v412
  %vm414 = vcmp.eq.s32.totalorder %v19, 1
  %v415 = vstv %s413
  %v416 = vsel %vm414, %v415, 0.0
  %v417 = vadd.f32 %v218, %v416
  %s418 = scalar_lea.vmem %s1, 32
  %v419 = vld [vmem:[%s418] sm:$0xff]
  %v420 = vld [vmem:[%s418 + $0x8] sm:$0xff]
  %422 = vset.pattern.permute.xlu0 0
  %423 = vperm.xlu0 %422, %v419
  %v424 = vpop.permute.xlu0 %423
  %427 = vset.pattern.permute.xlu0 0
  %428 = vperm.xlu0 %427, %v420
  %v429 = vpop.permute.xlu0 %428
  %v431 = vmul.f32 %v14, %v424
  %v432 = vmul.f32 %v15, %v429
  %433 = vmatprep.subr.mxu0 0.0
  %434 = vmatpush1.xpose.msra.mxu0 %v431
  %435 = vmatprep.subr.mxu0 0.0
  %436 = vmatpush1.xpose.msra.mxu0 %v432
  %437 = vmatprep.subr.mxu0 0.0
  %438 = vmatpush1.xpose.msra.mxu0 0.0
  %439 = vmatprep.subr.mxu0 0.0
  %440 = vmatpush1.xpose.msra.mxu0 0.0
  %441 = vmatprep.subr.mxu0 0.0
  %442 = vmatpush1.xpose.msra.mxu0 0.0
  %443 = vmatprep.subr.mxu0 0.0
  %444 = vmatpush1.xpose.msra.mxu0 0.0
  %445 = vmatprep.subr.mxu0 0.0
  %446 = vmatpush1.xpose.msra.mxu0 0.0
  %447 = vmatprep.subr.mxu0 0.0
  %448 = vmatpush1.xpose.msra.mxu0 0.0
  %449 = vmatprep.subr.mxu0 0.0
  %450 = vmatpush1.xpose.msra.mxu0 0.0
  %451 = vmatprep.subr.mxu0 0.0
  %452 = vmatpush1.xpose.msra.mxu0 0.0
  %453 = vmatprep.subr.mxu0 0.0
  %454 = vmatpush1.xpose.msra.mxu0 0.0
  %455 = vmatprep.subr.mxu0 0.0
  %456 = vmatpush1.xpose.msra.mxu0 0.0
  %457 = vmatprep.subr.mxu0 0.0
  %458 = vmatpush1.xpose.msra.mxu0 0.0
  %459 = vmatprep.subr.mxu0 0.0
  %460 = vmatpush1.xpose.msra.mxu0 0.0
  %461 = vmatprep.subr.mxu0 0.0
  %462 = vmatpush1.xpose.msra.mxu0 0.0
  %463 = vmatprep.subr.mxu0 0.0
  %464 = vmatpush1.xpose.msra.mxu0 0.0
  %465 = vmatprep.subr.mxu0 0.0
  %466 = vmatpush1.xpose.msra.mxu0 0.0
  %467 = vmatprep.subr.mxu0 0.0
  %468 = vmatpush1.xpose.msra.mxu0 0.0
  %469 = vmatprep.subr.mxu0 0.0
  %470 = vmatpush1.xpose.msra.mxu0 0.0
  %471 = vmatprep.subr.mxu0 0.0
  %472 = vmatpush1.xpose.msra.mxu0 0.0
  %473 = vmatprep.subr.mxu0 0.0
  %474 = vmatpush1.xpose.msra.mxu0 0.0
  %475 = vmatprep.subr.mxu0 0.0
  %476 = vmatpush1.xpose.msra.mxu0 0.0
  %477 = vmatprep.subr.mxu0 0.0
  %478 = vmatpush1.xpose.msra.mxu0 0.0
  %479 = vmatprep.subr.mxu0 0.0
  %480 = vmatpush1.xpose.msra.mxu0 0.0
  %481 = vmatprep.subr.mxu0 0.0
  %482 = vmatpush1.xpose.msra.mxu0 0.0
  %483 = vmatprep.subr.mxu0 0.0
  %484 = vmatpush1.xpose.msra.mxu0 0.0
  %485 = vmatprep.subr.mxu0 0.0
  %486 = vmatpush1.xpose.msra.mxu0 0.0
  %487 = vmatprep.subr.mxu0 0.0
  %488 = vmatpush1.xpose.msra.mxu0 0.0
  %489 = vmatprep.subr.mxu0 0.0
  %490 = vmatpush1.xpose.msra.mxu0 0.0
  %491 = vmatprep.subr.mxu0 0.0
  %492 = vmatpush1.xpose.msra.mxu0 0.0
  %493 = vmatprep.subr.mxu0 0.0
  %494 = vmatpush1.xpose.msra.mxu0 0.0
  %495 = vmatprep.subr.mxu0 0.0
  %496 = vmatpush1.xpose.msra.mxu0 0.0
  %497 = vmatprep.mubr.f32.mxu0 0.0
  %498 = vmatmul.mubr.f32.gmra.mrb[0].mxu0 %v431
  %v499 = vpop.f32.mrb[0].mxu0
  %v500 = vadd.f32 0.0, %v499
  %v501 = vpop.f32.mrb[0].mxu0
  %502 = vmatprep.mubr.f32.mxu0 0.0
  %503 = vmatmul.mubr.f32.gmra.mrb[0].mxu0 %v432
  %v504 = vpop.f32.mrb[0].mxu0
  %v505 = vadd.f32 0.0, %v504
  %v506 = vpop.f32.mrb[0].mxu0
  %507 = vdwg.mxu0
  %v508 = vmul.f32 %v431, %v431
  %v509 = vmul.f32 %v432, %v432
  %510 = vadd.xlane.f32.xlu0 %v508
  %v511 = vpop.xlane.xlu0 %510
  %512 = vadd.xlane.f32.xlu0 %v509
  %v513 = vpop.xlane.xlu0 %512
  %514 = vxpose.xlu0.b32.start [1/16] %v511, 128
  %515 = vxpose.xlu0.b32.cont [2/16] %v513, 128
  %516 = vxpose.xlu0.b32.cont [3/16] 0.0, 128
  %517 = vxpose.xlu0.b32.cont [4/16] 0.0, 128
  %518 = vxpose.xlu0.b32.cont [5/16] 0.0, 128
  %519 = vxpose.xlu0.b32.cont [6/16] 0.0, 128
  %520 = vxpose.xlu0.b32.cont [7/16] 0.0, 128
  %521 = vxpose.xlu0.b32.cont [8/16] 0.0, 128
  %522 = vxpose.xlu0.b32.cont [9/16] 0.0, 128
  %523 = vxpose.xlu0.b32.cont [10/16] 0.0, 128
  %524 = vxpose.xlu0.b32.cont [11/16] 0.0, 128
  %525 = vxpose.xlu0.b32.cont [12/16] 0.0, 128
  %526 = vxpose.xlu0.b32.cont [13/16] 0.0, 128
  %527 = vxpose.xlu0.b32.cont [14/16] 0.0, 128
  %528 = vxpose.xlu0.b32.cont [15/16] 0.0, 128
  %529 = vxpose.xlu0.b32.end [16/16] 0.0, 128
  %v530 = vpop.trf.xlu0
  %v531 = vpop.trf.xlu0
  %v532 = vpop.trf.xlu0
  %v533 = vpop.trf.xlu0
  %v534 = vpop.trf.xlu0
  %v535 = vpop.trf.xlu0
  %v536 = vpop.trf.xlu0
  %v537 = vpop.trf.xlu0
  %v538 = vpop.trf.xlu0
  %v539 = vpop.trf.xlu0
  %v540 = vpop.trf.xlu0
  %v541 = vpop.trf.xlu0
  %v542 = vpop.trf.xlu0
  %v543 = vpop.trf.xlu0
  %v544 = vpop.trf.xlu0
  %v545 = vpop.trf.xlu0
  %v546 = vlaneseq
  %v547 = vshrl.u32 %v546, 7
  %v548 = vsub.s32 0, %v547
  %v549 = vrot.slane %v530, %v548
  %v550 = vadd.f32 %v511, %v549
  %v551 = vadd.f32 %v513, %v549
  %v552 = vmul.f32 %v500, 2.0
  %v553 = vmul.f32 %v505, 2.0
  %v554 = vsub.f32 %v550, %v552
  %v555 = vsub.f32 %v551, %v553
  %v556 = vmax.f32 %v554, 0.0
  %v557 = vmax.f32 %v555, 0.0
  %v558 = vsel %vm159, %v556, 0.0
  %v559 = vsel %vm159, %v557, 0.0
  %v560 = vadd.f32 %v558, %v559
  %561 = vadd.xlane.f32.xlu0 %v560
  %v562 = vpop.xlane.xlu0 %561
  %v563 = vrot.slane %v562, 4
  %v564 = vadd.f32 %v562, %v563
  %v565 = vrot.slane %v564, 2
  %v566 = vadd.f32 %v564, %v565
  %v567 = vrot.slane %v566, 1
  %v568 = vadd.f32 %v566, %v567
  %s569 = vtos %v568
  %s570 = smul.f32 %s569, 0.00390625
  %s571 = smul.f32 %s570, 4.0
  %v572 = vstv %s571
  %v573 = vrcp.pop %v572
  %s574 = vtos %v573
  %s575 = smul.f32 -1.0, %s574
  %v576 = vstv %s575
  %v577 = vmul.f32 %v556, %v576
  %v578 = vmul.f32 %v557, %v576
  %v579 = vmul.f32 %v577, 1.442695
  %v580 = vpow.pop %v579
  %v581 = vmul.f32 %v578, 1.442695
  %v582 = vpow.pop %v581
  %v583 = vmul.f32 %v580, %v580
  %v584 = vmul.f32 %v582, %v582
  %v585 = vmul.f32 %v583, %v583
  %v586 = vmul.f32 %v584, %v584
  %v587 = vmul.f32 %v585, %v585
  %v588 = vmul.f32 %v586, %v586
  %v589 = vmul.f32 %v587, %v587
  %v590 = vmul.f32 %v588, %v588
  %v591 = vadd.f32 %v580, %v583
  %v592 = vadd.f32 %v582, %v584
  %v593 = vadd.f32 %v591, %v585
  %v594 = vadd.f32 %v592, %v586
  %v595 = vadd.f32 %v593, %v587
  %v596 = vadd.f32 %v594, %v588
  %v597 = vadd.f32 %v595, %v589
  %v598 = vadd.f32 %v596, %v590
  %v599 = vmul.f32 %v597, %v16
  %v600 = vmul.f32 %v598, %v17
  %v601 = vsel %vm159, %v599, 0.0
  %v602 = vsel %vm159, %v600, 0.0
  %v603 = vadd.f32 %v601, %v602
  %604 = vadd.xlane.f32.xlu0 %v603
  %v605 = vpop.xlane.xlu0 %604
  %v606 = vrot.slane %v605, 4
  %v607 = vadd.f32 %v605, %v606
  %v608 = vrot.slane %v607, 2
  %v609 = vadd.f32 %v607, %v608
  %v610 = vrot.slane %v609, 1
  %v611 = vadd.f32 %v609, %v610
  %s612 = vtos %v611
  %vm613 = vcmp.eq.s32.totalorder %v19, 2
  %v614 = vstv %s612
  %v615 = vsel %vm613, %v614, 0.0
  %v616 = vadd.f32 %v417, %v615
  %vm617 = vcmask 16384
  %618 = vst.msk [vmem:[%s3] sm:$0x1] %vm617, %v616
  // Predicated region
  $region14: #{mssa_forward.7} parent=0 // pred_check
    _
  $region15: #{mssa_forward.7} parent=0 // pred_check_branch
    %620 = sbr.rel (0) target = $region17
  $region16: #{mssa_forward.7} parent=0 // pred_region
    _
  $region17: #{mssa_forward.7} parent=0 // pred_fallthru
    _
  // Predicated region
  $region18: #{mssa_forward.7} parent=0 // pred_check
    _
  $region19: #{mssa_forward.7} parent=0 // pred_check_branch
    %622 = sbr.rel (0) target = $region21
  $region20: #{mssa_forward.7} parent=0 // pred_region
    _
  $region21: #{mssa_forward.7} parent=0 // pred_fallthru
    _

// kernel: mssa_forward.4
$region0: #{mssa_forward.4}
  #allocation0 [shape = 'u32[]', space=smem, size = 0x4, offset = 0x4, fixed_abs, tag = 'smem constant byte address 0x4 - core index']
  #allocation1 [shape = 'u32[144,128]{1,0:T(1,128)}', space=vmem, size = 0x12000, scoped, tag = 'internal scratch']
  %s0 = inlined_call_operand.vmem [shape: f32[8,1024], index: 0, kind: input, shape index: {}]
  %s1 = inlined_call_operand.vmem [shape: bf16[16,24], index: 1, kind: input, shape index: {}]
  %s2 = inlined_call_operand.vmem [shape: f32[16,1], index: 2, kind: input, shape index: {}]
  %s3 = inlined_call_operand.vmem [shape: f32[16,1], index: 3, kind: input, shape index: {}]
  %s4 = inlined_call_operand.vmem [shape: bf16[32,48], index: 4, kind: input, shape index: {}]
  %s5 = inlined_call_operand.vmem [shape: f32[32,1], index: 5, kind: input, shape index: {}]
  %s6 = inlined_call_operand.vmem [shape: f32[32,1], index: 6, kind: input, shape index: {}]
  %s7 = inlined_call_operand.vmem [shape: bf16[64,96], index: 7, kind: input, shape index: {}]
  %s8 = inlined_call_operand.vmem [shape: f32[64,1], index: 8, kind: input, shape index: {}]
  %s9 = inlined_call_operand.vmem [shape: f32[64,1], index: 9, kind: input, shape index: {}]
  %s10 = inlined_call_operand.vmem [shape: bf16[128,192], index: 10, kind: input, shape index: {}]
  %s11 = inlined_call_operand.vmem [shape: f32[128,1], index: 11, kind: input, shape index: {}]
  %s12 = inlined_call_operand.vmem [shape: f32[128,1], index: 12, kind: input, shape index: {}]
  %s13 = inlined_call_operand.vmem [shape: f32[128,512], index: 13, kind: output, shape index: {}]
  %s14 = sld [smem:[#allocation0]]
  $region104: #{mssa_forward.4} parent=0
    _
  %s16 = ssub.s32 1, %s14
  %s17 = scalar_select 0, %s16, %s14
  $region1: #{mssa_forward.4} parent=0
    #allocation2 [shape = 'u8[262144]{0}', space=vmem, size = 0x40000, scoped, tag = 'output window, operand 0']
    loop: start=0, step=1, limit=4
    $region2: #{mssa_forward.4} parent=1 // loop_pre_header
      _
    $region3: #{mssa_forward.4} parent=1 // loop_header
      %s19 = sphi 0, %s23
      %p20 = scmp.ge.s32.totalorder %s19, 4
      %s29 = sphi 0, %s31
      %s32 = sphi 0, %s29
      %s33 = sphi 0, %s32
      %s49 = sphi 0, %s33
      %s53 = sphi 0, %s53
      %s55 = sphi 0, %s53
      %s56 = sphi 0, %s55
      %s70 = sphi 0, %s56
      %s74 = sphi 0, %s74
      %s76 = sphi 0, %s74
      %s77 = sphi 0, %s76
      %s91 = sphi 0, %s77
      %s95 = sphi 0, %s95
      %s97 = sphi 0, %s95
      %s98 = sphi 0, %s97
      %s112 = sphi 0, %s98
      %s116 = sphi 0, %s116
      %s118 = sphi 0, %s116
      %s119 = sphi 0, %s118
      %s133 = sphi 0, %s119
      %s137 = sphi 0, %s137
      %s139 = sphi 0, %s137
      %s140 = sphi 0, %s139
      %s154 = sphi 0, %s140
      %s158 = sphi 0, %s158
      %s160 = sphi 0, %s158
      %s161 = sphi 0, %s160
      %s175 = sphi 0, %s161
      %s179 = sphi 0, %s179
      %s181 = sphi 0, %s179
      %s182 = sphi 0, %s181
      %s196 = sphi 0, %s182
      %s200 = sphi 0, %s200
      %s202 = sphi 0, %s200
      %s203 = sphi 0, %s202
      %s217 = sphi 0, %s203
      %s221 = sphi 0, %s221
      %s223 = sphi 0, %s221
      %s224 = sphi 0, %s223
      %s238 = sphi 0, %s224
      %s242 = sphi 0, %s242
      %s244 = sphi 0, %s242
      %s245 = sphi 0, %s244
      %s259 = sphi 0, %s245
      %s263 = sphi 0, %s263
      %s265 = sphi 0, %s263
      %s266 = sphi 0, %s265
      %s280 = sphi 0, %s266
      %s284 = sphi 0, %s284
      %s286 = sphi 0, %s284
      %s287 = sphi 0, %s286
      %s301 = sphi 0, %s287
      %s307 = sphi 0, %s309
      %s310 = sphi 0, %s307
      %s311 = sphi 0, %s310
      %s327 = sphi 0, %s311
    $region4: #{mssa_forward.4} parent=1 // loop_header_branch
      %22 = sbr.rel (%p20) target = $region8
    $region5: #{mssa_forward.4} parent=1 // loop_body
      %s24 = ssub.s32 %s19, 1
      %s25 = ssub.s32 %s19, 2
      %s26 = sadd.s32 %s19, 1
      %s27 = ssub.s32 %s19, %s26
      %p28 = scmp.eq.s32.totalorder %s27, 0
      %s30 = sadd.s32 %s29, 1
      %s31 = scalar_select %p28, %s29, %s30
      %p34 = pneg %p28
      %p35 = scmp.eq.s32.totalorder %s19, 1
      %p36 = por %p34, %p35
      %p37 = scmp.ne.s32.totalorder %s29, %s32
      %p38 = scmp.eq.s32.totalorder %s19, 0
      %p39 = por %p37, %p38
      %p40 = scmp.ne.s32.totalorder %s29, %s32
      %p41 = scmp.eq.s32.totalorder %s24, 1
      %p42 = por %p40, %p41
      %p43 = scmp.ne.s32.totalorder %s32, %s33
      %p44 = scmp.eq.s32.totalorder %s24, 0
      %p45 = por %p43, %p44
      %p46 = scmp.ne.s32.totalorder %s32, %s33
      %p47 = scmp.eq.s32.totalorder %s25, 1
      %p48 = por %p46, %p47
      %p50 = scmp.ne.s32.totalorder %s33, %s49
      %p51 = scmp.eq.s32.totalorder %s25, 0
      %p52 = por %p50, %p51
      %s54 = sadd.s32 %s53, 1
      %p57 = scmp.eq.s32.totalorder %s19, 1
      %p58 = scmp.ne.s32.totalorder %s53, %s55
      %p59 = scmp.eq.s32.totalorder %s19, 0
      %p60 = por %p58, %p59
      %p61 = scmp.ne.s32.totalorder %s53, %s55
      %p62 = scmp.eq.s32.totalorder %s24, 1
      %p63 = por %p61, %p62
      %p64 = scmp.ne.s32.totalorder %s55, %s56
      %p65 = scmp.eq.s32.totalorder %s24, 0
      %p66 = por %p64, %p65
      %p67 = scmp.ne.s32.totalorder %s55, %s56
      %p68 = scmp.eq.s32.totalorder %s25, 1
      %p69 = por %p67, %p68
      %p71 = scmp.ne.s32.totalorder %s56, %s70
      %p72 = scmp.eq.s32.totalorder %s25, 0
      %p73 = por %p71, %p72
      %s75 = sadd.s32 %s74, 1
      %p78 = scmp.eq.s32.totalorder %s19, 1
      %p79 = scmp.ne.s32.totalorder %s74, %s76
      %p80 = scmp.eq.s32.totalorder %s19, 0
      %p81 = por %p79, %p80
      %p82 = scmp.ne.s32.totalorder %s74, %s76
      %p83 = scmp.eq.s32.totalorder %s24, 1
      %p84 = por %p82, %p83
      %p85 = scmp.ne.s32.totalorder %s76, %s77
      %p86 = scmp.eq.s32.totalorder %s24, 0
      %p87 = por %p85, %p86
      %p88 = scmp.ne.s32.totalorder %s76, %s77
      %p89 = scmp.eq.s32.totalorder %s25, 1
      %p90 = por %p88, %p89
      %p92 = scmp.ne.s32.totalorder %s77, %s91
      %p93 = scmp.eq.s32.totalorder %s25, 0
      %p94 = por %p92, %p93
      %s96 = sadd.s32 %s95, 1
      %p99 = scmp.eq.s32.totalorder %s19, 1
      %p100 = scmp.ne.s32.totalorder %s95, %s97
      %p101 = scmp.eq.s32.totalorder %s19, 0
      %p102 = por %p100, %p101
      %p103 = scmp.ne.s32.totalorder %s95, %s97
      %p104 = scmp.eq.s32.totalorder %s24, 1
      %p105 = por %p103, %p104
      %p106 = scmp.ne.s32.totalorder %s97, %s98
      %p107 = scmp.eq.s32.totalorder %s24, 0
      %p108 = por %p106, %p107
      %p109 = scmp.ne.s32.totalorder %s97, %s98
      %p110 = scmp.eq.s32.totalorder %s25, 1
      %p111 = por %p109, %p110
      %p113 = scmp.ne.s32.totalorder %s98, %s112
      %p114 = scmp.eq.s32.totalorder %s25, 0
      %p115 = por %p113, %p114
      %s117 = sadd.s32 %s116, 1
      %p120 = scmp.eq.s32.totalorder %s19, 1
      %p121 = scmp.ne.s32.totalorder %s116, %s118
      %p122 = scmp.eq.s32.totalorder %s19, 0
      %p123 = por %p121, %p122
      %p124 = scmp.ne.s32.totalorder %s116, %s118
      %p125 = scmp.eq.s32.totalorder %s24, 1
      %p126 = por %p124, %p125
      %p127 = scmp.ne.s32.totalorder %s118, %s119
      %p128 = scmp.eq.s32.totalorder %s24, 0
      %p129 = por %p127, %p128
      %p130 = scmp.ne.s32.totalorder %s118, %s119
      %p131 = scmp.eq.s32.totalorder %s25, 1
      %p132 = por %p130, %p131
      %p134 = scmp.ne.s32.totalorder %s119, %s133
      %p135 = scmp.eq.s32.totalorder %s25, 0
      %p136 = por %p134, %p135
      %s138 = sadd.s32 %s137, 1
      %p141 = scmp.eq.s32.totalorder %s19, 1
      %p142 = scmp.ne.s32.totalorder %s137, %s139
      %p143 = scmp.eq.s32.totalorder %s19, 0
      %p144 = por %p142, %p143
      %p145 = scmp.ne.s32.totalorder %s137, %s139
      %p146 = scmp.eq.s32.totalorder %s24, 1
      %p147 = por %p145, %p146
      %p148 = scmp.ne.s32.totalorder %s139, %s140
      %p149 = scmp.eq.s32.totalorder %s24, 0
      %p150 = por %p148, %p149
      %p151 = scmp.ne.s32.totalorder %s139, %s140
      %p152 = scmp.eq.s32.totalorder %s25, 1
      %p153 = por %p151, %p152
      %p155 = scmp.ne.s32.totalorder %s140, %s154
      %p156 = scmp.eq.s32.totalorder %s25, 0
      %p157 = por %p155, %p156
      %s159 = sadd.s32 %s158, 1
      %p162 = scmp.eq.s32.totalorder %s19, 1
      %p163 = scmp.ne.s32.totalorder %s158, %s160
      %p164 = scmp.eq.s32.totalorder %s19, 0
      %p165 = por %p163, %p164
      %p166 = scmp.ne.s32.totalorder %s158, %s160
      %p167 = scmp.eq.s32.totalorder %s24, 1
      %p168 = por %p166, %p167
      %p169 = scmp.ne.s32.totalorder %s160, %s161
      %p170 = scmp.eq.s32.totalorder %s24, 0
      %p171 = por %p169, %p170
      %p172 = scmp.ne.s32.totalorder %s160, %s161
      %p173 = scmp.eq.s32.totalorder %s25, 1
      %p174 = por %p172, %p173
      %p176 = scmp.ne.s32.totalorder %s161, %s175
      %p177 = scmp.eq.s32.totalorder %s25, 0
      %p178 = por %p176, %p177
      %s180 = sadd.s32 %s179, 1
      %p183 = scmp.eq.s32.totalorder %s19, 1
      %p184 = scmp.ne.s32.totalorder %s179, %s181
      %p185 = scmp.eq.s32.totalorder %s19, 0
      %p186 = por %p184, %p185
      %p187 = scmp.ne.s32.totalorder %s179, %s181
      %p188 = scmp.eq.s32.totalorder %s24, 1
      %p189 = por %p187, %p188
      %p190 = scmp.ne.s32.totalorder %s181, %s182
      %p191 = scmp.eq.s32.totalorder %s24, 0
      %p192 = por %p190, %p191
      %p193 = scmp.ne.s32.totalorder %s181, %s182
      %p194 = scmp.eq.s32.totalorder %s25, 1
      %p195 = por %p193, %p194
      %p197 = scmp.ne.s32.totalorder %s182, %s196
      %p198 = scmp.eq.s32.totalorder %s25, 0
      %p199 = por %p197, %p198
      %s201 = sadd.s32 %s200, 1
      %p204 = scmp.eq.s32.totalorder %s19, 1
      %p205 = scmp.ne.s32.totalorder %s200, %s202
      %p206 = scmp.eq.s32.totalorder %s19, 0
      %p207 = por %p205, %p206
      %p208 = scmp.ne.s32.totalorder %s200, %s202
      %p209 = scmp.eq.s32.totalorder %s24, 1
      %p210 = por %p208, %p209
      %p211 = scmp.ne.s32.totalorder %s202, %s203
      %p212 = scmp.eq.s32.totalorder %s24, 0
      %p213 = por %p211, %p212
      %p214 = scmp.ne.s32.totalorder %s202, %s203
      %p215 = scmp.eq.s32.totalorder %s25, 1
      %p216 = por %p214, %p215
      %p218 = scmp.ne.s32.totalorder %s203, %s217
      %p219 = scmp.eq.s32.totalorder %s25, 0
      %p220 = por %p218, %p219
      %s222 = sadd.s32 %s221, 1
      %p225 = scmp.eq.s32.totalorder %s19, 1
      %p226 = scmp.ne.s32.totalorder %s221, %s223
      %p227 = scmp.eq.s32.totalorder %s19, 0
      %p228 = por %p226, %p227
      %p229 = scmp.ne.s32.totalorder %s221, %s223
      %p230 = scmp.eq.s32.totalorder %s24, 1
      %p231 = por %p229, %p230
      %p232 = scmp.ne.s32.totalorder %s223, %s224
      %p233 = scmp.eq.s32.totalorder %s24, 0
      %p234 = por %p232, %p233
      %p235 = scmp.ne.s32.totalorder %s223, %s224
      %p236 = scmp.eq.s32.totalorder %s25, 1
      %p237 = por %p235, %p236
      %p239 = scmp.ne.s32.totalorder %s224, %s238
      %p240 = scmp.eq.s32.totalorder %s25, 0
      %p241 = por %p239, %p240
      %s243 = sadd.s32 %s242, 1
      %p246 = scmp.eq.s32.totalorder %s19, 1
      %p247 = scmp.ne.s32.totalorder %s242, %s244
      %p248 = scmp.eq.s32.totalorder %s19, 0
      %p249 = por %p247, %p248
      %p250 = scmp.ne.s32.totalorder %s242, %s244
      %p251 = scmp.eq.s32.totalorder %s24, 1
      %p252 = por %p250, %p251
      %p253 = scmp.ne.s32.totalorder %s244, %s245
      %p254 = scmp.eq.s32.totalorder %s24, 0
      %p255 = por %p253, %p254
      %p256 = scmp.ne.s32.totalorder %s244, %s245
      %p257 = scmp.eq.s32.totalorder %s25, 1
      %p258 = por %p256, %p257
      %p260 = scmp.ne.s32.totalorder %s245, %s259
      %p261 = scmp.eq.s32.totalorder %s25, 0
      %p262 = por %p260, %p261
      %s264 = sadd.s32 %s263, 1
      %p267 = scmp.eq.s32.totalorder %s19, 1
      %p268 = scmp.ne.s32.totalorder %s263, %s265
      %p269 = scmp.eq.s32.totalorder %s19, 0
      %p270 = por %p268, %p269
      %p271 = scmp.ne.s32.totalorder %s263, %s265
      %p272 = scmp.eq.s32.totalorder %s24, 1
      %p273 = por %p271, %p272
      %p274 = scmp.ne.s32.totalorder %s265, %s266
      %p275 = scmp.eq.s32.totalorder %s24, 0
      %p276 = por %p274, %p275
      %p277 = scmp.ne.s32.totalorder %s265, %s266
      %p278 = scmp.eq.s32.totalorder %s25, 1
      %p279 = por %p277, %p278
      %p281 = scmp.ne.s32.totalorder %s266, %s280
      %p282 = scmp.eq.s32.totalorder %s25, 0
      %p283 = por %p281, %p282
      %s285 = sadd.s32 %s284, 1
      %p288 = scmp.eq.s32.totalorder %s19, 1
      %p289 = scmp.ne.s32.totalorder %s284, %s286
      %p290 = scmp.eq.s32.totalorder %s19, 0
      %p291 = por %p289, %p290
      %p292 = scmp.ne.s32.totalorder %s284, %s286
      %p293 = scmp.eq.s32.totalorder %s24, 1
      %p294 = por %p292, %p293
      %p295 = scmp.ne.s32.totalorder %s286, %s287
      %p296 = scmp.eq.s32.totalorder %s24, 0
      %p297 = por %p295, %p296
      %p298 = scmp.ne.s32.totalorder %s286, %s287
      %p299 = scmp.eq.s32.totalorder %s25, 1
      %p300 = por %p298, %p299
      %p302 = scmp.ne.s32.totalorder %s287, %s301
      %p303 = scmp.eq.s32.totalorder %s25, 0
      %p304 = por %p302, %p303
      %s305 = ssub.s32 %s19, %s26
      %p306 = scmp.eq.s32.totalorder %s305, 0
      %s308 = sadd.s32 %s307, 1
      %s309 = scalar_select %p306, %s307, %s308
      %p312 = pneg %p306
      %p313 = scmp.eq.s32.totalorder %s19, 1
      %p314 = por %p312, %p313
      %p315 = scmp.ne.s32.totalorder %s307, %s310
      %p316 = scmp.eq.s32.totalorder %s19, 0
      %p317 = por %p315, %p316
      %p318 = scmp.ne.s32.totalorder %s307, %s310
      %p319 = scmp.eq.s32.totalorder %s24, 1
      %p320 = por %p318, %p319
      %p321 = scmp.ne.s32.totalorder %s310, %s311
      %p322 = scmp.eq.s32.totalorder %s24, 0
      %p323 = por %p321, %p322
      %p324 = scmp.ne.s32.totalorder %s310, %s311
      %p325 = scmp.eq.s32.totalorder %s25, 1
      %p326 = por %p324, %p325
      %p328 = scmp.ne.s32.totalorder %s311, %s327
      %p329 = scmp.eq.s32.totalorder %s25, 0
      %p330 = por %p328, %p329
      %p331 = scmp.le.s32.totalorder 1, %s19
      %p332 = scmp.lt.s32.totalorder %s19, 3
      %p333 = pnand %p331, %p332
      %p334 = pneg %p333
      // Predicated region
      $region9: #{mssa_forward.4} parent=5 // pred_check
        _
      $region10: #{mssa_forward.4} parent=5 // pred_check_branch
        %336 = sbr.rel (%p333) target = $region12
      $region11: #{mssa_forward.4} parent=5 // pred_region
        %s337 = ssub.s32 %s19, 1
        // Predicated region
        $region13: #{mssa_forward.4} parent=11 // pred_check
          %p338 = pneg %p66
        $region14: #{mssa_forward.4} parent=11 // pred_check_branch
          %340 = sbr.rel (%p338) target = $region16
        $region15: #{mssa_forward.4} parent=11 // pred_region
          _
        $region16: #{mssa_forward.4} parent=11 // pred_fallthru
          _
        // Predicated region
        $region17: #{mssa_forward.4} parent=11 // pred_check
          %p341 = pneg %p87
        $region18: #{mssa_forward.4} parent=11 // pred_check_branch
          %343 = sbr.rel (%p341) target = $region20
        $region19: #{mssa_forward.4} parent=11 // pred_region
          _
        $region20: #{mssa_forward.4} parent=11 // pred_fallthru
          _
        // Predicated region
        $region21: #{mssa_forward.4} parent=11 // pred_check
          %p344 = pneg %p108
        $region22: #{mssa_forward.4} parent=11 // pred_check_branch
          %346 = sbr.rel (%p344) target = $region24
        $region23: #{mssa_forward.4} parent=11 // pred_region
          _
        $region24: #{mssa_forward.4} parent=11 // pred_fallthru
          _
        // Predicated region
        $region25: #{mssa_forward.4} parent=11 // pred_check
          %p347 = pneg %p129
        $region26: #{mssa_forward.4} parent=11 // pred_check_branch
          %349 = sbr.rel (%p347) target = $region28
        $region27: #{mssa_forward.4} parent=11 // pred_region
          _
        $region28: #{mssa_forward.4} parent=11 // pred_fallthru
          _
        // Predicated region
        $region29: #{mssa_forward.4} parent=11 // pred_check
          %p350 = pneg %p150
        $region30: #{mssa_forward.4} parent=11 // pred_check_branch
          %352 = sbr.rel (%p350) target = $region32
        $region31: #{mssa_forward.4} parent=11 // pred_region
          _
        $region32: #{mssa_forward.4} parent=11 // pred_fallthru
          _
        // Predicated region
        $region33: #{mssa_forward.4} parent=11 // pred_check
          %p353 = pneg %p171
        $region34: #{mssa_forward.4} parent=11 // pred_check_branch
          %355 = sbr.rel (%p353) target = $region36
        $region35: #{mssa_forward.4} parent=11 // pred_region
          _
        $region36: #{mssa_forward.4} parent=11 // pred_fallthru
          _
        // Predicated region
        $region37: #{mssa_forward.4} parent=11 // pred_check
          %p356 = pneg %p192
        $region38: #{mssa_forward.4} parent=11 // pred_check_branch
          %358 = sbr.rel (%p356) target = $region40
        $region39: #{mssa_forward.4} parent=11 // pred_region
          _
        $region40: #{mssa_forward.4} parent=11 // pred_fallthru
          _
        // Predicated region
        $region41: #{mssa_forward.4} parent=11 // pred_check
          %p359 = pneg %p213
        $region42: #{mssa_forward.4} parent=11 // pred_check_branch
          %361 = sbr.rel (%p359) target = $region44
        $region43: #{mssa_forward.4} parent=11 // pred_region
          _
        $region44: #{mssa_forward.4} parent=11 // pred_fallthru
          _
        // Predicated region
        $region45: #{mssa_forward.4} parent=11 // pred_check
          %p362 = pneg %p234
        $region46: #{mssa_forward.4} parent=11 // pred_check_branch
          %364 = sbr.rel (%p362) target = $region48
        $region47: #{mssa_forward.4} parent=11 // pred_region
          _
        $region48: #{mssa_forward.4} parent=11 // pred_fallthru
          _
        // Predicated region
        $region49: #{mssa_forward.4} parent=11 // pred_check
          %p365 = pneg %p255
        $region50: #{mssa_forward.4} parent=11 // pred_check_branch
          %367 = sbr.rel (%p365) target = $region52
        $region51: #{mssa_forward.4} parent=11 // pred_region
          _
        $region52: #{mssa_forward.4} parent=11 // pred_fallthru
          _
        // Predicated region
        $region53: #{mssa_forward.4} parent=11 // pred_check
          %p368 = pneg %p276
        $region54: #{mssa_forward.4} parent=11 // pred_check_branch
          %370 = sbr.rel (%p368) target = $region56
        $region55: #{mssa_forward.4} parent=11 // pred_region
          _
        $region56: #{mssa_forward.4} parent=11 // pred_fallthru
          _
        // Predicated region
        $region57: #{mssa_forward.4} parent=11 // pred_check
          %p371 = pneg %p297
        $region58: #{mssa_forward.4} parent=11 // pred_check_branch
          %373 = sbr.rel (%p371) target = $region60
        $region59: #{mssa_forward.4} parent=11 // pred_region
          _
        $region60: #{mssa_forward.4} parent=11 // pred_fallthru
          _
      $region12: #{mssa_forward.4} parent=5 // pred_fallthru
        _
      %p374 = scmp.lt.s32.totalorder %s19, 2
      // Predicated region
      $region61: #{mssa_forward.4} parent=5 // pred_check
        %p375 = pneg %p374
      $region62: #{mssa_forward.4} parent=5 // pred_check_branch
        %377 = sbr.rel (%p375) target = $region64
      $region63: #{mssa_forward.4} parent=5 // pred_region
        // Predicated region
        $region65: #{mssa_forward.4} parent=63 // pred_check
          %p378 = pneg %p39
        $region66: #{mssa_forward.4} parent=63 // pred_check_branch
          %380 = sbr.rel (%p378) target = $region68
        $region67: #{mssa_forward.4} parent=63 // pred_region
          %s381 = smul.u32 4, %s19
          %p382 = scmp.lt.s32.totalorder %s381, 7
          %s383 = scalar_select %p382, %s381, 7
          %s384 = smul.addr %s383, 8
          %s385 = scalar_lea.vmem %s0, %s384
          %s386 = smul.u32 4, %s19
        $region68: #{mssa_forward.4} parent=63 // pred_fallthru
          _
      $region64: #{mssa_forward.4} parent=5 // pred_fallthru
        _
      %p387 = scmp.le.s32.totalorder 1, %s19
      %p388 = scmp.lt.s32.totalorder %s19, 3
      %p389 = pnand %p387, %p388
      %p390 = pneg %p389
      // Predicated region
      $region69: #{mssa_forward.4} parent=5 // pred_check
        _
      $region70: #{mssa_forward.4} parent=5 // pred_check_branch
        %392 = sbr.rel (%p389) target = $region72
      $region71: #{mssa_forward.4} parent=5 // pred_region
        %s393 = ssub.s32 %s19, 1
        %s394 = smul.u32 4, %s24
        %p395 = scmp.lt.s32.totalorder %s394, 7
        %s396 = scalar_select %p395, %s394, 7
        %s397 = smul.addr %s396, 8
        %s398 = scalar_lea.vmem %s0, %s397
        %p399 = pneg %p45
        %p400 = pneg %p42
        %p401 = pneg %p66
        %p402 = pneg %p63
        %p403 = pneg %p87
        %p404 = pneg %p84
        %p405 = pneg %p108
        %p406 = pneg %p105
        %p407 = pneg %p129
        %p408 = pneg %p126
        %p409 = pneg %p150
        %p410 = pneg %p147
        %p411 = pneg %p171
        %p412 = pneg %p168
        %p413 = pneg %p192
        %p414 = pneg %p189
        %p415 = pneg %p213
        %p416 = pneg %p210
        %p417 = pneg %p234
        %p418 = pneg %p231
        %p419 = pneg %p255
        %p420 = pneg %p252
        %p421 = pneg %p276
        %p422 = pneg %p273
        %p423 = pneg %p297
        %p424 = pneg %p294
        %p425 = pneg %p323
        %p426 = pneg %p320
        %s427 = sand.u32 %s310, 1
        %s428 = sand.u32 %s310, 1
        %s429 = smul.addr %s428, 256
        %s430 = scalar_lea.vmem [#allocation2], %s429
        %s431 = smul.u32 4, %s24
        %p432 = scmp.lt.s32.totalorder %s431, 7
        %s433 = scalar_select %p432, %s431, 7
        %s434 = smul.addr %s433, 8
        %s435 = scalar_lea.vmem %s0, %s434
        %s436 = smul.u32 4, %s24
        %s437 = smul.u32 2, %s24
        %v439 = vld [vmem:[%s435] sm:$0xff]
        %v440 = vld [vmem:[%s435 + $0x8] sm:$0xff]
        %v441 = vld [vmem:[%s435 + $0x10] sm:$0xff]
        %v442 = vld [vmem:[%s435 + $0x18] sm:$0xff]
        %v443 = vlaneseq
        %v444 = vand.u32 %v443, 127
        %v445 = vadd.s32 %v444, 128
        %v446 = vadd.s32 %v444, 256
        %v447 = vadd.s32 %v444, 384
        %v448 = vand.u32 %v444, 63
        %v449 = vand.u32 %v445, 63
        %v450 = vand.u32 %v446, 63
        %v451 = vand.u32 %v447, 63
        %vm452 = vcmp.ge.s32.totalorder %v448, 1
        %vm453 = vcmp.ge.s32.totalorder %v449, 1
        %vm454 = vcmp.ge.s32.totalorder %v450, 1
        %vm455 = vcmp.ge.s32.totalorder %v451, 1
        %456 = vrot.lane.b32.xlu0 %v439, 1
        %v457 = vpop.permute.xlu0 %456
        %458 = vrot.lane.b32.xlu0 %v440, 1
        %v459 = vpop.permute.xlu0 %458
        %460 = vrot.lane.b32.xlu0 %v441, 1
        %v461 = vpop.permute.xlu0 %460
        %462 = vrot.lane.b32.xlu0 %v442, 1
        %v463 = vpop.permute.xlu0 %462
        %vm464 = vcmp.lt.s32.totalorder %v444, 1
        %v465 = vsel %vm464, %v461, %v463
        %v466 = vsel %vm464, %v459, %v461
        %v467 = vsel %vm464, %v457, %v459
        %v468 = vsel %vm464, %v463, %v457
        %v469 = vsel %vm452, %v468, 0.0
        %v470 = vsel %vm453, %v467, 0.0
        %v471 = vsel %vm454, %v466, 0.0
        %v472 = vsel %vm455, %v465, 0.0
        %vm473 = vcmp.le.s32.totalorder %v448, 62
        %vm474 = vcmp.le.s32.totalorder %v449, 62
        %vm475 = vcmp.le.s32.totalorder %v450, 62
        %vm476 = vcmp.le.s32.totalorder %v451, 62
        %477 = vrot.lane.b32.xlu0 %v439, 127
        %v478 = vpop.permute.xlu0 %477
        %479 = vrot.lane.b32.xlu0 %v440, 127
        %v480 = vpop.permute.xlu0 %479
        %481 = vrot.lane.b32.xlu0 %v441, 127
        %v482 = vpop.permute.xlu0 %481
        %483 = vrot.lane.b32.xlu0 %v442, 127
        %v484 = vpop.permute.xlu0 %483
        %vm485 = vcmp.lt.s32.totalorder %v444, 127
        %v486 = vsel %vm485, %v482, %v484
        %v487 = vsel %vm485, %v480, %v482
        %v488 = vsel %vm485, %v478, %v480
        %v489 = vsel %vm485, %v484, %v478
        %v490 = vsel %vm473, %v488, 0.0
        %v491 = vsel %vm474, %v487, 0.0
        %v492 = vsel %vm475, %v486, 0.0
        %v493 = vsel %vm476, %v489, 0.0
        %v494 = vpack.c.bf16 %v439, %v469
        %v495 = vpack.c.bf16 %v440, %v470
        %v496 = vpack.c.bf16 %v441, %v471
        %v497 = vpack.c.bf16 %v442, %v472
        %v498 = vpack.c.bf16 %v490, %v490
        %v499 = vpack.c.bf16 %v491, %v491
        %v500 = vpack.c.bf16 %v492, %v492
        %v501 = vpack.c.bf16 %v493, %v493
        %v502 = vld [vmem:[%s1] sm:$0xf]
        %v503 = vld [vmem:[%s1 + $0x4] sm:$0xf]
        %v506 = vunpack.c.l.b16 %v502
        %v507 = vunpack.c.l.b16 %v503
        %v508 = vpack.c.b16 %v507, %v506
        %vm509 = vcmask 195584
        %v511 = vsel %vm509, %v508, 0
        %vm513 = vcmask 1043456
        %v515 = vsel %vm513, %v498, 0
        %v518 = vsel %vm513, %v499, 0
        %v521 = vsel %vm513, %v500, 0
        %v524 = vsel %vm513, %v501, 0
        %526 = vmatprep.subr.bf16.mxu0 %v495
        %527 = vmatpush1.bf16.msra.mxu0 %v494
        %528 = vmatprep.subr.bf16.mxu0 %v518
        %529 = vmatpush1.bf16.msra.mxu0 %v515
        %530 = vmatprep.subr.bf16.mxu0 0
        %531 = vmatpush1.bf16.msra.mxu0 0
        %532 = vmatprep.subr.bf16.mxu0 0
        %533 = vmatpush1.bf16.msra.mxu0 0
        %534 = vmatprep.subr.bf16.mxu0 0
        %535 = vmatpush1.bf16.msra.mxu0 0
        %536 = vmatprep.subr.bf16.mxu0 0
        %537 = vmatpush1.bf16.msra.mxu0 0
        %538 = vmatprep.subr.bf16.mxu0 0
        %539 = vmatpush1.bf16.msra.mxu0 0
        %540 = vmatprep.subr.bf16.mxu0 0
        %541 = vmatpush1.bf16.msra.mxu0 0
        %542 = vmatprep.subr.bf16.mxu0 0
        %543 = vmatpush1.bf16.msra.mxu0 0
        %544 = vmatprep.subr.bf16.mxu0 0
        %545 = vmatpush1.bf16.msra.mxu0 0
        %546 = vmatprep.subr.bf16.mxu0 0
        %547 = vmatpush1.bf16.msra.mxu0 0
        %548 = vmatprep.subr.bf16.mxu0 0
        %549 = vmatpush1.bf16.msra.mxu0 0
        %550 = vmatprep.subr.bf16.mxu0 0
        %551 = vmatpush1.bf16.msra.mxu0 0
        %552 = vmatprep.subr.bf16.mxu0 0
        %553 = vmatpush1.bf16.msra.mxu0 0
        %554 = vmatprep.subr.bf16.mxu0 0
        %555 = vmatpush1.bf16.msra.mxu0 0
        %556 = vmatprep.subr.bf16.mxu0 0
        %557 = vmatpush1.bf16.msra.mxu0 0
        %558 = vmatprep.mubr.bf16.mxu0 0
        %559 = vmatmul.mubr.bf16.gmra.mrb[0].mxu0 %v511
        %v560 = vpop.f32.mrb[0].mxu0
        %v561 = vadd.f32 0.0, %v560
        %v562 = vpop.f32.mrb[0].mxu0
        %v563 = vadd.f32 0.0, %v562
        %v564 = vpop.f32.mrb[0].mxu0
        %v565 = vadd.f32 0.0, %v564
        %v566 = vpop.f32.mrb[0].mxu0
        %v567 = vadd.f32 0.0, %v566
        %568 = vdwg.mxu0
        %569 = vmatprep.subr.bf16.mxu0 %v497
        %570 = vmatpush1.bf16.msra.mxu0 %v496
        %571 = vmatprep.subr.bf16.mxu0 %v524
        %572 = vmatpush1.bf16.msra.mxu0 %v521
        %573 = vmatprep.subr.bf16.mxu0 0
        %574 = vmatpush1.bf16.msra.mxu0 0
        %575 = vmatprep.subr.bf16.mxu0 0
        %576 = vmatpush1.bf16.msra.mxu0 0
        %577 = vmatprep.subr.bf16.mxu0 0
        %578 = vmatpush1.bf16.msra.mxu0 0
        %579 = vmatprep.subr.bf16.mxu0 0
        %580 = vmatpush1.bf16.msra.mxu0 0
        %581 = vmatprep.subr.bf16.mxu0 0
        %582 = vmatpush1.bf16.msra.mxu0 0
        %583 = vmatprep.subr.bf16.mxu0 0
        %584 = vmatpush1.bf16.msra.mxu0 0
        %585 = vmatprep.subr.bf16.mxu0 0
        %586 = vmatpush1.bf16.msra.mxu0 0
        %587 = vmatprep.subr.bf16.mxu0 0
        %588 = vmatpush1.bf16.msra.mxu0 0
        %589 = vmatprep.subr.bf16.mxu0 0
        %590 = vmatpush1.bf16.msra.mxu0 0
        %591 = vmatprep.subr.bf16.mxu0 0
        %592 = vmatpush1.bf16.msra.mxu0 0
        %593 = vmatprep.subr.bf16.mxu0 0
        %594 = vmatpush1.bf16.msra.mxu0 0
        %595 = vmatprep.subr.bf16.mxu0 0
        %596 = vmatpush1.bf16.msra.mxu0 0
        %597 = vmatprep.subr.bf16.mxu0 0
        %598 = vmatpush1.bf16.msra.mxu0 0
        %599 = vmatprep.subr.bf16.mxu0 0
        %600 = vmatpush1.bf16.msra.mxu0 0
        %601 = vmatprep.mubr.bf16.mxu0 0
        %602 = vmatmul.mubr.bf16.gmra.mrb[0].mxu0 %v511
        %v603 = vpop.f32.mrb[0].mxu0
        %v604 = vadd.f32 0.0, %v603
        %v605 = vpop.f32.mrb[0].mxu0
        %v606 = vadd.f32 0.0, %v605
        %v607 = vpop.f32.mrb[0].mxu0
        %v608 = vadd.f32 0.0, %v607
        %v609 = vpop.f32.mrb[0].mxu0
        %v610 = vadd.f32 0.0, %v609
        %611 = vdwg.mxu0
        %v612 = vld [vmem:[%s2] sm:$0xff]
        %v613 = vld [vmem:[%s2 + $0x8] sm:$0xff]
        %615 = vset.pattern.permute.xlu0 0
        %616 = vperm.xlu0 %615, %v612
        %v617 = vpop.permute.xlu0 %616
        %620 = vset.pattern.permute.xlu0 0
        %621 = vperm.xlu0 %620, %v613
        %v622 = vpop.permute.xlu0 %621
        %v624 = vmul.f32 %v561, %v617
        %v625 = vmul.f32 %v563, %v617
        %v626 = vmul.f32 %v604, %v617
        %v627 = vmul.f32 %v606, %v617
        %v628 = vmul.f32 %v565, %v622
        %v629 = vmul.f32 %v567, %v622
        %v630 = vmul.f32 %v608, %v622
        %v631 = vmul.f32 %v610, %v622
        %v632 = vld [vmem:[%s3] sm:$0xff]
        %v633 = vld [vmem:[%s3 + $0x8] sm:$0xff]
        %635 = vset.pattern.permute.xlu0 0
        %636 = vperm.xlu0 %635, %v632
        %v637 = vpop.permute.xlu0 %636
        %640 = vset.pattern.permute.xlu0 0
        %641 = vperm.xlu0 %640, %v633
        %v642 = vpop.permute.xlu0 %641
        %v644 = vadd.f32 %v624, %v637
        %v645 = vadd.f32 %v625, %v637
        %v646 = vadd.f32 %v626, %v637
        %v647 = vadd.f32 %v627, %v637
        %v648 = vadd.f32 %v628, %v642
        %v649 = vadd.f32 %v629, %v642
        %v650 = vadd.f32 %v630, %v642
        %v651 = vadd.f32 %v631, %v642
        %v652 = vmax.f32 %v644, 0.0
        %v653 = vmax.f32 %v645, 0.0
        %v654 = vmax.f32 %v646, 0.0
        %v655 = vmax.f32 %v647, 0.0
        %v656 = vmax.f32 %v648, 0.0
        %v657 = vmax.f32 %v649, 0.0
        %v658 = vmax.f32 %v650, 0.0
        %v659 = vmax.f32 %v651, 0.0
        %660 = vrot.lane.b32.xlu0 %v652, 127
        %v661 = vpop.permute.xlu0 %660
        %662 = vrot.lane.b32.xlu0 %v656, 127
        %v663 = vpop.permute.xlu0 %662
        %664 = vrot.lane.b32.xlu0 %v653, 127
        %v665 = vpop.permute.xlu0 %664
        %666 = vrot.lane.b32.xlu0 %v657, 127
        %v667 = vpop.permute.xlu0 %666
        %668 = vrot.lane.b32.xlu0 %v654, 127
        %v669 = vpop.permute.xlu0 %668
        %670 = vrot.lane.b32.xlu0 %v658, 127
        %v671 = vpop.permute.xlu0 %670
        %672 = vrot.lane.b32.xlu0 %v655, 127
        %v673 = vpop.permute.xlu0 %672
        %674 = vrot.lane.b32.xlu0 %v659, 127
        %v675 = vpop.permute.xlu0 %674
        %v676 = vsel %vm485, %v669, %v673
        %v677 = vsel %vm485, %v671, %v675
        %v678 = vsel %vm485, %v665, %v669
        %v679 = vsel %vm485, %v667, %v671
        %v680 = vsel %vm485, %v661, %v665
        %v681 = vsel %vm485, %v663, %v667
        %v682 = vsel %vm485, %v673, %v661
        %v683 = vsel %vm485, %v675, %v663
        %v684 = vmax.f32 %v652, %v680
        %v685 = vmax.f32 %v653, %v678
        %v686 = vmax.f32 %v654, %v676
        %v687 = vmax.f32 %v655, %v682
        %v688 = vmax.f32 %v656, %v681
        %v689 = vmax.f32 %v657, %v679
        %v690 = vmax.f32 %v658, %v677
        %v691 = vmax.f32 %v659, %v683
        %v692 = vlaneseq
        %v693 = vshrl.u32 %v692, 7
        %v694 = vadd.s32 %v693, 8
        %v695 = vadd.s32 %v693, 16
        %v696 = vadd.s32 %v693, 24
        %v697 = vadd.s32 %v693, 32
        %v698 = vadd.s32 %v693, 40
        %v699 = vadd.s32 %v693, 48
        %v700 = vadd.s32 %v693, 56
        %v701 = vadd.s32 %v693, 64
        %v702 = vadd.s32 %v693, 72
        %v703 = vadd.s32 %v693, 80
        %v704 = vadd.s32 %v693, 88
        %v705 = vadd.s32 %v693, 96
        %v706 = vadd.s32 %v693, 104
        %v707 = vadd.s32 %v693, 112
        %v708 = vadd.s32 %v693, 120
        %v709 = vadd.s32 %v693, 128
        %v710 = vadd.s32 %v693, 136
        %v711 = vadd.s32 %v693, 144
        %v712 = vadd.s32 %v693, 152
        %v713 = vadd.s32 %v693, 160
        %v714 = vadd.s32 %v693, 168
        %v715 = vadd.s32 %v693, 176
        %v716 = vadd.s32 %v693, 184
        %v717 = vadd.s32 %v693, 192
        %v718 = vadd.s32 %v693, 200
        %v719 = vadd.s32 %v693, 208
        %v720 = vadd.s32 %v693, 216
        %v721 = vadd.s32 %v693, 224
        %v722 = vadd.s32 %v693, 232
        %v723 = vadd.s32 %v693, 240
        %v724 = vadd.s32 %v693, 248
        %v725 = vadd.s32 %v693, 256
        %v726 = vadd.s32 %v693, 264
        %v727 = vadd.s32 %v693, 272
        %v728 = vadd.s32 %v693, 280
        %v729 = vadd.s32 %v693, 288
        %v730 = vadd.s32 %v693, 296
        %v731 = vadd.s32 %v693, 304
        %v732 = vadd.s32 %v693, 312
        %v733 = vadd.s32 %v693, 320
        %v734 = vadd.s32 %v693, 328
        %v735 = vadd.s32 %v693, 336
        %v736 = vadd.s32 %v693, 344
        %v737 = vadd.s32 %v693, 352
        %v738 = vadd.s32 %v693, 360
        %v739 = vadd.s32 %v693, 368
        %v740 = vadd.s32 %v693, 376
        %v741 = vadd.s32 %v693, 384
        %v742 = vadd.s32 %v693, 392
        %v743 = vadd.s32 %v693, 400
        %v744 = vadd.s32 %v693, 408
        %v745 = vadd.s32 %v693, 416
        %v746 = vadd.s32 %v693, 424
        %v747 = vadd.s32 %v693, 432
        %v748 = vadd.s32 %v693, 440
        %v749 = vadd.s32 %v693, 448
        %v750 = vadd.s32 %v693, 456
        %v751 = vadd.s32 %v693, 464
        %v752 = vadd.s32 %v693, 472
        %v753 = vadd.s32 %v693, 480
        %v754 = vadd.s32 %v693, 488
        %v755 = vadd.s32 %v693, 496
        %v756 = vadd.s32 %v693, 504
        %v757 = vmul.u32 %v444, 2
        %v758 = vmul.u32 %v445, 2
        %vm759 = vcmp.eq.s32.totalorder %v693, %v757
        %vm760 = vcmp.eq.s32.totalorder %v693, %v758
        %vm761 = vcmp.eq.s32.totalorder %v694, %v757
        %vm762 = vcmp.eq.s32.totalorder %v694, %v758
        %vm763 = vcmp.eq.s32.totalorder %v695, %v757
        %vm764 = vcmp.eq.s32.totalorder %v695, %v758
        %vm765 = vcmp.eq.s32.totalorder %v696, %v757
        %vm766 = vcmp.eq.s32.totalorder %v696, %v758
        %vm767 = vcmp.eq.s32.totalorder %v697, %v757
        %vm768 = vcmp.eq.s32.totalorder %v697, %v758
        %vm769 = vcmp.eq.s32.totalorder %v698, %v757
        %vm770 = vcmp.eq.s32.totalorder %v698, %v758
        %vm771 = vcmp.eq.s32.totalorder %v699, %v757
        %vm772 = vcmp.eq.s32.totalorder %v699, %v758
        %vm773 = vcmp.eq.s32.totalorder %v700, %v757
        %vm774 = vcmp.eq.s32.totalorder %v700, %v758
        %vm775 = vcmp.eq.s32.totalorder %v701, %v757
        %vm776 = vcmp.eq.s32.totalorder %v701, %v758
        %vm777 = vcmp.eq.s32.totalorder %v702, %v757
        %vm778 = vcmp.eq.s32.totalorder %v702, %v758
        %vm779 = vcmp.eq.s32.totalorder %v703, %v757
        %vm780 = vcmp.eq.s32.totalorder %v703, %v758
        %vm781 = vcmp.eq.s32.totalorder %v704, %v757
        %vm782 = vcmp.eq.s32.totalorder %v704, %v758
        %vm783 = vcmp.eq.s32.totalorder %v705, %v757
        %vm784 = vcmp.eq.s32.totalorder %v705, %v758
        %vm785 = vcmp.eq.s32.totalorder %v706, %v757
        %vm786 = vcmp.eq.s32.totalorder %v706, %v758
        %vm787 = vcmp.eq.s32.totalorder %v707, %v757
        %vm788 = vcmp.eq.s32.totalorder %v707, %v758
        %vm789 = vcmp.eq.s32.totalorder %v708, %v757
        %vm790 = vcmp.eq.s32.totalorder %v708, %v758
        %vm791 = vcmp.eq.s32.totalorder %v709, %v757
        %vm792 = vcmp.eq.s32.totalorder %v709, %v758
        %vm793 = vcmp.eq.s32.totalorder %v710, %v757
        %vm794 = vcmp.eq.s32.totalorder %v710, %v758
        %vm795 = vcmp.eq.s32.totalorder %v711, %v757
        %vm796 = vcmp.eq.s32.totalorder %v711, %v758
        %vm797 = vcmp.eq.s32.totalorder %v712, %v757
        %vm798 = vcmp.eq.s32.totalorder %v712, %v758
        %vm799 = vcmp.eq.s32.totalorder %v713, %v757
        %vm800 = vcmp.eq.s32.totalorder %v713, %v758
        %vm801 = vcmp.eq.s32.totalorder %v714, %v757
        %vm802 = vcmp.eq.s32.totalorder %v714, %v758
        %vm803 = vcmp.eq.s32.totalorder %v715, %v757
        %vm804 = vcmp.eq.s32.totalorder %v715, %v758
        %vm805 = vcmp.eq.s32.totalorder %v716, %v757
        %vm806 = vcmp.eq.s32.totalorder %v716, %v758
        %vm807 = vcmp.eq.s32.totalorder %v717, %v757
        %vm808 = vcmp.eq.s32.totalorder %v717, %v758
        %vm809 = vcmp.eq.s32.totalorder %v718, %v757
        %vm810 = vcmp.eq.s32.totalorder %v718, %v758
        %vm811 = vcmp.eq.s32.totalorder %v719, %v757
        %vm812 = vcmp.eq.s32.totalorder %v719, %v758
        %vm813 = vcmp.eq.s32.totalorder %v720, %v757
        %vm814 = vcmp.eq.s32.totalorder %v720, %v758
        %vm815 = vcmp.eq.s32.totalorder %v721, %v757
        %vm816 = vcmp.eq.s32.totalorder %v721, %v758
        %vm817 = vcmp.eq.s32.totalorder %v722, %v757
        %vm818 = vcmp.eq.s32.totalorder %v722, %v758
        %vm819 = vcmp.eq.s32.totalorder %v723, %v757
        %vm820 = vcmp.eq.s32.totalorder %v723, %v758
        %vm821 = vcmp.eq.s32.totalorder %v724, %v757
        %vm822 = vcmp.eq.s32.totalorder %v724, %v758
        %vm823 = vcmp.eq.s32.totalorder %v725, %v757
        %vm824 = vcmp.eq.s32.totalorder %v725, %v758
        %vm825 = vcmp.eq.s32.totalorder %v726, %v757
        %vm826 = vcmp.eq.s32.totalorder %v726, %v758
        %vm827 = vcmp.eq.s32.totalorder %v727, %v757
        %vm828 = vcmp.eq.s32.totalorder %v727, %v758
        %vm829 = vcmp.eq.s32.totalorder %v728, %v757
        %vm830 = vcmp.eq.s32.totalorder %v728, %v758
        %vm831 = vcmp.eq.s32.totalorder %v729, %v757
        %vm832 = vcmp.eq.s32.totalorder %v729, %v758
        %vm833 = vcmp.eq.s32.totalorder %v730, %v757
        %vm834 = vcmp.eq.s32.totalorder %v730, %v758
        %vm835 = vcmp.eq.s32.totalorder %v731, %v757
        %vm836 = vcmp.eq.s32.totalorder %v731, %v758
        %vm837 = vcmp.eq.s32.totalorder %v732, %v757
        %vm838 = vcmp.eq.s32.totalorder %v732, %v758
        %vm839 = vcmp.eq.s32.totalorder %v733, %v757
        %vm840 = vcmp.eq.s32.totalorder %v733, %v758
        %vm841 = vcmp.eq.s32.totalorder %v734, %v757
        %vm842 = vcmp.eq.s32.totalorder %v734, %v758
        %vm843 = vcmp.eq.s32.totalorder %v735, %v757
        %vm844 = vcmp.eq.s32.totalorder %v735, %v758
        %vm845 = vcmp.eq.s32.totalorder %v736, %v757
        %vm846 = vcmp.eq.s32.totalorder %v736, %v758
        %vm847 = vcmp.eq.s32.totalorder %v737, %v757
        %vm848 = vcmp.eq.s32.totalorder %v737, %v758
        %vm849 = vcmp.eq.s32.totalorder %v738, %v757
        %vm850 = vcmp.eq.s32.totalorder %v738, %v758
        %vm851 = vcmp.eq.s32.totalorder %v739, %v757
        %vm852 = vcmp.eq.s32.totalorder %v739, %v758
        %vm853 = vcmp.eq.s32.totalorder %v740, %v757
        %vm854 = vcmp.eq.s32.totalorder %v740, %v758
        %vm855 = vcmp.eq.s32.totalorder %v741, %v757
        %vm856 = vcmp.eq.s32.totalorder %v741, %v758
        %vm857 = vcmp.eq.s32.totalorder %v742, %v757
        %vm858 = vcmp.eq.s32.totalorder %v742, %v758
        %vm859 = vcmp.eq.s32.totalorder %v743, %v757
        %vm860 = vcmp.eq.s32.totalorder %v743, %v758
        %vm861 = vcmp.eq.s32.totalorder %v744, %v757
        %vm862 = vcmp.eq.s32.totalorder %v744, %v758
        %vm863 = vcmp.eq.s32.totalorder %v745, %v757
        %vm864 = vcmp.eq.s32.totalorder %v745, %v758
        %vm865 = vcmp.eq.s32.totalorder %v746, %v757
        %vm866 = vcmp.eq.s32.totalorder %v746, %v758
        %vm867 = vcmp.eq.s32.totalorder %v747, %v757
        %vm868 = vcmp.eq.s32.totalorder %v747, %v758
        %vm869 = vcmp.eq.s32.totalorder %v748, %v757
        %vm870 = vcmp.eq.s32.totalorder %v748, %v758
        %vm871 = vcmp.eq.s32.totalorder %v749, %v757
        %vm872 = vcmp.eq.s32.totalorder %v749, %v758
        %vm873 = vcmp.eq.s32.totalorder %v750, %v757
        %vm874 = vcmp.eq.s32.totalorder %v750, %v758
        %vm875 = vcmp.eq.s32.totalorder %v751, %v757
        %vm876 = vcmp.eq.s32.totalorder %v751, %v758
        %vm877 = vcmp.eq.s32.totalorder %v752, %v757
        %vm878 = vcmp.eq.s32.totalorder %v752, %v758
        %vm879 = vcmp.eq.s32.totalorder %v753, %v757
        %vm880 = vcmp.eq.s32.totalorder %v753, %v758
        %vm881 = vcmp.eq.s32.totalorder %v754, %v757
        %vm882 = vcmp.eq.s32.totalorder %v754, %v758
        %vm883 = vcmp.eq.s32.totalorder %v755, %v757
        %vm884 = vcmp.eq.s32.totalorder %v755, %v758
        %vm885 = vcmp.eq.s32.totalorder %v756, %v757
        %vm886 = vcmp.eq.s32.totalorder %v756, %v758
        %v887 = vsel %vm759, 1.0, 0.0
        %v888 = vsel %vm760, 1.0, 0.0
        %v889 = vsel %vm761, 1.0, 0.0
        %v890 = vsel %vm762, 1.0, 0.0
        %v891 = vsel %vm763, 1.0, 0.0
        %v892 = vsel %vm764, 1.0, 0.0
        %v893 = vsel %vm765, 1.0, 0.0
        %v894 = vsel %vm766, 1.0, 0.0
        %v895 = vsel %vm767, 1.0, 0.0
        %v896 = vsel %vm768, 1.0, 0.0
        %v897 = vsel %vm769, 1.0, 0.0
        %v898 = vsel %vm770, 1.0, 0.0
        %v899 = vsel %vm771, 1.0, 0.0
        %v900 = vsel %vm772, 1.0, 0.0
        %v901 = vsel %vm773, 1.0, 0.0
        %v902 = vsel %vm774, 1.0, 0.0
        %v903 = vsel %vm775, 1.0, 0.0
        %v904 = vsel %vm776, 1.0, 0.0
        %v905 = vsel %vm777, 1.0, 0.0
        %v906 = vsel %vm778, 1.0, 0.0
        %v907 = vsel %vm779, 1.0, 0.0
        %v908 = vsel %vm780, 1.0, 0.0
        %v909 = vsel %vm781, 1.0, 0.0
        %v910 = vsel %vm782, 1.0, 0.0
        %v911 = vsel %vm783, 1.0, 0.0
        %v912 = vsel %vm784, 1.0, 0.0
        %v913 = vsel %vm785, 1.0, 0.0
        %v914 = vsel %vm786, 1.0, 0.0
        %v915 = vsel %vm787, 1.0, 0.0
        %v916 = vsel %vm788, 1.0, 0.0
        %v917 = vsel %vm789, 1.0, 0.0
        %v918 = vsel %vm790, 1.0, 0.0
        %v919 = vsel %vm791, 1.0, 0.0
        %v920 = vsel %vm792, 1.0, 0.0
        %v921 = vsel %vm793, 1.0, 0.0
        %v922 = vsel %vm794, 1.0, 0.0
        %v923 = vsel %vm795, 1.0, 0.0
        %v924 = vsel %vm796, 1.0, 0.0
        %v925 = vsel %vm797, 1.0, 0.0
        %v926 = vsel %vm798, 1.0, 0.0
        %v927 = vsel %vm799, 1.0, 0.0
        %v928 = vsel %vm800, 1.0, 0.0
        %v929 = vsel %vm801, 1.0, 0.0
        %v930 = vsel %vm802, 1.0, 0.0
        %v931 = vsel %vm803, 1.0, 0.0
        %v932 = vsel %vm804, 1.0, 0.0
        %v933 = vsel %vm805, 1.0, 0.0
        %v934 = vsel %vm806, 1.0, 0.0
        %v935 = vsel %vm807, 1.0, 0.0
        %v936 = vsel %vm808, 1.0, 0.0
        %v937 = vsel %vm809, 1.0, 0.0
        %v938 = vsel %vm810, 1.0, 0.0
        %v939 = vsel %vm811, 1.0, 0.0
        %v940 = vsel %vm812, 1.0, 0.0
        %v941 = vsel %vm813, 1.0, 0.0
        %v942 = vsel %vm814, 1.0, 0.0
        %v943 = vsel %vm815, 1.0, 0.0
        %v944 = vsel %vm816, 1.0, 0.0
        %v945 = vsel %vm817, 1.0, 0.0
        %v946 = vsel %vm818, 1.0, 0.0
        %v947 = vsel %vm819, 1.0, 0.0
        %v948 = vsel %vm820, 1.0, 0.0
        %v949 = vsel %vm821, 1.0, 0.0
        %v950 = vsel %vm822, 1.0, 0.0
        %v951 = vsel %vm823, 1.0, 0.0
        %v952 = vsel %vm824, 1.0, 0.0
        %v953 = vsel %vm825, 1.0, 0.0
        %v954 = vsel %vm826, 1.0, 0.0
        %v955 = vsel %vm827, 1.0, 0.0
        %v956 = vsel %vm828, 1.0, 0.0
        %v957 = vsel %vm829, 1.0, 0.0
        %v958 = vsel %vm830, 1.0, 0.0
        %v959 = vsel %vm831, 1.0, 0.0
        %v960 = vsel %vm832, 1.0, 0.0
        %v961 = vsel %vm833, 1.0, 0.0
        %v962 = vsel %vm834, 1.0, 0.0
        %v963 = vsel %vm835, 1.0, 0.0
        %v964 = vsel %vm836, 1.0, 0.0
        %v965 = vsel %vm837, 1.0, 0.0
        %v966 = vsel %vm838, 1.0, 0.0
        %v967 = vsel %vm839, 1.0, 0.0
        %v968 = vsel %vm840, 1.0, 0.0
        %v969 = vsel %vm841, 1.0, 0.0
        %v970 = vsel %vm842, 1.0, 0.0
        %v971 = vsel %vm843, 1.0, 0.0
        %v972 = vsel %vm844, 1.0, 0.0
        %v973 = vsel %vm845, 1.0, 0.0
        %v974 = vsel %vm846, 1.0, 0.0
        %v975 = vsel %vm847, 1.0, 0.0
        %v976 = vsel %vm848, 1.0, 0.0
        %v977 = vsel %vm849, 1.0, 0.0
        %v978 = vsel %vm850, 1.0, 0.0
        %v979 = vsel %vm851, 1.0, 0.0
        %v980 = vsel %vm852, 1.0, 0.0
        %v981 = vsel %vm853, 1.0, 0.0
        %v982 = vsel %vm854, 1.0, 0.0
        %v983 = vsel %vm855, 1.0, 0.0
        %v984 = vsel %vm856, 1.0, 0.0
        %v985 = vsel %vm857, 1.0, 0.0
        %v986 = vsel %vm858, 1.0, 0.0
        %v987 = vsel %vm859, 1.0, 0.0
        %v988 = vsel %vm860, 1.0, 0.0
        %v989 = vsel %vm861, 1.0, 0.0
        %v990 = vsel %vm862, 1.0, 0.0
        %v991 = vsel %vm863, 1.0, 0.0
        %v992 = vsel %vm864, 1.0, 0.0
        %v993 = vsel %vm865, 1.0, 0.0
        %v994 = vsel %vm866, 1.0, 0.0
        %v995 = vsel %vm867, 1.0, 0.0
        %v996 = vsel %vm868, 1.0, 0.0
        %v997 = vsel %vm869, 1.0, 0.0
        %v998 = vsel %vm870, 1.0, 0.0
        %v999 = vsel %vm871, 1.0, 0.0
        %v1000 = vsel %vm872, 1.0, 0.0
        %v1001 = vsel %vm873, 1.0, 0.0
        %v1002 = vsel %vm874, 1.0, 0.0
        %v1003 = vsel %vm875, 1.0, 0.0
        %v1004 = vsel %vm876, 1.0, 0.0
        %v1005 = vsel %vm877, 1.0, 0.0
        %v1006 = vsel %vm878, 1.0, 0.0
        %v1007 = vsel %vm879, 1.0, 0.0
        %v1008 = vsel %vm880, 1.0, 0.0
        %v1009 = vsel %vm881, 1.0, 0.0
        %v1010 = vsel %vm882, 1.0, 0.0
        %v1011 = vsel %vm883, 1.0, 0.0
        %v1012 = vsel %vm884, 1.0, 0.0
        %v1013 = vsel %vm885, 1.0, 0.0
        %v1014 = vsel %vm886, 1.0, 0.0
        %v1015 = vpack.c.bf16 %v889, %v887
        %v1016 = vpack.c.bf16 %v890, %v888
        %v1017 = vpack.c.bf16 %v893, %v891
        %v1018 = vpack.c.bf16 %v894, %v892
        %v1019 = vpack.c.bf16 %v897, %v895
        %v1020 = vpack.c.bf16 %v898, %v896
        %v1021 = vpack.c.bf16 %v901, %v899
        %v1022 = vpack.c.bf16 %v902, %v900
        %v1023 = vpack.c.bf16 %v905, %v903
        %v1024 = vpack.c.bf16 %v906, %v904
        %v1025 = vpack.c.bf16 %v909, %v907
        %v1026 = vpack.c.bf16 %v910, %v908
        %v1027 = vpack.c.bf16 %v913, %v911
        %v1028 = vpack.c.bf16 %v914, %v912
        %v1029 = vpack.c.bf16 %v917, %v915
        %v1030 = vpack.c.bf16 %v918, %v916
        %v1031 = vpack.c.bf16 %v921, %v919
        %v1032 = vpack.c.bf16 %v922, %v920
        %v1033 = vpack.c.bf16 %v925, %v923
        %v1034 = vpack.c.bf16 %v926, %v924
        %v1035 = vpack.c.bf16 %v929, %v927
        %v1036 = vpack.c.bf16 %v930, %v928
        %v1037 = vpack.c.bf16 %v933, %v931
        %v1038 = vpack.c.bf16 %v934, %v932
        %v1039 = vpack.c.bf16 %v937, %v935
        %v1040 = vpack.c.bf16 %v938, %v936
        %v1041 = vpack.c.bf16 %v941, %v939
        %v1042 = vpack.c.bf16 %v942, %v940
        %v1043 = vpack.c.bf16 %v945, %v943
        %v1044 = vpack.c.bf16 %v946, %v944
        %v1045 = vpack.c.bf16 %v949, %v947
        %v1046 = vpack.c.bf16 %v950, %v948
        %v1047 = vpack.c.bf16 %v953, %v951
        %v1048 = vpack.c.bf16 %v954, %v952
        %v1049 = vpack.c.bf16 %v957, %v955
        %v1050 = vpack.c.bf16 %v958, %v956
        %v1051 = vpack.c.bf16 %v961, %v959
        %v1052 = vpack.c.bf16 %v962, %v960
        %v1053 = vpack.c.bf16 %v965, %v963
        %v1054 = vpack.c.bf16 %v966, %v964
        %v1055 = vpack.c.bf16 %v969, %v967
        %v1056 = vpack.c.bf16 %v970, %v968
        %v1057 = vpack.c.bf16 %v973, %v971
        %v1058 = vpack.c.bf16 %v974, %v972
        %v1059 = vpack.c.bf16 %v977, %v975
        %v1060 = vpack.c.bf16 %v978, %v976
        %v1061 = vpack.c.bf16 %v981, %v979
        %v1062 = vpack.c.bf16 %v982, %v980
        %v1063 = vpack.c.bf16 %v985, %v983
        %v1064 = vpack.c.bf16 %v986, %v984
        %v1065 = vpack.c.bf16 %v989, %v987
        %v1066 = vpack.c.bf16 %v990, %v988
        %v1067 = vpack.c.bf16 %v993, %v991
        %v1068 = vpack.c.bf16 %v994, %v992
        %v1069 = vpack.c.bf16 %v997, %v995
        %v1070 = vpack.c.bf16 %v998, %v996
        %v1071 = vpack.c.bf16 %v1001, %v999
        %v1072 = vpack.c.bf16 %v1002, %v1000
        %v1073 = vpack.c.bf16 %v1005, %v1003
        %v1074 = vpack.c.bf16 %v1006, %v1004
        %v1075 = vpack.c.bf16 %v1009, %v1007
        %v1076 = vpack.c.bf16 %v1010, %v1008
        %v1077 = vpack.c.bf16 %v1013, %v1011
        %v1078 = vpack.c.bf16 %v1014, %v1012
        %v1079 = vpack.c.bf16 %v688, %v684
        %v1080 = vpack.c.bf16 %v689, %v685
        %v1081 = vpack.c.bf16 %v690, %v686
        %v1082 = vpack.c.bf16 %v691, %v687
        %1083 = vmatprep.subr.bf16.mxu0 %v1016
        %1084 = vmatpush1.bf16.msra.mxu0 %v1015
        %1085 = vmatprep.subr.bf16.mxu0 %v1018
        %1086 = vmatpush1.bf16.msra.mxu0 %v1017
        %1087 = vmatprep.subr.bf16.mxu0 %v1020
        %1088 = vmatpush1.bf16.msra.mxu0 %v1019
        %1089 = vmatprep.subr.bf16.mxu0 %v1022
        %1090 = vmatpush1.bf16.msra.mxu0 %v1021
        %1091 = vmatprep.subr.bf16.mxu0 %v1024
        %1092 = vmatpush1.bf16.msra.mxu0 %v1023
        %1093 = vmatprep.subr.bf16.mxu0 %v1026
        %1094 = vmatpush1.bf16.msra.mxu0 %v1025
        %1095 = vmatprep.subr.bf16.mxu0 %v1028
        %1096 = vmatpush1.bf16.msra.mxu0 %v1027
        %1097 = vmatprep.subr.bf16.mxu0 %v1030
        %1098 = vmatpush1.bf16.msra.mxu0 %v1029
        %1099 = vmatprep.subr.bf16.mxu0 %v1032
        %1100 = vmatpush1.bf16.msra.mxu0 %v1031
        %1101 = vmatprep.subr.bf16.mxu0 %v1034
        %1102 = vmatpush1.bf16.msra.mxu0 %v1033
        %1103 = vmatprep.subr.bf16.mxu0 %v1036
        %1104 = vmatpush1.bf16.msra.mxu0 %v1035
        %1105 = vmatprep.subr.bf16.mxu0 %v1038
        %1106 = vmatpush1.bf16.msra.mxu0 %v1037
        %1107 = vmatprep.subr.bf16.mxu0 %v1040
        %1108 = vmatpush1.bf16.msra.mxu0 %v1039
        %1109 = vmatprep.subr.bf16.mxu0 %v1042
        %1110 = vmatpush1.bf16.msra.mxu0 %v1041
        %1111 = vmatprep.subr.bf16.mxu0 %v1044
        %1112 = vmatpush1.bf16.msra.mxu0 %v1043
        %1113 = vmatprep.subr.bf16.mxu0 %v1046
        %1114 = vmatpush1.bf16.msra.mxu0 %v1045
        %1115 = vmatprep.mubr.bf16.mxu0 %v1080
        %1116 = vmatmul.mubr.bf16.gmra.mrb[0].mxu0 %v1079
        %v1117 = vpop.f32.mrb[0].mxu0
        %v1118 = vadd.f32 0.0, %v1117
        %v1119 = vpop.f32.mrb[0].mxu0
        %v1120 = vadd.f32 0.0, %v1119
        %v1121 = vpop.f32.mrb[0].mxu0
        %v1122 = vadd.f32 0.0, %v1121
        %v1123 = vpop.f32.mrb[0].mxu0
        %v1124 = vadd.f32 0.0, %v1123
        %1125 = vdwg.mxu0
        %1126 = vmatprep.subr.bf16.mxu0 %v1048
        %1127 = vmatpush1.bf16.msra.mxu0 %v1047
        %1128 = vmatprep.subr.bf16.mxu0 %v1050
        %1129 = vmatpush1.bf16.msra.mxu0 %v1049
        %1130 = vmatprep.subr.bf16.mxu0 %v1052
        %1131 = vmatpush1.bf16.msra.mxu0 %v1051
        %1132 = vmatprep.subr.bf16.mxu0 %v1054
        %1133 = vmatpush1.bf16.msra.mxu0 %v1053
        %1134 = vmatprep.subr.bf16.mxu0 %v1056
        %1135 = vmatpush1.bf16.msra.mxu0 %v1055
        %1136 = vmatprep.subr.bf16.mxu0 %v1058
        %1137 = vmatpush1.bf16.msra.mxu0 %v1057
        %1138 = vmatprep.subr.bf16.mxu0 %v1060
        %1139 = vmatpush1.bf16.msra.mxu0 %v1059
        %1140 = vmatprep.subr.bf16.mxu0 %v1062
        %1141 = vmatpush1.bf16.msra.mxu0 %v1061
        %1142 = vmatprep.subr.bf16.mxu0 %v1064
        %1143 = vmatpush1.bf16.msra.mxu0 %v1063
        %1144 = vmatprep.subr.bf16.mxu0 %v1066
        %1145 = vmatpush1.bf16.msra.mxu0 %v1065
        %1146 = vmatprep.subr.bf16.mxu0 %v1068
        %1147 = vmatpush1.bf16.msra.mxu0 %v1067
        %1148 = vmatprep.subr.bf16.mxu0 %v1070
        %1149 = vmatpush1.bf16.msra.mxu0 %v1069
        %1150 = vmatprep.subr.bf16.mxu0 %v1072
        %1151 = vmatpush1.bf16.msra.mxu0 %v1071
        %1152 = vmatprep.subr.bf16.mxu0 %v1074
        %1153 = vmatpush1.bf16.msra.mxu0 %v1073
        %1154 = vmatprep.subr.bf16.mxu0 %v1076
        %1155 = vmatpush1.bf16.msra.mxu0 %v1075
        %1156 = vmatprep.subr.bf16.mxu0 %v1078
        %1157 = vmatpush1.bf16.msra.mxu0 %v1077
        %1158 = vmatprep.mubr.bf16.mxu0 %v1082
        %1159 = vmatmul.mubr.bf16.gmra.mrb[0].mxu0 %v1081
        %v1160 = vpop.f32.mrb[0].mxu0
        %v1161 = vadd.f32 %v1118, %v1160
        %v1162 = vpop.f32.mrb[0].mxu0
        %v1163 = vadd.f32 %v1120, %v1162
        %v1164 = vpop.f32.mrb[0].mxu0
        %v1165 = vadd.f32 %v1122, %v1164
        %v1166 = vpop.f32.mrb[0].mxu0
        %v1167 = vadd.f32 %v1124, %v1166
        %1168 = vdwg.mxu0
        %v1169 = vand.u32 %v444, 31
        %v1170 = vand.u32 %v445, 31
        %vm1171 = vcmp.ge.s32.totalorder %v1169, 1
        %vm1172 = vcmp.ge.s32.totalorder %v1170, 1
        %1173 = vrot.lane.b32.xlu0 %v1161, 1
        %v1174 = vpop.permute.xlu0 %1173
        %1175 = vrot.lane.b32.xlu0 %v1165, 1
        %v1176 = vpop.permute.xlu0 %1175
        %1177 = vrot.lane.b32.xlu0 %v1163, 1
        %v1178 = vpop.permute.xlu0 %1177
        %1179 = vrot.lane.b32.xlu0 %v1167, 1
        %v1180 = vpop.permute.xlu0 %1179
        %v1181 = vsel %vm464, %v1174, %v1178
        %v1182 = vsel %vm464, %v1176, %v1180
        %v1183 = vsel %vm464, %v1178, %v1174
        %v1184 = vsel %vm464, %v1180, %v1176
        %v1185 = vsel %vm1171, %v1183, 0.0
        %v1186 = vsel %vm1172, %v1181, 0.0
        %v1187 = vsel %vm1171, %v1184, 0.0
        %v1188 = vsel %vm1172, %v1182, 0.0
        %vm1189 = vcmp.le.s32.totalorder %v1169, 30
        %vm1190 = vcmp.le.s32.totalorder %v1170, 30
        %1191 = vrot.lane.b32.xlu0 %v1161, 127
        %v1192 = vpop.permute.xlu0 %1191
        %1193 = vrot.lane.b32.xlu0 %v1165, 127
        %v1194 = vpop.permute.xlu0 %1193
        %1195 = vrot.lane.b32.xlu0 %v1163, 127
        %v1196 = vpop.permute.xlu0 %1195
        %1197 = vrot.lane.b32.xlu0 %v1167, 127
        %v1198 = vpop.permute.xlu0 %1197
        %v1199 = vsel %vm485, %v1192, %v1196
        %v1200 = vsel %vm485, %v1194, %v1198
        %v1201 = vsel %vm485, %v1196, %v1192
        %v1202 = vsel %vm485, %v1198, %v1194
        %v1203 = vsel %vm1189, %v1199, 0.0
        %v1204 = vsel %vm1190, %v1201, 0.0
        %v1205 = vsel %vm1189, %v1200, 0.0
        %v1206 = vsel %vm1190, %v1202, 0.0
        %v1207 = vpack.c.bf16 %v1187, %v1185
        %v1208 = vpack.c.bf16 %v1188, %v1186
        %v1209 = vpack.c.bf16 %v1165, %v1161
        %v1210 = vpack.c.bf16 %v1167, %v1163
        %v1211 = vpack.c.bf16 %v1205, %v1203
        %v1212 = vpack.c.bf16 %v1206, %v1204
        %v1213 = vld [vmem:[%s4] sm:$0xf]
        %v1214 = vld [vmem:[%s4 + $0x4] sm:$0xf]
        %v1215 = vld [vmem:[%s4 + $0x8] sm:$0xf]
        %v1216 = vld [vmem:[%s4 + $0xc] sm:$0xf]
        %v1221 = vunpack.c.l.b16 %v1213
        %v1222 = vunpack.c.l.b16 %v1214
        %v1223 = vunpack.c.l.b16 %v1215
        %v1224 = vunpack.c.l.b16 %v1216
        %v1225 = vpack.c.b16 %v1222, %v1221
        %v1226 = vpack.c.b16 %v1224, %v1223
        %vm1227 = vcmask 392192
        %v1229 = vsel %vm1227, %v1225, 0
        %v1232 = vsel %vm1227, %v1226, 0
        %1234 = vmatprep.subr.bf16.mxu0 %v1208
        %1235 = vmatpush1.bf16.msra.mxu0 %v1207
        %1236 = vmatprep.subr.bf16.mxu0 %v1210
        %1237 = vmatpush1.bf16.msra.mxu0 %v1209
        %1238 = vmatprep.subr.bf16.mxu0 %v1212
        %1239 = vmatpush1.bf16.msra.mxu0 %v1211
        %1240 = vmatprep.subr.bf16.mxu0 0
        %1241 = vmatpush1.bf16.msra.mxu0 0
        %1242 = vmatprep.subr.bf16.mxu0 0
        %1243 = vmatpush1.bf16.msra.mxu0 0
        %1244 = vmatprep.subr.bf16.mxu0 0
        %1245 = vmatpush1.bf16.msra.mxu0 0
        %1246 = vmatprep.subr.bf16.mxu0 0
        %1247 = vmatpush1.bf16.msra.mxu0 0
        %1248 = vmatprep.subr.bf16.mxu0 0
        %1249 = vmatpush1.bf16.msra.mxu0 0
        %1250 = vmatprep.subr.bf16.mxu0 0
        %1251 = vmatpush1.bf16.msra.mxu0 0
        %1252 = vmatprep.subr.bf16.mxu0 0
        %1253 = vmatpush1.bf16.msra.mxu0 0
        %1254 = vmatprep.subr.bf16.mxu0 0
        %1255 = vmatpush1.bf16.msra.mxu0 0
        %1256 = vmatprep.subr.bf16.mxu0 0
        %1257 = vmatpush1.bf16.msra.mxu0 0
        %1258 = vmatprep.subr.bf16.mxu0 0
        %1259 = vmatpush1.bf16.msra.mxu0 0
        %1260 = vmatprep.subr.bf16.mxu0 0
        %1261 = vmatpush1.bf16.msra.mxu0 0
        %1262 = vmatprep.subr.bf16.mxu0 0
        %1263 = vmatpush1.bf16.msra.mxu0 0
        %1264 = vmatprep.subr.bf16.mxu0 0
        %1265 = vmatpush1.bf16.msra.mxu0 0
        %1266 = vmatprep.mubr.bf16.mxu0 0
        %1267 = vmatmul.mubr.bf16.gmra.mrb[0].mxu0 %v1229
        %v1268 = vpop.f32.mrb[0].mxu0
        %v1269 = vadd.f32 0.0, %v1268
        %v1270 = vpop.f32.mrb[0].mxu0
        %v1271 = vadd.f32 0.0, %v1270
        %v1272 = vpop.f32.mrb[0].mxu0
        %v1273 = vadd.f32 0.0, %v1272
        %v1274 = vpop.f32.mrb[0].mxu0
        %v1275 = vadd.f32 0.0, %v1274
        %1276 = vmatprep.mubr.bf16.mxu0 0
        %1277 = vmatmul.mubr.bf16.gmra.mrb[0].mxu0 %v1232
        %v1278 = vpop.f32.mrb[0].mxu0
        %v1279 = vadd.f32 0.0, %v1278
        %v1280 = vpop.f32.mrb[0].mxu0
        %v1281 = vadd.f32 0.0, %v1280
        %v1282 = vpop.f32.mrb[0].mxu0
        %v1283 = vadd.f32 0.0, %v1282
        %v1284 = vpop.f32.mrb[0].mxu0
        %v1285 = vadd.f32 0.0, %v1284
        %1286 = vdwg.mxu0
        %v1287 = vld [vmem:[%s5] sm:$0xff]
        %v1288 = vld [vmem:[%s5 + $0x8] sm:$0xff]
        %v1289 = vld [vmem:[%s5 + $0x10] sm:$0xff]
        %v1290 = vld [vmem:[%s5 + $0x18] sm:$0xff]
        %1292 = vset.pattern.permute.xlu0 0
        %1293 = vperm.xlu0 %1292, %v1287
        %v1294 = vpop.permute.xlu0 %1293
        %1297 = vset.pattern.permute.xlu0 0
        %1298 = vperm.xlu0 %1297, %v1288
        %v1299 = vpop.permute.xlu0 %1298
        %1302 = vset.pattern.permute.xlu0 0
        %1303 = vperm.xlu0 %1302, %v1289
        %v1304 = vpop.permute.xlu0 %1303
        %1307 = vset.pattern.permute.xlu0 0
        %1308 = vperm.xlu0 %1307, %v1290
        %v1309 = vpop.permute.xlu0 %1308
        %v1311 = vmul.f32 %v1269, %v1294
        %v1312 = vmul.f32 %v1271, %v1294
        %v1313 = vmul.f32 %v1273, %v1299
        %v1314 = vmul.f32 %v1275, %v1299
        %v1315 = vmul.f32 %v1279, %v1304
        %v1316 = vmul.f32 %v1281, %v1304
        %v1317 = vmul.f32 %v1283, %v1309
        %v1318 = vmul.f32 %v1285, %v1309
        %v1319 = vld [vmem:[%s6] sm:$0xff]
        %v1320 = vld [vmem:[%s6 + $0x8] sm:$0xff]
        %v1321 = vld [vmem:[%s6 + $0x10] sm:$0xff]
        %v1322 = vld [vmem:[%s6 + $0x18] sm:$0xff]
        %1324 = vset.pattern.permute.xlu0 0
        %1325 = vperm.xlu0 %1324, %v1319
        %v1326 = vpop.permute.xlu0 %1325
        %1329 = vset.pattern.permute.xlu0 0
        %1330 = vperm.xlu0 %1329, %v1320
        %v1331 = vpop.permute.xlu0 %1330
        %1334 = vset.pattern.permute.xlu0 0
        %1335 = vperm.xlu0 %1334, %v1321
        %v1336 = vpop.permute.xlu0 %1335
        %1339 = vset.pattern.permute.xlu0 0
        %1340 = vperm.xlu0 %1339, %v1322
        %v1341 = vpop.permute.xlu0 %1340
        %v1343 = vadd.f32 %v1311, %v1326
        %v1344 = vadd.f32 %v1312, %v1326
        %v1345 = vadd.f32 %v1313, %v1331
        %v1346 = vadd.f32 %v1314, %v1331
        %v1347 = vadd.f32 %v1315, %v1336
        %v1348 = vadd.f32 %v1316, %v1336
        %v1349 = vadd.f32 %v1317, %v1341
        %v1350 = vadd.f32 %v1318, %v1341
        %v1351 = vmax.f32 %v1343, 0.0
        %v1352 = vmax.f32 %v1344, 0.0
        %v1353 = vmax.f32 %v1345, 0.0
        %v1354 = vmax.f32 %v1346, 0.0
        %v1355 = vmax.f32 %v1347, 0.0
        %v1356 = vmax.f32 %v1348, 0.0
        %v1357 = vmax.f32 %v1349, 0.0
        %v1358 = vmax.f32 %v1350, 0.0
        %1359 = vrot.lane.b32.xlu0 %v1351, 1
        %v1360 = vpop.permute.xlu0 %1359
        %1361 = vrot.lane.b32.xlu0 %v1353, 1
        %v1362 = vpop.permute.xlu0 %1361
        %1363 = vrot.lane.b32.xlu0 %v1355, 1
        %v1364 = vpop.permute.xlu0 %1363
        %1365 = vrot.lane.b32.xlu0 %v1357, 1
        %v1366 = vpop.permute.xlu0 %1365
        %1367 = vrot.lane.b32.xlu0 %v1352, 1
        %v1368 = vpop.permute.xlu0 %1367
        %1369 = vrot.lane.b32.xlu0 %v1354, 1
        %v1370 = vpop.permute.xlu0 %1369
        %1371 = vrot.lane.b32.xlu0 %v1356, 1
        %v1372 = vpop.permute.xlu0 %1371
        %1373 = vrot.lane.b32.xlu0 %v1358, 1
        %v1374 = vpop.permute.xlu0 %1373
        %v1375 = vsel %vm464, %v1360, %v1368
        %v1376 = vsel %vm464, %v1362, %v1370
        %v1377 = vsel %vm464, %v1364, %v1372
        %v1378 = vsel %vm464, %v1366, %v1374
        %v1379 = vsel %vm464, %v1368, %v1360
        %v1380 = vsel %vm464, %v1370, %v1362
        %v1381 = vsel %vm464, %v1372, %v1364
        %v1382 = vsel %vm464, %v1374, %v1366
        %v1383 = vsel %vm1171, %v1379, 0.0
        %v1384 = vsel %vm1172, %v1375, 0.0
        %v1385 = vsel %vm1171, %v1380, 0.0
        %v1386 = vsel %vm1172, %v1376, 0.0
        %v1387 = vsel %vm1171, %v1381, 0.0
        %v1388 = vsel %vm1172, %v1377, 0.0
        %v1389 = vsel %vm1171, %v1382, 0.0
        %v1390 = vsel %vm1172, %v1378, 0.0
        %1391 = vrot.lane.b32.xlu0 %v1351, 127
        %v1392 = vpop.permute.xlu0 %1391
        %1393 = vrot.lane.b32.xlu0 %v1353, 127
        %v1394 = vpop.permute.xlu0 %1393
        %1395 = vrot.lane.b32.xlu0 %v1355, 127
        %v1396 = vpop.permute.xlu0 %1395
        %1397 = vrot.lane.b32.xlu0 %v1357, 127
        %v1398 = vpop.permute.xlu0 %1397
        %1399 = vrot.lane.b32.xlu0 %v1352, 127
        %v1400 = vpop.permute.xlu0 %1399
        %1401 = vrot.lane.b32.xlu0 %v1354, 127
        %v1402 = vpop.permute.xlu0 %1401
        %1403 = vrot.lane.b32.xlu0 %v1356, 127
        %v1404 = vpop.permute.xlu0 %1403
        %1405 = vrot.lane.b32.xlu0 %v1358, 127
        %v1406 = vpop.permute.xlu0 %1405
        %v1407 = vsel %vm485, %v1392, %v1400
        %v1408 = vsel %vm485, %v1394, %v1402
        %v1409 = vsel %vm485, %v1396, %v1404
        %v1410 = vsel %vm485, %v1398, %v1406
        %v1411 = vsel %vm485, %v1400, %v1392
        %v1412 = vsel %vm485, %v1402, %v1394
        %v1413 = vsel %vm485, %v1404, %v1396
        %v1414 = vsel %vm485, %v1406, %v1398
        %v1415 = vsel %vm1189, %v1407, 0.0
        %v1416 = vsel %vm1190, %v1411, 0.0
        %v1417 = vsel %vm1189, %v1408, 0.0
        %v1418 = vsel %vm1190, %v1412, 0.0
        %v1419 = vsel %vm1189, %v1409, 0.0
        %v1420 = vsel %vm1190, %v1413, 0.0
        %v1421 = vsel %vm1189, %v1410, 0.0
        %v1422 = vsel %vm1190, %v1414, 0.0
        %v1423 = vpack.c.bf16 %v1385, %v1383
        %v1424 = vpack.c.bf16 %v1386, %v1384
        %v1425 = vpack.c.bf16 %v1389, %v1387
        %v1426 = vpack.c.bf16 %v1390, %v1388
        %v1427 = vpack.c.bf16 %v1353, %v1351
        %v1428 = vpack.c.bf16 %v1354, %v1352
        %v1429 = vpack.c.bf16 %v1357, %v1355
        %v1430 = vpack.c.bf16 %v1358, %v1356
        %v1431 = vpack.c.bf16 %v1417, %v1415
        %v1432 = vpack.c.bf16 %v1418, %v1416
        %v1433 = vpack.c.bf16 %v1421, %v1419
        %v1434 = vpack.c.bf16 %v1422, %v1420
        %v1435 = vld [vmem:[%s7] sm:$0xf]
        %v1436 = vld [vmem:[%s7 + $0x4] sm:$0xf]
        %v1437 = vld [vmem:[%s7 + $0x8] sm:$0xf]
        %v1438 = vld [vmem:[%s7 + $0xc] sm:$0xf]
        %v1439 = vld [vmem:[%s7 + $0x10] sm:$0xf]
        %v1440 = vld [vmem:[%s7 + $0x14] sm:$0xf]
        %v1441 = vld [vmem:[%s7 + $0x18] sm:$0xf]
        %v1442 = vld [vmem:[%s7 + $0x1c] sm:$0xf]
        %v1451 = vunpack.c.l.b16 %v1435
        %v1452 = vunpack.c.l.b16 %v1436
        %v1453 = vunpack.c.l.b16 %v1437
        %v1454 = vunpack.c.l.b16 %v1438
        %v1455 = vunpack.c.l.b16 %v1439
        %v1456 = vunpack.c.l.b16 %v1440
        %v1457 = vunpack.c.l.b16 %v1441
        %v1458 = vunpack.c.l.b16 %v1442
        %v1459 = vpack.c.b16 %v1452, %v1451
        %v1460 = vpack.c.b16 %v1454, %v1453
        %v1461 = vpack.c.b16 %v1456, %v1455
        %v1462 = vpack.c.b16 %v1458, %v1457
        %vm1463 = vcmask 785408
        %v1465 = vsel %vm1463, %v1459, 0
        %v1468 = vsel %vm1463, %v1460, 0
        %v1471 = vsel %vm1463, %v1461, 0
        %v1474 = vsel %vm1463, %v1462, 0
        %1476 = vmatprep.subr.bf16.mxu0 %v1424
        %1477 = vmatpush1.bf16.msra.mxu0 %v1423
        %1478 = vmatprep.subr.bf16.mxu0 %v1426
        %1479 = vmatpush1.bf16.msra.mxu0 %v1425
        %1480 = vmatprep.subr.bf16.mxu0 %v1428
        %1481 = vmatpush1.bf16.msra.mxu0 %v1427
        %1482 = vmatprep.subr.bf16.mxu0 %v1430
        %1483 = vmatpush1.bf16.msra.mxu0 %v1429
        %1484 = vmatprep.subr.bf16.mxu0 %v1432
        %1485 = vmatpush1.bf16.msra.mxu0 %v1431
        %1486 = vmatprep.subr.bf16.mxu0 %v1434
        %1487 = vmatpush1.bf16.msra.mxu0 %v1433
        %1488 = vmatprep.subr.bf16.mxu0 0
        %1489 = vmatpush1.bf16.msra.mxu0 0
        %1490 = vmatprep.subr.bf16.mxu0 0
        %1491 = vmatpush1.bf16.msra.mxu0 0
        %1492 = vmatprep.subr.bf16.mxu0 0
        %1493 = vmatpush1.bf16.msra.mxu0 0
        %1494 = vmatprep.subr.bf16.mxu0 0
        %1495 = vmatpush1.bf16.msra.mxu0 0
        %1496 = vmatprep.subr.bf16.mxu0 0
        %1497 = vmatpush1.bf16.msra.mxu0 0
        %1498 = vmatprep.subr.bf16.mxu0 0
        %1499 = vmatpush1.bf16.msra.mxu0 0
        %1500 = vmatprep.subr.bf16.mxu0 0
        %1501 = vmatpush1.bf16.msra.mxu0 0
        %1502 = vmatprep.subr.bf16.mxu0 0
        %1503 = vmatpush1.bf16.msra.mxu0 0
        %1504 = vmatprep.subr.bf16.mxu0 0
        %1505 = vmatpush1.bf16.msra.mxu0 0
        %1506 = vmatprep.subr.bf16.mxu0 0
        %1507 = vmatpush1.bf16.msra.mxu0 0
        %1508 = vmatprep.mubr.bf16.mxu0 0
        %1509 = vmatmul.mubr.bf16.gmra.mrb[0].mxu0 %v1465
        %v1510 = vpop.f32.mrb[0].mxu0
        %v1511 = vadd.f32 0.0, %v1510
        %v1512 = vpop.f32.mrb[0].mxu0
        %v1513 = vadd.f32 0.0, %v1512
        %v1514 = vpop.f32.mrb[0].mxu0
        %v1515 = vadd.f32 0.0, %v1514
        %v1516 = vpop.f32.mrb[0].mxu0
        %v1517 = vadd.f32 0.0, %v1516
        %1518 = vmatprep.mubr.bf16.mxu0 0
        %1519 = vmatmul.mubr.bf16.gmra.mrb[0].mxu0 %v1468
        %v1520 = vpop.f32.mrb[0].mxu0
        %v1521 = vadd.f32 0.0, %v1520
        %v1522 = vpop.f32.mrb[0].mxu0
        %v1523 = vadd.f32 0.0, %v1522
        %v1524 = vpop.f32.mrb[0].mxu0
        %v1525 = vadd.f32 0.0, %v1524
        %v1526 = vpop.f32.mrb[0].mxu0
        %v1527 = vadd.f32 0.0, %v1526
        %1528 = vmatprep.mubr.bf16.mxu0 0
        %1529 = vmatmul.mubr.bf16.gmra.mrb[0].mxu0 %v1471
        %v1530 = vpop.f32.mrb[0].mxu0
        %v1531 = vadd.f32 0.0, %v1530
        %v1532 = vpop.f32.mrb[0].mxu0
        %v1533 = vadd.f32 0.0, %v1532
        %v1534 = vpop.f32.mrb[0].mxu0
        %v1535 = vadd.f32 0.0, %v1534
        %v1536 = vpop.f32.mrb[0].mxu0
        %v1537 = vadd.f32 0.0, %v1536
        %1538 = vmatprep.mubr.bf16.mxu0 0
        %1539 = vmatmul.mubr.bf16.gmra.mrb[0].mxu0 %v1474
        %v1540 = vpop.f32.mrb[0].mxu0
        %v1541 = vadd.f32 0.0, %v1540
        %v1542 = vpop.f32.mrb[0].mxu0
        %v1543 = vadd.f32 0.0, %v1542
        %v1544 = vpop.f32.mrb[0].mxu0
        %v1545 = vadd.f32 0.0, %v1544
        %v1546 = vpop.f32.mrb[0].mxu0
        %v1547 = vadd.f32 0.0, %v1546
        %1548 = vdwg.mxu0
        %v1549 = vld [vmem:[%s8] sm:$0xff]
        %v1550 = vld [vmem:[%s8 + $0x8] sm:$0xff]
        %v1551 = vld [vmem:[%s8 + $0x10] sm:$0xff]
        %v1552 = vld [vmem:[%s8 + $0x18] sm:$0xff]
        %v1553 = vld [vmem:[%s8 + $0x20] sm:$0xff]
        %v1554 = vld [vmem:[%s8 + $0x28] sm:$0xff]
        %v1555 = vld [vmem:[%s8 + $0x30] sm:$0xff]
        %v1556 = vld [vmem:[%s8 + $0x38] sm:$0xff]
        %1558 = vset.pattern.permute.xlu0 0
        %1559 = vperm.xlu0 %1558, %v1549
        %v1560 = vpop.permute.xlu0 %1559
        %1563 = vset.pattern.permute.xlu0 0
        %1564 = vperm.xlu0 %1563, %v1550
        %v1565 = vpop.permute.xlu0 %1564
        %1568 = vset.pattern.permute.xlu0 0
        %1569 = vperm.xlu0 %1568, %v1551
        %v1570 = vpop.permute.xlu0 %1569
        %1573 = vset.pattern.permute.xlu0 0
        %1574 = vperm.xlu0 %1573, %v1552
        %v1575 = vpop.permute.xlu0 %1574
        %1578 = vset.pattern.permute.xlu0 0
        %1579 = vperm.xlu0 %1578, %v1553
        %v1580 = vpop.permute.xlu0 %1579
        %1583 = vset.pattern.permute.xlu0 0
        %1584 = vperm.xlu0 %1583, %v1554
        %v1585 = vpop.permute.xlu0 %1584
        %1588 = vset.pattern.permute.xlu0 0
        %1589 = vperm.xlu0 %1588, %v1555
        %v1590 = vpop.permute.xlu0 %1589
        %1593 = vset.pattern.permute.xlu0 0
        %1594 = vperm.xlu0 %1593, %v1556
        %v1595 = vpop.permute.xlu0 %1594
        %v1597 = vmul.f32 %v1511, %v1560
        %v1598 = vmul.f32 %v1513, %v1560
        %v1599 = vmul.f32 %v1515, %v1565
        %v1600 = vmul.f32 %v1517, %v1565
        %v1601 = vmul.f32 %v1521, %v1570
        %v1602 = vmul.f32 %v1523, %v1570
        %v1603 = vmul.f32 %v1525, %v1575
        %v1604 = vmul.f32 %v1527, %v1575
        %v1605 = vmul.f32 %v1531, %v1580
        %v1606 = vmul.f32 %v1533, %v1580
        %v1607 = vmul.f32 %v1535, %v1585
        %v1608 = vmul.f32 %v1537, %v1585
        %v1609 = vmul.f32 %v1541, %v1590
        %v1610 = vmul.f32 %v1543, %v1590
        %v1611 = vmul.f32 %v1545, %v1595
        %v1612 = vmul.f32 %v1547, %v1595
        %v1613 = vld [vmem:[%s9] sm:$0xff]
        %v1614 = vld [vmem:[%s9 + $0x8] sm:$0xff]
        %v1615 = vld [vmem:[%s9 + $0x10] sm:$0xff]
        %v1616 = vld [vmem:[%s9 + $0x18] sm:$0xff]
        %v1617 = vld [vmem:[%s9 + $0x20] sm:$0xff]
        %v1618 = vld [vmem:[%s9 + $0x28] sm:$0xff]
        %v1619 = vld [vmem:[%s9 + $0x30] sm:$0xff]
        %v1620 = vld [vmem:[%s9 + $0x38] sm:$0xff]
        %1622 = vset.pattern.permute.xlu0 0
        %1623 = vperm.xlu0 %1622, %v1613
        %v1624 = vpop.permute.xlu0 %1623
        %1627 = vset.pattern.permute.xlu0 0
        %1628 = vperm.xlu0 %1627, %v1614
        %v1629 = vpop.permute.xlu0 %1628
        %1632 = vset.pattern.permute.xlu0 0
        %1633 = vperm.xlu0 %1632, %v1615
        %v1634 = vpop.permute.xlu0 %1633
        %1637 = vset.pattern.permute.xlu0 0
        %1638 = vperm.xlu0 %1637, %v1616
        %v1639 = vpop.permute.xlu0 %1638
        %1642 = vset.pattern.permute.xlu0 0
        %1643 = vperm.xlu0 %1642, %v1617
        %v1644 = vpop.permute.xlu0 %1643
        %1647 = vset.pattern.permute.xlu0 0
        %1648 = vperm.xlu0 %1647, %v1618
        %v1649 = vpop.permute.xlu0 %1648
        %1652 = vset.pattern.permute.xlu0 0
        %1653 = vperm.xlu0 %1652, %v1619
        %v1654 = vpop.permute.xlu0 %1653
        %1657 = vset.pattern.permute.xlu0 0
        %1658 = vperm.xlu0 %1657, %v1620
        %v1659 = vpop.permute.xlu0 %1658
        %v1661 = vadd.f32 %v1597, %v1624
        %v1662 = vadd.f32 %v1598, %v1624
        %v1663 = vadd.f32 %v1599, %v1629
        %v1664 = vadd.f32 %v1600, %v1629
        %v1665 = vadd.f32 %v1601, %v1634
        %v1666 = vadd.f32 %v1602, %v1634
        %v1667 = vadd.f32 %v1603, %v1639
        %v1668 = vadd.f32 %v1604, %v1639
        %v1669 = vadd.f32 %v1605, %v1644
        %v1670 = vadd.f32 %v1606, %v1644
        %v1671 = vadd.f32 %v1607, %v1649
        %v1672 = vadd.f32 %v1608, %v1649
        %v1673 = vadd.f32 %v1609, %v1654
        %v1674 = vadd.f32 %v1610, %v1654
        %v1675 = vadd.f32 %v1611, %v1659
        %v1676 = vadd.f32 %v1612, %v1659
        %v1677 = vmax.f32 %v1661, 0.0
        %v1678 = vmax.f32 %v1662, 0.0
        %v1679 = vmax.f32 %v1663, 0.0
        %v1680 = vmax.f32 %v1664, 0.0
        %v1681 = vmax.f32 %v1665, 0.0
        %v1682 = vmax.f32 %v1666, 0.0
        %v1683 = vmax.f32 %v1667, 0.0
        %v1684 = vmax.f32 %v1668, 0.0
        %v1685 = vmax.f32 %v1669, 0.0
        %v1686 = vmax.f32 %v1670, 0.0
        %v1687 = vmax.f32 %v1671, 0.0
        %v1688 = vmax.f32 %v1672, 0.0
        %v1689 = vmax.f32 %v1673, 0.0
        %v1690 = vmax.f32 %v1674, 0.0
        %v1691 = vmax.f32 %v1675, 0.0
        %v1692 = vmax.f32 %v1676, 0.0
        %1693 = vrot.lane.b32.xlu0 %v1677, 1
        %v1694 = vpop.permute.xlu0 %1693
        %1695 = vrot.lane.b32.xlu0 %v1679, 1
        %v1696 = vpop.permute.xlu0 %1695
        %1697 = vrot.lane.b32.xlu0 %v1681, 1
        %v1698 = vpop.permute.xlu0 %1697
        %1699 = vrot.lane.b32.xlu0 %v1683, 1
        %v1700 = vpop.permute.xlu0 %1699
        %1701 = vrot.lane.b32.xlu0 %v1685, 1
        %v1702 = vpop.permute.xlu0 %1701
        %1703 = vrot.lane.b32.xlu0 %v1687, 1
        %v1704 = vpop.permute.xlu0 %1703
        %1705 = vrot.lane.b32.xlu0 %v1689, 1
        %v1706 = vpop.permute.xlu0 %1705
        %1707 = vrot.lane.b32.xlu0 %v1691, 1
        %v1708 = vpop.permute.xlu0 %1707
        %1709 = vrot.lane.b32.xlu0 %v1678, 1
        %v1710 = vpop.permute.xlu0 %1709
        %1711 = vrot.lane.b32.xlu0 %v1680, 1
        %v1712 = vpop.permute.xlu0 %1711
        %1713 = vrot.lane.b32.xlu0 %v1682, 1
        %v1714 = vpop.permute.xlu0 %1713
        %1715 = vrot.lane.b32.xlu0 %v1684, 1
        %v1716 = vpop.permute.xlu0 %1715
        %1717 = vrot.lane.b32.xlu0 %v1686, 1
        %v1718 = vpop.permute.xlu0 %1717
        %1719 = vrot.lane.b32.xlu0 %v1688, 1
        %v1720 = vpop.permute.xlu0 %1719
        %1721 = vrot.lane.b32.xlu0 %v1690, 1
        %v1722 = vpop.permute.xlu0 %1721
        %1723 = vrot.lane.b32.xlu0 %v1692, 1
        %v1724 = vpop.permute.xlu0 %1723
        %v1725 = vsel %vm464, %v1694, %v1710
        %v1726 = vsel %vm464, %v1696, %v1712
        %v1727 = vsel %vm464, %v1698, %v1714
        %v1728 = vsel %vm464, %v1700, %v1716
        %v1729 = vsel %vm464, %v1702, %v1718
        %v1730 = vsel %vm464, %v1704, %v1720
        %v1731 = vsel %vm464, %v1706, %v1722
        %v1732 = vsel %vm464, %v1708, %v1724
        %v1733 = vsel %vm464, %v1710, %v1694
        %v1734 = vsel %vm464, %v1712, %v1696
        %v1735 = vsel %vm464, %v1714, %v1698
        %v1736 = vsel %vm464, %v1716, %v1700
        %v1737 = vsel %vm464, %v1718, %v1702
        %v1738 = vsel %vm464, %v1720, %v1704
        %v1739 = vsel %vm464, %v1722, %v1706
        %v1740 = vsel %vm464, %v1724, %v1708
        %v1741 = vsel %vm1171, %v1733, 0.0
        %v1742 = vsel %vm1172, %v1725, 0.0
        %v1743 = vsel %vm1171, %v1734, 0.0
        %v1744 = vsel %vm1172, %v1726, 0.0
        %v1745 = vsel %vm1171, %v1735, 0.0
        %v1746 = vsel %vm1172, %v1727, 0.0
        %v1747 = vsel %vm1171, %v1736, 0.0
        %v1748 = vsel %vm1172, %v1728, 0.0
        %v1749 = vsel %vm1171, %v1737, 0.0
        %v1750 = vsel %vm1172, %v1729, 0.0
        %v1751 = vsel %vm1171, %v1738, 0.0
        %v1752 = vsel %vm1172, %v1730, 0.0
        %v1753 = vsel %vm1171, %v1739, 0.0
        %v1754 = vsel %vm1172, %v1731, 0.0
        %v1755 = vsel %vm1171, %v1740, 0.0
        %v1756 = vsel %vm1172, %v1732, 0.0
        %1757 = vrot.lane.b32.xlu0 %v1677, 127
        %v1758 = vpop.permute.xlu0 %1757
        %1759 = vrot.lane.b32.xlu0 %v1679, 127
        %v1760 = vpop.permute.xlu0 %1759
        %1761 = vrot.lane.b32.xlu0 %v1681, 127
        %v1762 = vpop.permute.xlu0 %1761
        %1763 = vrot.lane.b32.xlu0 %v1683, 127
        %v1764 = vpop.permute.xlu0 %1763
        %1765 = vrot.lane.b32.xlu0 %v1685, 127
        %v1766 = vpop.permute.xlu0 %1765
        %1767 = vrot.lane.b32.xlu0 %v1687, 127
        %v1768 = vpop.permute.xlu0 %1767
        %1769 = vrot.lane.b32.xlu0 %v1689, 127
        %v1770 = vpop.permute.xlu0 %1769
        %1771 = vrot.lane.b32.xlu0 %v1691, 127
        %v1772 = vpop.permute.xlu0 %1771
        %1773 = vrot.lane.b32.xlu0 %v1678, 127
        %v1774 = vpop.permute.xlu0 %1773
        %1775 = vrot.lane.b32.xlu0 %v1680, 127
        %v1776 = vpop.permute.xlu0 %1775
        %1777 = vrot.lane.b32.xlu0 %v1682, 127
        %v1778 = vpop.permute.xlu0 %1777
        %1779 = vrot.lane.b32.xlu0 %v1684, 127
        %v1780 = vpop.permute.xlu0 %1779
        %1781 = vrot.lane.b32.xlu0 %v1686, 127
        %v1782 = vpop.permute.xlu0 %1781
        %1783 = vrot.lane.b32.xlu0 %v1688, 127
        %v1784 = vpop.permute.xlu0 %1783
        %1785 = vrot.lane.b32.xlu0 %v1690, 127
        %v1786 = vpop.permute.xlu0 %1785
        %1787 = vrot.lane.b32.xlu0 %v1692, 127
        %v1788 = vpop.permute.xlu0 %1787
        %v1789 = vsel %vm485, %v1758, %v1774
        %v1790 = vsel %vm485, %v1760, %v1776
        %v1791 = vsel %vm485, %v1762, %v1778
        %v1792 = vsel %vm485, %v1764, %v1780
        %v1793 = vsel %vm485, %v1766, %v1782
        %v1794 = vsel %vm485, %v1768, %v1784
        %v1795 = vsel %vm485, %v1770, %v1786
        %v1796 = vsel %vm485, %v1772, %v1788
        %v1797 = vsel %vm485, %v1774, %v1758
        %v1798 = vsel %vm485, %v1776, %v1760
        %v1799 = vsel %vm485, %v1778, %v1762
        %v1800 = vsel %vm485, %v1780, %v1764
        %v1801 = vsel %vm485, %v1782, %v1766
        %v1802 = vsel %vm485, %v1784, %v1768
        %v1803 = vsel %vm485, %v1786, %v1770
        %v1804 = vsel %vm485, %v1788, %v1772
        %v1805 = vsel %vm1189, %v1789, 0.0
        %v1806 = vsel %vm1190, %v1797, 0.0
        %v1807 = vsel %vm1189, %v1790, 0.0
        %v1808 = vsel %vm1190, %v1798, 0.0
        %v1809 = vsel %vm1189, %v1791, 0.0
        %v1810 = vsel %vm1190, %v1799, 0.0
        %v1811 = vsel %vm1189, %v1792, 0.0
        %v1812 = vsel %vm1190, %v1800, 0.0
        %v1813 = vsel %vm1189, %v1793, 0.0
        %v1814 = vsel %vm1190, %v1801, 0.0
        %v1815 = vsel %vm1189, %v1794, 0.0
        %v1816 = vsel %vm1190, %v1802, 0.0
        %v1817 = vsel %vm1189, %v1795, 0.0
        %v1818 = vsel %vm1190, %v1803, 0.0
        %v1819 = vsel %vm1189, %v1796, 0.0
        %v1820 = vsel %vm1190, %v1804, 0.0
        %v1821 = vpack.c.bf16 %v1743, %v1741
        %v1822 = vpack.c.bf16 %v1744, %v1742
        %v1823 = vpack.c.bf16 %v1747, %v1745
        %v1824 = vpack.c.bf16 %v1748, %v1746
        %v1825 = vpack.c.bf16 %v1751, %v1749
        %v1826 = vpack.c.bf16 %v1752, %v1750
        %v1827 = vpack.c.bf16 %v1755, %v1753
        %v1828 = vpack.c.bf16 %v1756, %v1754
        %v1829 = vpack.c.bf16 %v1679, %v1677
        %v1830 = vpack.c.bf16 %v1680, %v1678
        %v1831 = vpack.c.bf16 %v1683, %v1681
        %v1832 = vpack.c.bf16 %v1684, %v1682
        %v1833 = vpack.c.bf16 %v1687, %v1685
        %v1834 = vpack.c.bf16 %v1688, %v1686
        %v1835 = vpack.c.bf16 %v1691, %v1689
        %v1836 = vpack.c.bf16 %v1692, %v1690
        %v1837 = vpack.c.bf16 %v1807, %v1805
        %v1838 = vpack.c.bf16 %v1808, %v1806
        %v1839 = vpack.c.bf16 %v1811, %v1809
        %v1840 = vpack.c.bf16 %v1812, %v1810
        %v1841 = vpack.c.bf16 %v1815, %v1813
        %v1842 = vpack.c.bf16 %v1816, %v1814
        %v1843 = vpack.c.bf16 %v1819, %v1817
        %v1844 = vpack.c.bf16 %v1820, %v1818
        %v1845 = vld [vmem:[%s10] sm:$0xff]
        %v1846 = vld [vmem:[%s10 + $0x8] sm:$0xff]
        %v1847 = vld [vmem:[%s10 + $0x10] sm:$0xff]
        %v1848 = vld [vmem:[%s10 + $0x18] sm:$0xff]
        %v1849 = vld [vmem:[%s10 + $0x20] sm:$0xff]
        %v1850 = vld [vmem:[%s10 + $0x28] sm:$0xff]
        %v1851 = vld [vmem:[%s10 + $0x30] sm:$0xff]
        %v1852 = vld [vmem:[%s10 + $0x38] sm:$0xff]
        %v1853 = vld [vmem:[%s10 + $0x40] sm:$0xff]
        %v1854 = vld [vmem:[%s10 + $0x48] sm:$0xff]
        %v1855 = vld [vmem:[%s10 + $0x50] sm:$0xff]
        %v1856 = vld [vmem:[%s10 + $0x58] sm:$0xff]
        %v1857 = vld [vmem:[%s10 + $0x60] sm:$0xff]
        %v1858 = vld [vmem:[%s10 + $0x68] sm:$0xff]
        %v1859 = vld [vmem:[%s10 + $0x70] sm:$0xff]
        %v1860 = vld [vmem:[%s10 + $0x78] sm:$0xff]
        %v1877 = vunpack.c.l.b16 %v1845
        %v1878 = vunpack.c.h.b16 %v1845
        %v1879 = vunpack.c.l.b16 %v1846
        %v1880 = vunpack.c.h.b16 %v1846
        %v1881 = vunpack.c.l.b16 %v1847
        %v1882 = vunpack.c.h.b16 %v1847
        %v1883 = vunpack.c.l.b16 %v1848
        %v1884 = vunpack.c.h.b16 %v1848
        %v1885 = vunpack.c.l.b16 %v1849
        %v1886 = vunpack.c.h.b16 %v1849
        %v1887 = vunpack.c.l.b16 %v1850
        %v1888 = vunpack.c.h.b16 %v1850
        %v1889 = vunpack.c.l.b16 %v1851
        %v1890 = vunpack.c.h.b16 %v1851
        %v1891 = vunpack.c.l.b16 %v1852
        %v1892 = vunpack.c.h.b16 %v1852
        %v1893 = vunpack.c.l.b16 %v1853
        %v1894 = vunpack.c.h.b16 %v1853
        %v1895 = vunpack.c.l.b16 %v1854
        %v1896 = vunpack.c.h.b16 %v1854
        %v1897 = vunpack.c.l.b16 %v1855
        %v1898 = vunpack.c.h.b16 %v1855
        %v1899 = vunpack.c.l.b16 %v1856
        %v1900 = vunpack.c.h.b16 %v1856
        %v1901 = vunpack.c.l.b16 %v1857
        %v1902 = vunpack.c.h.b16 %v1857
        %v1903 = vunpack.c.l.b16 %v1858
        %v1904 = vunpack.c.h.b16 %v1858
        %v1905 = vunpack.c.l.b16 %v1859
        %v1906 = vunpack.c.h.b16 %v1859
        %v1907 = vunpack.c.l.b16 %v1860
        %v1908 = vunpack.c.h.b16 %v1860
        %v1909 = vpack.c.b16 %v1879, %v1877
        %v1910 = vpack.c.b16 %v1880, %v1878
        %v1911 = vpack.c.b16 %v1883, %v1881
        %v1912 = vpack.c.b16 %v1884, %v1882
        %v1913 = vpack.c.b16 %v1887, %v1885
        %v1914 = vpack.c.b16 %v1888, %v1886
        %v1915 = vpack.c.b16 %v1891, %v1889
        %v1916 = vpack.c.b16 %v1892, %v1890
        %v1917 = vpack.c.b16 %v1895, %v1893
        %v1918 = vpack.c.b16 %v1896, %v1894
        %v1919 = vpack.c.b16 %v1899, %v1897
        %v1920 = vpack.c.b16 %v1900, %v1898
        %v1921 = vpack.c.b16 %v1903, %v1901
        %v1922 = vpack.c.b16 %v1904, %v1902
        %v1923 = vpack.c.b16 %v1907, %v1905
        %v1924 = vpack.c.b16 %v1908, %v1906
        %vm1933 = vcmask 523264
        %v1935 = vsel %vm1933, %v1910, 0
        %v1938 = vsel %vm1933, %v1912, 0
        %v1941 = vsel %vm1933, %v1914, 0
        %v1944 = vsel %vm1933, %v1916, 0
        %v1947 = vsel %vm1933, %v1918, 0
        %v1950 = vsel %vm1933, %v1920, 0
        %v1953 = vsel %vm1933, %v1922, 0
        %v1956 = vsel %vm1933, %v1924, 0
        %1958 = vmatprep.subr.bf16.mxu0 %v1822
        %1959 = vmatpush1.bf16.msra.mxu0 %v1821
        %1960 = vmatprep.subr.bf16.mxu0 %v1824
        %1961 = vmatpush1.bf16.msra.mxu0 %v1823
        %1962 = vmatprep.subr.bf16.mxu0 %v1826
        %1963 = vmatpush1.bf16.msra.mxu0 %v1825
        %1964 = vmatprep.subr.bf16.mxu0 %v1828
        %1965 = vmatpush1.bf16.msra.mxu0 %v1827
        %1966 = vmatprep.subr.bf16.mxu0 %v1830
        %1967 = vmatpush1.bf16.msra.mxu0 %v1829
        %1968 = vmatprep.subr.bf16.mxu0 %v1832
        %1969 = vmatpush1.bf16.msra.mxu0 %v1831
        %1970 = vmatprep.subr.bf16.mxu0 %v1834
        %1971 = vmatpush1.bf16.msra.mxu0 %v1833
        %1972 = vmatprep.subr.bf16.mxu0 %v1836
        %1973 = vmatpush1.bf16.msra.mxu0 %v1835
        %1974 = vmatprep.subr.bf16.mxu0 %v1838
        %1975 = vmatpush1.bf16.msra.mxu0 %v1837
        %1976 = vmatprep.subr.bf16.mxu0 %v1840
        %1977 = vmatpush1.bf16.msra.mxu0 %v1839
        %1978 = vmatprep.subr.bf16.mxu0 %v1842
        %1979 = vmatpush1.bf16.msra.mxu0 %v1841
        %1980 = vmatprep.subr.bf16.mxu0 %v1844
        %1981 = vmatpush1.bf16.msra.mxu0 %v1843
        %1982 = vmatprep.subr.bf16.mxu0 0
        %1983 = vmatpush1.bf16.msra.mxu0 0
        %1984 = vmatprep.subr.bf16.mxu0 0
        %1985 = vmatpush1.bf16.msra.mxu0 0
        %1986 = vmatprep.subr.bf16.mxu0 0
        %1987 = vmatpush1.bf16.msra.mxu0 0
        %1988 = vmatprep.subr.bf16.mxu0 0
        %1989 = vmatpush1.bf16.msra.mxu0 0
        %1990 = vmatprep.mubr.bf16.mxu0 %v1935
        %1991 = vmatmul.mubr.bf16.gmra.mrb[0].mxu0 %v1909
        %v1992 = vpop.f32.mrb[0].mxu0
        %v1993 = vadd.f32 0.0, %v1992
        %v1994 = vpop.f32.mrb[0].mxu0
        %v1995 = vadd.f32 0.0, %v1994
        %v1996 = vpop.f32.mrb[0].mxu0
        %v1997 = vadd.f32 0.0, %v1996
        %v1998 = vpop.f32.mrb[0].mxu0
        %v1999 = vadd.f32 0.0, %v1998
        %2000 = vmatprep.mubr.bf16.mxu0 %v1938
        %2001 = vmatmul.mubr.bf16.gmra.mrb[0].mxu0 %v1911
        %v2002 = vpop.f32.mrb[0].mxu0
        %v2003 = vadd.f32 0.0, %v2002
        %v2004 = vpop.f32.mrb[0].mxu0
        %v2005 = vadd.f32 0.0, %v2004
        %v2006 = vpop.f32.mrb[0].mxu0
        %v2007 = vadd.f32 0.0, %v2006
        %v2008 = vpop.f32.mrb[0].mxu0
        %v2009 = vadd.f32 0.0, %v2008
        %2010 = vmatprep.mubr.bf16.mxu0 %v1941
        %2011 = vmatmul.mubr.bf16.gmra.mrb[0].mxu0 %v1913
        %v2012 = vpop.f32.mrb[0].mxu0
        %v2013 = vadd.f32 0.0, %v2012
        %v2014 = vpop.f32.mrb[0].mxu0
        %v2015 = vadd.f32 0.0, %v2014
        %v2016 = vpop.f32.mrb[0].mxu0
        %v2017 = vadd.f32 0.0, %v2016
        %v2018 = vpop.f32.mrb[0].mxu0
        %v2019 = vadd.f32 0.0, %v2018
        %2020 = vmatprep.mubr.bf16.mxu0 %v1944
        %2021 = vmatmul.mubr.bf16.gmra.mrb[0].mxu0 %v1915
        %v2022 = vpop.f32.mrb[0].mxu0
        %v2023 = vadd.f32 0.0, %v2022
        %v2024 = vpop.f32.mrb[0].mxu0
        %v2025 = vadd.f32 0.0, %v2024
        %v2026 = vpop.f32.mrb[0].mxu0
        %v2027 = vadd.f32 0.0, %v2026
        %v2028 = vpop.f32.mrb[0].mxu0
        %v2029 = vadd.f32 0.0, %v2028
        %2030 = vmatprep.mubr.bf16.mxu0 %v1947
        %2031 = vmatmul.mubr.bf16.gmra.mrb[0].mxu0 %v1917
        %v2032 = vpop.f32.mrb[0].mxu0
        %v2033 = vadd.f32 0.0, %v2032
        %v2034 = vpop.f32.mrb[0].mxu0
        %v2035 = vadd.f32 0.0, %v2034
        %v2036 = vpop.f32.mrb[0].mxu0
        %v2037 = vadd.f32 0.0, %v2036
        %v2038 = vpop.f32.mrb[0].mxu0
        %v2039 = vadd.f32 0.0, %v2038
        %2040 = vmatprep.mubr.bf16.mxu0 %v1950
        %2041 = vmatmul.mubr.bf16.gmra.mrb[0].mxu0 %v1919
        %v2042 = vpop.f32.mrb[0].mxu0
        %v2043 = vadd.f32 0.0, %v2042
        %v2044 = vpop.f32.mrb[0].mxu0
        %v2045 = vadd.f32 0.0, %v2044
        %v2046 = vpop.f32.mrb[0].mxu0
        %v2047 = vadd.f32 0.0, %v2046
        %v2048 = vpop.f32.mrb[0].mxu0
        %v2049 = vadd.f32 0.0, %v2048
        %2050 = vmatprep.mubr.bf16.mxu0 %v1953
        %2051 = vmatmul.mubr.bf16.gmra.mrb[0].mxu0 %v1921
        %v2052 = vpop.f32.mrb[0].mxu0
        %v2053 = vadd.f32 0.0, %v2052
        %v2054 = vpop.f32.mrb[0].mxu0
        %v2055 = vadd.f32 0.0, %v2054
        %v2056 = vpop.f32.mrb[0].mxu0
        %v2057 = vadd.f32 0.0, %v2056
        %v2058 = vpop.f32.mrb[0].mxu0
        %v2059 = vadd.f32 0.0, %v2058
        %2060 = vmatprep.mubr.bf16.mxu0 %v1956
        %2061 = vmatmul.mubr.bf16.gmra.mrb[0].mxu0 %v1923
        %v2062 = vpop.f32.mrb[0].mxu0
        %v2063 = vadd.f32 0.0, %v2062
        %v2064 = vpop.f32.mrb[0].mxu0
        %v2065 = vadd.f32 0.0, %v2064
        %v2066 = vpop.f32.mrb[0].mxu0
        %v2067 = vadd.f32 0.0, %v2066
        %v2068 = vpop.f32.mrb[0].mxu0
        %v2069 = vadd.f32 0.0, %v2068
        %2070 = vdwg.mxu0
        %v2071 = vld [vmem:[%s11] sm:$0xff]
        %v2072 = vld [vmem:[%s11 + $0x8] sm:$0xff]
        %v2073 = vld [vmem:[%s11 + $0x10] sm:$0xff]
        %v2074 = vld [vmem:[%s11 + $0x18] sm:$0xff]
        %v2075 = vld [vmem:[%s11 + $0x20] sm:$0xff]
        %v2076 = vld [vmem:[%s11 + $0x28] sm:$0xff]
        %v2077 = vld [vmem:[%s11 + $0x30] sm:$0xff]
        %v2078 = vld [vmem:[%s11 + $0x38] sm:$0xff]
        %v2079 = vld [vmem:[%s11 + $0x40] sm:$0xff]
        %v2080 = vld [vmem:[%s11 + $0x48] sm:$0xff]
        %v2081 = vld [vmem:[%s11 + $0x50] sm:$0xff]
        %v2082 = vld [vmem:[%s11 + $0x58] sm:$0xff]
        %v2083 = vld [vmem:[%s11 + $0x60] sm:$0xff]
        %v2084 = vld [vmem:[%s11 + $0x68] sm:$0xff]
        %v2085 = vld [vmem:[%s11 + $0x70] sm:$0xff]
        %v2086 = vld [vmem:[%s11 + $0x78] sm:$0xff]
        %2088 = vset.pattern.permute.xlu0 0
        %2089 = vperm.xlu0 %2088, %v2071
        %v2090 = vpop.permute.xlu0 %2089
        %2093 = vset.pattern.permute.xlu0 0
        %2094 = vperm.xlu0 %2093, %v2072
        %v2095 = vpop.permute.xlu0 %2094
        %2098 = vset.pattern.permute.xlu0 0
        %2099 = vperm.xlu0 %2098, %v2073
        %v2100 = vpop.permute.xlu0 %2099
        %2103 = vset.pattern.permute.xlu0 0
        %2104 = vperm.xlu0 %2103, %v2074
        %v2105 = vpop.permute.xlu0 %2104
        %2108 = vset.pattern.permute.xlu0 0
        %2109 = vperm.xlu0 %2108, %v2075
        %v2110 = vpop.permute.xlu0 %2109
        %2113 = vset.pattern.permute.xlu0 0
        %2114 = vperm.xlu0 %2113, %v2076
        %v2115 = vpop.permute.xlu0 %2114
        %2118 = vset.pattern.permute.xlu0 0
        %2119 = vperm.xlu0 %2118, %v2077
        %v2120 = vpop.permute.xlu0 %2119
        %2123 = vset.pattern.permute.xlu0 0
        %2124 = vperm.xlu0 %2123, %v2078
        %v2125 = vpop.permute.xlu0 %2124
        %2128 = vset.pattern.permute.xlu0 0
        %2129 = vperm.xlu0 %2128, %v2079
        %v2130 = vpop.permute.xlu0 %2129
        %2133 = vset.pattern.permute.xlu0 0
        %2134 = vperm.xlu0 %2133, %v2080
        %v2135 = vpop.permute.xlu0 %2134
        %2138 = vset.pattern.permute.xlu0 0
        %2139 = vperm.xlu0 %2138, %v2081
        %v2140 = vpop.permute.xlu0 %2139
        %2143 = vset.pattern.permute.xlu0 0
        %2144 = vperm.xlu0 %2143, %v2082
        %v2145 = vpop.permute.xlu0 %2144
        %2148 = vset.pattern.permute.xlu0 0
        %2149 = vperm.xlu0 %2148, %v2083
        %v2150 = vpop.permute.xlu0 %2149
        %2153 = vset.pattern.permute.xlu0 0
        %2154 = vperm.xlu0 %2153, %v2084
        %v2155 = vpop.permute.xlu0 %2154
        %2158 = vset.pattern.permute.xlu0 0
        %2159 = vperm.xlu0 %2158, %v2085
        %v2160 = vpop.permute.xlu0 %2159
        %2163 = vset.pattern.permute.xlu0 0
        %2164 = vperm.xlu0 %2163, %v2086
        %v2165 = vpop.permute.xlu0 %2164
        %v2167 = vmul.f32 %v1993, %v2090
        %v2168 = vmul.f32 %v1995, %v2090
        %v2169 = vmul.f32 %v1997, %v2095
        %v2170 = vmul.f32 %v1999, %v2095
        %v2171 = vmul.f32 %v2003, %v2100
        %v2172 = vmul.f32 %v2005, %v2100
        %v2173 = vmul.f32 %v2007, %v2105
        %v2174 = vmul.f32 %v2009, %v2105
        %v2175 = vmul.f32 %v2013, %v2110
        %v2176 = vmul.f32 %v2015, %v2110
        %v2177 = vmul.f32 %v2017, %v2115
        %v2178 = vmul.f32 %v2019, %v2115
        %v2179 = vmul.f32 %v2023, %v2120
        %v2180 = vmul.f32 %v2025, %v2120
        %v2181 = vmul.f32 %v2027, %v2125
        %v2182 = vmul.f32 %v2029, %v2125
        %v2183 = vmul.f32 %v2033, %v2130
        %v2184 = vmul.f32 %v2035, %v2130
        %v2185 = vmul.f32 %v2037, %v2135
        %v2186 = vmul.f32 %v2039, %v2135
        %v2187 = vmul.f32 %v2043, %v2140
        %v2188 = vmul.f32 %v2045, %v2140
        %v2189 = vmul.f32 %v2047, %v2145
        %v2190 = vmul.f32 %v2049, %v2145
        %v2191 = vmul.f32 %v2053, %v2150
        %v2192 = vmul.f32 %v2055, %v2150
        %v2193 = vmul.f32 %v2057, %v2155
        %v2194 = vmul.f32 %v2059, %v2155
        %v2195 = vmul.f32 %v2063, %v2160
        %v2196 = vmul.f32 %v2065, %v2160
        %v2197 = vmul.f32 %v2067, %v2165
        %v2198 = vmul.f32 %v2069, %v2165
        %v2199 = vld [vmem:[%s12] sm:$0xff]
        %v2200 = vld [vmem:[%s12 + $0x8] sm:$0xff]
        %v2201 = vld [vmem:[%s12 + $0x10] sm:$0xff]
        %v2202 = vld [vmem:[%s12 + $0x18] sm:$0xff]
        %v2203 = vld [vmem:[%s12 + $0x20] sm:$0xff]
        %v2204 = vld [vmem:[%s12 + $0x28] sm:$0xff]
        %v2205 = vld [vmem:[%s12 + $0x30] sm:$0xff]
        %v2206 = vld [vmem:[%s12 + $0x38] sm:$0xff]
        %v2207 = vld [vmem:[%s12 + $0x40] sm:$0xff]
        %v2208 = vld [vmem:[%s12 + $0x48] sm:$0xff]
        %v2209 = vld [vmem:[%s12 + $0x50] sm:$0xff]
        %v2210 = vld [vmem:[%s12 + $0x58] sm:$0xff]
        %v2211 = vld [vmem:[%s12 + $0x60] sm:$0xff]
        %v2212 = vld [vmem:[%s12 + $0x68] sm:$0xff]
        %v2213 = vld [vmem:[%s12 + $0x70] sm:$0xff]
        %v2214 = vld [vmem:[%s12 + $0x78] sm:$0xff]
        %2216 = vset.pattern.permute.xlu0 0
        %2217 = vperm.xlu0 %2216, %v2199
        %v2218 = vpop.permute.xlu0 %2217
        %2221 = vset.pattern.permute.xlu0 0
        %2222 = vperm.xlu0 %2221, %v2200
        %v2223 = vpop.permute.xlu0 %2222
        %2226 = vset.pattern.permute.xlu0 0
        %2227 = vperm.xlu0 %2226, %v2201
        %v2228 = vpop.permute.xlu0 %2227
        %2231 = vset.pattern.permute.xlu0 0
        %2232 = vperm.xlu0 %2231, %v2202
        %v2233 = vpop.permute.xlu0 %2232
        %2236 = vset.pattern.permute.xlu0 0
        %2237 = vperm.xlu0 %2236, %v2203
        %v2238 = vpop.permute.xlu0 %2237
        %2241 = vset.pattern.permute.xlu0 0
        %2242 = vperm.xlu0 %2241, %v2204
        %v2243 = vpop.permute.xlu0 %2242
        %2246 = vset.pattern.permute.xlu0 0
        %2247 = vperm.xlu0 %2246, %v2205
        %v2248 = vpop.permute.xlu0 %2247
        %2251 = vset.pattern.permute.xlu0 0
        %2252 = vperm.xlu0 %2251, %v2206
        %v2253 = vpop.permute.xlu0 %2252
        %2256 = vset.pattern.permute.xlu0 0
        %2257 = vperm.xlu0 %2256, %v2207
        %v2258 = vpop.permute.xlu0 %2257
        %2261 = vset.pattern.permute.xlu0 0
        %2262 = vperm.xlu0 %2261, %v2208
        %v2263 = vpop.permute.xlu0 %2262
        %2266 = vset.pattern.permute.xlu0 0
        %2267 = vperm.xlu0 %2266, %v2209
        %v2268 = vpop.permute.xlu0 %2267
        %2271 = vset.pattern.permute.xlu0 0
        %2272 = vperm.xlu0 %2271, %v2210
        %v2273 = vpop.permute.xlu0 %2272
        %2276 = vset.pattern.permute.xlu0 0
        %2277 = vperm.xlu0 %2276, %v2211
        %v2278 = vpop.permute.xlu0 %2277
        %2281 = vset.pattern.permute.xlu0 0
        %2282 = vperm.xlu0 %2281, %v2212
        %v2283 = vpop.permute.xlu0 %2282
        %2286 = vset.pattern.permute.xlu0 0
        %2287 = vperm.xlu0 %2286, %v2213
        %v2288 = vpop.permute.xlu0 %2287
        %2291 = vset.pattern.permute.xlu0 0
        %2292 = vperm.xlu0 %2291, %v2214
        %v2293 = vpop.permute.xlu0 %2292
        %v2295 = vadd.f32 %v2167, %v2218
        %v2296 = vadd.f32 %v2168, %v2218
        %v2297 = vadd.f32 %v2169, %v2223
        %v2298 = vadd.f32 %v2170, %v2223
        %v2299 = vadd.f32 %v2171, %v2228
        %v2300 = vadd.f32 %v2172, %v2228
        %v2301 = vadd.f32 %v2173, %v2233
        %v2302 = vadd.f32 %v2174, %v2233
        %v2303 = vadd.f32 %v2175, %v2238
        %v2304 = vadd.f32 %v2176, %v2238
        %v2305 = vadd.f32 %v2177, %v2243
        %v2306 = vadd.f32 %v2178, %v2243
        %v2307 = vadd.f32 %v2179, %v2248
        %v2308 = vadd.f32 %v2180, %v2248
        %v2309 = vadd.f32 %v2181, %v2253
        %v2310 = vadd.f32 %v2182, %v2253
        %v2311 = vadd.f32 %v2183, %v2258
        %v2312 = vadd.f32 %v2184, %v2258
        %v2313 = vadd.f32 %v2185, %v2263
        %v2314 = vadd.f32 %v2186, %v2263
        %v2315 = vadd.f32 %v2187, %v2268
        %v2316 = vadd.f32 %v2188, %v2268
        %v2317 = vadd.f32 %v2189, %v2273
        %v2318 = vadd.f32 %v2190, %v2273
        %v2319 = vadd.f32 %v2191, %v2278
        %v2320 = vadd.f32 %v2192, %v2278
        %v2321 = vadd.f32 %v2193, %v2283
        %v2322 = vadd.f32 %v2194, %v2283
        %v2323 = vadd.f32 %v2195, %v2288
        %v2324 = vadd.f32 %v2196, %v2288
        %v2325 = vadd.f32 %v2197, %v2293
        %v2326 = vadd.f32 %v2198, %v2293
        %v2327 = vmax.f32 %v2295, 0.0
        %v2328 = vmax.f32 %v2296, 0.0
        %v2329 = vmax.f32 %v2297, 0.0
        %v2330 = vmax.f32 %v2298, 0.0
        %v2331 = vmax.f32 %v2299, 0.0
        %v2332 = vmax.f32 %v2300, 0.0
        %v2333 = vmax.f32 %v2301, 0.0
        %v2334 = vmax.f32 %v2302, 0.0
        %v2335 = vmax.f32 %v2303, 0.0
        %v2336 = vmax.f32 %v2304, 0.0
        %v2337 = vmax.f32 %v2305, 0.0
        %v2338 = vmax.f32 %v2306, 0.0
        %v2339 = vmax.f32 %v2307, 0.0
        %v2340 = vmax.f32 %v2308, 0.0
        %v2341 = vmax.f32 %v2309, 0.0
        %v2342 = vmax.f32 %v2310, 0.0
        %v2343 = vmax.f32 %v2311, 0.0
        %v2344 = vmax.f32 %v2312, 0.0
        %v2345 = vmax.f32 %v2313, 0.0
        %v2346 = vmax.f32 %v2314, 0.0
        %v2347 = vmax.f32 %v2315, 0.0
        %v2348 = vmax.f32 %v2316, 0.0
        %v2349 = vmax.f32 %v2317, 0.0
        %v2350 = vmax.f32 %v2318, 0.0
        %v2351 = vmax.f32 %v2319, 0.0
        %v2352 = vmax.f32 %v2320, 0.0
        %v2353 = vmax.f32 %v2321, 0.0
        %v2354 = vmax.f32 %v2322, 0.0
        %v2355 = vmax.f32 %v2323, 0.0
        %v2356 = vmax.f32 %v2324, 0.0
        %v2357 = vmax.f32 %v2325, 0.0
        %v2358 = vmax.f32 %v2326, 0.0
        %2359 = vst [vmem:[%s430] sm:$0xff] %v2327
        %2360 = vst [vmem:[%s430 + $0x8] sm:$0xff] %v2328
        %2361 = vst [vmem:[%s430 + $0x10] sm:$0xff] %v2329
        %2362 = vst [vmem:[%s430 + $0x18] sm:$0xff] %v2330
        %2363 = vst [vmem:[%s430 + $0x20] sm:$0xff] %v2331
        %2364 = vst [vmem:[%s430 + $0x28] sm:$0xff] %v2332
        %2365 = vst [vmem:[%s430 + $0x30] sm:$0xff] %v2333
        %2366 = vst [vmem:[%s430 + $0x38] sm:$0xff] %v2334
        %2367 = vst [vmem:[%s430 + $0x40] sm:$0xff] %v2335
        %2368 = vst [vmem:[%s430 + $0x48] sm:$0xff] %v2336
        %2369 = vst [vmem:[%s430 + $0x50] sm:$0xff] %v2337
        %2370 = vst [vmem:[%s430 + $0x58] sm:$0xff] %v2338
        %2371 = vst [vmem:[%s430 + $0x60] sm:$0xff] %v2339
        %2372 = vst [vmem:[%s430 + $0x68] sm:$0xff] %v2340
        %2373 = vst [vmem:[%s430 + $0x70] sm:$0xff] %v2341
        %2374 = vst [vmem:[%s430 + $0x78] sm:$0xff] %v2342
        %2375 = vst [vmem:[%s430 + $0x80] sm:$0xff] %v2343
        %2376 = vst [vmem:[%s430 + $0x88] sm:$0xff] %v2344
        %2377 = vst [vmem:[%s430 + $0x90] sm:$0xff] %v2345
        %2378 = vst [vmem:[%s430 + $0x98] sm:$0xff] %v2346
        %2379 = vst [vmem:[%s430 + $0xa0] sm:$0xff] %v2347
        %2380 = vst [vmem:[%s430 + $0xa8] sm:$0xff] %v2348
        %2381 = vst [vmem:[%s430 + $0xb0] sm:$0xff] %v2349
        %2382 = vst [vmem:[%s430 + $0xb8] sm:$0xff] %v2350
        %2383 = vst [vmem:[%s430 + $0xc0] sm:$0xff] %v2351
        %2384 = vst [vmem:[%s430 + $0xc8] sm:$0xff] %v2352
        %2385 = vst [vmem:[%s430 + $0xd0] sm:$0xff] %v2353
        %2386 = vst [vmem:[%s430 + $0xd8] sm:$0xff] %v2354
        %2387 = vst [vmem:[%s430 + $0xe0] sm:$0xff] %v2355
        %2388 = vst [vmem:[%s430 + $0xe8] sm:$0xff] %v2356
        %2389 = vst [vmem:[%s430 + $0xf0] sm:$0xff] %v2357
        %2390 = vst [vmem:[%s430 + $0xf8] sm:$0xff] %v2358
        %s2391 = sand.u32 %s310, 1
        %s2392 = sand.u32 %s310, 1
        %s2393 = smul.addr %s2392, 256
        %s2394 = scalar_lea.vmem [#allocation2], %s2393
        // Predicated region
        $region73: #{mssa_forward.4} parent=71 // pred_check
          %p2395 = pneg %p320
        $region74: #{mssa_forward.4} parent=71 // pred_check_branch
          %2397 = sbr.rel (%p2395) target = $region76
        $region75: #{mssa_forward.4} parent=71 // pred_region
          %s2398 = smul.u32 2, %s24
          %s2399 = smul.addr %s2398, 8
          %s2400 = scalar_lea.vmem %s13, %s2399
          // Predicated region
          $region77: #{mssa_forward.4} parent=75 // pred_check
            _
          $region78: #{mssa_forward.4} parent=75 // pred_check_branch
            %2402 = sbr.rel (0) target = $region80
          $region79: #{mssa_forward.4} parent=75 // pred_region
            // Predicated region
            $region81: #{mssa_forward.4} parent=79 // pred_check
              _
            $region82: #{mssa_forward.4} parent=79 // pred_check_branch
              %2404 = sbr.rel (0) target = $region84
            $region83: #{mssa_forward.4} parent=79 // pred_region
              loop: start=0, step=1, limit=1
              $region85: #{mssa_forward.4} parent=83 // loop_pre_header
                _
              $region86: #{mssa_forward.4} parent=83 // loop_header
                %s2406 = sphi 0, %s2410
                %p2407 = scmp.ge.s32.totalorder %s2406, 1
                %s2411 = sphi %s2394, %s2394
                %s2412 = sphi %s2400, %s2400
              $region87: #{mssa_forward.4} parent=83 // loop_header_branch
                %2409 = sbr.rel (%p2407) target = $region91
              $region88: #{mssa_forward.4} parent=83 // loop_body
                %v2413 = vld [vmem:[%s2411] sm:$0xff]
                %2414 = vst [vmem:[%s2412] sm:$0xff] %v2413
                %v2415 = vld [vmem:[%s2411 + $0x8] sm:$0xff]
                %2416 = vst [vmem:[%s2412 + $0x8] sm:$0xff] %v2415
                %v2417 = vld [vmem:[%s2411 + $0x10] sm:$0xff]
                %2418 = vst [vmem:[%s2412 + $0x20] sm:$0xff] %v2417
                %v2419 = vld [vmem:[%s2411 + $0x18] sm:$0xff]
                %2420 = vst [vmem:[%s2412 + $0x28] sm:$0xff] %v2419
                %v2421 = vld [vmem:[%s2411 + $0x20] sm:$0xff]
                %2422 = vst [vmem:[%s2412 + $0x40] sm:$0xff] %v2421
                %v2423 = vld [vmem:[%s2411 + $0x28] sm:$0xff]
                %2424 = vst [vmem:[%s2412 + $0x48] sm:$0xff] %v2423
                %v2425 = vld [vmem:[%s2411 + $0x30] sm:$0xff]
                %2426 = vst [vmem:[%s2412 + $0x60] sm:$0xff] %v2425
                %v2427 = vld [vmem:[%s2411 + $0x38] sm:$0xff]
                %2428 = vst [vmem:[%s2412 + $0x68] sm:$0xff] %v2427
                %v2429 = vld [vmem:[%s2411 + $0x40] sm:$0xff]
                %2430 = vst [vmem:[%s2412 + $0x80] sm:$0xff] %v2429
                %v2431 = vld [vmem:[%s2411 + $0x48] sm:$0xff]
                %2432 = vst [vmem:[%s2412 + $0x88] sm:$0xff] %v2431
                %v2433 = vld [vmem:[%s2411 + $0x50] sm:$0xff]
                %2434 = vst [vmem:[%s2412 + $0xa0] sm:$0xff] %v2433
                %v2435 = vld [vmem:[%s2411 + $0x58] sm:$0xff]
                %2436 = vst [vmem:[%s2412 + $0xa8] sm:$0xff] %v2435
                %v2437 = vld [vmem:[%s2411 + $0x60] sm:$0xff]
                %2438 = vst [vmem:[%s2412 + $0xc0] sm:$0xff] %v2437
                %v2439 = vld [vmem:[%s2411 + $0x68] sm:$0xff]
                %2440 = vst [vmem:[%s2412 + $0xc8] sm:$0xff] %v2439
                %v2441 = vld [vmem:[%s2411 + $0x70] sm:$0xff]
                %2442 = vst [vmem:[%s2412 + $0xe0] sm:$0xff] %v2441
                %v2443 = vld [vmem:[%s2411 + $0x78] sm:$0xff]
                %2444 = vst [vmem:[%s2412 + $0xe8] sm:$0xff] %v2443
                %v2445 = vld [vmem:[%s2411 + $0x80] sm:$0xff]
                %2446 = vst [vmem:[%s2412 + $0x100] sm:$0xff] %v2445
                %v2447 = vld [vmem:[%s2411 + $0x88] sm:$0xff]
                %2448 = vst [vmem:[%s2412 + $0x108] sm:$0xff] %v2447
                %v2449 = vld [vmem:[%s2411 + $0x90] sm:$0xff]
                %2450 = vst [vmem:[%s2412 + $0x120] sm:$0xff] %v2449
                %v2451 = vld [vmem:[%s2411 + $0x98] sm:$0xff]
                %2452 = vst [vmem:[%s2412 + $0x128] sm:$0xff] %v2451
                %v2453 = vld [vmem:[%s2411 + $0xa0] sm:$0xff]
                %2454 = vst [vmem:[%s2412 + $0x140] sm:$0xff] %v2453
                %v2455 = vld [vmem:[%s2411 + $0xa8] sm:$0xff]
                %2456 = vst [vmem:[%s2412 + $0x148] sm:$0xff] %v2455
                %v2457 = vld [vmem:[%s2411 + $0xb0] sm:$0xff]
                %2458 = vst [vmem:[%s2412 + $0x160] sm:$0xff] %v2457
                %v2459 = vld [vmem:[%s2411 + $0xb8] sm:$0xff]
                %2460 = vst [vmem:[%s2412 + $0x168] sm:$0xff] %v2459
                %v2461 = vld [vmem:[%s2411 + $0xc0] sm:$0xff]
                %2462 = vst [vmem:[%s2412 + $0x180] sm:$0xff] %v2461
                %v2463 = vld [vmem:[%s2411 + $0xc8] sm:$0xff]
                %2464 = vst [vmem:[%s2412 + $0x188] sm:$0xff] %v2463
                %v2465 = vld [vmem:[%s2411 + $0xd0] sm:$0xff]
                %2466 = vst [vmem:[%s2412 + $0x1a0] sm:$0xff] %v2465
                %v2467 = vld [vmem:[%s2411 + $0xd8] sm:$0xff]
                %2468 = vst [vmem:[%s2412 + $0x1a8] sm:$0xff] %v2467
                %v2469 = vld [vmem:[%s2411 + $0xe0] sm:$0xff]
                %2470 = vst [vmem:[%s2412 + $0x1c0] sm:$0xff] %v2469
                %v2471 = vld [vmem:[%s2411 + $0xe8] sm:$0xff]
                %2472 = vst [vmem:[%s2412 + $0x1c8] sm:$0xff] %v2471
                %v2473 = vld [vmem:[%s2411 + $0xf0] sm:$0xff]
                %2474 = vst [vmem:[%s2412 + $0x1e0] sm:$0xff] %v2473
                %v2475 = vld [vmem:[%s2411 + $0xf8] sm:$0xff]
                %2476 = vst [vmem:[%s2412 + $0x1e8] sm:$0xff] %v2475
              $region89: #{mssa_forward.4} parent=83 // loop_footer
                %s2410 = sadd.s32 1, %s2406
              $region90: #{mssa_forward.4} parent=83 // loop_footer_branch
                %2405 = sbr.rel target = $region86
              $region91: #{mssa_forward.4} parent=83 // loop_exit
                _
            $region84: #{mssa_forward.4} parent=79 // pred_fallthru
              _
            // Predicated region
            $region92: #{mssa_forward.4} parent=79 // pred_check
              _
            $region93: #{mssa_forward.4} parent=79 // pred_check_branch
              %2478 = sbr.rel target = $region95
            $region94: #{mssa_forward.4} parent=79 // pred_region
              _
            $region95: #{mssa_forward.4} parent=79 // pred_fallthru
              _
          $region80: #{mssa_forward.4} parent=75 // pred_fallthru
            _
          %2479 = vnop
        $region76: #{mssa_forward.4} parent=71 // pred_fallthru
          _
      $region72: #{mssa_forward.4} parent=5 // pred_fallthru
        _
      %p2480 = scmp.le.s32.totalorder 2, %s19
      // Predicated region
      $region96: #{mssa_forward.4} parent=5 // pred_check
        %p2481 = pneg %p2480
      $region97: #{mssa_forward.4} parent=5 // pred_check_branch
        %2483 = sbr.rel (%p2481) target = $region99
      $region98: #{mssa_forward.4} parent=5 // pred_region
        %s2484 = ssub.s32 %s19, 2
        // Predicated region
        $region100: #{mssa_forward.4} parent=98 // pred_check
          %p2485 = pneg %p326
        $region101: #{mssa_forward.4} parent=98 // pred_check_branch
          %2487 = sbr.rel (%p2485) target = $region103
        $region102: #{mssa_forward.4} parent=98 // pred_region
          %s2488 = sand.u32 %s311, 1
          %s2489 = sand.u32 %s311, 1
          %s2490 = smul.addr %s2489, 256
          %s2491 = scalar_lea.vmem [#allocation2], %s2490
        $region103: #{mssa_forward.4} parent=98 // pred_fallthru
          _
      $region99: #{mssa_forward.4} parent=5 // pred_fallthru
        _
    $region6: #{mssa_forward.4} parent=1 // loop_footer
      %s23 = sadd.s32 1, %s19
    $region7: #{mssa_forward.4} parent=1 // loop_footer_branch
      %18 = sbr.rel target = $region3
    $region8: #{mssa_forward.4} parent=1 // loop_exit
      _

// kernel: mssa_forward.5
$region0: #{mssa_forward.5}
  #allocation0 [shape = 'u32[]', space=smem, size = 0x4, offset = 0x4, fixed_abs, tag = 'smem constant byte address 0x4 - core index']
  #allocation1 [shape = 'u32[144,128]{1,0:T(1,128)}', space=vmem, size = 0x12000, scoped, tag = 'internal scratch']
  %s0 = inlined_call_operand.vmem [shape: f32[128,512], index: 0, kind: input, shape index: {}]
  %s1 = inlined_call_operand.vmem [shape: bf16[128,384], index: 1, kind: input, shape index: {}]
  %s2 = inlined_call_operand.vmem [shape: f32[128,1], index: 2, kind: input, shape index: {}]
  %s3 = inlined_call_operand.vmem [shape: f32[128,1], index: 3, kind: input, shape index: {}]
  %s4 = inlined_call_operand.vmem [shape: bf16[128,384], index: 4, kind: input, shape index: {}]
  %s5 = inlined_call_operand.vmem [shape: f32[128,1], index: 5, kind: input, shape index: {}]
  %s6 = inlined_call_operand.vmem [shape: f32[128,1], index: 6, kind: input, shape index: {}]
  %s7 = inlined_call_operand.vmem [shape: bf16[128,384], index: 7, kind: input, shape index: {}]
  %s8 = inlined_call_operand.vmem [shape: f32[128,1], index: 8, kind: input, shape index: {}]
  %s9 = inlined_call_operand.vmem [shape: f32[128,1], index: 9, kind: input, shape index: {}]
  %s10 = inlined_call_operand.vmem [shape: bf16[4,128,128], index: 10, kind: input, shape index: {}]
  %s11 = inlined_call_operand.vmem [shape: f32[128,1], index: 11, kind: input, shape index: {}]
  %s12 = inlined_call_operand.vmem [shape: f32[2,128,8], index: 12, kind: output, shape index: {}]
  %s13 = sld [smem:[#allocation0]]
  $region104: #{mssa_forward.5} parent=0
    _
  %s15 = ssub.s32 1, %s13
  %s16 = scalar_select 0, %s15, %s13
  $region1: #{mssa_forward.5} parent=0
    #allocation2 [shape = 'u8[262144]{0}', space=vmem, size = 0x40000, scoped, tag = 'input window, operand 0']
    loop: start=0, step=1, limit=4
    $region2: #{mssa_forward.5} parent=1 // loop_pre_header
      _
    $region3: #{mssa_forward.5} parent=1 // loop_header
      %s18 = sphi 0, %s22
      %p19 = scmp.ge.s32.totalorder %s18, 4
      %s28 = sphi 0, %s30
      %s31 = sphi 0, %s28
      %s32 = sphi 0, %s31
      %s48 = sphi 0, %s32
      %s52 = sphi 0, %s52
      %s54 = sphi 0, %s52
      %s55 = sphi 0, %s54
      %s69 = sphi 0, %s55
      %s73 = sphi 0, %s73
      %s75 = sphi 0, %s73
      %s76 = sphi 0, %s75
      %s90 = sphi 0, %s76
      %s94 = sphi 0, %s94
      %s96 = sphi 0, %s94
      %s97 = sphi 0, %s96
      %s111 = sphi 0, %s97
      %s115 = sphi 0, %s115
      %s117 = sphi 0, %s115
      %s118 = sphi 0, %s117
      %s132 = sphi 0, %s118
      %s136 = sphi 0, %s136
      %s138 = sphi 0, %s136
      %s139 = sphi 0, %s138
      %s153 = sphi 0, %s139
      %s157 = sphi 0, %s157
      %s159 = sphi 0, %s157
      %s160 = sphi 0, %s159
      %s174 = sphi 0, %s160
      %s178 = sphi 0, %s178
      %s180 = sphi 0, %s178
      %s181 = sphi 0, %s180
      %s195 = sphi 0, %s181
      %s199 = sphi 0, %s199
      %s201 = sphi 0, %s199
      %s202 = sphi 0, %s201
      %s216 = sphi 0, %s202
      %s220 = sphi 0, %s220
      %s222 = sphi 0, %s220
      %s223 = sphi 0, %s222
      %s237 = sphi 0, %s223
      %s241 = sphi 0, %s241
      %s243 = sphi 0, %s241
      %s244 = sphi 0, %s243
      %s258 = sphi 0, %s244
      %s262 = sphi 0, %s262
      %s264 = sphi 0, %s262
      %s265 = sphi 0, %s264
      %s279 = sphi 0, %s265
      %s285 = sphi 0, %s287
      %s288 = sphi 0, %s285
      %s289 = sphi 0, %s288
      %s305 = sphi 0, %s289
    $region4: #{mssa_forward.5} parent=1 // loop_header_branch
      %21 = sbr.rel (%p19) target = $region8
    $region5: #{mssa_forward.5} parent=1 // loop_body
      %s23 = ssub.s32 %s18, 1
      %s24 = ssub.s32 %s18, 2
      %s25 = sadd.s32 %s18, 1
      %s26 = ssub.s32 %s18, %s25
      %p27 = scmp.eq.s32.totalorder %s26, 0
      %s29 = sadd.s32 %s28, 1
      %s30 = scalar_select %p27, %s28, %s29
      %p33 = pneg %p27
      %p34 = scmp.eq.s32.totalorder %s18, 1
      %p35 = por %p33, %p34
      %p36 = scmp.ne.s32.totalorder %s28, %s31
      %p37 = scmp.eq.s32.totalorder %s18, 0
      %p38 = por %p36, %p37
      %p39 = scmp.ne.s32.totalorder %s28, %s31
      %p40 = scmp.eq.s32.totalorder %s23, 1
      %p41 = por %p39, %p40
      %p42 = scmp.ne.s32.totalorder %s31, %s32
      %p43 = scmp.eq.s32.totalorder %s23, 0
      %p44 = por %p42, %p43
      %p45 = scmp.ne.s32.totalorder %s31, %s32
      %p46 = scmp.eq.s32.totalorder %s24, 1
      %p47 = por %p45, %p46
      %p49 = scmp.ne.s32.totalorder %s32, %s48
      %p50 = scmp.eq.s32.totalorder %s24, 0
      %p51 = por %p49, %p50
      %s53 = sadd.s32 %s52, 1
      %p56 = scmp.eq.s32.totalorder %s18, 1
      %p57 = scmp.ne.s32.totalorder %s52, %s54
      %p58 = scmp.eq.s32.totalorder %s18, 0
      %p59 = por %p57, %p58
      %p60 = scmp.ne.s32.totalorder %s52, %s54
      %p61 = scmp.eq.s32.totalorder %s23, 1
      %p62 = por %p60, %p61
      %p63 = scmp.ne.s32.totalorder %s54, %s55
      %p64 = scmp.eq.s32.totalorder %s23, 0
      %p65 = por %p63, %p64
      %p66 = scmp.ne.s32.totalorder %s54, %s55
      %p67 = scmp.eq.s32.totalorder %s24, 1
      %p68 = por %p66, %p67
      %p70 = scmp.ne.s32.totalorder %s55, %s69
      %p71 = scmp.eq.s32.totalorder %s24, 0
      %p72 = por %p70, %p71
      %s74 = sadd.s32 %s73, 1
      %p77 = scmp.eq.s32.totalorder %s18, 1
      %p78 = scmp.ne.s32.totalorder %s73, %s75
      %p79 = scmp.eq.s32.totalorder %s18, 0
      %p80 = por %p78, %p79
      %p81 = scmp.ne.s32.totalorder %s73, %s75
      %p82 = scmp.eq.s32.totalorder %s23, 1
      %p83 = por %p81, %p82
      %p84 = scmp.ne.s32.totalorder %s75, %s76
      %p85 = scmp.eq.s32.totalorder %s23, 0
      %p86 = por %p84, %p85
      %p87 = scmp.ne.s32.totalorder %s75, %s76
      %p88 = scmp.eq.s32.totalorder %s24, 1
      %p89 = por %p87, %p88
      %p91 = scmp.ne.s32.totalorder %s76, %s90
      %p92 = scmp.eq.s32.totalorder %s24, 0
      %p93 = por %p91, %p92
      %s95 = sadd.s32 %s94, 1
      %p98 = scmp.eq.s32.totalorder %s18, 1
      %p99 = scmp.ne.s32.totalorder %s94, %s96
      %p100 = scmp.eq.s32.totalorder %s18, 0
      %p101 = por %p99, %p100
      %p102 = scmp.ne.s32.totalorder %s94, %s96
      %p103 = scmp.eq.s32.totalorder %s23, 1
      %p104 = por %p102, %p103
      %p105 = scmp.ne.s32.totalorder %s96, %s97
      %p106 = scmp.eq.s32.totalorder %s23, 0
      %p107 = por %p105, %p106
      %p108 = scmp.ne.s32.totalorder %s96, %s97
      %p109 = scmp.eq.s32.totalorder %s24, 1
      %p110 = por %p108, %p109
      %p112 = scmp.ne.s32.totalorder %s97, %s111
      %p113 = scmp.eq.s32.totalorder %s24, 0
      %p114 = por %p112, %p113
      %s116 = sadd.s32 %s115, 1
      %p119 = scmp.eq.s32.totalorder %s18, 1
      %p120 = scmp.ne.s32.totalorder %s115, %s117
      %p121 = scmp.eq.s32.totalorder %s18, 0
      %p122 = por %p120, %p121
      %p123 = scmp.ne.s32.totalorder %s115, %s117
      %p124 = scmp.eq.s32.totalorder %s23, 1
      %p125 = por %p123, %p124
      %p126 = scmp.ne.s32.totalorder %s117, %s118
      %p127 = scmp.eq.s32.totalorder %s23, 0
      %p128 = por %p126, %p127
      %p129 = scmp.ne.s32.totalorder %s117, %s118
      %p130 = scmp.eq.s32.totalorder %s24, 1
      %p131 = por %p129, %p130
      %p133 = scmp.ne.s32.totalorder %s118, %s132
      %p134 = scmp.eq.s32.totalorder %s24, 0
      %p135 = por %p133, %p134
      %s137 = sadd.s32 %s136, 1
      %p140 = scmp.eq.s32.totalorder %s18, 1
      %p141 = scmp.ne.s32.totalorder %s136, %s138
      %p142 = scmp.eq.s32.totalorder %s18, 0
      %p143 = por %p141, %p142
      %p144 = scmp.ne.s32.totalorder %s136, %s138
      %p145 = scmp.eq.s32.totalorder %s23, 1
      %p146 = por %p144, %p145
      %p147 = scmp.ne.s32.totalorder %s138, %s139
      %p148 = scmp.eq.s32.totalorder %s23, 0
      %p149 = por %p147, %p148
      %p150 = scmp.ne.s32.totalorder %s138, %s139
      %p151 = scmp.eq.s32.totalorder %s24, 1
      %p152 = por %p150, %p151
      %p154 = scmp.ne.s32.totalorder %s139, %s153
      %p155 = scmp.eq.s32.totalorder %s24, 0
      %p156 = por %p154, %p155
      %s158 = sadd.s32 %s157, 1
      %p161 = scmp.eq.s32.totalorder %s18, 1
      %p162 = scmp.ne.s32.totalorder %s157, %s159
      %p163 = scmp.eq.s32.totalorder %s18, 0
      %p164 = por %p162, %p163
      %p165 = scmp.ne.s32.totalorder %s157, %s159
      %p166 = scmp.eq.s32.totalorder %s23, 1
      %p167 = por %p165, %p166
      %p168 = scmp.ne.s32.totalorder %s159, %s160
      %p169 = scmp.eq.s32.totalorder %s23, 0
      %p170 = por %p168, %p169
      %p171 = scmp.ne.s32.totalorder %s159, %s160
      %p172 = scmp.eq.s32.totalorder %s24, 1
      %p173 = por %p171, %p172
      %p175 = scmp.ne.s32.totalorder %s160, %s174
      %p176 = scmp.eq.s32.totalorder %s24, 0
      %p177 = por %p175, %p176
      %s179 = sadd.s32 %s178, 1
      %p182 = scmp.eq.s32.totalorder %s18, 1
      %p183 = scmp.ne.s32.totalorder %s178, %s180
      %p184 = scmp.eq.s32.totalorder %s18, 0
      %p185 = por %p183, %p184
      %p186 = scmp.ne.s32.totalorder %s178, %s180
      %p187 = scmp.eq.s32.totalorder %s23, 1
      %p188 = por %p186, %p187
      %p189 = scmp.ne.s32.totalorder %s180, %s181
      %p190 = scmp.eq.s32.totalorder %s23, 0
      %p191 = por %p189, %p190
      %p192 = scmp.ne.s32.totalorder %s180, %s181
      %p193 = scmp.eq.s32.totalorder %s24, 1
      %p194 = por %p192, %p193
      %p196 = scmp.ne.s32.totalorder %s181, %s195
      %p197 = scmp.eq.s32.totalorder %s24, 0
      %p198 = por %p196, %p197
      %s200 = sadd.s32 %s199, 1
      %p203 = scmp.eq.s32.totalorder %s18, 1
      %p204 = scmp.ne.s32.totalorder %s199, %s201
      %p205 = scmp.eq.s32.totalorder %s18, 0
      %p206 = por %p204, %p205
      %p207 = scmp.ne.s32.totalorder %s199, %s201
      %p208 = scmp.eq.s32.totalorder %s23, 1
      %p209 = por %p207, %p208
      %p210 = scmp.ne.s32.totalorder %s201, %s202
      %p211 = scmp.eq.s32.totalorder %s23, 0
      %p212 = por %p210, %p211
      %p213 = scmp.ne.s32.totalorder %s201, %s202
      %p214 = scmp.eq.s32.totalorder %s24, 1
      %p215 = por %p213, %p214
      %p217 = scmp.ne.s32.totalorder %s202, %s216
      %p218 = scmp.eq.s32.totalorder %s24, 0
      %p219 = por %p217, %p218
      %s221 = sadd.s32 %s220, 1
      %p224 = scmp.eq.s32.totalorder %s18, 1
      %p225 = scmp.ne.s32.totalorder %s220, %s222
      %p226 = scmp.eq.s32.totalorder %s18, 0
      %p227 = por %p225, %p226
      %p228 = scmp.ne.s32.totalorder %s220, %s222
      %p229 = scmp.eq.s32.totalorder %s23, 1
      %p230 = por %p228, %p229
      %p231 = scmp.ne.s32.totalorder %s222, %s223
      %p232 = scmp.eq.s32.totalorder %s23, 0
      %p233 = por %p231, %p232
      %p234 = scmp.ne.s32.totalorder %s222, %s223
      %p235 = scmp.eq.s32.totalorder %s24, 1
      %p236 = por %p234, %p235
      %p238 = scmp.ne.s32.totalorder %s223, %s237
      %p239 = scmp.eq.s32.totalorder %s24, 0
      %p240 = por %p238, %p239
      %s242 = sadd.s32 %s241, 1
      %p245 = scmp.eq.s32.totalorder %s18, 1
      %p246 = scmp.ne.s32.totalorder %s241, %s243
      %p247 = scmp.eq.s32.totalorder %s18, 0
      %p248 = por %p246, %p247
      %p249 = scmp.ne.s32.totalorder %s241, %s243
      %p250 = scmp.eq.s32.totalorder %s23, 1
      %p251 = por %p249, %p250
      %p252 = scmp.ne.s32.totalorder %s243, %s244
      %p253 = scmp.eq.s32.totalorder %s23, 0
      %p254 = por %p252, %p253
      %p255 = scmp.ne.s32.totalorder %s243, %s244
      %p256 = scmp.eq.s32.totalorder %s24, 1
      %p257 = por %p255, %p256
      %p259 = scmp.ne.s32.totalorder %s244, %s258
      %p260 = scmp.eq.s32.totalorder %s24, 0
      %p261 = por %p259, %p260
      %s263 = sadd.s32 %s262, 1
      %p266 = scmp.eq.s32.totalorder %s18, 1
      %p267 = scmp.ne.s32.totalorder %s262, %s264
      %p268 = scmp.eq.s32.totalorder %s18, 0
      %p269 = por %p267, %p268
      %p270 = scmp.ne.s32.totalorder %s262, %s264
      %p271 = scmp.eq.s32.totalorder %s23, 1
      %p272 = por %p270, %p271
      %p273 = scmp.ne.s32.totalorder %s264, %s265
      %p274 = scmp.eq.s32.totalorder %s23, 0
      %p275 = por %p273, %p274
      %p276 = scmp.ne.s32.totalorder %s264, %s265
      %p277 = scmp.eq.s32.totalorder %s24, 1
      %p278 = por %p276, %p277
      %p280 = scmp.ne.s32.totalorder %s265, %s279
      %p281 = scmp.eq.s32.totalorder %s24, 0
      %p282 = por %p280, %p281
      %s283 = ssub.s32 %s18, %s25
      %p284 = scmp.eq.s32.totalorder %s283, 0
      %s286 = sadd.s32 %s285, 1
      %s287 = scalar_select %p284, %s285, %s286
      %p290 = pneg %p284
      %p291 = scmp.eq.s32.totalorder %s18, 1
      %p292 = por %p290, %p291
      %p293 = scmp.ne.s32.totalorder %s285, %s288
      %p294 = scmp.eq.s32.totalorder %s18, 0
      %p295 = por %p293, %p294
      %p296 = scmp.ne.s32.totalorder %s285, %s288
      %p297 = scmp.eq.s32.totalorder %s23, 1
      %p298 = por %p296, %p297
      %p299 = scmp.ne.s32.totalorder %s288, %s289
      %p300 = scmp.eq.s32.totalorder %s23, 0
      %p301 = por %p299, %p300
      %p302 = scmp.ne.s32.totalorder %s288, %s289
      %p303 = scmp.eq.s32.totalorder %s24, 1
      %p304 = por %p302, %p303
      %p306 = scmp.ne.s32.totalorder %s289, %s305
      %p307 = scmp.eq.s32.totalorder %s24, 0
      %p308 = por %p306, %p307
      %p309 = scmp.le.s32.totalorder 1, %s18
      %p310 = scmp.lt.s32.totalorder %s18, 3
      %p311 = pnand %p309, %p310
      %p312 = pneg %p311
      // Predicated region
      $region9: #{mssa_forward.5} parent=5 // pred_check
        _
      $region10: #{mssa_forward.5} parent=5 // pred_check_branch
        %314 = sbr.rel (%p311) target = $region12
      $region11: #{mssa_forward.5} parent=5 // pred_region
        %s315 = ssub.s32 %s18, 1
        // Predicated region
        $region13: #{mssa_forward.5} parent=11 // pred_check
          %p316 = pneg %p65
        $region14: #{mssa_forward.5} parent=11 // pred_check_branch
          %318 = sbr.rel (%p316) target = $region16
        $region15: #{mssa_forward.5} parent=11 // pred_region
          _
        $region16: #{mssa_forward.5} parent=11 // pred_fallthru
          _
        // Predicated region
        $region17: #{mssa_forward.5} parent=11 // pred_check
          %p319 = pneg %p86
        $region18: #{mssa_forward.5} parent=11 // pred_check_branch
          %321 = sbr.rel (%p319) target = $region20
        $region19: #{mssa_forward.5} parent=11 // pred_region
          _
        $region20: #{mssa_forward.5} parent=11 // pred_fallthru
          _
        // Predicated region
        $region21: #{mssa_forward.5} parent=11 // pred_check
          %p322 = pneg %p107
        $region22: #{mssa_forward.5} parent=11 // pred_check_branch
          %324 = sbr.rel (%p322) target = $region24
        $region23: #{mssa_forward.5} parent=11 // pred_region
          _
        $region24: #{mssa_forward.5} parent=11 // pred_fallthru
          _
        // Predicated region
        $region25: #{mssa_forward.5} parent=11 // pred_check
          %p325 = pneg %p128
        $region26: #{mssa_forward.5} parent=11 // pred_check_branch
          %327 = sbr.rel (%p325) target = $region28
        $region27: #{mssa_forward.5} parent=11 // pred_region
          _
        $region28: #{mssa_forward.5} parent=11 // pred_fallthru
          _
        // Predicated region
        $region29: #{mssa_forward.5} parent=11 // pred_check
          %p328 = pneg %p149
        $region30: #{mssa_forward.5} parent=11 // pred_check_branch
          %330 = sbr.rel (%p328) target = $region32
        $region31: #{mssa_forward.5} parent=11 // pred_region
          _
        $region32: #{mssa_forward.5} parent=11 // pred_fallthru
          _
        // Predicated region
        $region33: #{mssa_forward.5} parent=11 // pred_check
          %p331 = pneg %p170
        $region34: #{mssa_forward.5} parent=11 // pred_check_branch
          %333 = sbr.rel (%p331) target = $region36
        $region35: #{mssa_forward.5} parent=11 // pred_region
          _
        $region36: #{mssa_forward.5} parent=11 // pred_fallthru
          _
        // Predicated region
        $region37: #{mssa_forward.5} parent=11 // pred_check
          %p334 = pneg %p191
        $region38: #{mssa_forward.5} parent=11 // pred_check_branch
          %336 = sbr.rel (%p334) target = $region40
        $region39: #{mssa_forward.5} parent=11 // pred_region
          _
        $region40: #{mssa_forward.5} parent=11 // pred_fallthru
          _
        // Predicated region
        $region41: #{mssa_forward.5} parent=11 // pred_check
          %p337 = pneg %p212
        $region42: #{mssa_forward.5} parent=11 // pred_check_branch
          %339 = sbr.rel (%p337) target = $region44
        $region43: #{mssa_forward.5} parent=11 // pred_region
          _
        $region44: #{mssa_forward.5} parent=11 // pred_fallthru
          _
        // Predicated region
        $region45: #{mssa_forward.5} parent=11 // pred_check
          %p340 = pneg %p233
        $region46: #{mssa_forward.5} parent=11 // pred_check_branch
          %342 = sbr.rel (%p340) target = $region48
        $region47: #{mssa_forward.5} parent=11 // pred_region
          _
        $region48: #{mssa_forward.5} parent=11 // pred_fallthru
          _
        // Predicated region
        $region49: #{mssa_forward.5} parent=11 // pred_check
          %p343 = pneg %p254
        $region50: #{mssa_forward.5} parent=11 // pred_check_branch
          %345 = sbr.rel (%p343) target = $region52
        $region51: #{mssa_forward.5} parent=11 // pred_region
          _
        $region52: #{mssa_forward.5} parent=11 // pred_fallthru
          _
        // Predicated region
        $region53: #{mssa_forward.5} parent=11 // pred_check
          %p346 = pneg %p275
        $region54: #{mssa_forward.5} parent=11 // pred_check_branch
          %348 = sbr.rel (%p346) target = $region56
        $region55: #{mssa_forward.5} parent=11 // pred_region
          _
        $region56: #{mssa_forward.5} parent=11 // pred_fallthru
          _
      $region12: #{mssa_forward.5} parent=5 // pred_fallthru
        _
      %p349 = scmp.lt.s32.totalorder %s18, 2
      // Predicated region
      $region57: #{mssa_forward.5} parent=5 // pred_check
        %p350 = pneg %p349
      $region58: #{mssa_forward.5} parent=5 // pred_check_branch
        %352 = sbr.rel (%p350) target = $region60
      $region59: #{mssa_forward.5} parent=5 // pred_region
        // Predicated region
        $region61: #{mssa_forward.5} parent=59 // pred_check
          %p353 = pneg %p38
        $region62: #{mssa_forward.5} parent=59 // pred_check_branch
          %355 = sbr.rel (%p353) target = $region64
        $region63: #{mssa_forward.5} parent=59 // pred_region
          %s356 = sand.u32 %s28, 1
          %s357 = sand.u32 %s28, 1
          %s358 = smul.addr %s357, 256
          %s359 = scalar_lea.vmem [#allocation2], %s358
          %s360 = smul.u32 2, %s18
          %s361 = smul.addr %s360, 8
          %s362 = scalar_lea.vmem %s0, %s361
          // Predicated region
          $region65: #{mssa_forward.5} parent=63 // pred_check
            _
          $region66: #{mssa_forward.5} parent=63 // pred_check_branch
            %364 = sbr.rel (0) target = $region68
          $region67: #{mssa_forward.5} parent=63 // pred_region
            // Predicated region
            $region69: #{mssa_forward.5} parent=67 // pred_check
              _
            $region70: #{mssa_forward.5} parent=67 // pred_check_branch
              %366 = sbr.rel (0) target = $region72
            $region71: #{mssa_forward.5} parent=67 // pred_region
              loop: start=0, step=1, limit=1
              $region73: #{mssa_forward.5} parent=71 // loop_pre_header
                _
              $region74: #{mssa_forward.5} parent=71 // loop_header
                %s368 = sphi 0, %s372
                %p369 = scmp.ge.s32.totalorder %s368, 1
                %s373 = sphi %s362, %s362
                %s374 = sphi %s359, %s359
              $region75: #{mssa_forward.5} parent=71 // loop_header_branch
                %371 = sbr.rel (%p369) target = $region79
              $region76: #{mssa_forward.5} parent=71 // loop_body
                %v375 = vld [vmem:[%s373] sm:$0xff]
                %376 = vst [vmem:[%s374] sm:$0xff] %v375
                %v377 = vld [vmem:[%s373 + $0x8] sm:$0xff]
                %378 = vst [vmem:[%s374 + $0x8] sm:$0xff] %v377
                %v379 = vld [vmem:[%s373 + $0x20] sm:$0xff]
                %380 = vst [vmem:[%s374 + $0x10] sm:$0xff] %v379
                %v381 = vld [vmem:[%s373 + $0x28] sm:$0xff]
                %382 = vst [vmem:[%s374 + $0x18] sm:$0xff] %v381
                %v383 = vld [vmem:[%s373 + $0x40] sm:$0xff]
                %384 = vst [vmem:[%s374 + $0x20] sm:$0xff] %v383
                %v385 = vld [vmem:[%s373 + $0x48] sm:$0xff]
                %386 = vst [vmem:[%s374 + $0x28] sm:$0xff] %v385
                %v387 = vld [vmem:[%s373 + $0x60] sm:$0xff]
                %388 = vst [vmem:[%s374 + $0x30] sm:$0xff] %v387
                %v389 = vld [vmem:[%s373 + $0x68] sm:$0xff]
                %390 = vst [vmem:[%s374 + $0x38] sm:$0xff] %v389
                %v391 = vld [vmem:[%s373 + $0x80] sm:$0xff]
                %392 = vst [vmem:[%s374 + $0x40] sm:$0xff] %v391
                %v393 = vld [vmem:[%s373 + $0x88] sm:$0xff]
                %394 = vst [vmem:[%s374 + $0x48] sm:$0xff] %v393
                %v395 = vld [vmem:[%s373 + $0xa0] sm:$0xff]
                %396 = vst [vmem:[%s374 + $0x50] sm:$0xff] %v395
                %v397 = vld [vmem:[%s373 + $0xa8] sm:$0xff]
                %398 = vst [vmem:[%s374 + $0x58] sm:$0xff] %v397
                %v399 = vld [vmem:[%s373 + $0xc0] sm:$0xff]
                %400 = vst [vmem:[%s374 + $0x60] sm:$0xff] %v399
                %v401 = vld [vmem:[%s373 + $0xc8] sm:$0xff]
                %402 = vst [vmem:[%s374 + $0x68] sm:$0xff] %v401
                %v403 = vld [vmem:[%s373 + $0xe0] sm:$0xff]
                %404 = vst [vmem:[%s374 + $0x70] sm:$0xff] %v403
                %v405 = vld [vmem:[%s373 + $0xe8] sm:$0xff]
                %406 = vst [vmem:[%s374 + $0x78] sm:$0xff] %v405
                %v407 = vld [vmem:[%s373 + $0x100] sm:$0xff]
                %408 = vst [vmem:[%s374 + $0x80] sm:$0xff] %v407
                %v409 = vld [vmem:[%s373 + $0x108] sm:$0xff]
                %410 = vst [vmem:[%s374 + $0x88] sm:$0xff] %v409
                %v411 = vld [vmem:[%s373 + $0x120] sm:$0xff]
                %412 = vst [vmem:[%s374 + $0x90] sm:$0xff] %v411
                %v413 = vld [vmem:[%s373 + $0x128] sm:$0xff]
                %414 = vst [vmem:[%s374 + $0x98] sm:$0xff] %v413
                %v415 = vld [vmem:[%s373 + $0x140] sm:$0xff]
                %416 = vst [vmem:[%s374 + $0xa0] sm:$0xff] %v415
                %v417 = vld [vmem:[%s373 + $0x148] sm:$0xff]
                %418 = vst [vmem:[%s374 + $0xa8] sm:$0xff] %v417
                %v419 = vld [vmem:[%s373 + $0x160] sm:$0xff]
                %420 = vst [vmem:[%s374 + $0xb0] sm:$0xff] %v419
                %v421 = vld [vmem:[%s373 + $0x168] sm:$0xff]
                %422 = vst [vmem:[%s374 + $0xb8] sm:$0xff] %v421
                %v423 = vld [vmem:[%s373 + $0x180] sm:$0xff]
                %424 = vst [vmem:[%s374 + $0xc0] sm:$0xff] %v423
                %v425 = vld [vmem:[%s373 + $0x188] sm:$0xff]
                %426 = vst [vmem:[%s374 + $0xc8] sm:$0xff] %v425
                %v427 = vld [vmem:[%s373 + $0x1a0] sm:$0xff]
                %428 = vst [vmem:[%s374 + $0xd0] sm:$0xff] %v427
                %v429 = vld [vmem:[%s373 + $0x1a8] sm:$0xff]
                %430 = vst [vmem:[%s374 + $0xd8] sm:$0xff] %v429
                %v431 = vld [vmem:[%s373 + $0x1c0] sm:$0xff]
                %432 = vst [vmem:[%s374 + $0xe0] sm:$0xff] %v431
                %v433 = vld [vmem:[%s373 + $0x1c8] sm:$0xff]
                %434 = vst [vmem:[%s374 + $0xe8] sm:$0xff] %v433
                %v435 = vld [vmem:[%s373 + $0x1e0] sm:$0xff]
                %436 = vst [vmem:[%s374 + $0xf0] sm:$0xff] %v435
                %v437 = vld [vmem:[%s373 + $0x1e8] sm:$0xff]
                %438 = vst [vmem:[%s374 + $0xf8] sm:$0xff] %v437
              $region77: #{mssa_forward.5} parent=71 // loop_footer
                %s372 = sadd.s32 1, %s368
              $region78: #{mssa_forward.5} parent=71 // loop_footer_branch
                %367 = sbr.rel target = $region74
              $region79: #{mssa_forward.5} parent=71 // loop_exit
                _
            $region72: #{mssa_forward.5} parent=67 // pred_fallthru
              _
            // Predicated region
            $region80: #{mssa_forward.5} parent=67 // pred_check
              _
            $region81: #{mssa_forward.5} parent=67 // pred_check_branch
              %440 = sbr.rel target = $region83
            $region82: #{mssa_forward.5} parent=67 // pred_region
              _
            $region83: #{mssa_forward.5} parent=67 // pred_fallthru
              _
          $region68: #{mssa_forward.5} parent=63 // pred_fallthru
            _
          %441 = vnop
        $region64: #{mssa_forward.5} parent=59 // pred_fallthru
          _
      $region60: #{mssa_forward.5} parent=5 // pred_fallthru
        _
      %p442 = scmp.le.s32.totalorder 1, %s18
      %p443 = scmp.lt.s32.totalorder %s18, 3
      %p444 = pnand %p442, %p443
      %p445 = pneg %p444
      // Predicated region
      $region84: #{mssa_forward.5} parent=5 // pred_check
        _
      $region85: #{mssa_forward.5} parent=5 // pred_check_branch
        %447 = sbr.rel (%p444) target = $region87
      $region86: #{mssa_forward.5} parent=5 // pred_region
        %s448 = ssub.s32 %s18, 1
        %s449 = sand.u32 %s31, 1
        %s450 = sand.u32 %s31, 1
        %s451 = smul.addr %s450, 256
        %s452 = scalar_lea.vmem [#allocation2], %s451
        // Predicated region
        $region88: #{mssa_forward.5} parent=86 // pred_check
          %p453 = pneg %p44
        $region89: #{mssa_forward.5} parent=86 // pred_check_branch
          %455 = sbr.rel (%p453) target = $region91
        $region90: #{mssa_forward.5} parent=86 // pred_region
          _
        $region91: #{mssa_forward.5} parent=86 // pred_fallthru
          _
        %s456 = sand.u32 %s31, 1
        %s457 = sand.u32 %s31, 1
        %s458 = smul.addr %s457, 256
        %s459 = scalar_lea.vmem [#allocation2], %s458
        %p460 = pneg %p44
        %p461 = pneg %p41
        %p462 = pneg %p65
        %p463 = pneg %p62
        %p464 = pneg %p86
        %p465 = pneg %p83
        %p466 = pneg %p107
        %p467 = pneg %p104
        %p468 = pneg %p128
        %p469 = pneg %p125
        %p470 = pneg %p149
        %p471 = pneg %p146
        %p472 = pneg %p170
        %p473 = pneg %p167
        %p474 = pneg %p191
        %p475 = pneg %p188
        %p476 = pneg %p212
        %p477 = pneg %p209
        %p478 = pneg %p233
        %p479 = pneg %p230
        %p480 = pneg %p254
        %p481 = pneg %p251
        %p482 = pneg %p275
        %p483 = pneg %p272
        %p484 = pneg %p301
        %p485 = pneg %p298
        %p486 = scmp.lt.s32.totalorder %s23, 1
        %s487 = scalar_select %p486, %s23, 1
        %s488 = smul.addr %s487, 16
        %s489 = smul.addr %s488, 8
        %s490 = scalar_lea.vmem %s12, %s489
        %s491 = smul.u32 2, %s23
        %p492 = scmp.lt.s32.totalorder %s23, 1
        %s493 = scalar_select %p492, %s23, 1
        %s494 = smul.addr %s493, 16
        %s495 = smul.addr %s494, 8
        %s496 = scalar_lea.vmem %s12, %s495
        %v498 = vld [vmem:[%s452] sm:$0xff]
        %v499 = vld [vmem:[%s452 + $0x8] sm:$0xff]
        %v500 = vld [vmem:[%s452 + $0x10] sm:$0xff]
        %v501 = vld [vmem:[%s452 + $0x18] sm:$0xff]
        %v502 = vld [vmem:[%s452 + $0x20] sm:$0xff]
        %v503 = vld [vmem:[%s452 + $0x28] sm:$0xff]
        %v504 = vld [vmem:[%s452 + $0x30] sm:$0xff]
        %v505 = vld [vmem:[%s452 + $0x38] sm:$0xff]
        %v506 = vld [vmem:[%s452 + $0x40] sm:$0xff]
        %v507 = vld [vmem:[%s452 + $0x48] sm:$0xff]
        %v508 = vld [vmem:[%s452 + $0x50] sm:$0xff]
        %v509 = vld [vmem:[%s452 + $0x58] sm:$0xff]
        %v510 = vld [vmem:[%s452 + $0x60] sm:$0xff]
        %v511 = vld [vmem:[%s452 + $0x68] sm:$0xff]
        %v512 = vld [vmem:[%s452 + $0x70] sm:$0xff]
        %v513 = vld [vmem:[%s452 + $0x78] sm:$0xff]
        %v514 = vld [vmem:[%s452 + $0x80] sm:$0xff]
        %v515 = vld [vmem:[%s452 + $0x88] sm:$0xff]
        %v516 = vld [vmem:[%s452 + $0x90] sm:$0xff]
        %v517 = vld [vmem:[%s452 + $0x98] sm:$0xff]
        %v518 = vld [vmem:[%s452 + $0xa0] sm:$0xff]
        %v519 = vld [vmem:[%s452 + $0xa8] sm:$0xff]
        %v520 = vld [vmem:[%s452 + $0xb0] sm:$0xff]
        %v521 = vld [vmem:[%s452 + $0xb8] sm:$0xff]
        %v522 = vld [vmem:[%s452 + $0xc0] sm:$0xff]
        %v523 = vld [vmem:[%s452 + $0xc8] sm:$0xff]
        %v524 = vld [vmem:[%s452 + $0xd0] sm:$0xff]
        %v525 = vld [vmem:[%s452 + $0xd8] sm:$0xff]
        %v526 = vld [vmem:[%s452 + $0xe0] sm:$0xff]
        %v527 = vld [vmem:[%s452 + $0xe8] sm:$0xff]
        %v528 = vld [vmem:[%s452 + $0xf0] sm:$0xff]
        %v529 = vld [vmem:[%s452 + $0xf8] sm:$0xff]
        %v530 = vlaneseq
        %v531 = vand.u32 %v530, 127
        %v532 = vadd.s32 %v531, 128
        %v533 = vand.u32 %v531, 31
        %v534 = vand.u32 %v532, 31
        %vm535 = vcmp.ge.s32.totalorder %v533, 1
        %vm536 = vcmp.ge.s32.totalorder %v534, 1
        %537 = vrot.lane.b32.xlu0 %v498, 1
        %v538 = vpop.permute.xlu0 %537
        %539 = vrot.lane.b32.xlu0 %v500, 1
        %v540 = vpop.permute.xlu0 %539
        %541 = vrot.lane.b32.xlu0 %v502, 1
        %v542 = vpop.permute.xlu0 %541
        %543 = vrot.lane.b32.xlu0 %v504, 1
        %v544 = vpop.permute.xlu0 %543
        %545 = vrot.lane.b32.xlu0 %v506, 1
        %v546 = vpop.permute.xlu0 %545
        %547 = vrot.lane.b32.xlu0 %v508, 1
        %v548 = vpop.permute.xlu0 %547
        %549 = vrot.lane.b32.xlu0 %v510, 1
        %v550 = vpop.permute.xlu0 %549
        %551 = vrot.lane.b32.xlu0 %v512, 1
        %v552 = vpop.permute.xlu0 %551
        %553 = vrot.lane.b32.xlu0 %v514, 1
        %v554 = vpop.permute.xlu0 %553
        %555 = vrot.lane.b32.xlu0 %v516, 1
        %v556 = vpop.permute.xlu0 %555
        %557 = vrot.lane.b32.xlu0 %v518, 1
        %v558 = vpop.permute.xlu0 %557
        %559 = vrot.lane.b32.xlu0 %v520, 1
        %v560 = vpop.permute.xlu0 %559
        %561 = vrot.lane.b32.xlu0 %v522, 1
        %v562 = vpop.permute.xlu0 %561
        %563 = vrot.lane.b32.xlu0 %v524, 1
        %v564 = vpop.permute.xlu0 %563
        %565 = vrot.lane.b32.xlu0 %v526, 1
        %v566 = vpop.permute.xlu0 %565
        %567 = vrot.lane.b32.xlu0 %v528, 1
        %v568 = vpop.permute.xlu0 %567
        %569 = vrot.lane.b32.xlu0 %v499, 1
        %v570 = vpop.permute.xlu0 %569
        %571 = vrot.lane.b32.xlu0 %v501, 1
        %v572 = vpop.permute.xlu0 %571
        %573 = vrot.lane.b32.xlu0 %v503, 1
        %v574 = vpop.permute.xlu0 %573
        %575 = vrot.lane.b32.xlu0 %v505, 1
        %v576 = vpop.permute.xlu0 %575
        %577 = vrot.lane.b32.xlu0 %v507, 1
        %v578 = vpop.permute.xlu0 %577
        %579 = vrot.lane.b32.xlu0 %v509, 1
        %v580 = vpop.permute.xlu0 %579
        %581 = vrot.lane.b32.xlu0 %v511, 1
        %v582 = vpop.permute.xlu0 %581
        %583 = vrot.lane.b32.xlu0 %v513, 1
        %v584 = vpop.permute.xlu0 %583
        %585 = vrot.lane.b32.xlu0 %v515, 1
        %v586 = vpop.permute.xlu0 %585
        %587 = vrot.lane.b32.xlu0 %v517, 1
        %v588 = vpop.permute.xlu0 %587
        %589 = vrot.lane.b32.xlu0 %v519, 1
        %v590 = vpop.permute.xlu0 %589
        %591 = vrot.lane.b32.xlu0 %v521, 1
        %v592 = vpop.permute.xlu0 %591
        %593 = vrot.lane.b32.xlu0 %v523, 1
        %v594 = vpop.permute.xlu0 %593
        %595 = vrot.lane.b32.xlu0 %v525, 1
        %v596 = vpop.permute.xlu0 %595
        %597 = vrot.lane.b32.xlu0 %v527, 1
        %v598 = vpop.permute.xlu0 %597
        %599 = vrot.lane.b32.xlu0 %v529, 1
        %v600 = vpop.permute.xlu0 %599
        %vm601 = vcmp.lt.s32.totalorder %v531, 1
        %v602 = vsel %vm601, %v538, %v570
        %v603 = vsel %vm601, %v540, %v572
        %v604 = vsel %vm601, %v542, %v574
        %v605 = vsel %vm601, %v544, %v576
        %v606 = vsel %vm601, %v546, %v578
        %v607 = vsel %vm601, %v548, %v580
        %v608 = vsel %vm601, %v550, %v582
        %v609 = vsel %vm601, %v552, %v584
        %v610 = vsel %vm601, %v554, %v586
        %v611 = vsel %vm601, %v556, %v588
        %v612 = vsel %vm601, %v558, %v590
        %v613 = vsel %vm601, %v560, %v592
        %v614 = vsel %vm601, %v562, %v594
        %v615 = vsel %vm601, %v564, %v596
        %v616 = vsel %vm601, %v566, %v598
        %v617 = vsel %vm601, %v568, %v600
        %v618 = vsel %vm601, %v570, %v538
        %v619 = vsel %vm601, %v572, %v540
        %v620 = vsel %vm601, %v574, %v542
        %v621 = vsel %vm601, %v576, %v544
        %v622 = vsel %vm601, %v578, %v546
        %v623 = vsel %vm601, %v580, %v548
        %v624 = vsel %vm601, %v582, %v550
        %v625 = vsel %vm601, %v584, %v552
        %v626 = vsel %vm601, %v586, %v554
        %v627 = vsel %vm601, %v588, %v556
        %v628 = vsel %vm601, %v590, %v558
        %v629 = vsel %vm601, %v592, %v560
        %v630 = vsel %vm601, %v594, %v562
        %v631 = vsel %vm601, %v596, %v564
        %v632 = vsel %vm601, %v598, %v566
        %v633 = vsel %vm601, %v600, %v568
        %v634 = vsel %vm535, %v618, 0.0
        %v635 = vsel %vm536, %v602, 0.0
        %v636 = vsel %vm535, %v619, 0.0
        %v637 = vsel %vm536, %v603, 0.0
        %v638 = vsel %vm535, %v620, 0.0
        %v639 = vsel %vm536, %v604, 0.0
        %v640 = vsel %vm535, %v621, 0.0
        %v641 = vsel %vm536, %v605, 0.0
        %v642 = vsel %vm535, %v622, 0.0
        %v643 = vsel %vm536, %v606, 0.0
        %v644 = vsel %vm535, %v623, 0.0
        %v645 = vsel %vm536, %v607, 0.0
        %v646 = vsel %vm535, %v624, 0.0
        %v647 = vsel %vm536, %v608, 0.0
        %v648 = vsel %vm535, %v625, 0.0
        %v649 = vsel %vm536, %v609, 0.0
        %v650 = vsel %vm535, %v626, 0.0
        %v651 = vsel %vm536, %v610, 0.0
        %v652 = vsel %vm535, %v627, 0.0
        %v653 = vsel %vm536, %v611, 0.0
        %v654 = vsel %vm535, %v628, 0.0
        %v655 = vsel %vm536, %v612, 0.0
        %v656 = vsel %vm535, %v629, 0.0
        %v657 = vsel %vm536, %v613, 0.0
        %v658 = vsel %vm535, %v630, 0.0
        %v659 = vsel %vm536, %v614, 0.0
        %v660 = vsel %vm535, %v631, 0.0
        %v661 = vsel %vm536, %v615, 0.0
        %v662 = vsel %vm535, %v632, 0.0
        %v663 = vsel %vm536, %v616, 0.0
        %v664 = vsel %vm535, %v633, 0.0
        %v665 = vsel %vm536, %v617, 0.0
        %vm666 = vcmp.le.s32.totalorder %v533, 30
        %vm667 = vcmp.le.s32.totalorder %v534, 30
        %668 = vrot.lane.b32.xlu0 %v498, 127
        %v669 = vpop.permute.xlu0 %668
        %670 = vrot.lane.b32.xlu0 %v500, 127
        %v671 = vpop.permute.xlu0 %670
        %672 = vrot.lane.b32.xlu0 %v502, 127
        %v673 = vpop.permute.xlu0 %672
        %674 = vrot.lane.b32.xlu0 %v504, 127
        %v675 = vpop.permute.xlu0 %674
        %676 = vrot.lane.b32.xlu0 %v506, 127
        %v677 = vpop.permute.xlu0 %676
        %678 = vrot.lane.b32.xlu0 %v508, 127
        %v679 = vpop.permute.xlu0 %678
        %680 = vrot.lane.b32.xlu0 %v510, 127
        %v681 = vpop.permute.xlu0 %680
        %682 = vrot.lane.b32.xlu0 %v512, 127
        %v683 = vpop.permute.xlu0 %682
        %684 = vrot.lane.b32.xlu0 %v514, 127
        %v685 = vpop.permute.xlu0 %684
        %686 = vrot.lane.b32.xlu0 %v516, 127
        %v687 = vpop.permute.xlu0 %686
        %688 = vrot.lane.b32.xlu0 %v518, 127
        %v689 = vpop.permute.xlu0 %688
        %690 = vrot.lane.b32.xlu0 %v520, 127
        %v691 = vpop.permute.xlu0 %690
        %692 = vrot.lane.b32.xlu0 %v522, 127
        %v693 = vpop.permute.xlu0 %692
        %694 = vrot.lane.b32.xlu0 %v524, 127
        %v695 = vpop.permute.xlu0 %694
        %696 = vrot.lane.b32.xlu0 %v526, 127
        %v697 = vpop.permute.xlu0 %696
        %698 = vrot.lane.b32.xlu0 %v528, 127
        %v699 = vpop.permute.xlu0 %698
        %700 = vrot.lane.b32.xlu0 %v499, 127
        %v701 = vpop.permute.xlu0 %700
        %702 = vrot.lane.b32.xlu0 %v501, 127
        %v703 = vpop.permute.xlu0 %702
        %704 = vrot.lane.b32.xlu0 %v503, 127
        %v705 = vpop.permute.xlu0 %704
        %706 = vrot.lane.b32.xlu0 %v505, 127
        %v707 = vpop.permute.xlu0 %706
        %708 = vrot.lane.b32.xlu0 %v507, 127
        %v709 = vpop.permute.xlu0 %708
        %710 = vrot.lane.b32.xlu0 %v509, 127
        %v711 = vpop.permute.xlu0 %710
        %712 = vrot.lane.b32.xlu0 %v511, 127
        %v713 = vpop.permute.xlu0 %712
        %714 = vrot.lane.b32.xlu0 %v513, 127
        %v715 = vpop.permute.xlu0 %714
        %716 = vrot.lane.b32.xlu0 %v515, 127
        %v717 = vpop.permute.xlu0 %716
        %718 = vrot.lane.b32.xlu0 %v517, 127
        %v719 = vpop.permute.xlu0 %718
        %720 = vrot.lane.b32.xlu0 %v519, 127
        %v721 = vpop.permute.xlu0 %720
        %722 = vrot.lane.b32.xlu0 %v521, 127
        %v723 = vpop.permute.xlu0 %722
        %724 = vrot.lane.b32.xlu0 %v523, 127
        %v725 = vpop.permute.xlu0 %724
        %726 = vrot.lane.b32.xlu0 %v525, 127
        %v727 = vpop.permute.xlu0 %726
        %728 = vrot.lane.b32.xlu0 %v527, 127
        %v729 = vpop.permute.xlu0 %728
        %730 = vrot.lane.b32.xlu0 %v529, 127
        %v731 = vpop.permute.xlu0 %730
        %vm732 = vcmp.lt.s32.totalorder %v531, 127
        %v733 = vsel %vm732, %v669, %v701
        %v734 = vsel %vm732, %v671, %v703
        %v735 = vsel %vm732, %v673, %v705
        %v736 = vsel %vm732, %v675, %v707
        %v737 = vsel %vm732, %v677, %v709
        %v738 = vsel %vm732, %v679, %v711
        %v739 = vsel %vm732, %v681, %v713
        %v740 = vsel %vm732, %v683, %v715
        %v741 = vsel %vm732, %v685, %v717
        %v742 = vsel %vm732, %v687, %v719
        %v743 = vsel %vm732, %v689, %v721
        %v744 = vsel %vm732, %v691, %v723
        %v745 = vsel %vm732, %v693, %v725
        %v746 = vsel %vm732, %v695, %v727
        %v747 = vsel %vm732, %v697, %v729
        %v748 = vsel %vm732, %v699, %v731
        %v749 = vsel %vm732, %v701, %v669
        %v750 = vsel %vm732, %v703, %v671
        %v751 = vsel %vm732, %v705, %v673
        %v752 = vsel %vm732, %v707, %v675
        %v753 = vsel %vm732, %v709, %v677
        %v754 = vsel %vm732, %v711, %v679
        %v755 = vsel %vm732, %v713, %v681
        %v756 = vsel %vm732, %v715, %v683
        %v757 = vsel %vm732, %v717, %v685
        %v758 = vsel %vm732, %v719, %v687
        %v759 = vsel %vm732, %v721, %v689
        %v760 = vsel %vm732, %v723, %v691
        %v761 = vsel %vm732, %v725, %v693
        %v762 = vsel %vm732, %v727, %v695
        %v763 = vsel %vm732, %v729, %v697
        %v764 = vsel %vm732, %v731, %v699
        %v765 = vsel %vm666, %v733, 0.0
        %v766 = vsel %vm667, %v749, 0.0
        %v767 = vsel %vm666, %v734, 0.0
        %v768 = vsel %vm667, %v750, 0.0
        %v769 = vsel %vm666, %v735, 0.0
        %v770 = vsel %vm667, %v751, 0.0
        %v771 = vsel %vm666, %v736, 0.0
        %v772 = vsel %vm667, %v752, 0.0
        %v773 = vsel %vm666, %v737, 0.0
        %v774 = vsel %vm667, %v753, 0.0
        %v775 = vsel %vm666, %v738, 0.0
        %v776 = vsel %vm667, %v754, 0.0
        %v777 = vsel %vm666, %v739, 0.0
        %v778 = vsel %vm667, %v755, 0.0
        %v779 = vsel %vm666, %v740, 0.0
        %v780 = vsel %vm667, %v756, 0.0
        %v781 = vsel %vm666, %v741, 0.0
        %v782 = vsel %vm667, %v757, 0.0
        %v783 = vsel %vm666, %v742, 0.0
        %v784 = vsel %vm667, %v758, 0.0
        %v785 = vsel %vm666, %v743, 0.0
        %v786 = vsel %vm667, %v759, 0.0
        %v787 = vsel %vm666, %v744, 0.0
        %v788 = vsel %vm667, %v760, 0.0
        %v789 = vsel %vm666, %v745, 0.0
        %v790 = vsel %vm667, %v761, 0.0
        %v791 = vsel %vm666, %v746, 0.0
        %v792 = vsel %vm667, %v762, 0.0
        %v793 = vsel %vm666, %v747, 0.0
        %v794 = vsel %vm667, %v763, 0.0
        %v795 = vsel %vm666, %v748, 0.0
        %v796 = vsel %vm667, %v764, 0.0
        %v797 = vpack.c.bf16 %v636, %v634
        %v798 = vpack.c.bf16 %v637, %v635
        %v799 = vpack.c.bf16 %v640, %v638
        %v800 = vpack.c.bf16 %v641, %v639
        %v801 = vpack.c.bf16 %v644, %v642
        %v802 = vpack.c.bf16 %v645, %v643
        %v803 = vpack.c.bf16 %v648, %v646
        %v804 = vpack.c.bf16 %v649, %v647
        %v805 = vpack.c.bf16 %v652, %v650
        %v806 = vpack.c.bf16 %v653, %v651
        %v807 = vpack.c.bf16 %v656, %v654
        %v808 = vpack.c.bf16 %v657, %v655
        %v809 = vpack.c.bf16 %v660, %v658
        %v810 = vpack.c.bf16 %v661, %v659
        %v811 = vpack.c.bf16 %v664, %v662
        %v812 = vpack.c.bf16 %v665, %v663
        %v813 = vpack.c.bf16 %v500, %v498
        %v814 = vpack.c.bf16 %v501, %v499
        %v815 = vpack.c.bf16 %v504, %v502
        %v816 = vpack.c.bf16 %v505, %v503
        %v817 = vpack.c.bf16 %v508, %v506
        %v818 = vpack.c.bf16 %v509, %v507
        %v819 = vpack.c.bf16 %v512, %v510
        %v820 = vpack.c.bf16 %v513, %v511
        %v821 = vpack.c.bf16 %v516, %v514
        %v822 = vpack.c.bf16 %v517, %v515
        %v823 = vpack.c.bf16 %v520, %v518
        %v824 = vpack.c.bf16 %v521, %v519
        %v825 = vpack.c.bf16 %v524, %v522
        %v826 = vpack.c.bf16 %v525, %v523
        %v827 = vpack.c.bf16 %v528, %v526
        %v828 = vpack.c.bf16 %v529, %v527
        %v829 = vpack.c.bf16 %v767, %v765
        %v830 = vpack.c.bf16 %v768, %v766
        %v831 = vpack.c.bf16 %v771, %v769
        %v832 = vpack.c.bf16 %v772, %v770
        %v833 = vpack.c.bf16 %v775, %v773
        %v834 = vpack.c.bf16 %v776, %v774
        %v835 = vpack.c.bf16 %v779, %v777
        %v836 = vpack.c.bf16 %v780, %v778
        %v837 = vpack.c.bf16 %v783, %v781
        %v838 = vpack.c.bf16 %v784, %v782
        %v839 = vpack.c.bf16 %v787, %v785
        %v840 = vpack.c.bf16 %v788, %v786
        %v841 = vpack.c.bf16 %v791, %v789
        %v842 = vpack.c.bf16 %v792, %v790
        %v843 = vpack.c.bf16 %v795, %v793
        %v844 = vpack.c.bf16 %v796, %v794
        %v845 = vld [vmem:[%s1] sm:$0xff]
        %v846 = vld [vmem:[%s1 + $0x8] sm:$0xf]
        %v847 = vld [vmem:[%s1 + $0xc] sm:$0xff]
        %v848 = vld [vmem:[%s1 + $0x14] sm:$0xf]
        %v849 = vld [vmem:[%s1 + $0x18] sm:$0xff]
        %v850 = vld [vmem:[%s1 + $0x20] sm:$0xf]
        %v851 = vld [vmem:[%s1 + $0x24] sm:$0xff]
        %v852 = vld [vmem:[%s1 + $0x2c] sm:$0xf]
        %v853 = vld [vmem:[%s1 + $0x30] sm:$0xff]
        %v854 = vld [vmem:[%s1 + $0x38] sm:$0xf]
        %v855 = vld [vmem:[%s1 + $0x3c] sm:$0xff]
        %v856 = vld [vmem:[%s1 + $0x44] sm:$0xf]
        %v857 = vld [vmem:[%s1 + $0x48] sm:$0xff]
        %v858 = vld [vmem:[%s1 + $0x50] sm:$0xf]
        %v859 = vld [vmem:[%s1 + $0x54] sm:$0xff]
        %v860 = vld [vmem:[%s1 + $0x5c] sm:$0xf]
        %v861 = vld [vmem:[%s1 + $0x60] sm:$0xff]
        %v862 = vld [vmem:[%s1 + $0x68] sm:$0xf]
        %v863 = vld [vmem:[%s1 + $0x6c] sm:$0xff]
        %v864 = vld [vmem:[%s1 + $0x74] sm:$0xf]
        %v865 = vld [vmem:[%s1 + $0x78] sm:$0xff]
        %v866 = vld [vmem:[%s1 + $0x80] sm:$0xf]
        %v867 = vld [vmem:[%s1 + $0x84] sm:$0xff]
        %v868 = vld [vmem:[%s1 + $0x8c] sm:$0xf]
        %v869 = vld [vmem:[%s1 + $0x90] sm:$0xff]
        %v870 = vld [vmem:[%s1 + $0x98] sm:$0xf]
        %v871 = vld [vmem:[%s1 + $0x9c] sm:$0xff]
        %v872 = vld [vmem:[%s1 + $0xa4] sm:$0xf]
        %v873 = vld [vmem:[%s1 + $0xa8] sm:$0xff]
        %v874 = vld [vmem:[%s1 + $0xb0] sm:$0xf]
        %v875 = vld [vmem:[%s1 + $0xb4] sm:$0xff]
        %v876 = vld [vmem:[%s1 + $0xbc] sm:$0xf]
        %v909 = vunpack.c.l.b16 %v845
        %v910 = vunpack.c.h.b16 %v845
        %v911 = vunpack.c.l.b16 %v846
        %v912 = vunpack.c.l.b16 %v847
        %v913 = vunpack.c.h.b16 %v847
        %v914 = vunpack.c.l.b16 %v848
        %v915 = vunpack.c.l.b16 %v849
        %v916 = vunpack.c.h.b16 %v849
        %v917 = vunpack.c.l.b16 %v850
        %v918 = vunpack.c.l.b16 %v851
        %v919 = vunpack.c.h.b16 %v851
        %v920 = vunpack.c.l.b16 %v852
        %v921 = vunpack.c.l.b16 %v853
        %v922 = vunpack.c.h.b16 %v853
        %v923 = vunpack.c.l.b16 %v854
        %v924 = vunpack.c.l.b16 %v855
        %v925 = vunpack.c.h.b16 %v855
        %v926 = vunpack.c.l.b16 %v856
        %v927 = vunpack.c.l.b16 %v857
        %v928 = vunpack.c.h.b16 %v857
        %v929 = vunpack.c.l.b16 %v858
        %v930 = vunpack.c.l.b16 %v859
        %v931 = vunpack.c.h.b16 %v859
        %v932 = vunpack.c.l.b16 %v860
        %v933 = vunpack.c.l.b16 %v861
        %v934 = vunpack.c.h.b16 %v861
        %v935 = vunpack.c.l.b16 %v862
        %v936 = vunpack.c.l.b16 %v863
        %v937 = vunpack.c.h.b16 %v863
        %v938 = vunpack.c.l.b16 %v864
        %v939 = vunpack.c.l.b16 %v865
        %v940 = vunpack.c.h.b16 %v865
        %v941 = vunpack.c.l.b16 %v866
        %v942 = vunpack.c.l.b16 %v867
        %v943 = vunpack.c.h.b16 %v867
        %v944 = vunpack.c.l.b16 %v868
        %v945 = vunpack.c.l.b16 %v869
        %v946 = vunpack.c.h.b16 %v869
        %v947 = vunpack.c.l.b16 %v870
        %v948 = vunpack.c.l.b16 %v871
        %v949 = vunpack.c.h.b16 %v871
        %v950 = vunpack.c.l.b16 %v872
        %v951 = vunpack.c.l.b16 %v873
        %v952 = vunpack.c.h.b16 %v873
        %v953 = vunpack.c.l.b16 %v874
        %v954 = vunpack.c.l.b16 %v875
        %v955 = vunpack.c.h.b16 %v875
        %v956 = vunpack.c.l.b16 %v876
        %v957 = vpack.c.b16 %v912, %v909
        %v958 = vpack.c.b16 %v913, %v910
        %v959 = vpack.c.b16 %v914, %v911
        %v960 = vpack.c.b16 %v918, %v915
        %v961 = vpack.c.b16 %v919, %v916
        %v962 = vpack.c.b16 %v920, %v917
        %v963 = vpack.c.b16 %v924, %v921
        %v964 = vpack.c.b16 %v925, %v922
        %v965 = vpack.c.b16 %v926, %v923
        %v966 = vpack.c.b16 %v930, %v927
        %v967 = vpack.c.b16 %v931, %v928
        %v968 = vpack.c.b16 %v932, %v929
        %v969 = vpack.c.b16 %v936, %v933
        %v970 = vpack.c.b16 %v937, %v934
        %v971 = vpack.c.b16 %v938, %v935
        %v972 = vpack.c.b16 %v942, %v939
        %v973 = vpack.c.b16 %v943, %v940
        %v974 = vpack.c.b16 %v944, %v941
        %v975 = vpack.c.b16 %v948, %v945
        %v976 = vpack.c.b16 %v949, %v946
        %v977 = vpack.c.b16 %v950, %v947
        %v978 = vpack.c.b16 %v954, %v951
        %v979 = vpack.c.b16 %v955, %v952
        %v980 = vpack.c.b16 %v956, %v953
        %1005 = vmatprep.subr.bf16.mxu0 %v798
        %1006 = vmatpush1.bf16.msra.mxu0 %v797
        %1007 = vmatprep.subr.bf16.mxu0 %v800
        %1008 = vmatpush1.bf16.msra.mxu0 %v799
        %1009 = vmatprep.subr.bf16.mxu0 %v802
        %1010 = vmatpush1.bf16.msra.mxu0 %v801
        %1011 = vmatprep.subr.bf16.mxu0 %v804
        %1012 = vmatpush1.bf16.msra.mxu0 %v803
        %1013 = vmatprep.subr.bf16.mxu0 %v806
        %1014 = vmatpush1.bf16.msra.mxu0 %v805
        %1015 = vmatprep.subr.bf16.mxu0 %v808
        %1016 = vmatpush1.bf16.msra.mxu0 %v807
        %1017 = vmatprep.subr.bf16.mxu0 %v810
        %1018 = vmatpush1.bf16.msra.mxu0 %v809
        %1019 = vmatprep.subr.bf16.mxu0 %v812
        %1020 = vmatpush1.bf16.msra.mxu0 %v811
        %1021 = vmatprep.subr.bf16.mxu0 %v814
        %1022 = vmatpush1.bf16.msra.mxu0 %v813
        %1023 = vmatprep.subr.bf16.mxu0 %v816
        %1024 = vmatpush1.bf16.msra.mxu0 %v815
        %1025 = vmatprep.subr.bf16.mxu0 %v818
        %1026 = vmatpush1.bf16.msra.mxu0 %v817
        %1027 = vmatprep.subr.bf16.mxu0 %v820
        %1028 = vmatpush1.bf16.msra.mxu0 %v819
        %1029 = vmatprep.subr.bf16.mxu0 %v822
        %1030 = vmatpush1.bf16.msra.mxu0 %v821
        %1031 = vmatprep.subr.bf16.mxu0 %v824
        %1032 = vmatpush1.bf16.msra.mxu0 %v823
        %1033 = vmatprep.subr.bf16.mxu0 %v826
        %1034 = vmatpush1.bf16.msra.mxu0 %v825
        %1035 = vmatprep.subr.bf16.mxu0 %v828
        %1036 = vmatpush1.bf16.msra.mxu0 %v827
        %1037 = vmatprep.mubr.bf16.mxu0 %v958
        %1038 = vmatmul.mubr.bf16.gmra.mrb[0].mxu0 %v957
        %v1039 = vpop.f32.mrb[0].mxu0
        %v1040 = vadd.f32 0.0, %v1039
        %v1041 = vpop.f32.mrb[0].mxu0
        %v1042 = vadd.f32 0.0, %v1041
        %v1043 = vpop.f32.mrb[0].mxu0
        %v1044 = vadd.f32 0.0, %v1043
        %v1045 = vpop.f32.mrb[0].mxu0
        %v1046 = vadd.f32 0.0, %v1045
        %1047 = vmatprep.mubr.bf16.mxu0 %v961
        %1048 = vmatmul.mubr.bf16.gmra.mrb[0].mxu0 %v960
        %v1049 = vpop.f32.mrb[0].mxu0
        %v1050 = vadd.f32 0.0, %v1049
        %v1051 = vpop.f32.mrb[0].mxu0
        %v1052 = vadd.f32 0.0, %v1051
        %v1053 = vpop.f32.mrb[0].mxu0
        %v1054 = vadd.f32 0.0, %v1053
        %v1055 = vpop.f32.mrb[0].mxu0
        %v1056 = vadd.f32 0.0, %v1055
        %1057 = vmatprep.mubr.bf16.mxu0 %v964
        %1058 = vmatmul.mubr.bf16.gmra.mrb[0].mxu0 %v963
        %v1059 = vpop.f32.mrb[0].mxu0
        %v1060 = vadd.f32 0.0, %v1059
        %v1061 = vpop.f32.mrb[0].mxu0
        %v1062 = vadd.f32 0.0, %v1061
        %v1063 = vpop.f32.mrb[0].mxu0
        %v1064 = vadd.f32 0.0, %v1063
        %v1065 = vpop.f32.mrb[0].mxu0
        %v1066 = vadd.f32 0.0, %v1065
        %1067 = vmatprep.mubr.bf16.mxu0 %v967
        %1068 = vmatmul.mubr.bf16.gmra.mrb[0].mxu0 %v966
        %v1069 = vpop.f32.mrb[0].mxu0
        %v1070 = vadd.f32 0.0, %v1069
        %v1071 = vpop.f32.mrb[0].mxu0
        %v1072 = vadd.f32 0.0, %v1071
        %v1073 = vpop.f32.mrb[0].mxu0
        %v1074 = vadd.f32 0.0, %v1073
        %v1075 = vpop.f32.mrb[0].mxu0
        %v1076 = vadd.f32 0.0, %v1075
        %1077 = vmatprep.mubr.bf16.mxu0 %v970
        %1078 = vmatmul.mubr.bf16.gmra.mrb[0].mxu0 %v969
        %v1079 = vpop.f32.mrb[0].mxu0
        %v1080 = vadd.f32 0.0, %v1079
        %v1081 = vpop.f32.mrb[0].mxu0
        %v1082 = vadd.f32 0.0, %v1081
        %v1083 = vpop.f32.mrb[0].mxu0
        %v1084 = vadd.f32 0.0, %v1083
        %v1085 = vpop.f32.mrb[0].mxu0
        %v1086 = vadd.f32 0.0, %v1085
        %1087 = vmatprep.mubr.bf16.mxu0 %v973
        %1088 = vmatmul.mubr.bf16.gmra.mrb[0].mxu0 %v972
        %v1089 = vpop.f32.mrb[0].mxu0
        %v1090 = vadd.f32 0.0, %v1089
        %v1091 = vpop.f32.mrb[0].mxu0
        %v1092 = vadd.f32 0.0, %v1091
        %v1093 = vpop.f32.mrb[0].mxu0
        %v1094 = vadd.f32 0.0, %v1093
        %v1095 = vpop.f32.mrb[0].mxu0
        %v1096 = vadd.f32 0.0, %v1095
        %1097 = vmatprep.mubr.bf16.mxu0 %v976
        %1098 = vmatmul.mubr.bf16.gmra.mrb[0].mxu0 %v975
        %v1099 = vpop.f32.mrb[0].mxu0
        %v1100 = vadd.f32 0.0, %v1099
        %v1101 = vpop.f32.mrb[0].mxu0
        %v1102 = vadd.f32 0.0, %v1101
        %v1103 = vpop.f32.mrb[0].mxu0
        %v1104 = vadd.f32 0.0, %v1103
        %v1105 = vpop.f32.mrb[0].mxu0
        %v1106 = vadd.f32 0.0, %v1105
        %1107 = vmatprep.mubr.bf16.mxu0 %v979
        %1108 = vmatmul.mubr.bf16.gmra.mrb[0].mxu0 %v978
        %v1109 = vpop.f32.mrb[0].mxu0
        %v1110 = vadd.f32 0.0, %v1109
        %v1111 = vpop.f32.mrb[0].mxu0
        %v1112 = vadd.f32 0.0, %v1111
        %v1113 = vpop.f32.mrb[0].mxu0
        %v1114 = vadd.f32 0.0, %v1113
        %v1115 = vpop.f32.mrb[0].mxu0
        %v1116 = vadd.f32 0.0, %v1115
        %1117 = vdwg.mxu0
        %1118 = vmatprep.subr.bf16.mxu0 %v830
        %1119 = vmatpush1.bf16.msra.mxu0 %v829
        %1120 = vmatprep.subr.bf16.mxu0 %v832
        %1121 = vmatpush1.bf16.msra.mxu0 %v831
        %1122 = vmatprep.subr.bf16.mxu0 %v834
        %1123 = vmatpush1.bf16.msra.mxu0 %v833
        %1124 = vmatprep.subr.bf16.mxu0 %v836
        %1125 = vmatpush1.bf16.msra.mxu0 %v835
        %1126 = vmatprep.subr.bf16.mxu0 %v838
        %1127 = vmatpush1.bf16.msra.mxu0 %v837
        %1128 = vmatprep.subr.bf16.mxu0 %v840
        %1129 = vmatpush1.bf16.msra.mxu0 %v839
        %1130 = vmatprep.subr.bf16.mxu0 %v842
        %1131 = vmatpush1.bf16.msra.mxu0 %v841
        %1132 = vmatprep.subr.bf16.mxu0 %v844
        %1133 = vmatpush1.bf16.msra.mxu0 %v843
        %1134 = vmatprep.subr.bf16.mxu0 0
        %1135 = vmatpush1.bf16.msra.mxu0 0
        %1136 = vmatprep.subr.bf16.mxu0 0
        %1137 = vmatpush1.bf16.msra.mxu0 0
        %1138 = vmatprep.subr.bf16.mxu0 0
        %1139 = vmatpush1.bf16.msra.mxu0 0
        %1140 = vmatprep.subr.bf16.mxu0 0
        %1141 = vmatpush1.bf16.msra.mxu0 0
        %1142 = vmatprep.subr.bf16.mxu0 0
        %1143 = vmatpush1.bf16.msra.mxu0 0
        %1144 = vmatprep.subr.bf16.mxu0 0
        %1145 = vmatpush1.bf16.msra.mxu0 0
        %1146 = vmatprep.subr.bf16.mxu0 0
        %1147 = vmatpush1.bf16.msra.mxu0 0
        %1148 = vmatprep.subr.bf16.mxu0 0
        %1149 = vmatpush1.bf16.msra.mxu0 0
        %1150 = vmatprep.mubr.bf16.mxu0 0
        %1151 = vmatmul.mubr.bf16.gmra.mrb[0].mxu0 %v959
        %v1152 = vpop.f32.mrb[0].mxu0
        %v1153 = vadd.f32 %v1040, %v1152
        %v1154 = vpop.f32.mrb[0].mxu0
        %v1155 = vadd.f32 %v1042, %v1154
        %v1156 = vpop.f32.mrb[0].mxu0
        %v1157 = vadd.f32 %v1044, %v1156
        %v1158 = vpop.f32.mrb[0].mxu0
        %v1159 = vadd.f32 %v1046, %v1158
        %1160 = vmatprep.mubr.bf16.mxu0 0
        %1161 = vmatmul.mubr.bf16.gmra.mrb[0].mxu0 %v962
        %v1162 = vpop.f32.mrb[0].mxu0
        %v1163 = vadd.f32 %v1050, %v1162
        %v1164 = vpop.f32.mrb[0].mxu0
        %v1165 = vadd.f32 %v1052, %v1164
        %v1166 = vpop.f32.mrb[0].mxu0
        %v1167 = vadd.f32 %v1054, %v1166
        %v1168 = vpop.f32.mrb[0].mxu0
        %v1169 = vadd.f32 %v1056, %v1168
        %1170 = vmatprep.mubr.bf16.mxu0 0
        %1171 = vmatmul.mubr.bf16.gmra.mrb[0].mxu0 %v965
        %v1172 = vpop.f32.mrb[0].mxu0
        %v1173 = vadd.f32 %v1060, %v1172
        %v1174 = vpop.f32.mrb[0].mxu0
        %v1175 = vadd.f32 %v1062, %v1174
        %v1176 = vpop.f32.mrb[0].mxu0
        %v1177 = vadd.f32 %v1064, %v1176
        %v1178 = vpop.f32.mrb[0].mxu0
        %v1179 = vadd.f32 %v1066, %v1178
        %1180 = vmatprep.mubr.bf16.mxu0 0
        %1181 = vmatmul.mubr.bf16.gmra.mrb[0].mxu0 %v968
        %v1182 = vpop.f32.mrb[0].mxu0
        %v1183 = vadd.f32 %v1070, %v1182
        %v1184 = vpop.f32.mrb[0].mxu0
        %v1185 = vadd.f32 %v1072, %v1184
        %v1186 = vpop.f32.mrb[0].mxu0
        %v1187 = vadd.f32 %v1074, %v1186
        %v1188 = vpop.f32.mrb[0].mxu0
        %v1189 = vadd.f32 %v1076, %v1188
        %1190 = vmatprep.mubr.bf16.mxu0 0
        %1191 = vmatmul.mubr.bf16.gmra.mrb[0].mxu0 %v971
        %v1192 = vpop.f32.mrb[0].mxu0
        %v1193 = vadd.f32 %v1080, %v1192
        %v1194 = vpop.f32.mrb[0].mxu0
        %v1195 = vadd.f32 %v1082, %v1194
        %v1196 = vpop.f32.mrb[0].mxu0
        %v1197 = vadd.f32 %v1084, %v1196
        %v1198 = vpop.f32.mrb[0].mxu0
        %v1199 = vadd.f32 %v1086, %v1198
        %1200 = vmatprep.mubr.bf16.mxu0 0
        %1201 = vmatmul.mubr.bf16.gmra.mrb[0].mxu0 %v974
        %v1202 = vpop.f32.mrb[0].mxu0
        %v1203 = vadd.f32 %v1090, %v1202
        %v1204 = vpop.f32.mrb[0].mxu0
        %v1205 = vadd.f32 %v1092, %v1204
        %v1206 = vpop.f32.mrb[0].mxu0
        %v1207 = vadd.f32 %v1094, %v1206
        %v1208 = vpop.f32.mrb[0].mxu0
        %v1209 = vadd.f32 %v1096, %v1208
        %1210 = vmatprep.mubr.bf16.mxu0 0
        %1211 = vmatmul.mubr.bf16.gmra.mrb[0].mxu0 %v977
        %v1212 = vpop.f32.mrb[0].mxu0
        %v1213 = vadd.f32 %v1100, %v1212
        %v1214 = vpop.f32.mrb[0].mxu0
        %v1215 = vadd.f32 %v1102, %v1214
        %v1216 = vpop.f32.mrb[0].mxu0
        %v1217 = vadd.f32 %v1104, %v1216
        %v1218 = vpop.f32.mrb[0].mxu0
        %v1219 = vadd.f32 %v1106, %v1218
        %1220 = vmatprep.mubr.bf16.mxu0 0
        %1221 = vmatmul.mubr.bf16.gmra.mrb[0].mxu0 %v980
        %v1222 = vpop.f32.mrb[0].mxu0
        %v1223 = vadd.f32 %v1110, %v1222
        %v1224 = vpop.f32.mrb[0].mxu0
        %v1225 = vadd.f32 %v1112, %v1224
        %v1226 = vpop.f32.mrb[0].mxu0
        %v1227 = vadd.f32 %v1114, %v1226
        %v1228 = vpop.f32.mrb[0].mxu0
        %v1229 = vadd.f32 %v1116, %v1228
        %1230 = vdwg.mxu0
        %v1231 = vld [vmem:[%s2] sm:$0xff]
        %v1232 = vld [vmem:[%s2 + $0x8] sm:$0xff]
        %v1233 = vld [vmem:[%s2 + $0x10] sm:$0xff]
        %v1234 = vld [vmem:[%s2 + $0x18] sm:$0xff]
        %v1235 = vld [vmem:[%s2 + $0x20] sm:$0xff]
        %v1236 = vld [vmem:[%s2 + $0x28] sm:$0xff]
        %v1237 = vld [vmem:[%s2 + $0x30] sm:$0xff]
        %v1238 = vld [vmem:[%s2 + $0x38] sm:$0xff]
        %v1239 = vld [vmem:[%s2 + $0x40] sm:$0xff]
        %v1240 = vld [vmem:[%s2 + $0x48] sm:$0xff]
        %v1241 = vld [vmem:[%s2 + $0x50] sm:$0xff]
        %v1242 = vld [vmem:[%s2 + $0x58] sm:$0xff]
        %v1243 = vld [vmem:[%s2 + $0x60] sm:$0xff]
        %v1244 = vld [vmem:[%s2 + $0x68] sm:$0xff]
        %v1245 = vld [vmem:[%s2 + $0x70] sm:$0xff]
        %v1246 = vld [vmem:[%s2 + $0x78] sm:$0xff]
        %1248 = vset.pattern.permute.xlu0 0
        %1249 = vperm.xlu0 %1248, %v1231
        %v1250 = vpop.permute.xlu0 %1249
        %1253 = vset.pattern.permute.xlu0 0
        %1254 = vperm.xlu0 %1253, %v1232
        %v1255 = vpop.permute.xlu0 %1254
        %1258 = vset.pattern.permute.xlu0 0
        %1259 = vperm.xlu0 %1258, %v1233
        %v1260 = vpop.permute.xlu0 %1259
        %1263 = vset.pattern.permute.xlu0 0
        %1264 = vperm.xlu0 %1263, %v1234
        %v1265 = vpop.permute.xlu0 %1264
        %1268 = vset.pattern.permute.xlu0 0
        %1269 = vperm.xlu0 %1268, %v1235
        %v1270 = vpop.permute.xlu0 %1269
        %1273 = vset.pattern.permute.xlu0 0
        %1274 = vperm.xlu0 %1273, %v1236
        %v1275 = vpop.permute.xlu0 %1274
        %1278 = vset.pattern.permute.xlu0 0
        %1279 = vperm.xlu0 %1278, %v1237
        %v1280 = vpop.permute.xlu0 %1279
        %1283 = vset.pattern.permute.xlu0 0
        %1284 = vperm.xlu0 %1283, %v1238
        %v1285 = vpop.permute.xlu0 %1284
        %1288 = vset.pattern.permute.xlu0 0
        %1289 = vperm.xlu0 %1288, %v1239
        %v1290 = vpop.permute.xlu0 %1289
        %1293 = vset.pattern.permute.xlu0 0
        %1294 = vperm.xlu0 %1293, %v1240
        %v1295 = vpop.permute.xlu0 %1294
        %1298 = vset.pattern.permute.xlu0 0
        %1299 = vperm.xlu0 %1298, %v1241
        %v1300 = vpop.permute.xlu0 %1299
        %1303 = vset.pattern.permute.xlu0 0
        %1304 = vperm.xlu0 %1303, %v1242
        %v1305 = vpop.permute.xlu0 %1304
        %1308 = vset.pattern.permute.xlu0 0
        %1309 = vperm.xlu0 %1308, %v1243
        %v1310 = vpop.permute.xlu0 %1309
        %1313 = vset.pattern.permute.xlu0 0
        %1314 = vperm.xlu0 %1313, %v1244
        %v1315 = vpop.permute.xlu0 %1314
        %1318 = vset.pattern.permute.xlu0 0
        %1319 = vperm.xlu0 %1318, %v1245
        %v1320 = vpop.permute.xlu0 %1319
        %1323 = vset.pattern.permute.xlu0 0
        %1324 = vperm.xlu0 %1323, %v1246
        %v1325 = vpop.permute.xlu0 %1324
        %v1327 = vmul.f32 %v1153, %v1250
        %v1328 = vmul.f32 %v1155, %v1250
        %v1329 = vmul.f32 %v1157, %v1255
        %v1330 = vmul.f32 %v1159, %v1255
        %v1331 = vmul.f32 %v1163, %v1260
        %v1332 = vmul.f32 %v1165, %v1260
        %v1333 = vmul.f32 %v1167, %v1265
        %v1334 = vmul.f32 %v1169, %v1265
        %v1335 = vmul.f32 %v1173, %v1270
        %v1336 = vmul.f32 %v1175, %v1270
        %v1337 = vmul.f32 %v1177, %v1275
        %v1338 = vmul.f32 %v1179, %v1275
        %v1339 = vmul.f32 %v1183, %v1280
        %v1340 = vmul.f32 %v1185, %v1280
        %v1341 = vmul.f32 %v1187, %v1285
        %v1342 = vmul.f32 %v1189, %v1285
        %v1343 = vmul.f32 %v1193, %v1290
        %v1344 = vmul.f32 %v1195, %v1290
        %v1345 = vmul.f32 %v1197, %v1295
        %v1346 = vmul.f32 %v1199, %v1295
        %v1347 = vmul.f32 %v1203, %v1300
        %v1348 = vmul.f32 %v1205, %v1300
        %v1349 = vmul.f32 %v1207, %v1305
        %v1350 = vmul.f32 %v1209, %v1305
        %v1351 = vmul.f32 %v1213, %v1310
        %v1352 = vmul.f32 %v1215, %v1310
        %v1353 = vmul.f32 %v1217, %v1315
        %v1354 = vmul.f32 %v1219, %v1315
        %v1355 = vmul.f32 %v1223, %v1320
        %v1356 = vmul.f32 %v1225, %v1320
        %v1357 = vmul.f32 %v1227, %v1325
        %v1358 = vmul.f32 %v1229, %v1325
        %v1359 = vld [vmem:[%s3] sm:$0xff]
        %v1360 = vld [vmem:[%s3 + $0x8] sm:$0xff]
        %v1361 = vld [vmem:[%s3 + $0x10] sm:$0xff]
        %v1362 = vld [vmem:[%s3 + $0x18] sm:$0xff]
        %v1363 = vld [vmem:[%s3 + $0x20] sm:$0xff]
        %v1364 = vld [vmem:[%s3 + $0x28] sm:$0xff]
        %v1365 = vld [vmem:[%s3 + $0x30] sm:$0xff]
        %v1366 = vld [vmem:[%s3 + $0x38] sm:$0xff]
        %v1367 = vld [vmem:[%s3 + $0x40] sm:$0xff]
        %v1368 = vld [vmem:[%s3 + $0x48] sm:$0xff]
        %v1369 = vld [vmem:[%s3 + $0x50] sm:$0xff]
        %v1370 = vld [vmem:[%s3 + $0x58] sm:$0xff]
        %v1371 = vld [vmem:[%s3 + $0x60] sm:$0xff]
        %v1372 = vld [vmem:[%s3 + $0x68] sm:$0xff]
        %v1373 = vld [vmem:[%s3 + $0x70] sm:$0xff]
        %v1374 = vld [vmem:[%s3 + $0x78] sm:$0xff]
        %1376 = vset.pattern.permute.xlu0 0
        %1377 = vperm.xlu0 %1376, %v1359
        %v1378 = vpop.permute.xlu0 %1377
        %1381 = vset.pattern.permute.xlu0 0
        %1382 = vperm.xlu0 %1381, %v1360
        %v1383 = vpop.permute.xlu0 %1382
        %1386 = vset.pattern.permute.xlu0 0
        %1387 = vperm.xlu0 %1386, %v1361
        %v1388 = vpop.permute.xlu0 %1387
        %1391 = vset.pattern.permute.xlu0 0
        %1392 = vperm.xlu0 %1391, %v1362
        %v1393 = vpop.permute.xlu0 %1392
        %1396 = vset.pattern.permute.xlu0 0
        %1397 = vperm.xlu0 %1396, %v1363
        %v1398 = vpop.permute.xlu0 %1397
        %1401 = vset.pattern.permute.xlu0 0
        %1402 = vperm.xlu0 %1401, %v1364
        %v1403 = vpop.permute.xlu0 %1402
        %1406 = vset.pattern.permute.xlu0 0
        %1407 = vperm.xlu0 %1406, %v1365
        %v1408 = vpop.permute.xlu0 %1407
        %1411 = vset.pattern.permute.xlu0 0
        %1412 = vperm.xlu0 %1411, %v1366
        %v1413 = vpop.permute.xlu0 %1412
        %1416 = vset.pattern.permute.xlu0 0
        %1417 = vperm.xlu0 %1416, %v1367
        %v1418 = vpop.permute.xlu0 %1417
        %1421 = vset.pattern.permute.xlu0 0
        %1422 = vperm.xlu0 %1421, %v1368
        %v1423 = vpop.permute.xlu0 %1422
        %1426 = vset.pattern.permute.xlu0 0
        %1427 = vperm.xlu0 %1426, %v1369
        %v1428 = vpop.permute.xlu0 %1427
        %1431 = vset.pattern.permute.xlu0 0
        %1432 = vperm.xlu0 %1431, %v1370
        %v1433 = vpop.permute.xlu0 %1432
        %1436 = vset.pattern.permute.xlu0 0
        %1437 = vperm.xlu0 %1436, %v1371
        %v1438 = vpop.permute.xlu0 %1437
        %1441 = vset.pattern.permute.xlu0 0
        %1442 = vperm.xlu0 %1441, %v1372
        %v1443 = vpop.permute.xlu0 %1442
        %1446 = vset.pattern.permute.xlu0 0
        %1447 = vperm.xlu0 %1446, %v1373
        %v1448 = vpop.permute.xlu0 %1447
        %1451 = vset.pattern.permute.xlu0 0
        %1452 = vperm.xlu0 %1451, %v1374
        %v1453 = vpop.permute.xlu0 %1452
        %v1455 = vadd.f32 %v1327, %v1378
        %v1456 = vadd.f32 %v1328, %v1378
        %v1457 = vadd.f32 %v1329, %v1383
        %v1458 = vadd.f32 %v1330, %v1383
        %v1459 = vadd.f32 %v1331, %v1388
        %v1460 = vadd.f32 %v1332, %v1388
        %v1461 = vadd.f32 %v1333, %v1393
        %v1462 = vadd.f32 %v1334, %v1393
        %v1463 = vadd.f32 %v1335, %v1398
        %v1464 = vadd.f32 %v1336, %v1398
        %v1465 = vadd.f32 %v1337, %v1403
        %v1466 = vadd.f32 %v1338, %v1403
        %v1467 = vadd.f32 %v1339, %v1408
        %v1468 = vadd.f32 %v1340, %v1408
        %v1469 = vadd.f32 %v1341, %v1413
        %v1470 = vadd.f32 %v1342, %v1413
        %v1471 = vadd.f32 %v1343, %v1418
        %v1472 = vadd.f32 %v1344, %v1418
        %v1473 = vadd.f32 %v1345, %v1423
        %v1474 = vadd.f32 %v1346, %v1423
        %v1475 = vadd.f32 %v1347, %v1428
        %v1476 = vadd.f32 %v1348, %v1428
        %v1477 = vadd.f32 %v1349, %v1433
        %v1478 = vadd.f32 %v1350, %v1433
        %v1479 = vadd.f32 %v1351, %v1438
        %v1480 = vadd.f32 %v1352, %v1438
        %v1481 = vadd.f32 %v1353, %v1443
        %v1482 = vadd.f32 %v1354, %v1443
        %v1483 = vadd.f32 %v1355, %v1448
        %v1484 = vadd.f32 %v1356, %v1448
        %v1485 = vadd.f32 %v1357, %v1453
        %v1486 = vadd.f32 %v1358, %v1453
        %v1487 = vmax.f32 %v1455, 0.0
        %v1488 = vmax.f32 %v1456, 0.0
        %v1489 = vmax.f32 %v1457, 0.0
        %v1490 = vmax.f32 %v1458, 0.0
        %v1491 = vmax.f32 %v1459, 0.0
        %v1492 = vmax.f32 %v1460, 0.0
        %v1493 = vmax.f32 %v1461, 0.0
        %v1494 = vmax.f32 %v1462, 0.0
        %v1495 = vmax.f32 %v1463, 0.0
        %v1496 = vmax.f32 %v1464, 0.0
        %v1497 = vmax.f32 %v1465, 0.0
        %v1498 = vmax.f32 %v1466, 0.0
        %v1499 = vmax.f32 %v1467, 0.0
        %v1500 = vmax.f32 %v1468, 0.0
        %v1501 = vmax.f32 %v1469, 0.0
        %v1502 = vmax.f32 %v1470, 0.0
        %v1503 = vmax.f32 %v1471, 0.0
        %v1504 = vmax.f32 %v1472, 0.0
        %v1505 = vmax.f32 %v1473, 0.0
        %v1506 = vmax.f32 %v1474, 0.0
        %v1507 = vmax.f32 %v1475, 0.0
        %v1508 = vmax.f32 %v1476, 0.0
        %v1509 = vmax.f32 %v1477, 0.0
        %v1510 = vmax.f32 %v1478, 0.0
        %v1511 = vmax.f32 %v1479, 0.0
        %v1512 = vmax.f32 %v1480, 0.0
        %v1513 = vmax.f32 %v1481, 0.0
        %v1514 = vmax.f32 %v1482, 0.0
        %v1515 = vmax.f32 %v1483, 0.0
        %v1516 = vmax.f32 %v1484, 0.0
        %v1517 = vmax.f32 %v1485, 0.0
        %v1518 = vmax.f32 %v1486, 0.0
        %1519 = vrot.lane.b32.xlu0 %v1487, 1
        %v1520 = vpop.permute.xlu0 %1519
        %1521 = vrot.lane.b32.xlu0 %v1489, 1
        %v1522 = vpop.permute.xlu0 %1521
        %1523 = vrot.lane.b32.xlu0 %v1491, 1
        %v1524 = vpop.permute.xlu0 %1523
        %1525 = vrot.lane.b32.xlu0 %v1493, 1
        %v1526 = vpop.permute.xlu0 %1525
        %1527 = vrot.lane.b32.xlu0 %v1495, 1
        %v1528 = vpop.permute.xlu0 %1527
        %1529 = vrot.lane.b32.xlu0 %v1497, 1
        %v1530 = vpop.permute.xlu0 %1529
        %1531 = vrot.lane.b32.xlu0 %v1499, 1
        %v1532 = vpop.permute.xlu0 %1531
        %1533 = vrot.lane.b32.xlu0 %v1501, 1
        %v1534 = vpop.permute.xlu0 %1533
        %1535 = vrot.lane.b32.xlu0 %v1503, 1
        %v1536 = vpop.permute.xlu0 %1535
        %1537 = vrot.lane.b32.xlu0 %v1505, 1
        %v1538 = vpop.permute.xlu0 %1537
        %1539 = vrot.lane.b32.xlu0 %v1507, 1
        %v1540 = vpop.permute.xlu0 %1539
        %1541 = vrot.lane.b32.xlu0 %v1509, 1
        %v1542 = vpop.permute.xlu0 %1541
        %1543 = vrot.lane.b32.xlu0 %v1511, 1
        %v1544 = vpop.permute.xlu0 %1543
        %1545 = vrot.lane.b32.xlu0 %v1513, 1
        %v1546 = vpop.permute.xlu0 %1545
        %1547 = vrot.lane.b32.xlu0 %v1515, 1
        %v1548 = vpop.permute.xlu0 %1547
        %1549 = vrot.lane.b32.xlu0 %v1517, 1
        %v1550 = vpop.permute.xlu0 %1549
        %1551 = vrot.lane.b32.xlu0 %v1488, 1
        %v1552 = vpop.permute.xlu0 %1551
        %1553 = vrot.lane.b32.xlu0 %v1490, 1
        %v1554 = vpop.permute.xlu0 %1553
        %1555 = vrot.lane.b32.xlu0 %v1492, 1
        %v1556 = vpop.permute.xlu0 %1555
        %1557 = vrot.lane.b32.xlu0 %v1494, 1
        %v1558 = vpop.permute.xlu0 %1557
        %1559 = vrot.lane.b32.xlu0 %v1496, 1
        %v1560 = vpop.permute.xlu0 %1559
        %1561 = vrot.lane.b32.xlu0 %v1498, 1
        %v1562 = vpop.permute.xlu0 %1561
        %1563 = vrot.lane.b32.xlu0 %v1500, 1
        %v1564 = vpop.permute.xlu0 %1563
        %1565 = vrot.lane.b32.xlu0 %v1502, 1
        %v1566 = vpop.permute.xlu0 %1565
        %1567 = vrot.lane.b32.xlu0 %v1504, 1
        %v1568 = vpop.permute.xlu0 %1567
        %1569 = vrot.lane.b32.xlu0 %v1506, 1
        %v1570 = vpop.permute.xlu0 %1569
        %1571 = vrot.lane.b32.xlu0 %v1508, 1
        %v1572 = vpop.permute.xlu0 %1571
        %1573 = vrot.lane.b32.xlu0 %v1510, 1
        %v1574 = vpop.permute.xlu0 %1573
        %1575 = vrot.lane.b32.xlu0 %v1512, 1
        %v1576 = vpop.permute.xlu0 %1575
        %1577 = vrot.lane.b32.xlu0 %v1514, 1
        %v1578 = vpop.permute.xlu0 %1577
        %1579 = vrot.lane.b32.xlu0 %v1516, 1
        %v1580 = vpop.permute.xlu0 %1579
        %1581 = vrot.lane.b32.xlu0 %v1518, 1
        %v1582 = vpop.permute.xlu0 %1581
        %v1583 = vsel %vm601, %v1520, %v1552
        %v1584 = vsel %vm601, %v1522, %v1554
        %v1585 = vsel %vm601, %v1524, %v1556
        %v1586 = vsel %vm601, %v1526, %v1558
        %v1587 = vsel %vm601, %v1528, %v1560
        %v1588 = vsel %vm601, %v1530, %v1562
        %v1589 = vsel %vm601, %v1532, %v1564
        %v1590 = vsel %vm601, %v1534, %v1566
        %v1591 = vsel %vm601, %v1536, %v1568
        %v1592 = vsel %vm601, %v1538, %v1570
        %v1593 = vsel %vm601, %v1540, %v1572
        %v1594 = vsel %vm601, %v1542, %v1574
        %v1595 = vsel %vm601, %v1544, %v1576
        %v1596 = vsel %vm601, %v1546, %v1578
        %v1597 = vsel %vm601, %v1548, %v1580
        %v1598 = vsel %vm601, %v1550, %v1582
        %v1599 = vsel %vm601, %v1552, %v1520
        %v1600 = vsel %vm601, %v1554, %v1522
        %v1601 = vsel %vm601, %v1556, %v1524
        %v1602 = vsel %vm601, %v1558, %v1526
        %v1603 = vsel %vm601, %v1560, %v1528
        %v1604 = vsel %vm601, %v1562, %v1530
        %v1605 = vsel %vm601, %v1564, %v1532
        %v1606 = vsel %vm601, %v1566, %v1534
        %v1607 = vsel %vm601, %v1568, %v1536
        %v1608 = vsel %vm601, %v1570, %v1538
        %v1609 = vsel %vm601, %v1572, %v1540
        %v1610 = vsel %vm601, %v1574, %v1542
        %v1611 = vsel %vm601, %v1576, %v1544
        %v1612 = vsel %vm601, %v1578, %v1546
        %v1613 = vsel %vm601, %v1580, %v1548
        %v1614 = vsel %vm601, %v1582, %v1550
        %v1615 = vsel %vm535, %v1599, 0.0
        %v1616 = vsel %vm536, %v1583, 0.0
        %v1617 = vsel %vm535, %v1600, 0.0
        %v1618 = vsel %vm536, %v1584, 0.0
        %v1619 = vsel %vm535, %v1601, 0.0
        %v1620 = vsel %vm536, %v1585, 0.0
        %v1621 = vsel %vm535, %v1602, 0.0
        %v1622 = vsel %vm536, %v1586, 0.0
        %v1623 = vsel %vm535, %v1603, 0.0
        %v1624 = vsel %vm536, %v1587, 0.0
        %v1625 = vsel %vm535, %v1604, 0.0
        %v1626 = vsel %vm536, %v1588, 0.0
        %v1627 = vsel %vm535, %v1605, 0.0
        %v1628 = vsel %vm536, %v1589, 0.0
        %v1629 = vsel %vm535, %v1606, 0.0
        %v1630 = vsel %vm536, %v1590, 0.0
        %v1631 = vsel %vm535, %v1607, 0.0
        %v1632 = vsel %vm536, %v1591, 0.0
        %v1633 = vsel %vm535, %v1608, 0.0
        %v1634 = vsel %vm536, %v1592, 0.0
        %v1635 = vsel %vm535, %v1609, 0.0
        %v1636 = vsel %vm536, %v1593, 0.0
        %v1637 = vsel %vm535, %v1610, 0.0
        %v1638 = vsel %vm536, %v1594, 0.0
        %v1639 = vsel %vm535, %v1611, 0.0
        %v1640 = vsel %vm536, %v1595, 0.0
        %v1641 = vsel %vm535, %v1612, 0.0
        %v1642 = vsel %vm536, %v1596, 0.0
        %v1643 = vsel %vm535, %v1613, 0.0
        %v1644 = vsel %vm536, %v1597, 0.0
        %v1645 = vsel %vm535, %v1614, 0.0
        %v1646 = vsel %vm536, %v1598, 0.0
        %1647 = vrot.lane.b32.xlu0 %v1487, 127
        %v1648 = vpop.permute.xlu0 %1647
        %1649 = vrot.lane.b32.xlu0 %v1489, 127
        %v1650 = vpop.permute.xlu0 %1649
        %1651 = vrot.lane.b32.xlu0 %v1491, 127
        %v1652 = vpop.permute.xlu0 %1651
        %1653 = vrot.lane.b32.xlu0 %v1493, 127
        %v1654 = vpop.permute.xlu0 %1653
        %1655 = vrot.lane.b32.xlu0 %v1495, 127
        %v1656 = vpop.permute.xlu0 %1655
        %1657 = vrot.lane.b32.xlu0 %v1497, 127
        %v1658 = vpop.permute.xlu0 %1657
        %1659 = vrot.lane.b32.xlu0 %v1499, 127
        %v1660 = vpop.permute.xlu0 %1659
        %1661 = vrot.lane.b32.xlu0 %v1501, 127
        %v1662 = vpop.permute.xlu0 %1661
        %1663 = vrot.lane.b32.xlu0 %v1503, 127
        %v1664 = vpop.permute.xlu0 %1663
        %1665 = vrot.lane.b32.xlu0 %v1505, 127
        %v1666 = vpop.permute.xlu0 %1665
        %1667 = vrot.lane.b32.xlu0 %v1507, 127
        %v1668 = vpop.permute.xlu0 %1667
        %1669 = vrot.lane.b32.xlu0 %v1509, 127
        %v1670 = vpop.permute.xlu0 %1669
        %1671 = vrot.lane.b32.xlu0 %v1511, 127
        %v1672 = vpop.permute.xlu0 %1671
        %1673 = vrot.lane.b32.xlu0 %v1513, 127
        %v1674 = vpop.permute.xlu0 %1673
        %1675 = vrot.lane.b32.xlu0 %v1515, 127
        %v1676 = vpop.permute.xlu0 %1675
        %1677 = vrot.lane.b32.xlu0 %v1517, 127
        %v1678 = vpop.permute.xlu0 %1677
        %1679 = vrot.lane.b32.xlu0 %v1488, 127
        %v1680 = vpop.permute.xlu0 %1679
        %1681 = vrot.lane.b32.xlu0 %v1490, 127
        %v1682 = vpop.permute.xlu0 %1681
        %1683 = vrot.lane.b32.xlu0 %v1492, 127
        %v1684 = vpop.permute.xlu0 %1683
        %1685 = vrot.lane.b32.xlu0 %v1494, 127
        %v1686 = vpop.permute.xlu0 %1685
        %1687 = vrot.lane.b32.xlu0 %v1496, 127
        %v1688 = vpop.permute.xlu0 %1687
        %1689 = vrot.lane.b32.xlu0 %v1498, 127
        %v1690 = vpop.permute.xlu0 %1689
        %1691 = vrot.lane.b32.xlu0 %v1500, 127
        %v1692 = vpop.permute.xlu0 %1691
        %1693 = vrot.lane.b32.xlu0 %v1502, 127
        %v1694 = vpop.permute.xlu0 %1693
        %1695 = vrot.lane.b32.xlu0 %v1504, 127
        %v1696 = vpop.permute.xlu0 %1695
        %1697 = vrot.lane.b32.xlu0 %v1506, 127
        %v1698 = vpop.permute.xlu0 %1697
        %1699 = vrot.lane.b32.xlu0 %v1508, 127
        %v1700 = vpop.permute.xlu0 %1699
        %1701 = vrot.lane.b32.xlu0 %v1510, 127
        %v1702 = vpop.permute.xlu0 %1701
        %1703 = vrot.lane.b32.xlu0 %v1512, 127
        %v1704 = vpop.permute.xlu0 %1703
        %1705 = vrot.lane.b32.xlu0 %v1514, 127
        %v1706 = vpop.permute.xlu0 %1705
        %1707 = vrot.lane.b32.xlu0 %v1516, 127
        %v1708 = vpop.permute.xlu0 %1707
        %1709 = vrot.lane.b32.xlu0 %v1518, 127
        %v1710 = vpop.permute.xlu0 %1709
        %v1711 = vsel %vm732, %v1648, %v1680
        %v1712 = vsel %vm732, %v1650, %v1682
        %v1713 = vsel %vm732, %v1652, %v1684
        %v1714 = vsel %vm732, %v1654, %v1686
        %v1715 = vsel %vm732, %v1656, %v1688
        %v1716 = vsel %vm732, %v1658, %v1690
        %v1717 = vsel %vm732, %v1660, %v1692
        %v1718 = vsel %vm732, %v1662, %v1694
        %v1719 = vsel %vm732, %v1664, %v1696
        %v1720 = vsel %vm732, %v1666, %v1698
        %v1721 = vsel %vm732, %v1668, %v1700
        %v1722 = vsel %vm732, %v1670, %v1702
        %v1723 = vsel %vm732, %v1672, %v1704
        %v1724 = vsel %vm732, %v1674, %v1706
        %v1725 = vsel %vm732, %v1676, %v1708
        %v1726 = vsel %vm732, %v1678, %v1710
        %v1727 = vsel %vm732, %v1680, %v1648
        %v1728 = vsel %vm732, %v1682, %v1650
        %v1729 = vsel %vm732, %v1684, %v1652
        %v1730 = vsel %vm732, %v1686, %v1654
        %v1731 = vsel %vm732, %v1688, %v1656
        %v1732 = vsel %vm732, %v1690, %v1658
        %v1733 = vsel %vm732, %v1692, %v1660
        %v1734 = vsel %vm732, %v1694, %v1662
        %v1735 = vsel %vm732, %v1696, %v1664
        %v1736 = vsel %vm732, %v1698, %v1666
        %v1737 = vsel %vm732, %v1700, %v1668
        %v1738 = vsel %vm732, %v1702, %v1670
        %v1739 = vsel %vm732, %v1704, %v1672
        %v1740 = vsel %vm732, %v1706, %v1674
        %v1741 = vsel %vm732, %v1708, %v1676
        %v1742 = vsel %vm732, %v1710, %v1678
        %v1743 = vsel %vm666, %v1711, 0.0
        %v1744 = vsel %vm667, %v1727, 0.0
        %v1745 = vsel %vm666, %v1712, 0.0
        %v1746 = vsel %vm667, %v1728, 0.0
        %v1747 = vsel %vm666, %v1713, 0.0
        %v1748 = vsel %vm667, %v1729, 0.0
        %v1749 = vsel %vm666, %v1714, 0.0
        %v1750 = vsel %vm667, %v1730, 0.0
        %v1751 = vsel %vm666, %v1715, 0.0
        %v1752 = vsel %vm667, %v1731, 0.0
        %v1753 = vsel %vm666, %v1716, 0.0
        %v1754 = vsel %vm667, %v1732, 0.0
        %v1755 = vsel %vm666, %v1717, 0.0
        %v1756 = vsel %vm667, %v1733, 0.0
        %v1757 = vsel %vm666, %v1718, 0.0
        %v1758 = vsel %vm667, %v1734, 0.0
        %v1759 = vsel %vm666, %v1719, 0.0
        %v1760 = vsel %vm667, %v1735, 0.0
        %v1761 = vsel %vm666, %v1720, 0.0
        %v1762 = vsel %vm667, %v1736, 0.0
        %v1763 = vsel %vm666, %v1721, 0.0
        %v1764 = vsel %vm667, %v1737, 0.0
        %v1765 = vsel %vm666, %v1722, 0.0
        %v1766 = vsel %vm667, %v1738, 0.0
        %v1767 = vsel %vm666, %v1723, 0.0
        %v1768 = vsel %vm667, %v1739, 0.0
        %v1769 = vsel %vm666, %v1724, 0.0
        %v1770 = vsel %vm667, %v1740, 0.0
        %v1771 = vsel %vm666, %v1725, 0.0
        %v1772 = vsel %vm667, %v1741, 0.0
        %v1773 = vsel %vm666, %v1726, 0.0
        %v1774 = vsel %vm667, %v1742, 0.0
        %v1775 = vpack.c.bf16 %v1617, %v1615
        %v1776 = vpack.c.bf16 %v1618, %v1616
        %v1777 = vpack.c.bf16 %v1621, %v1619
        %v1778 = vpack.c.bf16 %v1622, %v1620
        %v1779 = vpack.c.bf16 %v1625, %v1623
        %v1780 = vpack.c.bf16 %v1626, %v1624
        %v1781 = vpack.c.bf16 %v1629, %v1627
        %v1782 = vpack.c.bf16 %v1630, %v1628
        %v1783 = vpack.c.bf16 %v1633, %v1631
        %v1784 = vpack.c.bf16 %v1634, %v1632
        %v1785 = vpack.c.bf16 %v1637, %v1635
        %v1786 = vpack.c.bf16 %v1638, %v1636
        %v1787 = vpack.c.bf16 %v1641, %v1639
        %v1788 = vpack.c.bf16 %v1642, %v1640
        %v1789 = vpack.c.bf16 %v1645, %v1643
        %v1790 = vpack.c.bf16 %v1646, %v1644
        %v1791 = vpack.c.bf16 %v1489, %v1487
        %v1792 = vpack.c.bf16 %v1490, %v1488
        %v1793 = vpack.c.bf16 %v1493, %v1491
        %v1794 = vpack.c.bf16 %v1494, %v1492
        %v1795 = vpack.c.bf16 %v1497, %v1495
        %v1796 = vpack.c.bf16 %v1498, %v1496
        %v1797 = vpack.c.bf16 %v1501, %v1499
        %v1798 = vpack.c.bf16 %v1502, %v1500
        %v1799 = vpack.c.bf16 %v1505, %v1503
        %v1800 = vpack.c.bf16 %v1506, %v1504
        %v1801 = vpack.c.bf16 %v1509, %v1507
        %v1802 = vpack.c.bf16 %v1510, %v1508
        %v1803 = vpack.c.bf16 %v1513, %v1511
        %v1804 = vpack.c.bf16 %v1514, %v1512
        %v1805 = vpack.c.bf16 %v1517, %v1515
        %v1806 = vpack.c.bf16 %v1518, %v1516
        %v1807 = vpack.c.bf16 %v1745, %v1743
        %v1808 = vpack.c.bf16 %v1746, %v1744
        %v1809 = vpack.c.bf16 %v1749, %v1747
        %v1810 = vpack.c.bf16 %v1750, %v1748
        %v1811 = vpack.c.bf16 %v1753, %v1751
        %v1812 = vpack.c.bf16 %v1754, %v1752
        %v1813 = vpack.c.bf16 %v1757, %v1755
        %v1814 = vpack.c.bf16 %v1758, %v1756
        %v1815 = vpack.c.bf16 %v1761, %v1759
        %v1816 = vpack.c.bf16 %v1762, %v1760
        %v1817 = vpack.c.bf16 %v1765, %v1763
        %v1818 = vpack.c.bf16 %v1766, %v1764
        %v1819 = vpack.c.bf16 %v1769, %v1767
        %v1820 = vpack.c.bf16 %v1770, %v1768
        %v1821 = vpack.c.bf16 %v1773, %v1771
        %v1822 = vpack.c.bf16 %v1774, %v1772
        %v1823 = vld [vmem:[%s4] sm:$0xff]
        %v1824 = vld [vmem:[%s4 + $0x8] sm:$0xf]
        %v1825 = vld [vmem:[%s4 + $0xc] sm:$0xff]
        %v1826 = vld [vmem:[%s4 + $0x14] sm:$0xf]
        %v1827 = vld [vmem:[%s4 + $0x18] sm:$0xff]
        %v1828 = vld [vmem:[%s4 + $0x20] sm:$0xf]
        %v1829 = vld [vmem:[%s4 + $0x24] sm:$0xff]
        %v1830 = vld [vmem:[%s4 + $0x2c] sm:$0xf]
        %v1831 = vld [vmem:[%s4 + $0x30] sm:$0xff]
        %v1832 = vld [vmem:[%s4 + $0x38] sm:$0xf]
        %v1833 = vld [vmem:[%s4 + $0x3c] sm:$0xff]
        %v1834 = vld [vmem:[%s4 + $0x44] sm:$0xf]
        %v1835 = vld [vmem:[%s4 + $0x48] sm:$0xff]
        %v1836 = vld [vmem:[%s4 + $0x50] sm:$0xf]
        %v1837 = vld [vmem:[%s4 + $0x54] sm:$0xff]
        %v1838 = vld [vmem:[%s4 + $0x5c] sm:$0xf]
        %v1839 = vld [vmem:[%s4 + $0x60] sm:$0xff]
        %v1840 = vld [vmem:[%s4 + $0x68] sm:$0xf]
        %v1841 = vld [vmem:[%s4 + $0x6c] sm:$0xff]
        %v1842 = vld [vmem:[%s4 + $0x74] sm:$0xf]
        %v1843 = vld [vmem:[%s4 + $0x78] sm:$0xff]
        %v1844 = vld [vmem:[%s4 + $0x80] sm:$0xf]
        %v1845 = vld [vmem:[%s4 + $0x84] sm:$0xff]
        %v1846 = vld [vmem:[%s4 + $0x8c] sm:$0xf]
        %v1847 = vld [vmem:[%s4 + $0x90] sm:$0xff]
        %v1848 = vld [vmem:[%s4 + $0x98] sm:$0xf]
        %v1849 = vld [vmem:[%s4 + $0x9c] sm:$0xff]
        %v1850 = vld [vmem:[%s4 + $0xa4] sm:$0xf]
        %v1851 = vld [vmem:[%s4 + $0xa8] sm:$0xff]
        %v1852 = vld [vmem:[%s4 + $0xb0] sm:$0xf]
        %v1853 = vld [vmem:[%s4 + $0xb4] sm:$0xff]
        %v1854 = vld [vmem:[%s4 + $0xbc] sm:$0xf]
        %v1887 = vunpack.c.l.b16 %v1823
        %v1888 = vunpack.c.h.b16 %v1823
        %v1889 = vunpack.c.l.b16 %v1824
        %v1890 = vunpack.c.l.b16 %v1825
        %v1891 = vunpack.c.h.b16 %v1825
        %v1892 = vunpack.c.l.b16 %v1826
        %v1893 = vunpack.c.l.b16 %v1827
        %v1894 = vunpack.c.h.b16 %v1827
        %v1895 = vunpack.c.l.b16 %v1828
        %v1896 = vunpack.c.l.b16 %v1829
        %v1897 = vunpack.c.h.b16 %v1829
        %v1898 = vunpack.c.l.b16 %v1830
        %v1899 = vunpack.c.l.b16 %v1831
        %v1900 = vunpack.c.h.b16 %v1831
        %v1901 = vunpack.c.l.b16 %v1832
        %v1902 = vunpack.c.l.b16 %v1833
        %v1903 = vunpack.c.h.b16 %v1833
        %v1904 = vunpack.c.l.b16 %v1834
        %v1905 = vunpack.c.l.b16 %v1835
        %v1906 = vunpack.c.h.b16 %v1835
        %v1907 = vunpack.c.l.b16 %v1836
        %v1908 = vunpack.c.l.b16 %v1837
        %v1909 = vunpack.c.h.b16 %v1837
        %v1910 = vunpack.c.l.b16 %v1838
        %v1911 = vunpack.c.l.b16 %v1839
        %v1912 = vunpack.c.h.b16 %v1839
        %v1913 = vunpack.c.l.b16 %v1840
        %v1914 = vunpack.c.l.b16 %v1841
        %v1915 = vunpack.c.h.b16 %v1841
        %v1916 = vunpack.c.l.b16 %v1842
        %v1917 = vunpack.c.l.b16 %v1843
        %v1918 = vunpack.c.h.b16 %v1843
        %v1919 = vunpack.c.l.b16 %v1844
        %v1920 = vunpack.c.l.b16 %v1845
        %v1921 = vunpack.c.h.b16 %v1845
        %v1922 = vunpack.c.l.b16 %v1846
        %v1923 = vunpack.c.l.b16 %v1847
        %v1924 = vunpack.c.h.b16 %v1847
        %v1925 = vunpack.c.l.b16 %v1848
        %v1926 = vunpack.c.l.b16 %v1849
        %v1927 = vunpack.c.h.b16 %v1849
        %v1928 = vunpack.c.l.b16 %v1850
        %v1929 = vunpack.c.l.b16 %v1851
        %v1930 = vunpack.c.h.b16 %v1851
        %v1931 = vunpack.c.l.b16 %v1852
        %v1932 = vunpack.c.l.b16 %v1853
        %v1933 = vunpack.c.h.b16 %v1853
        %v1934 = vunpack.c.l.b16 %v1854
        %v1935 = vpack.c.b16 %v1890, %v1887
        %v1936 = vpack.c.b16 %v1891, %v1888
        %v1937 = vpack.c.b16 %v1892, %v1889
        %v1938 = vpack.c.b16 %v1896, %v1893
        %v1939 = vpack.c.b16 %v1897, %v1894
        %v1940 = vpack.c.b16 %v1898, %v1895
        %v1941 = vpack.c.b16 %v1902, %v1899
        %v1942 = vpack.c.b16 %v1903, %v1900
        %v1943 = vpack.c.b16 %v1904, %v1901
        %v1944 = vpack.c.b16 %v1908, %v1905
        %v1945 = vpack.c.b16 %v1909, %v1906
        %v1946 = vpack.c.b16 %v1910, %v1907
        %v1947 = vpack.c.b16 %v1914, %v1911
        %v1948 = vpack.c.b16 %v1915, %v1912
        %v1949 = vpack.c.b16 %v1916, %v1913
        %v1950 = vpack.c.b16 %v1920, %v1917
        %v1951 = vpack.c.b16 %v1921, %v1918
        %v1952 = vpack.c.b16 %v1922, %v1919
        %v1953 = vpack.c.b16 %v1926, %v1923
        %v1954 = vpack.c.b16 %v1927, %v1924
        %v1955 = vpack.c.b16 %v1928, %v1925
        %v1956 = vpack.c.b16 %v1932, %v1929
        %v1957 = vpack.c.b16 %v1933, %v1930
        %v1958 = vpack.c.b16 %v1934, %v1931
        %1983 = vmatprep.subr.bf16.mxu0 %v1776
        %1984 = vmatpush1.bf16.msra.mxu0 %v1775
        %1985 = vmatprep.subr.bf16.mxu0 %v1778
        %1986 = vmatpush1.bf16.msra.mxu0 %v1777
        %1987 = vmatprep.subr.bf16.mxu0 %v1780
        %1988 = vmatpush1.bf16.msra.mxu0 %v1779
        %1989 = vmatprep.subr.bf16.mxu0 %v1782
        %1990 = vmatpush1.bf16.msra.mxu0 %v1781
        %1991 = vmatprep.subr.bf16.mxu0 %v1784
        %1992 = vmatpush1.bf16.msra.mxu0 %v1783
        %1993 = vmatprep.subr.bf16.mxu0 %v1786
        %1994 = vmatpush1.bf16.msra.mxu0 %v1785
        %1995 = vmatprep.subr.bf16.mxu0 %v1788
        %1996 = vmatpush1.bf16.msra.mxu0 %v1787
        %1997 = vmatprep.subr.bf16.mxu0 %v1790
        %1998 = vmatpush1.bf16.msra.mxu0 %v1789
        %1999 = vmatprep.subr.bf16.mxu0 %v1792
        %2000 = vmatpush1.bf16.msra.mxu0 %v1791
        %2001 = vmatprep.subr.bf16.mxu0 %v1794
        %2002 = vmatpush1.bf16.msra.mxu0 %v1793
        %2003 = vmatprep.subr.bf16.mxu0 %v1796
        %2004 = vmatpush1.bf16.msra.mxu0 %v1795
        %2005 = vmatprep.subr.bf16.mxu0 %v1798
        %2006 = vmatpush1.bf16.msra.mxu0 %v1797
        %2007 = vmatprep.subr.bf16.mxu0 %v1800
        %2008 = vmatpush1.bf16.msra.mxu0 %v1799
        %2009 = vmatprep.subr.bf16.mxu0 %v1802
        %2010 = vmatpush1.bf16.msra.mxu0 %v1801
        %2011 = vmatprep.subr.bf16.mxu0 %v1804
        %2012 = vmatpush1.bf16.msra.mxu0 %v1803
        %2013 = vmatprep.subr.bf16.mxu0 %v1806
        %2014 = vmatpush1.bf16.msra.mxu0 %v1805
        %2015 = vmatprep.mubr.bf16.mxu0 %v1936
        %2016 = vmatmul.mubr.bf16.gmra.mrb[0].mxu0 %v1935
        %v2017 = vpop.f32.mrb[0].mxu0
        %v2018 = vadd.f32 0.0, %v2017
        %v2019 = vpop.f32.mrb[0].mxu0
        %v2020 = vadd.f32 0.0, %v2019
        %v2021 = vpop.f32.mrb[0].mxu0
        %v2022 = vadd.f32 0.0, %v2021
        %v2023 = vpop.f32.mrb[0].mxu0
        %v2024 = vadd.f32 0.0, %v2023
        %2025 = vmatprep.mubr.bf16.mxu0 %v1939
        %2026 = vmatmul.mubr.bf16.gmra.mrb[0].mxu0 %v1938
        %v2027 = vpop.f32.mrb[0].mxu0
        %v2028 = vadd.f32 0.0, %v2027
        %v2029 = vpop.f32.mrb[0].mxu0
        %v2030 = vadd.f32 0.0, %v2029
        %v2031 = vpop.f32.mrb[0].mxu0
        %v2032 = vadd.f32 0.0, %v2031
        %v2033 = vpop.f32.mrb[0].mxu0
        %v2034 = vadd.f32 0.0, %v2033
        %2035 = vmatprep.mubr.bf16.mxu0 %v1942
        %2036 = vmatmul.mubr.bf16.gmra.mrb[0].mxu0 %v1941
        %v2037 = vpop.f32.mrb[0].mxu0
        %v2038 = vadd.f32 0.0, %v2037
        %v2039 = vpop.f32.mrb[0].mxu0
        %v2040 = vadd.f32 0.0, %v2039
        %v2041 = vpop.f32.mrb[0].mxu0
        %v2042 = vadd.f32 0.0, %v2041
        %v2043 = vpop.f32.mrb[0].mxu0
        %v2044 = vadd.f32 0.0, %v2043
        %2045 = vmatprep.mubr.bf16.mxu0 %v1945
        %2046 = vmatmul.mubr.bf16.gmra.mrb[0].mxu0 %v1944
        %v2047 = vpop.f32.mrb[0].mxu0
        %v2048 = vadd.f32 0.0, %v2047
        %v2049 = vpop.f32.mrb[0].mxu0
        %v2050 = vadd.f32 0.0, %v2049
        %v2051 = vpop.f32.mrb[0].mxu0
        %v2052 = vadd.f32 0.0, %v2051
        %v2053 = vpop.f32.mrb[0].mxu0
        %v2054 = vadd.f32 0.0, %v2053
        %2055 = vmatprep.mubr.bf16.mxu0 %v1948
        %2056 = vmatmul.mubr.bf16.gmra.mrb[0].mxu0 %v1947
        %v2057 = vpop.f32.mrb[0].mxu0
        %v2058 = vadd.f32 0.0, %v2057
        %v2059 = vpop.f32.mrb[0].mxu0
        %v2060 = vadd.f32 0.0, %v2059
        %v2061 = vpop.f32.mrb[0].mxu0
        %v2062 = vadd.f32 0.0, %v2061
        %v2063 = vpop.f32.mrb[0].mxu0
        %v2064 = vadd.f32 0.0, %v2063
        %2065 = vmatprep.mubr.bf16.mxu0 %v1951
        %2066 = vmatmul.mubr.bf16.gmra.mrb[0].mxu0 %v1950
        %v2067 = vpop.f32.mrb[0].mxu0
        %v2068 = vadd.f32 0.0, %v2067
        %v2069 = vpop.f32.mrb[0].mxu0
        %v2070 = vadd.f32 0.0, %v2069
        %v2071 = vpop.f32.mrb[0].mxu0
        %v2072 = vadd.f32 0.0, %v2071
        %v2073 = vpop.f32.mrb[0].mxu0
        %v2074 = vadd.f32 0.0, %v2073
        %2075 = vmatprep.mubr.bf16.mxu0 %v1954
        %2076 = vmatmul.mubr.bf16.gmra.mrb[0].mxu0 %v1953
        %v2077 = vpop.f32.mrb[0].mxu0
        %v2078 = vadd.f32 0.0, %v2077
        %v2079 = vpop.f32.mrb[0].mxu0
        %v2080 = vadd.f32 0.0, %v2079
        %v2081 = vpop.f32.mrb[0].mxu0
        %v2082 = vadd.f32 0.0, %v2081
        %v2083 = vpop.f32.mrb[0].mxu0
        %v2084 = vadd.f32 0.0, %v2083
        %2085 = vmatprep.mubr.bf16.mxu0 %v1957
        %2086 = vmatmul.mubr.bf16.gmra.mrb[0].mxu0 %v1956
        %v2087 = vpop.f32.mrb[0].mxu0
        %v2088 = vadd.f32 0.0, %v2087
        %v2089 = vpop.f32.mrb[0].mxu0
        %v2090 = vadd.f32 0.0, %v2089
        %v2091 = vpop.f32.mrb[0].mxu0
        %v2092 = vadd.f32 0.0, %v2091
        %v2093 = vpop.f32.mrb[0].mxu0
        %v2094 = vadd.f32 0.0, %v2093
        %2095 = vdwg.mxu0
        %2096 = vmatprep.subr.bf16.mxu0 %v1808
        %2097 = vmatpush1.bf16.msra.mxu0 %v1807
        %2098 = vmatprep.subr.bf16.mxu0 %v1810
        %2099 = vmatpush1.bf16.msra.mxu0 %v1809
        %2100 = vmatprep.subr.bf16.mxu0 %v1812
        %2101 = vmatpush1.bf16.msra.mxu0 %v1811
        %2102 = vmatprep.subr.bf16.mxu0 %v1814
        %2103 = vmatpush1.bf16.msra.mxu0 %v1813
        %2104 = vmatprep.subr.bf16.mxu0 %v1816
        %2105 = vmatpush1.bf16.msra.mxu0 %v1815
        %2106 = vmatprep.subr.bf16.mxu0 %v1818
        %2107 = vmatpush1.bf16.msra.mxu0 %v1817
        %2108 = vmatprep.subr.bf16.mxu0 %v1820
        %2109 = vmatpush1.bf16.msra.mxu0 %v1819
        %2110 = vmatprep.subr.bf16.mxu0 %v1822
        %2111 = vmatpush1.bf16.msra.mxu0 %v1821
        %2112 = vmatprep.subr.bf16.mxu0 0
        %2113 = vmatpush1.bf16.msra.mxu0 0
        %2114 = vmatprep.subr.bf16.mxu0 0
        %2115 = vmatpush1.bf16.msra.mxu0 0
        %2116 = vmatprep.subr.bf16.mxu0 0
        %2117 = vmatpush1.bf16.msra.mxu0 0
        %2118 = vmatprep.subr.bf16.mxu0 0
        %2119 = vmatpush1.bf16.msra.mxu0 0
        %2120 = vmatprep.subr.bf16.mxu0 0
        %2121 = vmatpush1.bf16.msra.mxu0 0
        %2122 = vmatprep.subr.bf16.mxu0 0
        %2123 = vmatpush1.bf16.msra.mxu0 0
        %2124 = vmatprep.subr.bf16.mxu0 0
        %2125 = vmatpush1.bf16.msra.mxu0 0
        %2126 = vmatprep.subr.bf16.mxu0 0
        %2127 = vmatpush1.bf16.msra.mxu0 0
        %2128 = vmatprep.mubr.bf16.mxu0 0
        %2129 = vmatmul.mubr.bf16.gmra.mrb[0].mxu0 %v1937
        %v2130 = vpop.f32.mrb[0].mxu0
        %v2131 = vadd.f32 %v2018, %v2130
        %v2132 = vpop.f32.mrb[0].mxu0
        %v2133 = vadd.f32 %v2020, %v2132
        %v2134 = vpop.f32.mrb[0].mxu0
        %v2135 = vadd.f32 %v2022, %v2134
        %v2136 = vpop.f32.mrb[0].mxu0
        %v2137 = vadd.f32 %v2024, %v2136
        %2138 = vmatprep.mubr.bf16.mxu0 0
        %2139 = vmatmul.mubr.bf16.gmra.mrb[0].mxu0 %v1940
        %v2140 = vpop.f32.mrb[0].mxu0
        %v2141 = vadd.f32 %v2028, %v2140
        %v2142 = vpop.f32.mrb[0].mxu0
        %v2143 = vadd.f32 %v2030, %v2142
        %v2144 = vpop.f32.mrb[0].mxu0
        %v2145 = vadd.f32 %v2032, %v2144
        %v2146 = vpop.f32.mrb[0].mxu0
        %v2147 = vadd.f32 %v2034, %v2146
        %2148 = vmatprep.mubr.bf16.mxu0 0
        %2149 = vmatmul.mubr.bf16.gmra.mrb[0].mxu0 %v1943
        %v2150 = vpop.f32.mrb[0].mxu0
        %v2151 = vadd.f32 %v2038, %v2150
        %v2152 = vpop.f32.mrb[0].mxu0
        %v2153 = vadd.f32 %v2040, %v2152
        %v2154 = vpop.f32.mrb[0].mxu0
        %v2155 = vadd.f32 %v2042, %v2154
        %v2156 = vpop.f32.mrb[0].mxu0
        %v2157 = vadd.f32 %v2044, %v2156
        %2158 = vmatprep.mubr.bf16.mxu0 0
        %2159 = vmatmul.mubr.bf16.gmra.mrb[0].mxu0 %v1946
        %v2160 = vpop.f32.mrb[0].mxu0
        %v2161 = vadd.f32 %v2048, %v2160
        %v2162 = vpop.f32.mrb[0].mxu0
        %v2163 = vadd.f32 %v2050, %v2162
        %v2164 = vpop.f32.mrb[0].mxu0
        %v2165 = vadd.f32 %v2052, %v2164
        %v2166 = vpop.f32.mrb[0].mxu0
        %v2167 = vadd.f32 %v2054, %v2166
        %2168 = vmatprep.mubr.bf16.mxu0 0
        %2169 = vmatmul.mubr.bf16.gmra.mrb[0].mxu0 %v1949
        %v2170 = vpop.f32.mrb[0].mxu0
        %v2171 = vadd.f32 %v2058, %v2170
        %v2172 = vpop.f32.mrb[0].mxu0
        %v2173 = vadd.f32 %v2060, %v2172
        %v2174 = vpop.f32.mrb[0].mxu0
        %v2175 = vadd.f32 %v2062, %v2174
        %v2176 = vpop.f32.mrb[0].mxu0
        %v2177 = vadd.f32 %v2064, %v2176
        %2178 = vmatprep.mubr.bf16.mxu0 0
        %2179 = vmatmul.mubr.bf16.gmra.mrb[0].mxu0 %v1952
        %v2180 = vpop.f32.mrb[0].mxu0
        %v2181 = vadd.f32 %v2068, %v2180
        %v2182 = vpop.f32.mrb[0].mxu0
        %v2183 = vadd.f32 %v2070, %v2182
        %v2184 = vpop.f32.mrb[0].mxu0
        %v2185 = vadd.f32 %v2072, %v2184
        %v2186 = vpop.f32.mrb[0].mxu0
        %v2187 = vadd.f32 %v2074, %v2186
        %2188 = vmatprep.mubr.bf16.mxu0 0
        %2189 = vmatmul.mubr.bf16.gmra.mrb[0].mxu0 %v1955
        %v2190 = vpop.f32.mrb[0].mxu0
        %v2191 = vadd.f32 %v2078, %v2190
        %v2192 = vpop.f32.mrb[0].mxu0
        %v2193 = vadd.f32 %v2080, %v2192
        %v2194 = vpop.f32.mrb[0].mxu0
        %v2195 = vadd.f32 %v2082, %v2194
        %v2196 = vpop.f32.mrb[0].mxu0
        %v2197 = vadd.f32 %v2084, %v2196
        %2198 = vmatprep.mubr.bf16.mxu0 0
        %2199 = vmatmul.mubr.bf16.gmra.mrb[0].mxu0 %v1958
        %v2200 = vpop.f32.mrb[0].mxu0
        %v2201 = vadd.f32 %v2088, %v2200
        %v2202 = vpop.f32.mrb[0].mxu0
        %v2203 = vadd.f32 %v2090, %v2202
        %v2204 = vpop.f32.mrb[0].mxu0
        %v2205 = vadd.f32 %v2092, %v2204
        %v2206 = vpop.f32.mrb[0].mxu0
        %v2207 = vadd.f32 %v2094, %v2206
        %2208 = vdwg.mxu0
        %v2209 = vld [vmem:[%s5] sm:$0xff]
        %v2210 = vld [vmem:[%s5 + $0x8] sm:$0xff]
        %v2211 = vld [vmem:[%s5 + $0x10] sm:$0xff]
        %v2212 = vld [vmem:[%s5 + $0x18] sm:$0xff]
        %v2213 = vld [vmem:[%s5 + $0x20] sm:$0xff]
        %v2214 = vld [vmem:[%s5 + $0x28] sm:$0xff]
        %v2215 = vld [vmem:[%s5 + $0x30] sm:$0xff]
        %v2216 = vld [vmem:[%s5 + $0x38] sm:$0xff]
        %v2217 = vld [vmem:[%s5 + $0x40] sm:$0xff]
        %v2218 = vld [vmem:[%s5 + $0x48] sm:$0xff]
        %v2219 = vld [vmem:[%s5 + $0x50] sm:$0xff]
        %v2220 = vld [vmem:[%s5 + $0x58] sm:$0xff]
        %v2221 = vld [vmem:[%s5 + $0x60] sm:$0xff]
        %v2222 = vld [vmem:[%s5 + $0x68] sm:$0xff]
        %v2223 = vld [vmem:[%s5 + $0x70] sm:$0xff]
        %v2224 = vld [vmem:[%s5 + $0x78] sm:$0xff]
        %2226 = vset.pattern.permute.xlu0 0
        %2227 = vperm.xlu0 %2226, %v2209
        %v2228 = vpop.permute.xlu0 %2227
        %2231 = vset.pattern.permute.xlu0 0
        %2232 = vperm.xlu0 %2231, %v2210
        %v2233 = vpop.permute.xlu0 %2232
        %2236 = vset.pattern.permute.xlu0 0
        %2237 = vperm.xlu0 %2236, %v2211
        %v2238 = vpop.permute.xlu0 %2237
        %2241 = vset.pattern.permute.xlu0 0
        %2242 = vperm.xlu0 %2241, %v2212
        %v2243 = vpop.permute.xlu0 %2242
        %2246 = vset.pattern.permute.xlu0 0
        %2247 = vperm.xlu0 %2246, %v2213
        %v2248 = vpop.permute.xlu0 %2247
        %2251 = vset.pattern.permute.xlu0 0
        %2252 = vperm.xlu0 %2251, %v2214
        %v2253 = vpop.permute.xlu0 %2252
        %2256 = vset.pattern.permute.xlu0 0
        %2257 = vperm.xlu0 %2256, %v2215
        %v2258 = vpop.permute.xlu0 %2257
        %2261 = vset.pattern.permute.xlu0 0
        %2262 = vperm.xlu0 %2261, %v2216
        %v2263 = vpop.permute.xlu0 %2262
        %2266 = vset.pattern.permute.xlu0 0
        %2267 = vperm.xlu0 %2266, %v2217
        %v2268 = vpop.permute.xlu0 %2267
        %2271 = vset.pattern.permute.xlu0 0
        %2272 = vperm.xlu0 %2271, %v2218
        %v2273 = vpop.permute.xlu0 %2272
        %2276 = vset.pattern.permute.xlu0 0
        %2277 = vperm.xlu0 %2276, %v2219
        %v2278 = vpop.permute.xlu0 %2277
        %2281 = vset.pattern.permute.xlu0 0
        %2282 = vperm.xlu0 %2281, %v2220
        %v2283 = vpop.permute.xlu0 %2282
        %2286 = vset.pattern.permute.xlu0 0
        %2287 = vperm.xlu0 %2286, %v2221
        %v2288 = vpop.permute.xlu0 %2287
        %2291 = vset.pattern.permute.xlu0 0
        %2292 = vperm.xlu0 %2291, %v2222
        %v2293 = vpop.permute.xlu0 %2292
        %2296 = vset.pattern.permute.xlu0 0
        %2297 = vperm.xlu0 %2296, %v2223
        %v2298 = vpop.permute.xlu0 %2297
        %2301 = vset.pattern.permute.xlu0 0
        %2302 = vperm.xlu0 %2301, %v2224
        %v2303 = vpop.permute.xlu0 %2302
        %v2305 = vmul.f32 %v2131, %v2228
        %v2306 = vmul.f32 %v2133, %v2228
        %v2307 = vmul.f32 %v2135, %v2233
        %v2308 = vmul.f32 %v2137, %v2233
        %v2309 = vmul.f32 %v2141, %v2238
        %v2310 = vmul.f32 %v2143, %v2238
        %v2311 = vmul.f32 %v2145, %v2243
        %v2312 = vmul.f32 %v2147, %v2243
        %v2313 = vmul.f32 %v2151, %v2248
        %v2314 = vmul.f32 %v2153, %v2248
        %v2315 = vmul.f32 %v2155, %v2253
        %v2316 = vmul.f32 %v2157, %v2253
        %v2317 = vmul.f32 %v2161, %v2258
        %v2318 = vmul.f32 %v2163, %v2258
        %v2319 = vmul.f32 %v2165, %v2263
        %v2320 = vmul.f32 %v2167, %v2263
        %v2321 = vmul.f32 %v2171, %v2268
        %v2322 = vmul.f32 %v2173, %v2268
        %v2323 = vmul.f32 %v2175, %v2273
        %v2324 = vmul.f32 %v2177, %v2273
        %v2325 = vmul.f32 %v2181, %v2278
        %v2326 = vmul.f32 %v2183, %v2278
        %v2327 = vmul.f32 %v2185, %v2283
        %v2328 = vmul.f32 %v2187, %v2283
        %v2329 = vmul.f32 %v2191, %v2288
        %v2330 = vmul.f32 %v2193, %v2288
        %v2331 = vmul.f32 %v2195, %v2293
        %v2332 = vmul.f32 %v2197, %v2293
        %v2333 = vmul.f32 %v2201, %v2298
        %v2334 = vmul.f32 %v2203, %v2298
        %v2335 = vmul.f32 %v2205, %v2303
        %v2336 = vmul.f32 %v2207, %v2303
        %v2337 = vld [vmem:[%s6] sm:$0xff]
        %v2338 = vld [vmem:[%s6 + $0x8] sm:$0xff]
        %v2339 = vld [vmem:[%s6 + $0x10] sm:$0xff]
        %v2340 = vld [vmem:[%s6 + $0x18] sm:$0xff]
        %v2341 = vld [vmem:[%s6 + $0x20] sm:$0xff]
        %v2342 = vld [vmem:[%s6 + $0x28] sm:$0xff]
        %v2343 = vld [vmem:[%s6 + $0x30] sm:$0xff]
        %v2344 = vld [vmem:[%s6 + $0x38] sm:$0xff]
        %v2345 = vld [vmem:[%s6 + $0x40] sm:$0xff]
        %v2346 = vld [vmem:[%s6 + $0x48] sm:$0xff]
        %v2347 = vld [vmem:[%s6 + $0x50] sm:$0xff]
        %v2348 = vld [vmem:[%s6 + $0x58] sm:$0xff]
        %v2349 = vld [vmem:[%s6 + $0x60] sm:$0xff]
        %v2350 = vld [vmem:[%s6 + $0x68] sm:$0xff]
        %v2351 = vld [vmem:[%s6 + $0x70] sm:$0xff]
        %v2352 = vld [vmem:[%s6 + $0x78] sm:$0xff]
        %2354 = vset.pattern.permute.xlu0 0
        %2355 = vperm.xlu0 %2354, %v2337
        %v2356 = vpop.permute.xlu0 %2355
        %2359 = vset.pattern.permute.xlu0 0
        %2360 = vperm.xlu0 %2359, %v2338
        %v2361 = vpop.permute.xlu0 %2360
        %2364 = vset.pattern.permute.xlu0 0
        %2365 = vperm.xlu0 %2364, %v2339
        %v2366 = vpop.permute.xlu0 %2365
        %2369 = vset.pattern.permute.xlu0 0
        %2370 = vperm.xlu0 %2369, %v2340
        %v2371 = vpop.permute.xlu0 %2370
        %2374 = vset.pattern.permute.xlu0 0
        %2375 = vperm.xlu0 %2374, %v2341
        %v2376 = vpop.permute.xlu0 %2375
        %2379 = vset.pattern.permute.xlu0 0
        %2380 = vperm.xlu0 %2379, %v2342
        %v2381 = vpop.permute.xlu0 %2380
        %2384 = vset.pattern.permute.xlu0 0
        %2385 = vperm.xlu0 %2384, %v2343
        %v2386 = vpop.permute.xlu0 %2385
        %2389 = vset.pattern.permute.xlu0 0
        %2390 = vperm.xlu0 %2389, %v2344
        %v2391 = vpop.permute.xlu0 %2390
        %2394 = vset.pattern.permute.xlu0 0
        %2395 = vperm.xlu0 %2394, %v2345
        %v2396 = vpop.permute.xlu0 %2395
        %2399 = vset.pattern.permute.xlu0 0
        %2400 = vperm.xlu0 %2399, %v2346
        %v2401 = vpop.permute.xlu0 %2400
        %2404 = vset.pattern.permute.xlu0 0
        %2405 = vperm.xlu0 %2404, %v2347
        %v2406 = vpop.permute.xlu0 %2405
        %2409 = vset.pattern.permute.xlu0 0
        %2410 = vperm.xlu0 %2409, %v2348
        %v2411 = vpop.permute.xlu0 %2410
        %2414 = vset.pattern.permute.xlu0 0
        %2415 = vperm.xlu0 %2414, %v2349
        %v2416 = vpop.permute.xlu0 %2415
        %2419 = vset.pattern.permute.xlu0 0
        %2420 = vperm.xlu0 %2419, %v2350
        %v2421 = vpop.permute.xlu0 %2420
        %2424 = vset.pattern.permute.xlu0 0
        %2425 = vperm.xlu0 %2424, %v2351
        %v2426 = vpop.permute.xlu0 %2425
        %2429 = vset.pattern.permute.xlu0 0
        %2430 = vperm.xlu0 %2429, %v2352
        %v2431 = vpop.permute.xlu0 %2430
        %v2433 = vadd.f32 %v2305, %v2356
        %v2434 = vadd.f32 %v2306, %v2356
        %v2435 = vadd.f32 %v2307, %v2361
        %v2436 = vadd.f32 %v2308, %v2361
        %v2437 = vadd.f32 %v2309, %v2366
        %v2438 = vadd.f32 %v2310, %v2366
        %v2439 = vadd.f32 %v2311, %v2371
        %v2440 = vadd.f32 %v2312, %v2371
        %v2441 = vadd.f32 %v2313, %v2376
        %v2442 = vadd.f32 %v2314, %v2376
        %v2443 = vadd.f32 %v2315, %v2381
        %v2444 = vadd.f32 %v2316, %v2381
        %v2445 = vadd.f32 %v2317, %v2386
        %v2446 = vadd.f32 %v2318, %v2386
        %v2447 = vadd.f32 %v2319, %v2391
        %v2448 = vadd.f32 %v2320, %v2391
        %v2449 = vadd.f32 %v2321, %v2396
        %v2450 = vadd.f32 %v2322, %v2396
        %v2451 = vadd.f32 %v2323, %v2401
        %v2452 = vadd.f32 %v2324, %v2401
        %v2453 = vadd.f32 %v2325, %v2406
        %v2454 = vadd.f32 %v2326, %v2406
        %v2455 = vadd.f32 %v2327, %v2411
        %v2456 = vadd.f32 %v2328, %v2411
        %v2457 = vadd.f32 %v2329, %v2416
        %v2458 = vadd.f32 %v2330, %v2416
        %v2459 = vadd.f32 %v2331, %v2421
        %v2460 = vadd.f32 %v2332, %v2421
        %v2461 = vadd.f32 %v2333, %v2426
        %v2462 = vadd.f32 %v2334, %v2426
        %v2463 = vadd.f32 %v2335, %v2431
        %v2464 = vadd.f32 %v2336, %v2431
        %v2465 = vmax.f32 %v2433, 0.0
        %v2466 = vmax.f32 %v2434, 0.0
        %v2467 = vmax.f32 %v2435, 0.0
        %v2468 = vmax.f32 %v2436, 0.0
        %v2469 = vmax.f32 %v2437, 0.0
        %v2470 = vmax.f32 %v2438, 0.0
        %v2471 = vmax.f32 %v2439, 0.0
        %v2472 = vmax.f32 %v2440, 0.0
        %v2473 = vmax.f32 %v2441, 0.0
        %v2474 = vmax.f32 %v2442, 0.0
        %v2475 = vmax.f32 %v2443, 0.0
        %v2476 = vmax.f32 %v2444, 0.0
        %v2477 = vmax.f32 %v2445, 0.0
        %v2478 = vmax.f32 %v2446, 0.0
        %v2479 = vmax.f32 %v2447, 0.0
        %v2480 = vmax.f32 %v2448, 0.0
        %v2481 = vmax.f32 %v2449, 0.0
        %v2482 = vmax.f32 %v2450, 0.0
        %v2483 = vmax.f32 %v2451, 0.0
        %v2484 = vmax.f32 %v2452, 0.0
        %v2485 = vmax.f32 %v2453, 0.0
        %v2486 = vmax.f32 %v2454, 0.0
        %v2487 = vmax.f32 %v2455, 0.0
        %v2488 = vmax.f32 %v2456, 0.0
        %v2489 = vmax.f32 %v2457, 0.0
        %v2490 = vmax.f32 %v2458, 0.0
        %v2491 = vmax.f32 %v2459, 0.0
        %v2492 = vmax.f32 %v2460, 0.0
        %v2493 = vmax.f32 %v2461, 0.0
        %v2494 = vmax.f32 %v2462, 0.0
        %v2495 = vmax.f32 %v2463, 0.0
        %v2496 = vmax.f32 %v2464, 0.0
        %2497 = vrot.lane.b32.xlu0 %v2465, 1
        %v2498 = vpop.permute.xlu0 %2497
        %2499 = vrot.lane.b32.xlu0 %v2467, 1
        %v2500 = vpop.permute.xlu0 %2499
        %2501 = vrot.lane.b32.xlu0 %v2469, 1
        %v2502 = vpop.permute.xlu0 %2501
        %2503 = vrot.lane.b32.xlu0 %v2471, 1
        %v2504 = vpop.permute.xlu0 %2503
        %2505 = vrot.lane.b32.xlu0 %v2473, 1
        %v2506 = vpop.permute.xlu0 %2505
        %2507 = vrot.lane.b32.xlu0 %v2475, 1
        %v2508 = vpop.permute.xlu0 %2507
        %2509 = vrot.lane.b32.xlu0 %v2477, 1
        %v2510 = vpop.permute.xlu0 %2509
        %2511 = vrot.lane.b32.xlu0 %v2479, 1
        %v2512 = vpop.permute.xlu0 %2511
        %2513 = vrot.lane.b32.xlu0 %v2481, 1
        %v2514 = vpop.permute.xlu0 %2513
        %2515 = vrot.lane.b32.xlu0 %v2483, 1
        %v2516 = vpop.permute.xlu0 %2515
        %2517 = vrot.lane.b32.xlu0 %v2485, 1
        %v2518 = vpop.permute.xlu0 %2517
        %2519 = vrot.lane.b32.xlu0 %v2487, 1
        %v2520 = vpop.permute.xlu0 %2519
        %2521 = vrot.lane.b32.xlu0 %v2489, 1
        %v2522 = vpop.permute.xlu0 %2521
        %2523 = vrot.lane.b32.xlu0 %v2491, 1
        %v2524 = vpop.permute.xlu0 %2523
        %2525 = vrot.lane.b32.xlu0 %v2493, 1
        %v2526 = vpop.permute.xlu0 %2525
        %2527 = vrot.lane.b32.xlu0 %v2495, 1
        %v2528 = vpop.permute.xlu0 %2527
        %2529 = vrot.lane.b32.xlu0 %v2466, 1
        %v2530 = vpop.permute.xlu0 %2529
        %2531 = vrot.lane.b32.xlu0 %v2468, 1
        %v2532 = vpop.permute.xlu0 %2531
        %2533 = vrot.lane.b32.xlu0 %v2470, 1
        %v2534 = vpop.permute.xlu0 %2533
        %2535 = vrot.lane.b32.xlu0 %v2472, 1
        %v2536 = vpop.permute.xlu0 %2535
        %2537 = vrot.lane.b32.xlu0 %v2474, 1
        %v2538 = vpop.permute.xlu0 %2537
        %2539 = vrot.lane.b32.xlu0 %v2476, 1
        %v2540 = vpop.permute.xlu0 %2539
        %2541 = vrot.lane.b32.xlu0 %v2478, 1
        %v2542 = vpop.permute.xlu0 %2541
        %2543 = vrot.lane.b32.xlu0 %v2480, 1
        %v2544 = vpop.permute.xlu0 %2543
        %2545 = vrot.lane.b32.xlu0 %v2482, 1
        %v2546 = vpop.permute.xlu0 %2545
        %2547 = vrot.lane.b32.xlu0 %v2484, 1
        %v2548 = vpop.permute.xlu0 %2547
        %2549 = vrot.lane.b32.xlu0 %v2486, 1
        %v2550 = vpop.permute.xlu0 %2549
        %2551 = vrot.lane.b32.xlu0 %v2488, 1
        %v2552 = vpop.permute.xlu0 %2551
        %2553 = vrot.lane.b32.xlu0 %v2490, 1
        %v2554 = vpop.permute.xlu0 %2553
        %2555 = vrot.lane.b32.xlu0 %v2492, 1
        %v2556 = vpop.permute.xlu0 %2555
        %2557 = vrot.lane.b32.xlu0 %v2494, 1
        %v2558 = vpop.permute.xlu0 %2557
        %2559 = vrot.lane.b32.xlu0 %v2496, 1
        %v2560 = vpop.permute.xlu0 %2559
        %v2561 = vsel %vm601, %v2498, %v2530
        %v2562 = vsel %vm601, %v2500, %v2532
        %v2563 = vsel %vm601, %v2502, %v2534
        %v2564 = vsel %vm601, %v2504, %v2536
        %v2565 = vsel %vm601, %v2506, %v2538
        %v2566 = vsel %vm601, %v2508, %v2540
        %v2567 = vsel %vm601, %v2510, %v2542
        %v2568 = vsel %vm601, %v2512, %v2544
        %v2569 = vsel %vm601, %v2514, %v2546
        %v2570 = vsel %vm601, %v2516, %v2548
        %v2571 = vsel %vm601, %v2518, %v2550
        %v2572 = vsel %vm601, %v2520, %v2552
        %v2573 = vsel %vm601, %v2522, %v2554
        %v2574 = vsel %vm601, %v2524, %v2556
        %v2575 = vsel %vm601, %v2526, %v2558
        %v2576 = vsel %vm601, %v2528, %v2560
        %v2577 = vsel %vm601, %v2530, %v2498
        %v2578 = vsel %vm601, %v2532, %v2500
        %v2579 = vsel %vm601, %v2534, %v2502
        %v2580 = vsel %vm601, %v2536, %v2504
        %v2581 = vsel %vm601, %v2538, %v2506
        %v2582 = vsel %vm601, %v2540, %v2508
        %v2583 = vsel %vm601, %v2542, %v2510
        %v2584 = vsel %vm601, %v2544, %v2512
        %v2585 = vsel %vm601, %v2546, %v2514
        %v2586 = vsel %vm601, %v2548, %v2516
        %v2587 = vsel %vm601, %v2550, %v2518
        %v2588 = vsel %vm601, %v2552, %v2520
        %v2589 = vsel %vm601, %v2554, %v2522
        %v2590 = vsel %vm601, %v2556, %v2524
        %v2591 = vsel %vm601, %v2558, %v2526
        %v2592 = vsel %vm601, %v2560, %v2528
        %v2593 = vsel %vm535, %v2577, 0.0
        %v2594 = vsel %vm536, %v2561, 0.0
        %v2595 = vsel %vm535, %v2578, 0.0
        %v2596 = vsel %vm536, %v2562, 0.0
        %v2597 = vsel %vm535, %v2579, 0.0
        %v2598 = vsel %vm536, %v2563, 0.0
        %v2599 = vsel %vm535, %v2580, 0.0
        %v2600 = vsel %vm536, %v2564, 0.0
        %v2601 = vsel %vm535, %v2581, 0.0
        %v2602 = vsel %vm536, %v2565, 0.0
        %v2603 = vsel %vm535, %v2582, 0.0
        %v2604 = vsel %vm536, %v2566, 0.0
        %v2605 = vsel %vm535, %v2583, 0.0
        %v2606 = vsel %vm536, %v2567, 0.0
        %v2607 = vsel %vm535, %v2584, 0.0
        %v2608 = vsel %vm536, %v2568, 0.0
        %v2609 = vsel %vm535, %v2585, 0.0
        %v2610 = vsel %vm536, %v2569, 0.0
        %v2611 = vsel %vm535, %v2586, 0.0
        %v2612 = vsel %vm536, %v2570, 0.0
        %v2613 = vsel %vm535, %v2587, 0.0
        %v2614 = vsel %vm536, %v2571, 0.0
        %v2615 = vsel %vm535, %v2588, 0.0
        %v2616 = vsel %vm536, %v2572, 0.0
        %v2617 = vsel %vm535, %v2589, 0.0
        %v2618 = vsel %vm536, %v2573, 0.0
        %v2619 = vsel %vm535, %v2590, 0.0
        %v2620 = vsel %vm536, %v2574, 0.0
        %v2621 = vsel %vm535, %v2591, 0.0
        %v2622 = vsel %vm536, %v2575, 0.0
        %v2623 = vsel %vm535, %v2592, 0.0
        %v2624 = vsel %vm536, %v2576, 0.0
        %2625 = vrot.lane.b32.xlu0 %v2465, 127
        %v2626 = vpop.permute.xlu0 %2625
        %2627 = vrot.lane.b32.xlu0 %v2467, 127
        %v2628 = vpop.permute.xlu0 %2627
        %2629 = vrot.lane.b32.xlu0 %v2469, 127
        %v2630 = vpop.permute.xlu0 %2629
        %2631 = vrot.lane.b32.xlu0 %v2471, 127
        %v2632 = vpop.permute.xlu0 %2631
        %2633 = vrot.lane.b32.xlu0 %v2473, 127
        %v2634 = vpop.permute.xlu0 %2633
        %2635 = vrot.lane.b32.xlu0 %v2475, 127
        %v2636 = vpop.permute.xlu0 %2635
        %2637 = vrot.lane.b32.xlu0 %v2477, 127
        %v2638 = vpop.permute.xlu0 %2637
        %2639 = vrot.lane.b32.xlu0 %v2479, 127
        %v2640 = vpop.permute.xlu0 %2639
        %2641 = vrot.lane.b32.xlu0 %v2481, 127
        %v2642 = vpop.permute.xlu0 %2641
        %2643 = vrot.lane.b32.xlu0 %v2483, 127
        %v2644 = vpop.permute.xlu0 %2643
        %2645 = vrot.lane.b32.xlu0 %v2485, 127
        %v2646 = vpop.permute.xlu0 %2645
        %2647 = vrot.lane.b32.xlu0 %v2487, 127
        %v2648 = vpop.permute.xlu0 %2647
        %2649 = vrot.lane.b32.xlu0 %v2489, 127
        %v2650 = vpop.permute.xlu0 %2649
        %2651 = vrot.lane.b32.xlu0 %v2491, 127
        %v2652 = vpop.permute.xlu0 %2651
        %2653 = vrot.lane.b32.xlu0 %v2493, 127
        %v2654 = vpop.permute.xlu0 %2653
        %2655 = vrot.lane.b32.xlu0 %v2495, 127
        %v2656 = vpop.permute.xlu0 %2655
        %2657 = vrot.lane.b32.xlu0 %v2466, 127
        %v2658 = vpop.permute.xlu0 %2657
        %2659 = vrot.lane.b32.xlu0 %v2468, 127
        %v2660 = vpop.permute.xlu0 %2659
        %2661 = vrot.lane.b32.xlu0 %v2470, 127
        %v2662 = vpop.permute.xlu0 %2661
        %2663 = vrot.lane.b32.xlu0 %v2472, 127
        %v2664 = vpop.permute.xlu0 %2663
        %2665 = vrot.lane.b32.xlu0 %v2474, 127
        %v2666 = vpop.permute.xlu0 %2665
        %2667 = vrot.lane.b32.xlu0 %v2476, 127
        %v2668 = vpop.permute.xlu0 %2667
        %2669 = vrot.lane.b32.xlu0 %v2478, 127
        %v2670 = vpop.permute.xlu0 %2669
        %2671 = vrot.lane.b32.xlu0 %v2480, 127
        %v2672 = vpop.permute.xlu0 %2671
        %2673 = vrot.lane.b32.xlu0 %v2482, 127
        %v2674 = vpop.permute.xlu0 %2673
        %2675 = vrot.lane.b32.xlu0 %v2484, 127
        %v2676 = vpop.permute.xlu0 %2675
        %2677 = vrot.lane.b32.xlu0 %v2486, 127
        %v2678 = vpop.permute.xlu0 %2677
        %2679 = vrot.lane.b32.xlu0 %v2488, 127
        %v2680 = vpop.permute.xlu0 %2679
        %2681 = vrot.lane.b32.xlu0 %v2490, 127
        %v2682 = vpop.permute.xlu0 %2681
        %2683 = vrot.lane.b32.xlu0 %v2492, 127
        %v2684 = vpop.permute.xlu0 %2683
        %2685 = vrot.lane.b32.xlu0 %v2494, 127
        %v2686 = vpop.permute.xlu0 %2685
        %2687 = vrot.lane.b32.xlu0 %v2496, 127
        %v2688 = vpop.permute.xlu0 %2687
        %v2689 = vsel %vm732, %v2626, %v2658
        %v2690 = vsel %vm732, %v2628, %v2660
        %v2691 = vsel %vm732, %v2630, %v2662
        %v2692 = vsel %vm732, %v2632, %v2664
        %v2693 = vsel %vm732, %v2634, %v2666
        %v2694 = vsel %vm732, %v2636, %v2668
        %v2695 = vsel %vm732, %v2638, %v2670
        %v2696 = vsel %vm732, %v2640, %v2672
        %v2697 = vsel %vm732, %v2642, %v2674
        %v2698 = vsel %vm732, %v2644, %v2676
        %v2699 = vsel %vm732, %v2646, %v2678
        %v2700 = vsel %vm732, %v2648, %v2680
        %v2701 = vsel %vm732, %v2650, %v2682
        %v2702 = vsel %vm732, %v2652, %v2684
        %v2703 = vsel %vm732, %v2654, %v2686
        %v2704 = vsel %vm732, %v2656, %v2688
        %v2705 = vsel %vm732, %v2658, %v2626
        %v2706 = vsel %vm732, %v2660, %v2628
        %v2707 = vsel %vm732, %v2662, %v2630
        %v2708 = vsel %vm732, %v2664, %v2632
        %v2709 = vsel %vm732, %v2666, %v2634
        %v2710 = vsel %vm732, %v2668, %v2636
        %v2711 = vsel %vm732, %v2670, %v2638
        %v2712 = vsel %vm732, %v2672, %v2640
        %v2713 = vsel %vm732, %v2674, %v2642
        %v2714 = vsel %vm732, %v2676, %v2644
        %v2715 = vsel %vm732, %v2678, %v2646
        %v2716 = vsel %vm732, %v2680, %v2648
        %v2717 = vsel %vm732, %v2682, %v2650
        %v2718 = vsel %vm732, %v2684, %v2652
        %v2719 = vsel %vm732, %v2686, %v2654
        %v2720 = vsel %vm732, %v2688, %v2656
        %v2721 = vsel %vm666, %v2689, 0.0
        %v2722 = vsel %vm667, %v2705, 0.0
        %v2723 = vsel %vm666, %v2690, 0.0
        %v2724 = vsel %vm667, %v2706, 0.0
        %v2725 = vsel %vm666, %v2691, 0.0
        %v2726 = vsel %vm667, %v2707, 0.0
        %v2727 = vsel %vm666, %v2692, 0.0
        %v2728 = vsel %vm667, %v2708, 0.0
        %v2729 = vsel %vm666, %v2693, 0.0
        %v2730 = vsel %vm667, %v2709, 0.0
        %v2731 = vsel %vm666, %v2694, 0.0
        %v2732 = vsel %vm667, %v2710, 0.0
        %v2733 = vsel %vm666, %v2695, 0.0
        %v2734 = vsel %vm667, %v2711, 0.0
        %v2735 = vsel %vm666, %v2696, 0.0
        %v2736 = vsel %vm667, %v2712, 0.0
        %v2737 = vsel %vm666, %v2697, 0.0
        %v2738 = vsel %vm667, %v2713, 0.0
        %v2739 = vsel %vm666, %v2698, 0.0
        %v2740 = vsel %vm667, %v2714, 0.0
        %v2741 = vsel %vm666, %v2699, 0.0
        %v2742 = vsel %vm667, %v2715, 0.0
        %v2743 = vsel %vm666, %v2700, 0.0
        %v2744 = vsel %vm667, %v2716, 0.0
        %v2745 = vsel %vm666, %v2701, 0.0
        %v2746 = vsel %vm667, %v2717, 0.0
        %v2747 = vsel %vm666, %v2702, 0.0
        %v2748 = vsel %vm667, %v2718, 0.0
        %v2749 = vsel %vm666, %v2703, 0.0
        %v2750 = vsel %vm667, %v2719, 0.0
        %v2751 = vsel %vm666, %v2704, 0.0
        %v2752 = vsel %vm667, %v2720, 0.0
        %v2753 = vpack.c.bf16 %v2595, %v2593
        %v2754 = vpack.c.bf16 %v2596, %v2594
        %v2755 = vpack.c.bf16 %v2599, %v2597
        %v2756 = vpack.c.bf16 %v2600, %v2598
        %v2757 = vpack.c.bf16 %v2603, %v2601
        %v2758 = vpack.c.bf16 %v2604, %v2602
        %v2759 = vpack.c.bf16 %v2607, %v2605
        %v2760 = vpack.c.bf16 %v2608, %v2606
        %v2761 = vpack.c.bf16 %v2611, %v2609
        %v2762 = vpack.c.bf16 %v2612, %v2610
        %v2763 = vpack.c.bf16 %v2615, %v2613
        %v2764 = vpack.c.bf16 %v2616, %v2614
        %v2765 = vpack.c.bf16 %v2619, %v2617
        %v2766 = vpack.c.bf16 %v2620, %v2618
        %v2767 = vpack.c.bf16 %v2623, %v2621
        %v2768 = vpack.c.bf16 %v2624, %v2622
        %v2769 = vpack.c.bf16 %v2467, %v2465
        %v2770 = vpack.c.bf16 %v2468, %v2466
        %v2771 = vpack.c.bf16 %v2471, %v2469
        %v2772 = vpack.c.bf16 %v2472, %v2470
        %v2773 = vpack.c.bf16 %v2475, %v2473
        %v2774 = vpack.c.bf16 %v2476, %v2474
        %v2775 = vpack.c.bf16 %v2479, %v2477
        %v2776 = vpack.c.bf16 %v2480, %v2478
        %v2777 = vpack.c.bf16 %v2483, %v2481
        %v2778 = vpack.c.bf16 %v2484, %v2482
        %v2779 = vpack.c.bf16 %v2487, %v2485
        %v2780 = vpack.c.bf16 %v2488, %v2486
        %v2781 = vpack.c.bf16 %v2491, %v2489
        %v2782 = vpack.c.bf16 %v2492, %v2490
        %v2783 = vpack.c.bf16 %v2495, %v2493
        %v2784 = vpack.c.bf16 %v2496, %v2494
        %v2785 = vpack.c.bf16 %v2723, %v2721
        %v2786 = vpack.c.bf16 %v2724, %v2722
        %v2787 = vpack.c.bf16 %v2727, %v2725
        %v2788 = vpack.c.bf16 %v2728, %v2726
        %v2789 = vpack.c.bf16 %v2731, %v2729
        %v2790 = vpack.c.bf16 %v2732, %v2730
        %v2791 = vpack.c.bf16 %v2735, %v2733
        %v2792 = vpack.c.bf16 %v2736, %v2734
        %v2793 = vpack.c.bf16 %v2739, %v2737
        %v2794 = vpack.c.bf16 %v2740, %v2738
        %v2795 = vpack.c.bf16 %v2743, %v2741
        %v2796 = vpack.c.bf16 %v2744, %v2742
        %v2797 = vpack.c.bf16 %v2747, %v2745
        %v2798 = vpack.c.bf16 %v2748, %v2746
        %v2799 = vpack.c.bf16 %v2751, %v2749
        %v2800 = vpack.c.bf16 %v2752, %v2750
        %v2801 = vld [vmem:[%s7] sm:$0xff]
        %v2802 = vld [vmem:[%s7 + $0x8] sm:$0xf]
        %v2803 = vld [vmem:[%s7 + $0xc] sm:$0xff]
        %v2804 = vld [vmem:[%s7 + $0x14] sm:$0xf]
        %v2805 = vld [vmem:[%s7 + $0x18] sm:$0xff]
        %v2806 = vld [vmem:[%s7 + $0x20] sm:$0xf]
        %v2807 = vld [vmem:[%s7 + $0x24] sm:$0xff]
        %v2808 = vld [vmem:[%s7 + $0x2c] sm:$0xf]
        %v2809 = vld [vmem:[%s7 + $0x30] sm:$0xff]
        %v2810 = vld [vmem:[%s7 + $0x38] sm:$0xf]
        %v2811 = vld [vmem:[%s7 + $0x3c] sm:$0xff]
        %v2812 = vld [vmem:[%s7 + $0x44] sm:$0xf]
        %v2813 = vld [vmem:[%s7 + $0x48] sm:$0xff]
        %v2814 = vld [vmem:[%s7 + $0x50] sm:$0xf]
        %v2815 = vld [vmem:[%s7 + $0x54] sm:$0xff]
        %v2816 = vld [vmem:[%s7 + $0x5c] sm:$0xf]
        %v2817 = vld [vmem:[%s7 + $0x60] sm:$0xff]
        %v2818 = vld [vmem:[%s7 + $0x68] sm:$0xf]
        %v2819 = vld [vmem:[%s7 + $0x6c] sm:$0xff]
        %v2820 = vld [vmem:[%s7 + $0x74] sm:$0xf]
        %v2821 = vld [vmem:[%s7 + $0x78] sm:$0xff]
        %v2822 = vld [vmem:[%s7 + $0x80] sm:$0xf]
        %v2823 = vld [vmem:[%s7 + $0x84] sm:$0xff]
        %v2824 = vld [vmem:[%s7 + $0x8c] sm:$0xf]
        %v2825 = vld [vmem:[%s7 + $0x90] sm:$0xff]
        %v2826 = vld [vmem:[%s7 + $0x98] sm:$0xf]
        %v2827 = vld [vmem:[%s7 + $0x9c] sm:$0xff]
        %v2828 = vld [vmem:[%s7 + $0xa4] sm:$0xf]
        %v2829 = vld [vmem:[%s7 + $0xa8] sm:$0xff]
        %v2830 = vld [vmem:[%s7 + $0xb0] sm:$0xf]
        %v2831 = vld [vmem:[%s7 + $0xb4] sm:$0xff]
        %v2832 = vld [vmem:[%s7 + $0xbc] sm:$0xf]
        %v2865 = vunpack.c.l.b16 %v2801
        %v2866 = vunpack.c.h.b16 %v2801
        %v2867 = vunpack.c.l.b16 %v2802
        %v2868 = vunpack.c.l.b16 %v2803
        %v2869 = vunpack.c.h.b16 %v2803
        %v2870 = vunpack.c.l.b16 %v2804
        %v2871 = vunpack.c.l.b16 %v2805
        %v2872 = vunpack.c.h.b16 %v2805
        %v2873 = vunpack.c.l.b16 %v2806
        %v2874 = vunpack.c.l.b16 %v2807
        %v2875 = vunpack.c.h.b16 %v2807
        %v2876 = vunpack.c.l.b16 %v2808
        %v2877 = vunpack.c.l.b16 %v2809
        %v2878 = vunpack.c.h.b16 %v2809
        %v2879 = vunpack.c.l.b16 %v2810
        %v2880 = vunpack.c.l.b16 %v2811
        %v2881 = vunpack.c.h.b16 %v2811
        %v2882 = vunpack.c.l.b16 %v2812
        %v2883 = vunpack.c.l.b16 %v2813
        %v2884 = vunpack.c.h.b16 %v2813
        %v2885 = vunpack.c.l.b16 %v2814
        %v2886 = vunpack.c.l.b16 %v2815
        %v2887 = vunpack.c.h.b16 %v2815
        %v2888 = vunpack.c.l.b16 %v2816
        %v2889 = vunpack.c.l.b16 %v2817
        %v2890 = vunpack.c.h.b16 %v2817
        %v2891 = vunpack.c.l.b16 %v2818
        %v2892 = vunpack.c.l.b16 %v2819
        %v2893 = vunpack.c.h.b16 %v2819
        %v2894 = vunpack.c.l.b16 %v2820
        %v2895 = vunpack.c.l.b16 %v2821
        %v2896 = vunpack.c.h.b16 %v2821
        %v2897 = vunpack.c.l.b16 %v2822
        %v2898 = vunpack.c.l.b16 %v2823
        %v2899 = vunpack.c.h.b16 %v2823
        %v2900 = vunpack.c.l.b16 %v2824
        %v2901 = vunpack.c.l.b16 %v2825
        %v2902 = vunpack.c.h.b16 %v2825
        %v2903 = vunpack.c.l.b16 %v2826
        %v2904 = vunpack.c.l.b16 %v2827
        %v2905 = vunpack.c.h.b16 %v2827
        %v2906 = vunpack.c.l.b16 %v2828
        %v2907 = vunpack.c.l.b16 %v2829
        %v2908 = vunpack.c.h.b16 %v2829
        %v2909 = vunpack.c.l.b16 %v2830
        %v2910 = vunpack.c.l.b16 %v2831
        %v2911 = vunpack.c.h.b16 %v2831
        %v2912 = vunpack.c.l.b16 %v2832
        %v2913 = vpack.c.b16 %v2868, %v2865
        %v2914 = vpack.c.b16 %v2869, %v2866
        %v2915 = vpack.c.b16 %v2870, %v2867
        %v2916 = vpack.c.b16 %v2874, %v2871
        %v2917 = vpack.c.b16 %v2875, %v2872
        %v2918 = vpack.c.b16 %v2876, %v2873
        %v2919 = vpack.c.b16 %v2880, %v2877
        %v2920 = vpack.c.b16 %v2881, %v2878
        %v2921 = vpack.c.b16 %v2882, %v2879
        %v2922 = vpack.c.b16 %v2886, %v2883
        %v2923 = vpack.c.b16 %v2887, %v2884
        %v2924 = vpack.c.b16 %v2888, %v2885
        %v2925 = vpack.c.b16 %v2892, %v2889
        %v2926 = vpack.c.b16 %v2893, %v2890
        %v2927 = vpack.c.b16 %v2894, %v2891
        %v2928 = vpack.c.b16 %v2898, %v2895
        %v2929 = vpack.c.b16 %v2899, %v2896
        %v2930 = vpack.c.b16 %v2900, %v2897
        %v2931 = vpack.c.b16 %v2904, %v2901
        %v2932 = vpack.c.b16 %v2905, %v2902
        %v2933 = vpack.c.b16 %v2906, %v2903
        %v2934 = vpack.c.b16 %v2910, %v2907
        %v2935 = vpack.c.b16 %v2911, %v2908
        %v2936 = vpack.c.b16 %v2912, %v2909
        %2961 = vmatprep.subr.bf16.mxu0 %v2754
        %2962 = vmatpush1.bf16.msra.mxu0 %v2753
        %2963 = vmatprep.subr.bf16.mxu0 %v2756
        %2964 = vmatpush1.bf16.msra.mxu0 %v2755
        %2965 = vmatprep.subr.bf16.mxu0 %v2758
        %2966 = vmatpush1.bf16.msra.mxu0 %v2757
        %2967 = vmatprep.subr.bf16.mxu0 %v2760
        %2968 = vmatpush1.bf16.msra.mxu0 %v2759
        %2969 = vmatprep.subr.bf16.mxu0 %v2762
        %2970 = vmatpush1.bf16.msra.mxu0 %v2761
        %2971 = vmatprep.subr.bf16.mxu0 %v2764
        %2972 = vmatpush1.bf16.msra.mxu0 %v2763
        %2973 = vmatprep.subr.bf16.mxu0 %v2766
        %2974 = vmatpush1.bf16.msra.mxu0 %v2765
        %2975 = vmatprep.subr.bf16.mxu0 %v2768
        %2976 = vmatpush1.bf16.msra.mxu0 %v2767
        %2977 = vmatprep.subr.bf16.mxu0 %v2770
        %2978 = vmatpush1.bf16.msra.mxu0 %v2769
        %2979 = vmatprep.subr.bf16.mxu0 %v2772
        %2980 = vmatpush1.bf16.msra.mxu0 %v2771
        %2981 = vmatprep.subr.bf16.mxu0 %v2774
        %2982 = vmatpush1.bf16.msra.mxu0 %v2773
        %2983 = vmatprep.subr.bf16.mxu0 %v2776
        %2984 = vmatpush1.bf16.msra.mxu0 %v2775
        %2985 = vmatprep.subr.bf16.mxu0 %v2778
        %2986 = vmatpush1.bf16.msra.mxu0 %v2777
        %2987 = vmatprep.subr.bf16.mxu0 %v2780
        %2988 = vmatpush1.bf16.msra.mxu0 %v2779
        %2989 = vmatprep.subr.bf16.mxu0 %v2782
        %2990 = vmatpush1.bf16.msra.mxu0 %v2781
        %2991 = vmatprep.subr.bf16.mxu0 %v2784
        %2992 = vmatpush1.bf16.msra.mxu0 %v2783
        %2993 = vmatprep.mubr.bf16.mxu0 %v2914
        %2994 = vmatmul.mubr.bf16.gmra.mrb[0].mxu0 %v2913
        %v2995 = vpop.f32.mrb[0].mxu0
        %v2996 = vadd.f32 0.0, %v2995
        %v2997 = vpop.f32.mrb[0].mxu0
        %v2998 = vadd.f32 0.0, %v2997
        %v2999 = vpop.f32.mrb[0].mxu0
        %v3000 = vadd.f32 0.0, %v2999
        %v3001 = vpop.f32.mrb[0].mxu0
        %v3002 = vadd.f32 0.0, %v3001
        %3003 = vmatprep.mubr.bf16.mxu0 %v2917
        %3004 = vmatmul.mubr.bf16.gmra.mrb[0].mxu0 %v2916
        %v3005 = vpop.f32.mrb[0].mxu0
        %v3006 = vadd.f32 0.0, %v3005
        %v3007 = vpop.f32.mrb[0].mxu0
        %v3008 = vadd.f32 0.0, %v3007
        %v3009 = vpop.f32.mrb[0].mxu0
        %v3010 = vadd.f32 0.0, %v3009
        %v3011 = vpop.f32.mrb[0].mxu0
        %v3012 = vadd.f32 0.0, %v3011
        %3013 = vmatprep.mubr.bf16.mxu0 %v2920
        %3014 = vmatmul.mubr.bf16.gmra.mrb[0].mxu0 %v2919
        %v3015 = vpop.f32.mrb[0].mxu0
        %v3016 = vadd.f32 0.0, %v3015
        %v3017 = vpop.f32.mrb[0].mxu0
        %v3018 = vadd.f32 0.0, %v3017
        %v3019 = vpop.f32.mrb[0].mxu0
        %v3020 = vadd.f32 0.0, %v3019
        %v3021 = vpop.f32.mrb[0].mxu0
        %v3022 = vadd.f32 0.0, %v3021
        %3023 = vmatprep.mubr.bf16.mxu0 %v2923
        %3024 = vmatmul.mubr.bf16.gmra.mrb[0].mxu0 %v2922
        %v3025 = vpop.f32.mrb[0].mxu0
        %v3026 = vadd.f32 0.0, %v3025
        %v3027 = vpop.f32.mrb[0].mxu0
        %v3028 = vadd.f32 0.0, %v3027
        %v3029 = vpop.f32.mrb[0].mxu0
        %v3030 = vadd.f32 0.0, %v3029
        %v3031 = vpop.f32.mrb[0].mxu0
        %v3032 = vadd.f32 0.0, %v3031
        %3033 = vmatprep.mubr.bf16.mxu0 %v2926
        %3034 = vmatmul.mubr.bf16.gmra.mrb[0].mxu0 %v2925
        %v3035 = vpop.f32.mrb[0].mxu0
        %v3036 = vadd.f32 0.0, %v3035
        %v3037 = vpop.f32.mrb[0].mxu0
        %v3038 = vadd.f32 0.0, %v3037
        %v3039 = vpop.f32.mrb[0].mxu0
        %v3040 = vadd.f32 0.0, %v3039
        %v3041 = vpop.f32.mrb[0].mxu0
        %v3042 = vadd.f32 0.0, %v3041
        %3043 = vmatprep.mubr.bf16.mxu0 %v2929
        %3044 = vmatmul.mubr.bf16.gmra.mrb[0].mxu0 %v2928
        %v3045 = vpop.f32.mrb[0].mxu0
        %v3046 = vadd.f32 0.0, %v3045
        %v3047 = vpop.f32.mrb[0].mxu0
        %v3048 = vadd.f32 0.0, %v3047
        %v3049 = vpop.f32.mrb[0].mxu0
        %v3050 = vadd.f32 0.0, %v3049
        %v3051 = vpop.f32.mrb[0].mxu0
        %v3052 = vadd.f32 0.0, %v3051
        %3053 = vmatprep.mubr.bf16.mxu0 %v2932
        %3054 = vmatmul.mubr.bf16.gmra.mrb[0].mxu0 %v2931
        %v3055 = vpop.f32.mrb[0].mxu0
        %v3056 = vadd.f32 0.0, %v3055
        %v3057 = vpop.f32.mrb[0].mxu0
        %v3058 = vadd.f32 0.0, %v3057
        %v3059 = vpop.f32.mrb[0].mxu0
        %v3060 = vadd.f32 0.0, %v3059
        %v3061 = vpop.f32.mrb[0].mxu0
        %v3062 = vadd.f32 0.0, %v3061
        %3063 = vmatprep.mubr.bf16.mxu0 %v2935
        %3064 = vmatmul.mubr.bf16.gmra.mrb[0].mxu0 %v2934
        %v3065 = vpop.f32.mrb[0].mxu0
        %v3066 = vadd.f32 0.0, %v3065
        %v3067 = vpop.f32.mrb[0].mxu0
        %v3068 = vadd.f32 0.0, %v3067
        %v3069 = vpop.f32.mrb[0].mxu0
        %v3070 = vadd.f32 0.0, %v3069
        %v3071 = vpop.f32.mrb[0].mxu0
        %v3072 = vadd.f32 0.0, %v3071
        %3073 = vdwg.mxu0
        %3074 = vmatprep.subr.bf16.mxu0 %v2786
        %3075 = vmatpush1.bf16.msra.mxu0 %v2785
        %3076 = vmatprep.subr.bf16.mxu0 %v2788
        %3077 = vmatpush1.bf16.msra.mxu0 %v2787
        %3078 = vmatprep.subr.bf16.mxu0 %v2790
        %3079 = vmatpush1.bf16.msra.mxu0 %v2789
        %3080 = vmatprep.subr.bf16.mxu0 %v2792
        %3081 = vmatpush1.bf16.msra.mxu0 %v2791
        %3082 = vmatprep.subr.bf16.mxu0 %v2794
        %3083 = vmatpush1.bf16.msra.mxu0 %v2793
        %3084 = vmatprep.subr.bf16.mxu0 %v2796
        %3085 = vmatpush1.bf16.msra.mxu0 %v2795
        %3086 = vmatprep.subr.bf16.mxu0 %v2798
        %3087 = vmatpush1.bf16.msra.mxu0 %v2797
        %3088 = vmatprep.subr.bf16.mxu0 %v2800
        %3089 = vmatpush1.bf16.msra.mxu0 %v2799
        %3090 = vmatprep.subr.bf16.mxu0 0
        %3091 = vmatpush1.bf16.msra.mxu0 0
        %3092 = vmatprep.subr.bf16.mxu0 0
        %3093 = vmatpush1.bf16.msra.mxu0 0
        %3094 = vmatprep.subr.bf16.mxu0 0
        %3095 = vmatpush1.bf16.msra.mxu0 0
        %3096 = vmatprep.subr.bf16.mxu0 0
        %3097 = vmatpush1.bf16.msra.mxu0 0
        %3098 = vmatprep.subr.bf16.mxu0 0
        %3099 = vmatpush1.bf16.msra.mxu0 0
        %3100 = vmatprep.subr.bf16.mxu0 0
        %3101 = vmatpush1.bf16.msra.mxu0 0
        %3102 = vmatprep.subr.bf16.mxu0 0
        %3103 = vmatpush1.bf16.msra.mxu0 0
        %3104 = vmatprep.subr.bf16.mxu0 0
        %3105 = vmatpush1.bf16.msra.mxu0 0
        %3106 = vmatprep.mubr.bf16.mxu0 0
        %3107 = vmatmul.mubr.bf16.gmra.mrb[0].mxu0 %v2915
        %v3108 = vpop.f32.mrb[0].mxu0
        %v3109 = vadd.f32 %v2996, %v3108
        %v3110 = vpop.f32.mrb[0].mxu0
        %v3111 = vadd.f32 %v2998, %v3110
        %v3112 = vpop.f32.mrb[0].mxu0
        %v3113 = vadd.f32 %v3000, %v3112
        %v3114 = vpop.f32.mrb[0].mxu0
        %v3115 = vadd.f32 %v3002, %v3114
        %3116 = vmatprep.mubr.bf16.mxu0 0
        %3117 = vmatmul.mubr.bf16.gmra.mrb[0].mxu0 %v2918
        %v3118 = vpop.f32.mrb[0].mxu0
        %v3119 = vadd.f32 %v3006, %v3118
        %v3120 = vpop.f32.mrb[0].mxu0
        %v3121 = vadd.f32 %v3008, %v3120
        %v3122 = vpop.f32.mrb[0].mxu0
        %v3123 = vadd.f32 %v3010, %v3122
        %v3124 = vpop.f32.mrb[0].mxu0
        %v3125 = vadd.f32 %v3012, %v3124
        %3126 = vmatprep.mubr.bf16.mxu0 0
        %3127 = vmatmul.mubr.bf16.gmra.mrb[0].mxu0 %v2921
        %v3128 = vpop.f32.mrb[0].mxu0
        %v3129 = vadd.f32 %v3016, %v3128
        %v3130 = vpop.f32.mrb[0].mxu0
        %v3131 = vadd.f32 %v3018, %v3130
        %v3132 = vpop.f32.mrb[0].mxu0
        %v3133 = vadd.f32 %v3020, %v3132
        %v3134 = vpop.f32.mrb[0].mxu0
        %v3135 = vadd.f32 %v3022, %v3134
        %3136 = vmatprep.mubr.bf16.mxu0 0
        %3137 = vmatmul.mubr.bf16.gmra.mrb[0].mxu0 %v2924
        %v3138 = vpop.f32.mrb[0].mxu0
        %v3139 = vadd.f32 %v3026, %v3138
        %v3140 = vpop.f32.mrb[0].mxu0
        %v3141 = vadd.f32 %v3028, %v3140
        %v3142 = vpop.f32.mrb[0].mxu0
        %v3143 = vadd.f32 %v3030, %v3142
        %v3144 = vpop.f32.mrb[0].mxu0
        %v3145 = vadd.f32 %v3032, %v3144
        %3146 = vmatprep.mubr.bf16.mxu0 0
        %3147 = vmatmul.mubr.bf16.gmra.mrb[0].mxu0 %v2927
        %v3148 = vpop.f32.mrb[0].mxu0
        %v3149 = vadd.f32 %v3036, %v3148
        %v3150 = vpop.f32.mrb[0].mxu0
        %v3151 = vadd.f32 %v3038, %v3150
        %v3152 = vpop.f32.mrb[0].mxu0
        %v3153 = vadd.f32 %v3040, %v3152
        %v3154 = vpop.f32.mrb[0].mxu0
        %v3155 = vadd.f32 %v3042, %v3154
        %3156 = vmatprep.mubr.bf16.mxu0 0
        %3157 = vmatmul.mubr.bf16.gmra.mrb[0].mxu0 %v2930
        %v3158 = vpop.f32.mrb[0].mxu0
        %v3159 = vadd.f32 %v3046, %v3158
        %v3160 = vpop.f32.mrb[0].mxu0
        %v3161 = vadd.f32 %v3048, %v3160
        %v3162 = vpop.f32.mrb[0].mxu0
        %v3163 = vadd.f32 %v3050, %v3162
        %v3164 = vpop.f32.mrb[0].mxu0
        %v3165 = vadd.f32 %v3052, %v3164
        %3166 = vmatprep.mubr.bf16.mxu0 0
        %3167 = vmatmul.mubr.bf16.gmra.mrb[0].mxu0 %v2933
        %v3168 = vpop.f32.mrb[0].mxu0
        %v3169 = vadd.f32 %v3056, %v3168
        %v3170 = vpop.f32.mrb[0].mxu0
        %v3171 = vadd.f32 %v3058, %v3170
        %v3172 = vpop.f32.mrb[0].mxu0
        %v3173 = vadd.f32 %v3060, %v3172
        %v3174 = vpop.f32.mrb[0].mxu0
        %v3175 = vadd.f32 %v3062, %v3174
        %3176 = vmatprep.mubr.bf16.mxu0 0
        %3177 = vmatmul.mubr.bf16.gmra.mrb[0].mxu0 %v2936
        %v3178 = vpop.f32.mrb[0].mxu0
        %v3179 = vadd.f32 %v3066, %v3178
        %v3180 = vpop.f32.mrb[0].mxu0
        %v3181 = vadd.f32 %v3068, %v3180
        %v3182 = vpop.f32.mrb[0].mxu0
        %v3183 = vadd.f32 %v3070, %v3182
        %v3184 = vpop.f32.mrb[0].mxu0
        %v3185 = vadd.f32 %v3072, %v3184
        %3186 = vdwg.mxu0
        %v3187 = vld [vmem:[%s8] sm:$0xff]
        %v3188 = vld [vmem:[%s8 + $0x8] sm:$0xff]
        %v3189 = vld [vmem:[%s8 + $0x10] sm:$0xff]
        %v3190 = vld [vmem:[%s8 + $0x18] sm:$0xff]
        %v3191 = vld [vmem:[%s8 + $0x20] sm:$0xff]
        %v3192 = vld [vmem:[%s8 + $0x28] sm:$0xff]
        %v3193 = vld [vmem:[%s8 + $0x30] sm:$0xff]
        %v3194 = vld [vmem:[%s8 + $0x38] sm:$0xff]
        %v3195 = vld [vmem:[%s8 + $0x40] sm:$0xff]
        %v3196 = vld [vmem:[%s8 + $0x48] sm:$0xff]
        %v3197 = vld [vmem:[%s8 + $0x50] sm:$0xff]
        %v3198 = vld [vmem:[%s8 + $0x58] sm:$0xff]
        %v3199 = vld [vmem:[%s8 + $0x60] sm:$0xff]
        %v3200 = vld [vmem:[%s8 + $0x68] sm:$0xff]
        %v3201 = vld [vmem:[%s8 + $0x70] sm:$0xff]
        %v3202 = vld [vmem:[%s8 + $0x78] sm:$0xff]
        %3204 = vset.pattern.permute.xlu0 0
        %3205 = vperm.xlu0 %3204, %v3187
        %v3206 = vpop.permute.xlu0 %3205
        %3209 = vset.pattern.permute.xlu0 0
        %3210 = vperm.xlu0 %3209, %v3188
        %v3211 = vpop.permute.xlu0 %3210
        %3214 = vset.pattern.permute.xlu0 0
        %3215 = vperm.xlu0 %3214, %v3189
        %v3216 = vpop.permute.xlu0 %3215
        %3219 = vset.pattern.permute.xlu0 0
        %3220 = vperm.xlu0 %3219, %v3190
        %v3221 = vpop.permute.xlu0 %3220
        %3224 = vset.pattern.permute.xlu0 0
        %3225 = vperm.xlu0 %3224, %v3191
        %v3226 = vpop.permute.xlu0 %3225
        %3229 = vset.pattern.permute.xlu0 0
        %3230 = vperm.xlu0 %3229, %v3192
        %v3231 = vpop.permute.xlu0 %3230
        %3234 = vset.pattern.permute.xlu0 0
        %3235 = vperm.xlu0 %3234, %v3193
        %v3236 = vpop.permute.xlu0 %3235
        %3239 = vset.pattern.permute.xlu0 0
        %3240 = vperm.xlu0 %3239, %v3194
        %v3241 = vpop.permute.xlu0 %3240
        %3244 = vset.pattern.permute.xlu0 0
        %3245 = vperm.xlu0 %3244, %v3195
        %v3246 = vpop.permute.xlu0 %3245
        %3249 = vset.pattern.permute.xlu0 0
        %3250 = vperm.xlu0 %3249, %v3196
        %v3251 = vpop.permute.xlu0 %3250
        %3254 = vset.pattern.permute.xlu0 0
        %3255 = vperm.xlu0 %3254, %v3197
        %v3256 = vpop.permute.xlu0 %3255
        %3259 = vset.pattern.permute.xlu0 0
        %3260 = vperm.xlu0 %3259, %v3198
        %v3261 = vpop.permute.xlu0 %3260
        %3264 = vset.pattern.permute.xlu0 0
        %3265 = vperm.xlu0 %3264, %v3199
        %v3266 = vpop.permute.xlu0 %3265
        %3269 = vset.pattern.permute.xlu0 0
        %3270 = vperm.xlu0 %3269, %v3200
        %v3271 = vpop.permute.xlu0 %3270
        %3274 = vset.pattern.permute.xlu0 0
        %3275 = vperm.xlu0 %3274, %v3201
        %v3276 = vpop.permute.xlu0 %3275
        %3279 = vset.pattern.permute.xlu0 0
        %3280 = vperm.xlu0 %3279, %v3202
        %v3281 = vpop.permute.xlu0 %3280
        %v3283 = vmul.f32 %v3109, %v3206
        %v3284 = vmul.f32 %v3111, %v3206
        %v3285 = vmul.f32 %v3113, %v3211
        %v3286 = vmul.f32 %v3115, %v3211
        %v3287 = vmul.f32 %v3119, %v3216
        %v3288 = vmul.f32 %v3121, %v3216
        %v3289 = vmul.f32 %v3123, %v3221
        %v3290 = vmul.f32 %v3125, %v3221
        %v3291 = vmul.f32 %v3129, %v3226
        %v3292 = vmul.f32 %v3131, %v3226
        %v3293 = vmul.f32 %v3133, %v3231
        %v3294 = vmul.f32 %v3135, %v3231
        %v3295 = vmul.f32 %v3139, %v3236
        %v3296 = vmul.f32 %v3141, %v3236
        %v3297 = vmul.f32 %v3143, %v3241
        %v3298 = vmul.f32 %v3145, %v3241
        %v3299 = vmul.f32 %v3149, %v3246
        %v3300 = vmul.f32 %v3151, %v3246
        %v3301 = vmul.f32 %v3153, %v3251
        %v3302 = vmul.f32 %v3155, %v3251
        %v3303 = vmul.f32 %v3159, %v3256
        %v3304 = vmul.f32 %v3161, %v3256
        %v3305 = vmul.f32 %v3163, %v3261
        %v3306 = vmul.f32 %v3165, %v3261
        %v3307 = vmul.f32 %v3169, %v3266
        %v3308 = vmul.f32 %v3171, %v3266
        %v3309 = vmul.f32 %v3173, %v3271
        %v3310 = vmul.f32 %v3175, %v3271
        %v3311 = vmul.f32 %v3179, %v3276
        %v3312 = vmul.f32 %v3181, %v3276
        %v3313 = vmul.f32 %v3183, %v3281
        %v3314 = vmul.f32 %v3185, %v3281
        %v3315 = vld [vmem:[%s9] sm:$0xff]
        %v3316 = vld [vmem:[%s9 + $0x8] sm:$0xff]
        %v3317 = vld [vmem:[%s9 + $0x10] sm:$0xff]
        %v3318 = vld [vmem:[%s9 + $0x18] sm:$0xff]
        %v3319 = vld [vmem:[%s9 + $0x20] sm:$0xff]
        %v3320 = vld [vmem:[%s9 + $0x28] sm:$0xff]
        %v3321 = vld [vmem:[%s9 + $0x30] sm:$0xff]
        %v3322 = vld [vmem:[%s9 + $0x38] sm:$0xff]
        %v3323 = vld [vmem:[%s9 + $0x40] sm:$0xff]
        %v3324 = vld [vmem:[%s9 + $0x48] sm:$0xff]
        %v3325 = vld [vmem:[%s9 + $0x50] sm:$0xff]
        %v3326 = vld [vmem:[%s9 + $0x58] sm:$0xff]
        %v3327 = vld [vmem:[%s9 + $0x60] sm:$0xff]
        %v3328 = vld [vmem:[%s9 + $0x68] sm:$0xff]
        %v3329 = vld [vmem:[%s9 + $0x70] sm:$0xff]
        %v3330 = vld [vmem:[%s9 + $0x78] sm:$0xff]
        %3332 = vset.pattern.permute.xlu0 0
        %3333 = vperm.xlu0 %3332, %v3315
        %v3334 = vpop.permute.xlu0 %3333
        %3337 = vset.pattern.permute.xlu0 0
        %3338 = vperm.xlu0 %3337, %v3316
        %v3339 = vpop.permute.xlu0 %3338
        %3342 = vset.pattern.permute.xlu0 0
        %3343 = vperm.xlu0 %3342, %v3317
        %v3344 = vpop.permute.xlu0 %3343
        %3347 = vset.pattern.permute.xlu0 0
        %3348 = vperm.xlu0 %3347, %v3318
        %v3349 = vpop.permute.xlu0 %3348
        %3352 = vset.pattern.permute.xlu0 0
        %3353 = vperm.xlu0 %3352, %v3319
        %v3354 = vpop.permute.xlu0 %3353
        %3357 = vset.pattern.permute.xlu0 0
        %3358 = vperm.xlu0 %3357, %v3320
        %v3359 = vpop.permute.xlu0 %3358
        %3362 = vset.pattern.permute.xlu0 0
        %3363 = vperm.xlu0 %3362, %v3321
        %v3364 = vpop.permute.xlu0 %3363
        %3367 = vset.pattern.permute.xlu0 0
        %3368 = vperm.xlu0 %3367, %v3322
        %v3369 = vpop.permute.xlu0 %3368
        %3372 = vset.pattern.permute.xlu0 0
        %3373 = vperm.xlu0 %3372, %v3323
        %v3374 = vpop.permute.xlu0 %3373
        %3377 = vset.pattern.permute.xlu0 0
        %3378 = vperm.xlu0 %3377, %v3324
        %v3379 = vpop.permute.xlu0 %3378
        %3382 = vset.pattern.permute.xlu0 0
        %3383 = vperm.xlu0 %3382, %v3325
        %v3384 = vpop.permute.xlu0 %3383
        %3387 = vset.pattern.permute.xlu0 0
        %3388 = vperm.xlu0 %3387, %v3326
        %v3389 = vpop.permute.xlu0 %3388
        %3392 = vset.pattern.permute.xlu0 0
        %3393 = vperm.xlu0 %3392, %v3327
        %v3394 = vpop.permute.xlu0 %3393
        %3397 = vset.pattern.permute.xlu0 0
        %3398 = vperm.xlu0 %3397, %v3328
        %v3399 = vpop.permute.xlu0 %3398
        %3402 = vset.pattern.permute.xlu0 0
        %3403 = vperm.xlu0 %3402, %v3329
        %v3404 = vpop.permute.xlu0 %3403
        %3407 = vset.pattern.permute.xlu0 0
        %3408 = vperm.xlu0 %3407, %v3330
        %v3409 = vpop.permute.xlu0 %3408
        %v3411 = vadd.f32 %v3283, %v3334
        %v3412 = vadd.f32 %v3284, %v3334
        %v3413 = vadd.f32 %v3285, %v3339
        %v3414 = vadd.f32 %v3286, %v3339
        %v3415 = vadd.f32 %v3287, %v3344
        %v3416 = vadd.f32 %v3288, %v3344
        %v3417 = vadd.f32 %v3289, %v3349
        %v3418 = vadd.f32 %v3290, %v3349
        %v3419 = vadd.f32 %v3291, %v3354
        %v3420 = vadd.f32 %v3292, %v3354
        %v3421 = vadd.f32 %v3293, %v3359
        %v3422 = vadd.f32 %v3294, %v3359
        %v3423 = vadd.f32 %v3295, %v3364
        %v3424 = vadd.f32 %v3296, %v3364
        %v3425 = vadd.f32 %v3297, %v3369
        %v3426 = vadd.f32 %v3298, %v3369
        %v3427 = vadd.f32 %v3299, %v3374
        %v3428 = vadd.f32 %v3300, %v3374
        %v3429 = vadd.f32 %v3301, %v3379
        %v3430 = vadd.f32 %v3302, %v3379
        %v3431 = vadd.f32 %v3303, %v3384
        %v3432 = vadd.f32 %v3304, %v3384
        %v3433 = vadd.f32 %v3305, %v3389
        %v3434 = vadd.f32 %v3306, %v3389
        %v3435 = vadd.f32 %v3307, %v3394
        %v3436 = vadd.f32 %v3308, %v3394
        %v3437 = vadd.f32 %v3309, %v3399
        %v3438 = vadd.f32 %v3310, %v3399
        %v3439 = vadd.f32 %v3311, %v3404
        %v3440 = vadd.f32 %v3312, %v3404
        %v3441 = vadd.f32 %v3313, %v3409
        %v3442 = vadd.f32 %v3314, %v3409
        %v3443 = vmax.f32 %v3411, 0.0
        %v3444 = vmax.f32 %v3412, 0.0
        %v3445 = vmax.f32 %v3413, 0.0
        %v3446 = vmax.f32 %v3414, 0.0
        %v3447 = vmax.f32 %v3415, 0.0
        %v3448 = vmax.f32 %v3416, 0.0
        %v3449 = vmax.f32 %v3417, 0.0
        %v3450 = vmax.f32 %v3418, 0.0
        %v3451 = vmax.f32 %v3419, 0.0
        %v3452 = vmax.f32 %v3420, 0.0
        %v3453 = vmax.f32 %v3421, 0.0
        %v3454 = vmax.f32 %v3422, 0.0
        %v3455 = vmax.f32 %v3423, 0.0
        %v3456 = vmax.f32 %v3424, 0.0
        %v3457 = vmax.f32 %v3425, 0.0
        %v3458 = vmax.f32 %v3426, 0.0
        %v3459 = vmax.f32 %v3427, 0.0
        %v3460 = vmax.f32 %v3428, 0.0
        %v3461 = vmax.f32 %v3429, 0.0
        %v3462 = vmax.f32 %v3430, 0.0
        %v3463 = vmax.f32 %v3431, 0.0
        %v3464 = vmax.f32 %v3432, 0.0
        %v3465 = vmax.f32 %v3433, 0.0
        %v3466 = vmax.f32 %v3434, 0.0
        %v3467 = vmax.f32 %v3435, 0.0
        %v3468 = vmax.f32 %v3436, 0.0
        %v3469 = vmax.f32 %v3437, 0.0
        %v3470 = vmax.f32 %v3438, 0.0
        %v3471 = vmax.f32 %v3439, 0.0
        %v3472 = vmax.f32 %v3440, 0.0
        %v3473 = vmax.f32 %v3441, 0.0
        %v3474 = vmax.f32 %v3442, 0.0
        %3475 = vrot.lane.b32.xlu0 %v3443, 127
        %v3476 = vpop.permute.xlu0 %3475
        %3477 = vrot.lane.b32.xlu0 %v3445, 127
        %v3478 = vpop.permute.xlu0 %3477
        %3479 = vrot.lane.b32.xlu0 %v3447, 127
        %v3480 = vpop.permute.xlu0 %3479
        %3481 = vrot.lane.b32.xlu0 %v3449, 127
        %v3482 = vpop.permute.xlu0 %3481
        %3483 = vrot.lane.b32.xlu0 %v3451, 127
        %v3484 = vpop.permute.xlu0 %3483
        %3485 = vrot.lane.b32.xlu0 %v3453, 127
        %v3486 = vpop.permute.xlu0 %3485
        %3487 = vrot.lane.b32.xlu0 %v3455, 127
        %v3488 = vpop.permute.xlu0 %3487
        %3489 = vrot.lane.b32.xlu0 %v3457, 127
        %v3490 = vpop.permute.xlu0 %3489
        %3491 = vrot.lane.b32.xlu0 %v3459, 127
        %v3492 = vpop.permute.xlu0 %3491
        %3493 = vrot.lane.b32.xlu0 %v3461, 127
        %v3494 = vpop.permute.xlu0 %3493
        %3495 = vrot.lane.b32.xlu0 %v3463, 127
        %v3496 = vpop.permute.xlu0 %3495
        %3497 = vrot.lane.b32.xlu0 %v3465, 127
        %v3498 = vpop.permute.xlu0 %3497
        %3499 = vrot.lane.b32.xlu0 %v3467, 127
        %v3500 = vpop.permute.xlu0 %3499
        %3501 = vrot.lane.b32.xlu0 %v3469, 127
        %v3502 = vpop.permute.xlu0 %3501
        %3503 = vrot.lane.b32.xlu0 %v3471, 127
        %v3504 = vpop.permute.xlu0 %3503
        %3505 = vrot.lane.b32.xlu0 %v3473, 127
        %v3506 = vpop.permute.xlu0 %3505
        %3507 = vrot.lane.b32.xlu0 %v3444, 127
        %v3508 = vpop.permute.xlu0 %3507
        %3509 = vrot.lane.b32.xlu0 %v3446, 127
        %v3510 = vpop.permute.xlu0 %3509
        %3511 = vrot.lane.b32.xlu0 %v3448, 127
        %v3512 = vpop.permute.xlu0 %3511
        %3513 = vrot.lane.b32.xlu0 %v3450, 127
        %v3514 = vpop.permute.xlu0 %3513
        %3515 = vrot.lane.b32.xlu0 %v3452, 127
        %v3516 = vpop.permute.xlu0 %3515
        %3517 = vrot.lane.b32.xlu0 %v3454, 127
        %v3518 = vpop.permute.xlu0 %3517
        %3519 = vrot.lane.b32.xlu0 %v3456, 127
        %v3520 = vpop.permute.xlu0 %3519
        %3521 = vrot.lane.b32.xlu0 %v3458, 127
        %v3522 = vpop.permute.xlu0 %3521
        %3523 = vrot.lane.b32.xlu0 %v3460, 127
        %v3524 = vpop.permute.xlu0 %3523
        %3525 = vrot.lane.b32.xlu0 %v3462, 127
        %v3526 = vpop.permute.xlu0 %3525
        %3527 = vrot.lane.b32.xlu0 %v3464, 127
        %v3528 = vpop.permute.xlu0 %3527
        %3529 = vrot.lane.b32.xlu0 %v3466, 127
        %v3530 = vpop.permute.xlu0 %3529
        %3531 = vrot.lane.b32.xlu0 %v3468, 127
        %v3532 = vpop.permute.xlu0 %3531
        %3533 = vrot.lane.b32.xlu0 %v3470, 127
        %v3534 = vpop.permute.xlu0 %3533
        %3535 = vrot.lane.b32.xlu0 %v3472, 127
        %v3536 = vpop.permute.xlu0 %3535
        %3537 = vrot.lane.b32.xlu0 %v3474, 127
        %v3538 = vpop.permute.xlu0 %3537
        %v3539 = vsel %vm732, %v3476, %v3508
        %v3540 = vsel %vm732, %v3478, %v3510
        %v3541 = vsel %vm732, %v3480, %v3512
        %v3542 = vsel %vm732, %v3482, %v3514
        %v3543 = vsel %vm732, %v3484, %v3516
        %v3544 = vsel %vm732, %v3486, %v3518
        %v3545 = vsel %vm732, %v3488, %v3520
        %v3546 = vsel %vm732, %v3490, %v3522
        %v3547 = vsel %vm732, %v3492, %v3524
        %v3548 = vsel %vm732, %v3494, %v3526
        %v3549 = vsel %vm732, %v3496, %v3528
        %v3550 = vsel %vm732, %v3498, %v3530
        %v3551 = vsel %vm732, %v3500, %v3532
        %v3552 = vsel %vm732, %v3502, %v3534
        %v3553 = vsel %vm732, %v3504, %v3536
        %v3554 = vsel %vm732, %v3506, %v3538
        %v3555 = vsel %vm732, %v3508, %v3476
        %v3556 = vsel %vm732, %v3510, %v3478
        %v3557 = vsel %vm732, %v3512, %v3480
        %v3558 = vsel %vm732, %v3514, %v3482
        %v3559 = vsel %vm732, %v3516, %v3484
        %v3560 = vsel %vm732, %v3518, %v3486
        %v3561 = vsel %vm732, %v3520, %v3488
        %v3562 = vsel %vm732, %v3522, %v3490
        %v3563 = vsel %vm732, %v3524, %v3492
        %v3564 = vsel %vm732, %v3526, %v3494
        %v3565 = vsel %vm732, %v3528, %v3496
        %v3566 = vsel %vm732, %v3530, %v3498
        %v3567 = vsel %vm732, %v3532, %v3500
        %v3568 = vsel %vm732, %v3534, %v3502
        %v3569 = vsel %vm732, %v3536, %v3504
        %v3570 = vsel %vm732, %v3538, %v3506
        %v3571 = vmax.f32 %v3443, %v3539
        %v3572 = vmax.f32 %v3444, %v3555
        %v3573 = vmax.f32 %v3445, %v3540
        %v3574 = vmax.f32 %v3446, %v3556
        %v3575 = vmax.f32 %v3447, %v3541
        %v3576 = vmax.f32 %v3448, %v3557
        %v3577 = vmax.f32 %v3449, %v3542
        %v3578 = vmax.f32 %v3450, %v3558
        %v3579 = vmax.f32 %v3451, %v3543
        %v3580 = vmax.f32 %v3452, %v3559
        %v3581 = vmax.f32 %v3453, %v3544
        %v3582 = vmax.f32 %v3454, %v3560
        %v3583 = vmax.f32 %v3455, %v3545
        %v3584 = vmax.f32 %v3456, %v3561
        %v3585 = vmax.f32 %v3457, %v3546
        %v3586 = vmax.f32 %v3458, %v3562
        %v3587 = vmax.f32 %v3459, %v3547
        %v3588 = vmax.f32 %v3460, %v3563
        %v3589 = vmax.f32 %v3461, %v3548
        %v3590 = vmax.f32 %v3462, %v3564
        %v3591 = vmax.f32 %v3463, %v3549
        %v3592 = vmax.f32 %v3464, %v3565
        %v3593 = vmax.f32 %v3465, %v3550
        %v3594 = vmax.f32 %v3466, %v3566
        %v3595 = vmax.f32 %v3467, %v3551
        %v3596 = vmax.f32 %v3468, %v3567
        %v3597 = vmax.f32 %v3469, %v3552
        %v3598 = vmax.f32 %v3470, %v3568
        %v3599 = vmax.f32 %v3471, %v3553
        %v3600 = vmax.f32 %v3472, %v3569
        %v3601 = vmax.f32 %v3473, %v3554
        %v3602 = vmax.f32 %v3474, %v3570
        %3603 = vrot.lane.b32.xlu0 %v3571, 126
        %v3604 = vpop.permute.xlu0 %3603
        %3605 = vrot.lane.b32.xlu0 %v3573, 126
        %v3606 = vpop.permute.xlu0 %3605
        %3607 = vrot.lane.b32.xlu0 %v3575, 126
        %v3608 = vpop.permute.xlu0 %3607
        %3609 = vrot.lane.b32.xlu0 %v3577, 126
        %v3610 = vpop.permute.xlu0 %3609
        %3611 = vrot.lane.b32.xlu0 %v3579, 126
        %v3612 = vpop.permute.xlu0 %3611
        %3613 = vrot.lane.b32.xlu0 %v3581, 126
        %v3614 = vpop.permute.xlu0 %3613
        %3615 = vrot.lane.b32.xlu0 %v3583, 126
        %v3616 = vpop.permute.xlu0 %3615
        %3617 = vrot.lane.b32.xlu0 %v3585, 126
        %v3618 = vpop.permute.xlu0 %3617
        %3619 = vrot.lane.b32.xlu0 %v3587, 126
        %v3620 = vpop.permute.xlu0 %3619
        %3621 = vrot.lane.b32.xlu0 %v3589, 126
        %v3622 = vpop.permute.xlu0 %3621
        %3623 = vrot.lane.b32.xlu0 %v3591, 126
        %v3624 = vpop.permute.xlu0 %3623
        %3625 = vrot.lane.b32.xlu0 %v3593, 126
        %v3626 = vpop.permute.xlu0 %3625
        %3627 = vrot.lane.b32.xlu0 %v3595, 126
        %v3628 = vpop.permute.xlu0 %3627
        %3629 = vrot.lane.b32.xlu0 %v3597, 126
        %v3630 = vpop.permute.xlu0 %3629
        %3631 = vrot.lane.b32.xlu0 %v3599, 126
        %v3632 = vpop.permute.xlu0 %3631
        %3633 = vrot.lane.b32.xlu0 %v3601, 126
        %v3634 = vpop.permute.xlu0 %3633
        %3635 = vrot.lane.b32.xlu0 %v3572, 126
        %v3636 = vpop.permute.xlu0 %3635
        %3637 = vrot.lane.b32.xlu0 %v3574, 126
        %v3638 = vpop.permute.xlu0 %3637
        %3639 = vrot.lane.b32.xlu0 %v3576, 126
        %v3640 = vpop.permute.xlu0 %3639
        %3641 = vrot.lane.b32.xlu0 %v3578, 126
        %v3642 = vpop.permute.xlu0 %3641
        %3643 = vrot.lane.b32.xlu0 %v3580, 126
        %v3644 = vpop.permute.xlu0 %3643
        %3645 = vrot.lane.b32.xlu0 %v3582, 126
        %v3646 = vpop.permute.xlu0 %3645
        %3647 = vrot.lane.b32.xlu0 %v3584, 126
        %v3648 = vpop.permute.xlu0 %3647
        %3649 = vrot.lane.b32.xlu0 %v3586, 126
        %v3650 = vpop.permute.xlu0 %3649
        %3651 = vrot.lane.b32.xlu0 %v3588, 126
        %v3652 = vpop.permute.xlu0 %3651
        %3653 = vrot.lane.b32.xlu0 %v3590, 126
        %v3654 = vpop.permute.xlu0 %3653
        %3655 = vrot.lane.b32.xlu0 %v3592, 126
        %v3656 = vpop.permute.xlu0 %3655
        %3657 = vrot.lane.b32.xlu0 %v3594, 126
        %v3658 = vpop.permute.xlu0 %3657
        %3659 = vrot.lane.b32.xlu0 %v3596, 126
        %v3660 = vpop.permute.xlu0 %3659
        %3661 = vrot.lane.b32.xlu0 %v3598, 126
        %v3662 = vpop.permute.xlu0 %3661
        %3663 = vrot.lane.b32.xlu0 %v3600, 126
        %v3664 = vpop.permute.xlu0 %3663
        %3665 = vrot.lane.b32.xlu0 %v3602, 126
        %v3666 = vpop.permute.xlu0 %3665
        %vm3667 = vcmp.lt.s32.totalorder %v531, 126
        %v3668 = vsel %vm3667, %v3604, %v3636
        %v3669 = vsel %vm3667, %v3606, %v3638
        %v3670 = vsel %vm3667, %v3608, %v3640
        %v3671 = vsel %vm3667, %v3610, %v3642
        %v3672 = vsel %vm3667, %v3612, %v3644
        %v3673 = vsel %vm3667, %v3614, %v3646
        %v3674 = vsel %vm3667, %v3616, %v3648
        %v3675 = vsel %vm3667, %v3618, %v3650
        %v3676 = vsel %vm3667, %v3620, %v3652
        %v3677 = vsel %vm3667, %v3622, %v3654
        %v3678 = vsel %vm3667, %v3624, %v3656
        %v3679 = vsel %vm3667, %v3626, %v3658
        %v3680 = vsel %vm3667, %v3628, %v3660
        %v3681 = vsel %vm3667, %v3630, %v3662
        %v3682 = vsel %vm3667, %v3632, %v3664
        %v3683 = vsel %vm3667, %v3634, %v3666
        %v3684 = vsel %vm3667, %v3636, %v3604
        %v3685 = vsel %vm3667, %v3638, %v3606
        %v3686 = vsel %vm3667, %v3640, %v3608
        %v3687 = vsel %vm3667, %v3642, %v3610
        %v3688 = vsel %vm3667, %v3644, %v3612
        %v3689 = vsel %vm3667, %v3646, %v3614
        %v3690 = vsel %vm3667, %v3648, %v3616
        %v3691 = vsel %vm3667, %v3650, %v3618
        %v3692 = vsel %vm3667, %v3652, %v3620
        %v3693 = vsel %vm3667, %v3654, %v3622
        %v3694 = vsel %vm3667, %v3656, %v3624
        %v3695 = vsel %vm3667, %v3658, %v3626
        %v3696 = vsel %vm3667, %v3660, %v3628
        %v3697 = vsel %vm3667, %v3662, %v3630
        %v3698 = vsel %vm3667, %v3664, %v3632
        %v3699 = vsel %vm3667, %v3666, %v3634
        %v3700 = vmax.f32 %v3571, %v3668
        %v3701 = vmax.f32 %v3572, %v3684
        %v3702 = vmax.f32 %v3573, %v3669
        %v3703 = vmax.f32 %v3574, %v3685
        %v3704 = vmax.f32 %v3575, %v3670
        %v3705 = vmax.f32 %v3576, %v3686
        %v3706 = vmax.f32 %v3577, %v3671
        %v3707 = vmax.f32 %v3578, %v3687
        %v3708 = vmax.f32 %v3579, %v3672
        %v3709 = vmax.f32 %v3580, %v3688
        %v3710 = vmax.f32 %v3581, %v3673
        %v3711 = vmax.f32 %v3582, %v3689
        %v3712 = vmax.f32 %v3583, %v3674
        %v3713 = vmax.f32 %v3584, %v3690
        %v3714 = vmax.f32 %v3585, %v3675
        %v3715 = vmax.f32 %v3586, %v3691
        %v3716 = vmax.f32 %v3587, %v3676
        %v3717 = vmax.f32 %v3588, %v3692
        %v3718 = vmax.f32 %v3589, %v3677
        %v3719 = vmax.f32 %v3590, %v3693
        %v3720 = vmax.f32 %v3591, %v3678
        %v3721 = vmax.f32 %v3592, %v3694
        %v3722 = vmax.f32 %v3593, %v3679
        %v3723 = vmax.f32 %v3594, %v3695
        %v3724 = vmax.f32 %v3595, %v3680
        %v3725 = vmax.f32 %v3596, %v3696
        %v3726 = vmax.f32 %v3597, %v3681
        %v3727 = vmax.f32 %v3598, %v3697
        %v3728 = vmax.f32 %v3599, %v3682
        %v3729 = vmax.f32 %v3600, %v3698
        %v3730 = vmax.f32 %v3601, %v3683
        %v3731 = vmax.f32 %v3602, %v3699
        %3732 = vrot.lane.b32.xlu0 %v3700, 124
        %v3733 = vpop.permute.xlu0 %3732
        %3734 = vrot.lane.b32.xlu0 %v3702, 124
        %v3735 = vpop.permute.xlu0 %3734
        %3736 = vrot.lane.b32.xlu0 %v3704, 124
        %v3737 = vpop.permute.xlu0 %3736
        %3738 = vrot.lane.b32.xlu0 %v3706, 124
        %v3739 = vpop.permute.xlu0 %3738
        %3740 = vrot.lane.b32.xlu0 %v3708, 124
        %v3741 = vpop.permute.xlu0 %3740
        %3742 = vrot.lane.b32.xlu0 %v3710, 124
        %v3743 = vpop.permute.xlu0 %3742
        %3744 = vrot.lane.b32.xlu0 %v3712, 124
        %v3745 = vpop.permute.xlu0 %3744
        %3746 = vrot.lane.b32.xlu0 %v3714, 124
        %v3747 = vpop.permute.xlu0 %3746
        %3748 = vrot.lane.b32.xlu0 %v3716, 124
        %v3749 = vpop.permute.xlu0 %3748
        %3750 = vrot.lane.b32.xlu0 %v3718, 124
        %v3751 = vpop.permute.xlu0 %3750
        %3752 = vrot.lane.b32.xlu0 %v3720, 124
        %v3753 = vpop.permute.xlu0 %3752
        %3754 = vrot.lane.b32.xlu0 %v3722, 124
        %v3755 = vpop.permute.xlu0 %3754
        %3756 = vrot.lane.b32.xlu0 %v3724, 124
        %v3757 = vpop.permute.xlu0 %3756
        %3758 = vrot.lane.b32.xlu0 %v3726, 124
        %v3759 = vpop.permute.xlu0 %3758
        %3760 = vrot.lane.b32.xlu0 %v3728, 124
        %v3761 = vpop.permute.xlu0 %3760
        %3762 = vrot.lane.b32.xlu0 %v3730, 124
        %v3763 = vpop.permute.xlu0 %3762
        %3764 = vrot.lane.b32.xlu0 %v3701, 124
        %v3765 = vpop.permute.xlu0 %3764
        %3766 = vrot.lane.b32.xlu0 %v3703, 124
        %v3767 = vpop.permute.xlu0 %3766
        %3768 = vrot.lane.b32.xlu0 %v3705, 124
        %v3769 = vpop.permute.xlu0 %3768
        %3770 = vrot.lane.b32.xlu0 %v3707, 124
        %v3771 = vpop.permute.xlu0 %3770
        %3772 = vrot.lane.b32.xlu0 %v3709, 124
        %v3773 = vpop.permute.xlu0 %3772
        %3774 = vrot.lane.b32.xlu0 %v3711, 124
        %v3775 = vpop.permute.xlu0 %3774
        %3776 = vrot.lane.b32.xlu0 %v3713, 124
        %v3777 = vpop.permute.xlu0 %3776
        %3778 = vrot.lane.b32.xlu0 %v3715, 124
        %v3779 = vpop.permute.xlu0 %3778
        %3780 = vrot.lane.b32.xlu0 %v3717, 124
        %v3781 = vpop.permute.xlu0 %3780
        %3782 = vrot.lane.b32.xlu0 %v3719, 124
        %v3783 = vpop.permute.xlu0 %3782
        %3784 = vrot.lane.b32.xlu0 %v3721, 124
        %v3785 = vpop.permute.xlu0 %3784
        %3786 = vrot.lane.b32.xlu0 %v3723, 124
        %v3787 = vpop.permute.xlu0 %3786
        %3788 = vrot.lane.b32.xlu0 %v3725, 124
        %v3789 = vpop.permute.xlu0 %3788
        %3790 = vrot.lane.b32.xlu0 %v3727, 124
        %v3791 = vpop.permute.xlu0 %3790
        %3792 = vrot.lane.b32.xlu0 %v3729, 124
        %v3793 = vpop.permute.xlu0 %3792
        %3794 = vrot.lane.b32.xlu0 %v3731, 124
        %v3795 = vpop.permute.xlu0 %3794
        %vm3796 = vcmp.lt.s32.totalorder %v531, 124
        %v3797 = vsel %vm3796, %v3733, %v3765
        %v3798 = vsel %vm3796, %v3735, %v3767
        %v3799 = vsel %vm3796, %v3737, %v3769
        %v3800 = vsel %vm3796, %v3739, %v3771
        %v3801 = vsel %vm3796, %v3741, %v3773
        %v3802 = vsel %vm3796, %v3743, %v3775
        %v3803 = vsel %vm3796, %v3745, %v3777
        %v3804 = vsel %vm3796, %v3747, %v3779
        %v3805 = vsel %vm3796, %v3749, %v3781
        %v3806 = vsel %vm3796, %v3751, %v3783
        %v3807 = vsel %vm3796, %v3753, %v3785
        %v3808 = vsel %vm3796, %v3755, %v3787
        %v3809 = vsel %vm3796, %v3757, %v3789
        %v3810 = vsel %vm3796, %v3759, %v3791
        %v3811 = vsel %vm3796, %v3761, %v3793
        %v3812 = vsel %vm3796, %v3763, %v3795
        %v3813 = vsel %vm3796, %v3765, %v3733
        %v3814 = vsel %vm3796, %v3767, %v3735
        %v3815 = vsel %vm3796, %v3769, %v3737
        %v3816 = vsel %vm3796, %v3771, %v3739
        %v3817 = vsel %vm3796, %v3773, %v3741
        %v3818 = vsel %vm3796, %v3775, %v3743
        %v3819 = vsel %vm3796, %v3777, %v3745
        %v3820 = vsel %vm3796, %v3779, %v3747
        %v3821 = vsel %vm3796, %v3781, %v3749
        %v3822 = vsel %vm3796, %v3783, %v3751
        %v3823 = vsel %vm3796, %v3785, %v3753
        %v3824 = vsel %vm3796, %v3787, %v3755
        %v3825 = vsel %vm3796, %v3789, %v3757
        %v3826 = vsel %vm3796, %v3791, %v3759
        %v3827 = vsel %vm3796, %v3793, %v3761
        %v3828 = vsel %vm3796, %v3795, %v3763
        %v3829 = vmax.f32 %v3700, %v3797
        %v3830 = vmax.f32 %v3701, %v3813
        %v3831 = vmax.f32 %v3702, %v3798
        %v3832 = vmax.f32 %v3703, %v3814
        %v3833 = vmax.f32 %v3704, %v3799
        %v3834 = vmax.f32 %v3705, %v3815
        %v3835 = vmax.f32 %v3706, %v3800
        %v3836 = vmax.f32 %v3707, %v3816
        %v3837 = vmax.f32 %v3708, %v3801
        %v3838 = vmax.f32 %v3709, %v3817
        %v3839 = vmax.f32 %v3710, %v3802
        %v3840 = vmax.f32 %v3711, %v3818
        %v3841 = vmax.f32 %v3712, %v3803
        %v3842 = vmax.f32 %v3713, %v3819
        %v3843 = vmax.f32 %v3714, %v3804
        %v3844 = vmax.f32 %v3715, %v3820
        %v3845 = vmax.f32 %v3716, %v3805
        %v3846 = vmax.f32 %v3717, %v3821
        %v3847 = vmax.f32 %v3718, %v3806
        %v3848 = vmax.f32 %v3719, %v3822
        %v3849 = vmax.f32 %v3720, %v3807
        %v3850 = vmax.f32 %v3721, %v3823
        %v3851 = vmax.f32 %v3722, %v3808
        %v3852 = vmax.f32 %v3723, %v3824
        %v3853 = vmax.f32 %v3724, %v3809
        %v3854 = vmax.f32 %v3725, %v3825
        %v3855 = vmax.f32 %v3726, %v3810
        %v3856 = vmax.f32 %v3727, %v3826
        %v3857 = vmax.f32 %v3728, %v3811
        %v3858 = vmax.f32 %v3729, %v3827
        %v3859 = vmax.f32 %v3730, %v3812
        %v3860 = vmax.f32 %v3731, %v3828
        %v3861 = vlaneseq
        %v3862 = vshrl.u32 %v3861, 7
        %v3863 = vadd.s32 %v3862, 8
        %v3864 = vadd.s32 %v3862, 16
        %v3865 = vadd.s32 %v3862, 24
        %v3866 = vadd.s32 %v3862, 32
        %v3867 = vadd.s32 %v3862, 40
        %v3868 = vadd.s32 %v3862, 48
        %v3869 = vadd.s32 %v3862, 56
        %v3870 = vadd.s32 %v3862, 64
        %v3871 = vadd.s32 %v3862, 72
        %v3872 = vadd.s32 %v3862, 80
        %v3873 = vadd.s32 %v3862, 88
        %v3874 = vadd.s32 %v3862, 96
        %v3875 = vadd.s32 %v3862, 104
        %v3876 = vadd.s32 %v3862, 112
        %v3877 = vadd.s32 %v3862, 120
        %v3878 = vadd.s32 %v3862, 128
        %v3879 = vadd.s32 %v3862, 136
        %v3880 = vadd.s32 %v3862, 144
        %v3881 = vadd.s32 %v3862, 152
        %v3882 = vadd.s32 %v3862, 160
        %v3883 = vadd.s32 %v3862, 168
        %v3884 = vadd.s32 %v3862, 176
        %v3885 = vadd.s32 %v3862, 184
        %v3886 = vadd.s32 %v3862, 192
        %v3887 = vadd.s32 %v3862, 200
        %v3888 = vadd.s32 %v3862, 208
        %v3889 = vadd.s32 %v3862, 216
        %v3890 = vadd.s32 %v3862, 224
        %v3891 = vadd.s32 %v3862, 232
        %v3892 = vadd.s32 %v3862, 240
        %v3893 = vadd.s32 %v3862, 248
        %v3894 = vpack.c.bf16 %v3831, %v3829
        %v3895 = vpack.c.bf16 %v3832, %v3830
        %v3896 = vpack.c.bf16 %v3835, %v3833
        %v3897 = vpack.c.bf16 %v3836, %v3834
        %v3898 = vpack.c.bf16 %v3839, %v3837
        %v3899 = vpack.c.bf16 %v3840, %v3838
        %v3900 = vpack.c.bf16 %v3843, %v3841
        %v3901 = vpack.c.bf16 %v3844, %v3842
        %v3902 = vpack.c.bf16 %v3847, %v3845
        %v3903 = vpack.c.bf16 %v3848, %v3846
        %v3904 = vpack.c.bf16 %v3851, %v3849
        %v3905 = vpack.c.bf16 %v3852, %v3850
        %v3906 = vpack.c.bf16 %v3855, %v3853
        %v3907 = vpack.c.bf16 %v3856, %v3854
        %v3908 = vpack.c.bf16 %v3859, %v3857
        %v3909 = vpack.c.bf16 %v3860, %v3858
        %v3910 = vmul.u32 %v531, 32
        %vm3911 = vcmp.eq.s32.totalorder %v3862, %v3910
        %vm3912 = vcmp.eq.s32.totalorder %v3863, %v3910
        %vm3913 = vcmp.eq.s32.totalorder %v3864, %v3910
        %vm3914 = vcmp.eq.s32.totalorder %v3865, %v3910
        %vm3915 = vcmp.eq.s32.totalorder %v3866, %v3910
        %vm3916 = vcmp.eq.s32.totalorder %v3867, %v3910
        %vm3917 = vcmp.eq.s32.totalorder %v3868, %v3910
        %vm3918 = vcmp.eq.s32.totalorder %v3869, %v3910
        %vm3919 = vcmp.eq.s32.totalorder %v3870, %v3910
        %vm3920 = vcmp.eq.s32.totalorder %v3871, %v3910
        %vm3921 = vcmp.eq.s32.totalorder %v3872, %v3910
        %vm3922 = vcmp.eq.s32.totalorder %v3873, %v3910
        %vm3923 = vcmp.eq.s32.totalorder %v3874, %v3910
        %vm3924 = vcmp.eq.s32.totalorder %v3875, %v3910
        %vm3925 = vcmp.eq.s32.totalorder %v3876, %v3910
        %vm3926 = vcmp.eq.s32.totalorder %v3877, %v3910
        %vm3927 = vcmp.eq.s32.totalorder %v3878, %v3910
        %vm3928 = vcmp.eq.s32.totalorder %v3879, %v3910
        %vm3929 = vcmp.eq.s32.totalorder %v3880, %v3910
        %vm3930 = vcmp.eq.s32.totalorder %v3881, %v3910
        %vm3931 = vcmp.eq.s32.totalorder %v3882, %v3910
        %vm3932 = vcmp.eq.s32.totalorder %v3883, %v3910
        %vm3933 = vcmp.eq.s32.totalorder %v3884, %v3910
        %vm3934 = vcmp.eq.s32.totalorder %v3885, %v3910
        %vm3935 = vcmp.eq.s32.totalorder %v3886, %v3910
        %vm3936 = vcmp.eq.s32.totalorder %v3887, %v3910
        %vm3937 = vcmp.eq.s32.totalorder %v3888, %v3910
        %vm3938 = vcmp.eq.s32.totalorder %v3889, %v3910
        %vm3939 = vcmp.eq.s32.totalorder %v3890, %v3910
        %vm3940 = vcmp.eq.s32.totalorder %v3891, %v3910
        %vm3941 = vcmp.eq.s32.totalorder %v3892, %v3910
        %vm3942 = vcmp.eq.s32.totalorder %v3893, %v3910
        %v3943 = vsel %vm3911, 1.0, 0.0
        %v3944 = vsel %vm3912, 1.0, 0.0
        %v3945 = vsel %vm3913, 1.0, 0.0
        %v3946 = vsel %vm3914, 1.0, 0.0
        %v3947 = vsel %vm3915, 1.0, 0.0
        %v3948 = vsel %vm3916, 1.0, 0.0
        %v3949 = vsel %vm3917, 1.0, 0.0
        %v3950 = vsel %vm3918, 1.0, 0.0
        %v3951 = vsel %vm3919, 1.0, 0.0
        %v3952 = vsel %vm3920, 1.0, 0.0
        %v3953 = vsel %vm3921, 1.0, 0.0
        %v3954 = vsel %vm3922, 1.0, 0.0
        %v3955 = vsel %vm3923, 1.0, 0.0
        %v3956 = vsel %vm3924, 1.0, 0.0
        %v3957 = vsel %vm3925, 1.0, 0.0
        %v3958 = vsel %vm3926, 1.0, 0.0
        %v3959 = vsel %vm3927, 1.0, 0.0
        %v3960 = vsel %vm3928, 1.0, 0.0
        %v3961 = vsel %vm3929, 1.0, 0.0
        %v3962 = vsel %vm3930, 1.0, 0.0
        %v3963 = vsel %vm3931, 1.0, 0.0
        %v3964 = vsel %vm3932, 1.0, 0.0
        %v3965 = vsel %vm3933, 1.0, 0.0
        %v3966 = vsel %vm3934, 1.0, 0.0
        %v3967 = vsel %vm3935, 1.0, 0.0
        %v3968 = vsel %vm3936, 1.0, 0.0
        %v3969 = vsel %vm3937, 1.0, 0.0
        %v3970 = vsel %vm3938, 1.0, 0.0
        %v3971 = vsel %vm3939, 1.0, 0.0
        %v3972 = vsel %vm3940, 1.0, 0.0
        %v3973 = vsel %vm3941, 1.0, 0.0
        %v3974 = vsel %vm3942, 1.0, 0.0
        %v3975 = vpack.c.bf16 %v3944, %v3943
        %v3976 = vpack.c.bf16 %v3946, %v3945
        %v3977 = vpack.c.bf16 %v3948, %v3947
        %v3978 = vpack.c.bf16 %v3950, %v3949
        %v3979 = vpack.c.bf16 %v3952, %v3951
        %v3980 = vpack.c.bf16 %v3954, %v3953
        %v3981 = vpack.c.bf16 %v3956, %v3955
        %v3982 = vpack.c.bf16 %v3958, %v3957
        %v3983 = vpack.c.bf16 %v3960, %v3959
        %v3984 = vpack.c.bf16 %v3962, %v3961
        %v3985 = vpack.c.bf16 %v3964, %v3963
        %v3986 = vpack.c.bf16 %v3966, %v3965
        %v3987 = vpack.c.bf16 %v3968, %v3967
        %v3988 = vpack.c.bf16 %v3970, %v3969
        %v3989 = vpack.c.bf16 %v3972, %v3971
        %v3990 = vpack.c.bf16 %v3974, %v3973
        %3991 = vmatprep.subr.bf16.mxu0 0
        %3992 = vmatpush1.bf16.msra.mxu0 %v3975
        %3993 = vmatprep.subr.bf16.mxu0 0
        %3994 = vmatpush1.bf16.msra.mxu0 %v3976
        %3995 = vmatprep.subr.bf16.mxu0 0
        %3996 = vmatpush1.bf16.msra.mxu0 %v3977
        %3997 = vmatprep.subr.bf16.mxu0 0
        %3998 = vmatpush1.bf16.msra.mxu0 %v3978
        %3999 = vmatprep.subr.bf16.mxu0 0
        %4000 = vmatpush1.bf16.msra.mxu0 %v3979
        %4001 = vmatprep.subr.bf16.mxu0 0
        %4002 = vmatpush1.bf16.msra.mxu0 %v3980
        %4003 = vmatprep.subr.bf16.mxu0 0
        %4004 = vmatpush1.bf16.msra.mxu0 %v3981
        %4005 = vmatprep.subr.bf16.mxu0 0
        %4006 = vmatpush1.bf16.msra.mxu0 %v3982
        %4007 = vmatprep.subr.bf16.mxu0 0
        %4008 = vmatpush1.bf16.msra.mxu0 %v3983
        %4009 = vmatprep.subr.bf16.mxu0 0
        %4010 = vmatpush1.bf16.msra.mxu0 %v3984
        %4011 = vmatprep.subr.bf16.mxu0 0
        %4012 = vmatpush1.bf16.msra.mxu0 %v3985
        %4013 = vmatprep.subr.bf16.mxu0 0
        %4014 = vmatpush1.bf16.msra.mxu0 %v3986
        %4015 = vmatprep.subr.bf16.mxu0 0
        %4016 = vmatpush1.bf16.msra.mxu0 %v3987
        %4017 = vmatprep.subr.bf16.mxu0 0
        %4018 = vmatpush1.bf16.msra.mxu0 %v3988
        %4019 = vmatprep.subr.bf16.mxu0 0
        %4020 = vmatpush1.bf16.msra.mxu0 %v3989
        %4021 = vmatprep.subr.bf16.mxu0 0
        %4022 = vmatpush1.bf16.msra.mxu0 %v3990
        %4023 = vmatprep.mubr.bf16.mxu0 %v3895
        %4024 = vmatmul.mubr.bf16.gmra.mrb[0].mxu0 %v3894
        %v4025 = vpop.f32.mrb[0].mxu0
        %v4026 = vadd.f32 0.0, %v4025
        %v4027 = vpop.f32.mrb[0].mxu0
        %v4028 = vpop.f32.mrb[0].mxu0
        %v4029 = vadd.f32 0.0, %v4028
        %v4030 = vpop.f32.mrb[0].mxu0
        %4031 = vmatprep.mubr.bf16.mxu0 %v3897
        %4032 = vmatmul.mubr.bf16.gmra.mrb[0].mxu0 %v3896
        %v4033 = vpop.f32.mrb[0].mxu0
        %v4034 = vadd.f32 0.0, %v4033
        %v4035 = vpop.f32.mrb[0].mxu0
        %v4036 = vpop.f32.mrb[0].mxu0
        %v4037 = vadd.f32 0.0, %v4036
        %v4038 = vpop.f32.mrb[0].mxu0
        %4039 = vmatprep.mubr.bf16.mxu0 %v3899
        %4040 = vmatmul.mubr.bf16.gmra.mrb[0].mxu0 %v3898
        %v4041 = vpop.f32.mrb[0].mxu0
        %v4042 = vadd.f32 0.0, %v4041
        %v4043 = vpop.f32.mrb[0].mxu0
        %v4044 = vpop.f32.mrb[0].mxu0
        %v4045 = vadd.f32 0.0, %v4044
        %v4046 = vpop.f32.mrb[0].mxu0
        %4047 = vmatprep.mubr.bf16.mxu0 %v3901
        %4048 = vmatmul.mubr.bf16.gmra.mrb[0].mxu0 %v3900
        %v4049 = vpop.f32.mrb[0].mxu0
        %v4050 = vadd.f32 0.0, %v4049
        %v4051 = vpop.f32.mrb[0].mxu0
        %v4052 = vpop.f32.mrb[0].mxu0
        %v4053 = vadd.f32 0.0, %v4052
        %v4054 = vpop.f32.mrb[0].mxu0
        %4055 = vmatprep.mubr.bf16.mxu0 %v3903
        %4056 = vmatmul.mubr.bf16.gmra.mrb[0].mxu0 %v3902
        %v4057 = vpop.f32.mrb[0].mxu0
        %v4058 = vadd.f32 0.0, %v4057
        %v4059 = vpop.f32.mrb[0].mxu0
        %v4060 = vpop.f32.mrb[0].mxu0
        %v4061 = vadd.f32 0.0, %v4060
        %v4062 = vpop.f32.mrb[0].mxu0
        %4063 = vmatprep.mubr.bf16.mxu0 %v3905
        %4064 = vmatmul.mubr.bf16.gmra.mrb[0].mxu0 %v3904
        %v4065 = vpop.f32.mrb[0].mxu0
        %v4066 = vadd.f32 0.0, %v4065
        %v4067 = vpop.f32.mrb[0].mxu0
        %v4068 = vpop.f32.mrb[0].mxu0
        %v4069 = vadd.f32 0.0, %v4068
        %v4070 = vpop.f32.mrb[0].mxu0
        %4071 = vmatprep.mubr.bf16.mxu0 %v3907
        %4072 = vmatmul.mubr.bf16.gmra.mrb[0].mxu0 %v3906
        %v4073 = vpop.f32.mrb[0].mxu0
        %v4074 = vadd.f32 0.0, %v4073
        %v4075 = vpop.f32.mrb[0].mxu0
        %v4076 = vpop.f32.mrb[0].mxu0
        %v4077 = vadd.f32 0.0, %v4076
        %v4078 = vpop.f32.mrb[0].mxu0
        %4079 = vmatprep.mubr.bf16.mxu0 %v3909
        %4080 = vmatmul.mubr.bf16.gmra.mrb[0].mxu0 %v3908
        %v4081 = vpop.f32.mrb[0].mxu0
        %v4082 = vadd.f32 0.0, %v4081
        %v4083 = vpop.f32.mrb[0].mxu0
        %v4084 = vpop.f32.mrb[0].mxu0
        %v4085 = vadd.f32 0.0, %v4084
        %v4086 = vpop.f32.mrb[0].mxu0
        %4087 = vdwg.mxu0
        %v4088 = vld [vmem:[%s10] sm:$0xf]
        %v4089 = vld [vmem:[%s10 + $0x4] sm:$0xf]
        %v4090 = vld [vmem:[%s10 + $0x8] sm:$0xf]
        %v4091 = vld [vmem:[%s10 + $0xc] sm:$0xf]
        %v4092 = vld [vmem:[%s10 + $0x10] sm:$0xf]
        %v4093 = vld [vmem:[%s10 + $0x14] sm:$0xf]
        %v4094 = vld [vmem:[%s10 + $0x18] sm:$0xf]
        %v4095 = vld [vmem:[%s10 + $0x1c] sm:$0xf]
        %v4096 = vld [vmem:[%s10 + $0x20] sm:$0xf]
        %v4097 = vld [vmem:[%s10 + $0x24] sm:$0xf]
        %v4098 = vld [vmem:[%s10 + $0x28] sm:$0xf]
        %v4099 = vld [vmem:[%s10 + $0x2c] sm:$0xf]
        %v4100 = vld [vmem:[%s10 + $0x30] sm:$0xf]
        %v4101 = vld [vmem:[%s10 + $0x34] sm:$0xf]
        %v4102 = vld [vmem:[%s10 + $0x38] sm:$0xf]
        %v4103 = vld [vmem:[%s10 + $0x3c] sm:$0xf]
        %v4104 = vpack.c.bf16 %v4029, %v4026
        %v4105 = vpack.c.bf16 %v4037, %v4034
        %v4106 = vpack.c.bf16 %v4045, %v4042
        %v4107 = vpack.c.bf16 %v4053, %v4050
        %v4108 = vpack.c.bf16 %v4061, %v4058
        %v4109 = vpack.c.bf16 %v4069, %v4066
        %v4110 = vpack.c.bf16 %v4077, %v4074
        %v4111 = vpack.c.bf16 %v4085, %v4082
        %v4112 = vadd.s32 %v3910, 8
        %vm4113 = vcmp.eq.s32.totalorder %v3862, %v4112
        %vm4114 = vcmp.eq.s32.totalorder %v3863, %v4112
        %vm4115 = vcmp.eq.s32.totalorder %v3864, %v4112
        %vm4116 = vcmp.eq.s32.totalorder %v3865, %v4112
        %vm4117 = vcmp.eq.s32.totalorder %v3866, %v4112
        %vm4118 = vcmp.eq.s32.totalorder %v3867, %v4112
        %vm4119 = vcmp.eq.s32.totalorder %v3868, %v4112
        %vm4120 = vcmp.eq.s32.totalorder %v3869, %v4112
        %vm4121 = vcmp.eq.s32.totalorder %v3870, %v4112
        %vm4122 = vcmp.eq.s32.totalorder %v3871, %v4112
        %vm4123 = vcmp.eq.s32.totalorder %v3872, %v4112
        %vm4124 = vcmp.eq.s32.totalorder %v3873, %v4112
        %vm4125 = vcmp.eq.s32.totalorder %v3874, %v4112
        %vm4126 = vcmp.eq.s32.totalorder %v3875, %v4112
        %vm4127 = vcmp.eq.s32.totalorder %v3876, %v4112
        %vm4128 = vcmp.eq.s32.totalorder %v3877, %v4112
        %vm4129 = vcmp.eq.s32.totalorder %v3878, %v4112
        %vm4130 = vcmp.eq.s32.totalorder %v3879, %v4112
        %vm4131 = vcmp.eq.s32.totalorder %v3880, %v4112
        %vm4132 = vcmp.eq.s32.totalorder %v3881, %v4112
        %vm4133 = vcmp.eq.s32.totalorder %v3882, %v4112
        %vm4134 = vcmp.eq.s32.totalorder %v3883, %v4112
        %vm4135 = vcmp.eq.s32.totalorder %v3884, %v4112
        %vm4136 = vcmp.eq.s32.totalorder %v3885, %v4112
        %vm4137 = vcmp.eq.s32.totalorder %v3886, %v4112
        %vm4138 = vcmp.eq.s32.totalorder %v3887, %v4112
        %vm4139 = vcmp.eq.s32.totalorder %v3888, %v4112
        %vm4140 = vcmp.eq.s32.totalorder %v3889, %v4112
        %vm4141 = vcmp.eq.s32.totalorder %v3890, %v4112
        %vm4142 = vcmp.eq.s32.totalorder %v3891, %v4112
        %vm4143 = vcmp.eq.s32.totalorder %v3892, %v4112
        %vm4144 = vcmp.eq.s32.totalorder %v3893, %v4112
        %v4145 = vsel %vm4113, 1.0, 0.0
        %v4146 = vsel %vm4114, 1.0, 0.0
        %v4147 = vsel %vm4115, 1.0, 0.0
        %v4148 = vsel %vm4116, 1.0, 0.0
        %v4149 = vsel %vm4117, 1.0, 0.0
        %v4150 = vsel %vm4118, 1.0, 0.0
        %v4151 = vsel %vm4119, 1.0, 0.0
        %v4152 = vsel %vm4120, 1.0, 0.0
        %v4153 = vsel %vm4121, 1.0, 0.0
        %v4154 = vsel %vm4122, 1.0, 0.0
        %v4155 = vsel %vm4123, 1.0, 0.0
        %v4156 = vsel %vm4124, 1.0, 0.0
        %v4157 = vsel %vm4125, 1.0, 0.0
        %v4158 = vsel %vm4126, 1.0, 0.0
        %v4159 = vsel %vm4127, 1.0, 0.0
        %v4160 = vsel %vm4128, 1.0, 0.0
        %v4161 = vsel %vm4129, 1.0, 0.0
        %v4162 = vsel %vm4130, 1.0, 0.0
        %v4163 = vsel %vm4131, 1.0, 0.0
        %v4164 = vsel %vm4132, 1.0, 0.0
        %v4165 = vsel %vm4133, 1.0, 0.0
        %v4166 = vsel %vm4134, 1.0, 0.0
        %v4167 = vsel %vm4135, 1.0, 0.0
        %v4168 = vsel %vm4136, 1.0, 0.0
        %v4169 = vsel %vm4137, 1.0, 0.0
        %v4170 = vsel %vm4138, 1.0, 0.0
        %v4171 = vsel %vm4139, 1.0, 0.0
        %v4172 = vsel %vm4140, 1.0, 0.0
        %v4173 = vsel %vm4141, 1.0, 0.0
        %v4174 = vsel %vm4142, 1.0, 0.0
        %v4175 = vsel %vm4143, 1.0, 0.0
        %v4176 = vsel %vm4144, 1.0, 0.0
        %v4177 = vpack.c.bf16 %v4146, %v4145
        %v4178 = vpack.c.bf16 %v4148, %v4147
        %v4179 = vpack.c.bf16 %v4150, %v4149
        %v4180 = vpack.c.bf16 %v4152, %v4151
        %v4181 = vpack.c.bf16 %v4154, %v4153
        %v4182 = vpack.c.bf16 %v4156, %v4155
        %v4183 = vpack.c.bf16 %v4158, %v4157
        %v4184 = vpack.c.bf16 %v4160, %v4159
        %v4185 = vpack.c.bf16 %v4162, %v4161
        %v4186 = vpack.c.bf16 %v4164, %v4163
        %v4187 = vpack.c.bf16 %v4166, %v4165
        %v4188 = vpack.c.bf16 %v4168, %v4167
        %v4189 = vpack.c.bf16 %v4170, %v4169
        %v4190 = vpack.c.bf16 %v4172, %v4171
        %v4191 = vpack.c.bf16 %v4174, %v4173
        %v4192 = vpack.c.bf16 %v4176, %v4175
        %4193 = vmatprep.subr.bf16.mxu0 0
        %4194 = vmatpush1.bf16.msra.mxu0 %v4177
        %4195 = vmatprep.subr.bf16.mxu0 0
        %4196 = vmatpush1.bf16.msra.mxu0 %v4178
        %4197 = vmatprep.subr.bf16.mxu0 0
        %4198 = vmatpush1.bf16.msra.mxu0 %v4179
        %4199 = vmatprep.subr.bf16.mxu0 0
        %4200 = vmatpush1.bf16.msra.mxu0 %v4180
        %4201 = vmatprep.subr.bf16.mxu0 0
        %4202 = vmatpush1.bf16.msra.mxu0 %v4181
        %4203 = vmatprep.subr.bf16.mxu0 0
        %4204 = vmatpush1.bf16.msra.mxu0 %v4182
        %4205 = vmatprep.subr.bf16.mxu0 0
        %4206 = vmatpush1.bf16.msra.mxu0 %v4183
        %4207 = vmatprep.subr.bf16.mxu0 0
        %4208 = vmatpush1.bf16.msra.mxu0 %v4184
        %4209 = vmatprep.subr.bf16.mxu0 0
        %4210 = vmatpush1.bf16.msra.mxu0 %v4185
        %4211 = vmatprep.subr.bf16.mxu0 0
        %4212 = vmatpush1.bf16.msra.mxu0 %v4186
        %4213 = vmatprep.subr.bf16.mxu0 0
        %4214 = vmatpush1.bf16.msra.mxu0 %v4187
        %4215 = vmatprep.subr.bf16.mxu0 0
        %4216 = vmatpush1.bf16.msra.mxu0 %v4188
        %4217 = vmatprep.subr.bf16.mxu0 0
        %4218 = vmatpush1.bf16.msra.mxu0 %v4189
        %4219 = vmatprep.subr.bf16.mxu0 0
        %4220 = vmatpush1.bf16.msra.mxu0 %v4190
        %4221 = vmatprep.subr.bf16.mxu0 0
        %4222 = vmatpush1.bf16.msra.mxu0 %v4191
        %4223 = vmatprep.subr.bf16.mxu0 0
        %4224 = vmatpush1.bf16.msra.mxu0 %v4192
        %4225 = vmatprep.mubr.bf16.mxu0 %v3895
        %4226 = vmatmul.mubr.bf16.gmra.mrb[0].mxu0 %v3894
        %v4227 = vpop.f32.mrb[0].mxu0
        %v4228 = vadd.f32 0.0, %v4227
        %v4229 = vpop.f32.mrb[0].mxu0
        %v4230 = vpop.f32.mrb[0].mxu0
        %v4231 = vadd.f32 0.0, %v4230
        %v4232 = vpop.f32.mrb[0].mxu0
        %4233 = vmatprep.mubr.bf16.mxu0 %v3897
        %4234 = vmatmul.mubr.bf16.gmra.mrb[0].mxu0 %v3896
        %v4235 = vpop.f32.mrb[0].mxu0
        %v4236 = vadd.f32 0.0, %v4235
        %v4237 = vpop.f32.mrb[0].mxu0
        %v4238 = vpop.f32.mrb[0].mxu0
        %v4239 = vadd.f32 0.0, %v4238
        %v4240 = vpop.f32.mrb[0].mxu0
        %4241 = vmatprep.mubr.bf16.mxu0 %v3899
        %4242 = vmatmul.mubr.bf16.gmra.mrb[0].mxu0 %v3898
        %v4243 = vpop.f32.mrb[0].mxu0
        %v4244 = vadd.f32 0.0, %v4243
        %v4245 = vpop.f32.mrb[0].mxu0
        %v4246 = vpop.f32.mrb[0].mxu0
        %v4247 = vadd.f32 0.0, %v4246
        %v4248 = vpop.f32.mrb[0].mxu0
        %4249 = vmatprep.mubr.bf16.mxu0 %v3901
        %4250 = vmatmul.mubr.bf16.gmra.mrb[0].mxu0 %v3900
        %v4251 = vpop.f32.mrb[0].mxu0
        %v4252 = vadd.f32 0.0, %v4251
        %v4253 = vpop.f32.mrb[0].mxu0
        %v4254 = vpop.f32.mrb[0].mxu0
        %v4255 = vadd.f32 0.0, %v4254
        %v4256 = vpop.f32.mrb[0].mxu0
        %4257 = vmatprep.mubr.bf16.mxu0 %v3903
        %4258 = vmatmul.mubr.bf16.gmra.mrb[0].mxu0 %v3902
        %v4259 = vpop.f32.mrb[0].mxu0
        %v4260 = vadd.f32 0.0, %v4259
        %v4261 = vpop.f32.mrb[0].mxu0
        %v4262 = vpop.f32.mrb[0].mxu0
        %v4263 = vadd.f32 0.0, %v4262
        %v4264 = vpop.f32.mrb[0].mxu0
        %4265 = vmatprep.mubr.bf16.mxu0 %v3905
        %4266 = vmatmul.mubr.bf16.gmra.mrb[0].mxu0 %v3904
        %v4267 = vpop.f32.mrb[0].mxu0
        %v4268 = vadd.f32 0.0, %v4267
        %v4269 = vpop.f32.mrb[0].mxu0
        %v4270 = vpop.f32.mrb[0].mxu0
        %v4271 = vadd.f32 0.0, %v4270
        %v4272 = vpop.f32.mrb[0].mxu0
        %4273 = vmatprep.mubr.bf16.mxu0 %v3907
        %4274 = vmatmul.mubr.bf16.gmra.mrb[0].mxu0 %v3906
        %v4275 = vpop.f32.mrb[0].mxu0
        %v4276 = vadd.f32 0.0, %v4275
        %v4277 = vpop.f32.mrb[0].mxu0
        %v4278 = vpop.f32.mrb[0].mxu0
        %v4279 = vadd.f32 0.0, %v4278
        %v4280 = vpop.f32.mrb[0].mxu0
        %4281 = vmatprep.mubr.bf16.mxu0 %v3909
        %4282 = vmatmul.mubr.bf16.gmra.mrb[0].mxu0 %v3908
        %v4283 = vpop.f32.mrb[0].mxu0
        %v4284 = vadd.f32 0.0, %v4283
        %v4285 = vpop.f32.mrb[0].mxu0
        %v4286 = vpop.f32.mrb[0].mxu0
        %v4287 = vadd.f32 0.0, %v4286
        %v4288 = vpop.f32.mrb[0].mxu0
        %4289 = vdwg.mxu0
        %s4290 = scalar_lea.vmem %s10, 64
        %v4291 = vld [vmem:[%s4290] sm:$0xf]
        %v4292 = vld [vmem:[%s4290 + $0x4] sm:$0xf]
        %v4293 = vld [vmem:[%s4290 + $0x8] sm:$0xf]
        %v4294 = vld [vmem:[%s4290 + $0xc] sm:$0xf]
        %v4295 = vld [vmem:[%s4290 + $0x10] sm:$0xf]
        %v4296 = vld [vmem:[%s4290 + $0x14] sm:$0xf]
        %v4297 = vld [vmem:[%s4290 + $0x18] sm:$0xf]
        %v4298 = vld [vmem:[%s4290 + $0x1c] sm:$0xf]
        %v4299 = vld [vmem:[%s4290 + $0x20] sm:$0xf]
        %v4300 = vld [vmem:[%s4290 + $0x24] sm:$0xf]
        %v4301 = vld [vmem:[%s4290 + $0x28] sm:$0xf]
        %v4302 = vld [vmem:[%s4290 + $0x2c] sm:$0xf]
        %v4303 = vld [vmem:[%s4290 + $0x30] sm:$0xf]
        %v4304 = vld [vmem:[%s4290 + $0x34] sm:$0xf]
        %v4305 = vld [vmem:[%s4290 + $0x38] sm:$0xf]
        %v4306 = vld [vmem:[%s4290 + $0x3c] sm:$0xf]
        %v4307 = vpack.c.bf16 %v4231, %v4228
        %v4308 = vpack.c.bf16 %v4239, %v4236
        %v4309 = vpack.c.bf16 %v4247, %v4244
        %v4310 = vpack.c.bf16 %v4255, %v4252
        %v4311 = vpack.c.bf16 %v4263, %v4260
        %v4312 = vpack.c.bf16 %v4271, %v4268
        %v4313 = vpack.c.bf16 %v4279, %v4276
        %v4314 = vpack.c.bf16 %v4287, %v4284
        %v4331 = vunpack.c.l.b16 %v4291
        %v4332 = vunpack.c.l.b16 %v4292
        %v4333 = vunpack.c.l.b16 %v4293
        %v4334 = vunpack.c.l.b16 %v4294
        %v4335 = vunpack.c.l.b16 %v4295
        %v4336 = vunpack.c.l.b16 %v4296
        %v4337 = vunpack.c.l.b16 %v4297
        %v4338 = vunpack.c.l.b16 %v4298
        %v4339 = vunpack.c.l.b16 %v4299
        %v4340 = vunpack.c.l.b16 %v4300
        %v4341 = vunpack.c.l.b16 %v4301
        %v4342 = vunpack.c.l.b16 %v4302
        %v4343 = vunpack.c.l.b16 %v4303
        %v4344 = vunpack.c.l.b16 %v4304
        %v4345 = vunpack.c.l.b16 %v4305
        %v4346 = vunpack.c.l.b16 %v4306
        %v4347 = vpack.c.b16 %v4332, %v4331
        %v4348 = vpack.c.b16 %v4334, %v4333
        %v4349 = vpack.c.b16 %v4336, %v4335
        %v4350 = vpack.c.b16 %v4338, %v4337
        %v4351 = vpack.c.b16 %v4340, %v4339
        %v4352 = vpack.c.b16 %v4342, %v4341
        %v4353 = vpack.c.b16 %v4344, %v4343
        %v4354 = vpack.c.b16 %v4346, %v4345
        %4363 = vmatprep.subr.bf16.mxu0 0
        %4364 = vmatpush1.bf16.msra.mxu0 %v4307
        %4365 = vmatprep.subr.bf16.mxu0 0
        %4366 = vmatpush1.bf16.msra.mxu0 %v4308
        %4367 = vmatprep.subr.bf16.mxu0 0
        %4368 = vmatpush1.bf16.msra.mxu0 %v4309
        %4369 = vmatprep.subr.bf16.mxu0 0
        %4370 = vmatpush1.bf16.msra.mxu0 %v4310
        %4371 = vmatprep.subr.bf16.mxu0 0
        %4372 = vmatpush1.bf16.msra.mxu0 %v4311
        %4373 = vmatprep.subr.bf16.mxu0 0
        %4374 = vmatpush1.bf16.msra.mxu0 %v4312
        %4375 = vmatprep.subr.bf16.mxu0 0
        %4376 = vmatpush1.bf16.msra.mxu0 %v4313
        %4377 = vmatprep.subr.bf16.mxu0 0
        %4378 = vmatpush1.bf16.msra.mxu0 %v4314
        %4379 = vmatprep.subr.bf16.mxu0 0
        %4380 = vmatpush1.bf16.msra.mxu0 0
        %4381 = vmatprep.subr.bf16.mxu0 0
        %4382 = vmatpush1.bf16.msra.mxu0 0
        %4383 = vmatprep.subr.bf16.mxu0 0
        %4384 = vmatpush1.bf16.msra.mxu0 0
        %4385 = vmatprep.subr.bf16.mxu0 0
        %4386 = vmatpush1.bf16.msra.mxu0 0
        %4387 = vmatprep.subr.bf16.mxu0 0
        %4388 = vmatpush1.bf16.msra.mxu0 0
        %4389 = vmatprep.subr.bf16.mxu0 0
        %4390 = vmatpush1.bf16.msra.mxu0 0
        %4391 = vmatprep.subr.bf16.mxu0 0
        %4392 = vmatpush1.bf16.msra.mxu0 0
        %4393 = vmatprep.subr.bf16.mxu0 0
        %4394 = vmatpush1.bf16.msra.mxu0 0
        %4395 = vmatprep.mubr.bf16.mxu0 0
        %4396 = vmatmul.mubr.bf16.gmra.mrb[0].mxu0 %v4347
        %v4397 = vpop.f32.mrb[0].mxu0
        %v4398 = vadd.f32 0.0, %v4397
        %v4399 = vpop.f32.mrb[0].mxu0
        %v4400 = vpop.f32.mrb[0].mxu0
        %v4401 = vadd.f32 0.0, %v4400
        %v4402 = vpop.f32.mrb[0].mxu0
        %4403 = vmatprep.mubr.bf16.mxu0 0
        %4404 = vmatmul.mubr.bf16.gmra.mrb[0].mxu0 %v4348
        %v4405 = vpop.f32.mrb[0].mxu0
        %v4406 = vadd.f32 0.0, %v4405
        %v4407 = vpop.f32.mrb[0].mxu0
        %v4408 = vpop.f32.mrb[0].mxu0
        %v4409 = vadd.f32 0.0, %v4408
        %v4410 = vpop.f32.mrb[0].mxu0
        %4411 = vmatprep.mubr.bf16.mxu0 0
        %4412 = vmatmul.mubr.bf16.gmra.mrb[0].mxu0 %v4349
        %v4413 = vpop.f32.mrb[0].mxu0
        %v4414 = vadd.f32 0.0, %v4413
        %v4415 = vpop.f32.mrb[0].mxu0
        %v4416 = vpop.f32.mrb[0].mxu0
        %v4417 = vadd.f32 0.0, %v4416
        %v4418 = vpop.f32.mrb[0].mxu0
        %4419 = vmatprep.mubr.bf16.mxu0 0
        %4420 = vmatmul.mubr.bf16.gmra.mrb[0].mxu0 %v4350
        %v4421 = vpop.f32.mrb[0].mxu0
        %v4422 = vadd.f32 0.0, %v4421
        %v4423 = vpop.f32.mrb[0].mxu0
        %v4424 = vpop.f32.mrb[0].mxu0
        %v4425 = vadd.f32 0.0, %v4424
        %v4426 = vpop.f32.mrb[0].mxu0
        %4427 = vmatprep.mubr.bf16.mxu0 0
        %4428 = vmatmul.mubr.bf16.gmra.mrb[0].mxu0 %v4351
        %v4429 = vpop.f32.mrb[0].mxu0
        %v4430 = vadd.f32 0.0, %v4429
        %v4431 = vpop.f32.mrb[0].mxu0
        %v4432 = vpop.f32.mrb[0].mxu0
        %v4433 = vadd.f32 0.0, %v4432
        %v4434 = vpop.f32.mrb[0].mxu0
        %4435 = vmatprep.mubr.bf16.mxu0 0
        %4436 = vmatmul.mubr.bf16.gmra.mrb[0].mxu0 %v4352
        %v4437 = vpop.f32.mrb[0].mxu0
        %v4438 = vadd.f32 0.0, %v4437
        %v4439 = vpop.f32.mrb[0].mxu0
        %v4440 = vpop.f32.mrb[0].mxu0
        %v4441 = vadd.f32 0.0, %v4440
        %v4442 = vpop.f32.mrb[0].mxu0
        %4443 = vmatprep.mubr.bf16.mxu0 0
        %4444 = vmatmul.mubr.bf16.gmra.mrb[0].mxu0 %v4353
        %v4445 = vpop.f32.mrb[0].mxu0
        %v4446 = vadd.f32 0.0, %v4445
        %v4447 = vpop.f32.mrb[0].mxu0
        %v4448 = vpop.f32.mrb[0].mxu0
        %v4449 = vadd.f32 0.0, %v4448
        %v4450 = vpop.f32.mrb[0].mxu0
        %4451 = vmatprep.mubr.bf16.mxu0 0
        %4452 = vmatmul.mubr.bf16.gmra.mrb[0].mxu0 %v4354
        %v4453 = vpop.f32.mrb[0].mxu0
        %v4454 = vadd.f32 0.0, %v4453
        %v4455 = vpop.f32.mrb[0].mxu0
        %v4456 = vpop.f32.mrb[0].mxu0
        %v4457 = vadd.f32 0.0, %v4456
        %v4458 = vpop.f32.mrb[0].mxu0
        %4459 = vdwg.mxu0
        %v4476 = vunpack.c.l.b16 %v4088
        %v4477 = vunpack.c.l.b16 %v4089
        %v4478 = vunpack.c.l.b16 %v4090
        %v4479 = vunpack.c.l.b16 %v4091
        %v4480 = vunpack.c.l.b16 %v4092
        %v4481 = vunpack.c.l.b16 %v4093
        %v4482 = vunpack.c.l.b16 %v4094
        %v4483 = vunpack.c.l.b16 %v4095
        %v4484 = vunpack.c.l.b16 %v4096
        %v4485 = vunpack.c.l.b16 %v4097
        %v4486 = vunpack.c.l.b16 %v4098
        %v4487 = vunpack.c.l.b16 %v4099
        %v4488 = vunpack.c.l.b16 %v4100
        %v4489 = vunpack.c.l.b16 %v4101
        %v4490 = vunpack.c.l.b16 %v4102
        %v4491 = vunpack.c.l.b16 %v4103
        %v4492 = vpack.c.b16 %v4477, %v4476
        %v4493 = vpack.c.b16 %v4479, %v4478
        %v4494 = vpack.c.b16 %v4481, %v4480
        %v4495 = vpack.c.b16 %v4483, %v4482
        %v4496 = vpack.c.b16 %v4485, %v4484
        %v4497 = vpack.c.b16 %v4487, %v4486
        %v4498 = vpack.c.b16 %v4489, %v4488
        %v4499 = vpack.c.b16 %v4491, %v4490
        %4508 = vmatprep.subr.bf16.mxu0 0
        %4509 = vmatpush1.bf16.msra.mxu0 %v4104
        %4510 = vmatprep.subr.bf16.mxu0 0
        %4511 = vmatpush1.bf16.msra.mxu0 %v4105
        %4512 = vmatprep.subr.bf16.mxu0 0
        %4513 = vmatpush1.bf16.msra.mxu0 %v4106
        %4514 = vmatprep.subr.bf16.mxu0 0
        %4515 = vmatpush1.bf16.msra.mxu0 %v4107
        %4516 = vmatprep.subr.bf16.mxu0 0
        %4517 = vmatpush1.bf16.msra.mxu0 %v4108
        %4518 = vmatprep.subr.bf16.mxu0 0
        %4519 = vmatpush1.bf16.msra.mxu0 %v4109
        %4520 = vmatprep.subr.bf16.mxu0 0
        %4521 = vmatpush1.bf16.msra.mxu0 %v4110
        %4522 = vmatprep.subr.bf16.mxu0 0
        %4523 = vmatpush1.bf16.msra.mxu0 %v4111
        %4524 = vmatprep.subr.bf16.mxu0 0
        %4525 = vmatpush1.bf16.msra.mxu0 0
        %4526 = vmatprep.subr.bf16.mxu0 0
        %4527 = vmatpush1.bf16.msra.mxu0 0
        %4528 = vmatprep.subr.bf16.mxu0 0
        %4529 = vmatpush1.bf16.msra.mxu0 0
        %4530 = vmatprep.subr.bf16.mxu0 0
        %4531 = vmatpush1.bf16.msra.mxu0 0
        %4532 = vmatprep.subr.bf16.mxu0 0
        %4533 = vmatpush1.bf16.msra.mxu0 0
        %4534 = vmatprep.subr.bf16.mxu0 0
        %4535 = vmatpush1.bf16.msra.mxu0 0
        %4536 = vmatprep.subr.bf16.mxu0 0
        %4537 = vmatpush1.bf16.msra.mxu0 0
        %4538 = vmatprep.subr.bf16.mxu0 0
        %4539 = vmatpush1.bf16.msra.mxu0 0
        %4540 = vmatprep.mubr.bf16.mxu0 0
        %4541 = vmatmul.mubr.bf16.gmra.mrb[0].mxu0 %v4492
        %v4542 = vpop.f32.mrb[0].mxu0
        %v4543 = vadd.f32 %v4398, %v4542
        %v4544 = vpop.f32.mrb[0].mxu0
        %v4545 = vpop.f32.mrb[0].mxu0
        %v4546 = vadd.f32 %v4401, %v4545
        %v4547 = vpop.f32.mrb[0].mxu0
        %4548 = vmatprep.mubr.bf16.mxu0 0
        %4549 = vmatmul.mubr.bf16.gmra.mrb[0].mxu0 %v4493
        %v4550 = vpop.f32.mrb[0].mxu0
        %v4551 = vadd.f32 %v4406, %v4550
        %v4552 = vpop.f32.mrb[0].mxu0
        %v4553 = vpop.f32.mrb[0].mxu0
        %v4554 = vadd.f32 %v4409, %v4553
        %v4555 = vpop.f32.mrb[0].mxu0
        %4556 = vmatprep.mubr.bf16.mxu0 0
        %4557 = vmatmul.mubr.bf16.gmra.mrb[0].mxu0 %v4494
        %v4558 = vpop.f32.mrb[0].mxu0
        %v4559 = vadd.f32 %v4414, %v4558
        %v4560 = vpop.f32.mrb[0].mxu0
        %v4561 = vpop.f32.mrb[0].mxu0
        %v4562 = vadd.f32 %v4417, %v4561
        %v4563 = vpop.f32.mrb[0].mxu0
        %4564 = vmatprep.mubr.bf16.mxu0 0
        %4565 = vmatmul.mubr.bf16.gmra.mrb[0].mxu0 %v4495
        %v4566 = vpop.f32.mrb[0].mxu0
        %v4567 = vadd.f32 %v4422, %v4566
        %v4568 = vpop.f32.mrb[0].mxu0
        %v4569 = vpop.f32.mrb[0].mxu0
        %v4570 = vadd.f32 %v4425, %v4569
        %v4571 = vpop.f32.mrb[0].mxu0
        %4572 = vmatprep.mubr.bf16.mxu0 0
        %4573 = vmatmul.mubr.bf16.gmra.mrb[0].mxu0 %v4496
        %v4574 = vpop.f32.mrb[0].mxu0
        %v4575 = vadd.f32 %v4430, %v4574
        %v4576 = vpop.f32.mrb[0].mxu0
        %v4577 = vpop.f32.mrb[0].mxu0
        %v4578 = vadd.f32 %v4433, %v4577
        %v4579 = vpop.f32.mrb[0].mxu0
        %4580 = vmatprep.mubr.bf16.mxu0 0
        %4581 = vmatmul.mubr.bf16.gmra.mrb[0].mxu0 %v4497
        %v4582 = vpop.f32.mrb[0].mxu0
        %v4583 = vadd.f32 %v4438, %v4582
        %v4584 = vpop.f32.mrb[0].mxu0
        %v4585 = vpop.f32.mrb[0].mxu0
        %v4586 = vadd.f32 %v4441, %v4585
        %v4587 = vpop.f32.mrb[0].mxu0
        %4588 = vmatprep.mubr.bf16.mxu0 0
        %4589 = vmatmul.mubr.bf16.gmra.mrb[0].mxu0 %v4498
        %v4590 = vpop.f32.mrb[0].mxu0
        %v4591 = vadd.f32 %v4446, %v4590
        %v4592 = vpop.f32.mrb[0].mxu0
        %v4593 = vpop.f32.mrb[0].mxu0
        %v4594 = vadd.f32 %v4449, %v4593
        %v4595 = vpop.f32.mrb[0].mxu0
        %4596 = vmatprep.mubr.bf16.mxu0 0
        %4597 = vmatmul.mubr.bf16.gmra.mrb[0].mxu0 %v4499
        %v4598 = vpop.f32.mrb[0].mxu0
        %v4599 = vadd.f32 %v4454, %v4598
        %v4600 = vpop.f32.mrb[0].mxu0
        %v4601 = vpop.f32.mrb[0].mxu0
        %v4602 = vadd.f32 %v4457, %v4601
        %v4603 = vpop.f32.mrb[0].mxu0
        %4604 = vdwg.mxu0
        %v4605 = vadd.s32 %v3910, 16
        %vm4606 = vcmp.eq.s32.totalorder %v3862, %v4605
        %vm4607 = vcmp.eq.s32.totalorder %v3863, %v4605
        %vm4608 = vcmp.eq.s32.totalorder %v3864, %v4605
        %vm4609 = vcmp.eq.s32.totalorder %v3865, %v4605
        %vm4610 = vcmp.eq.s32.totalorder %v3866, %v4605
        %vm4611 = vcmp.eq.s32.totalorder %v3867, %v4605
        %vm4612 = vcmp.eq.s32.totalorder %v3868, %v4605
        %vm4613 = vcmp.eq.s32.totalorder %v3869, %v4605
        %vm4614 = vcmp.eq.s32.totalorder %v3870, %v4605
        %vm4615 = vcmp.eq.s32.totalorder %v3871, %v4605
        %vm4616 = vcmp.eq.s32.totalorder %v3872, %v4605
        %vm4617 = vcmp.eq.s32.totalorder %v3873, %v4605
        %vm4618 = vcmp.eq.s32.totalorder %v3874, %v4605
        %vm4619 = vcmp.eq.s32.totalorder %v3875, %v4605
        %vm4620 = vcmp.eq.s32.totalorder %v3876, %v4605
        %vm4621 = vcmp.eq.s32.totalorder %v3877, %v4605
        %vm4622 = vcmp.eq.s32.totalorder %v3878, %v4605
        %vm4623 = vcmp.eq.s32.totalorder %v3879, %v4605
        %vm4624 = vcmp.eq.s32.totalorder %v3880, %v4605
        %vm4625 = vcmp.eq.s32.totalorder %v3881, %v4605
        %vm4626 = vcmp.eq.s32.totalorder %v3882, %v4605
        %vm4627 = vcmp.eq.s32.totalorder %v3883, %v4605
        %vm4628 = vcmp.eq.s32.totalorder %v3884, %v4605
        %vm4629 = vcmp.eq.s32.totalorder %v3885, %v4605
        %vm4630 = vcmp.eq.s32.totalorder %v3886, %v4605
        %vm4631 = vcmp.eq.s32.totalorder %v3887, %v4605
        %vm4632 = vcmp.eq.s32.totalorder %v3888, %v4605
        %vm4633 = vcmp.eq.s32.totalorder %v3889, %v4605
        %vm4634 = vcmp.eq.s32.totalorder %v3890, %v4605
        %vm4635 = vcmp.eq.s32.totalorder %v3891, %v4605
        %vm4636 = vcmp.eq.s32.totalorder %v3892, %v4605
        %vm4637 = vcmp.eq.s32.totalorder %v3893, %v4605
        %v4638 = vsel %vm4606, 1.0, 0.0
        %v4639 = vsel %vm4607, 1.0, 0.0
        %v4640 = vsel %vm4608, 1.0, 0.0
        %v4641 = vsel %vm4609, 1.0, 0.0
        %v4642 = vsel %vm4610, 1.0, 0.0
        %v4643 = vsel %vm4611, 1.0, 0.0
        %v4644 = vsel %vm4612, 1.0, 0.0
        %v4645 = vsel %vm4613, 1.0, 0.0
        %v4646 = vsel %vm4614, 1.0, 0.0
        %v4647 = vsel %vm4615, 1.0, 0.0
        %v4648 = vsel %vm4616, 1.0, 0.0
        %v4649 = vsel %vm4617, 1.0, 0.0
        %v4650 = vsel %vm4618, 1.0, 0.0
        %v4651 = vsel %vm4619, 1.0, 0.0
        %v4652 = vsel %vm4620, 1.0, 0.0
        %v4653 = vsel %vm4621, 1.0, 0.0
        %v4654 = vsel %vm4622, 1.0, 0.0
        %v4655 = vsel %vm4623, 1.0, 0.0
        %v4656 = vsel %vm4624, 1.0, 0.0
        %v4657 = vsel %vm4625, 1.0, 0.0
        %v4658 = vsel %vm4626, 1.0, 0.0
        %v4659 = vsel %vm4627, 1.0, 0.0
        %v4660 = vsel %vm4628, 1.0, 0.0
        %v4661 = vsel %vm4629, 1.0, 0.0
        %v4662 = vsel %vm4630, 1.0, 0.0
        %v4663 = vsel %vm4631, 1.0, 0.0
        %v4664 = vsel %vm4632, 1.0, 0.0
        %v4665 = vsel %vm4633, 1.0, 0.0
        %v4666 = vsel %vm4634, 1.0, 0.0
        %v4667 = vsel %vm4635, 1.0, 0.0
        %v4668 = vsel %vm4636, 1.0, 0.0
        %v4669 = vsel %vm4637, 1.0, 0.0
        %v4670 = vpack.c.bf16 %v4639, %v4638
        %v4671 = vpack.c.bf16 %v4641, %v4640
        %v4672 = vpack.c.bf16 %v4643, %v4642
        %v4673 = vpack.c.bf16 %v4645, %v4644
        %v4674 = vpack.c.bf16 %v4647, %v4646
        %v4675 = vpack.c.bf16 %v4649, %v4648
        %v4676 = vpack.c.bf16 %v4651, %v4650
        %v4677 = vpack.c.bf16 %v4653, %v4652
        %v4678 = vpack.c.bf16 %v4655, %v4654
        %v4679 = vpack.c.bf16 %v4657, %v4656
        %v4680 = vpack.c.bf16 %v4659, %v4658
        %v4681 = vpack.c.bf16 %v4661, %v4660
        %v4682 = vpack.c.bf16 %v4663, %v4662
        %v4683 = vpack.c.bf16 %v4665, %v4664
        %v4684 = vpack.c.bf16 %v4667, %v4666
        %v4685 = vpack.c.bf16 %v4669, %v4668
        %4686 = vmatprep.subr.bf16.mxu0 0
        %4687 = vmatpush1.bf16.msra.mxu0 %v4670
        %4688 = vmatprep.subr.bf16.mxu0 0
        %4689 = vmatpush1.bf16.msra.mxu0 %v4671
        %4690 = vmatprep.subr.bf16.mxu0 0
        %4691 = vmatpush1.bf16.msra.mxu0 %v4672
        %4692 = vmatprep.subr.bf16.mxu0 0
        %4693 = vmatpush1.bf16.msra.mxu0 %v4673
        %4694 = vmatprep.subr.bf16.mxu0 0
        %4695 = vmatpush1.bf16.msra.mxu0 %v4674
        %4696 = vmatprep.subr.bf16.mxu0 0
        %4697 = vmatpush1.bf16.msra.mxu0 %v4675
        %4698 = vmatprep.subr.bf16.mxu0 0
        %4699 = vmatpush1.bf16.msra.mxu0 %v4676
        %4700 = vmatprep.subr.bf16.mxu0 0
        %4701 = vmatpush1.bf16.msra.mxu0 %v4677
        %4702 = vmatprep.subr.bf16.mxu0 0
        %4703 = vmatpush1.bf16.msra.mxu0 %v4678
        %4704 = vmatprep.subr.bf16.mxu0 0
        %4705 = vmatpush1.bf16.msra.mxu0 %v4679
        %4706 = vmatprep.subr.bf16.mxu0 0
        %4707 = vmatpush1.bf16.msra.mxu0 %v4680
        %4708 = vmatprep.subr.bf16.mxu0 0
        %4709 = vmatpush1.bf16.msra.mxu0 %v4681
        %4710 = vmatprep.subr.bf16.mxu0 0
        %4711 = vmatpush1.bf16.msra.mxu0 %v4682
        %4712 = vmatprep.subr.bf16.mxu0 0
        %4713 = vmatpush1.bf16.msra.mxu0 %v4683
        %4714 = vmatprep.subr.bf16.mxu0 0
        %4715 = vmatpush1.bf16.msra.mxu0 %v4684
        %4716 = vmatprep.subr.bf16.mxu0 0
        %4717 = vmatpush1.bf16.msra.mxu0 %v4685
        %4718 = vmatprep.mubr.bf16.mxu0 %v3895
        %4719 = vmatmul.mubr.bf16.gmra.mrb[0].mxu0 %v3894
        %v4720 = vpop.f32.mrb[0].mxu0
        %v4721 = vadd.f32 0.0, %v4720
        %v4722 = vpop.f32.mrb[0].mxu0
        %v4723 = vpop.f32.mrb[0].mxu0
        %v4724 = vadd.f32 0.0, %v4723
        %v4725 = vpop.f32.mrb[0].mxu0
        %4726 = vmatprep.mubr.bf16.mxu0 %v3897
        %4727 = vmatmul.mubr.bf16.gmra.mrb[0].mxu0 %v3896
        %v4728 = vpop.f32.mrb[0].mxu0
        %v4729 = vadd.f32 0.0, %v4728
        %v4730 = vpop.f32.mrb[0].mxu0
        %v4731 = vpop.f32.mrb[0].mxu0
        %v4732 = vadd.f32 0.0, %v4731
        %v4733 = vpop.f32.mrb[0].mxu0
        %4734 = vmatprep.mubr.bf16.mxu0 %v3899
        %4735 = vmatmul.mubr.bf16.gmra.mrb[0].mxu0 %v3898
        %v4736 = vpop.f32.mrb[0].mxu0
        %v4737 = vadd.f32 0.0, %v4736
        %v4738 = vpop.f32.mrb[0].mxu0
        %v4739 = vpop.f32.mrb[0].mxu0
        %v4740 = vadd.f32 0.0, %v4739
        %v4741 = vpop.f32.mrb[0].mxu0
        %4742 = vmatprep.mubr.bf16.mxu0 %v3901
        %4743 = vmatmul.mubr.bf16.gmra.mrb[0].mxu0 %v3900
        %v4744 = vpop.f32.mrb[0].mxu0
        %v4745 = vadd.f32 0.0, %v4744
        %v4746 = vpop.f32.mrb[0].mxu0
        %v4747 = vpop.f32.mrb[0].mxu0
        %v4748 = vadd.f32 0.0, %v4747
        %v4749 = vpop.f32.mrb[0].mxu0
        %4750 = vmatprep.mubr.bf16.mxu0 %v3903
        %4751 = vmatmul.mubr.bf16.gmra.mrb[0].mxu0 %v3902
        %v4752 = vpop.f32.mrb[0].mxu0
        %v4753 = vadd.f32 0.0, %v4752
        %v4754 = vpop.f32.mrb[0].mxu0
        %v4755 = vpop.f32.mrb[0].mxu0
        %v4756 = vadd.f32 0.0, %v4755
        %v4757 = vpop.f32.mrb[0].mxu0
        %4758 = vmatprep.mubr.bf16.mxu0 %v3905
        %4759 = vmatmul.mubr.bf16.gmra.mrb[0].mxu0 %v3904
        %v4760 = vpop.f32.mrb[0].mxu0
        %v4761 = vadd.f32 0.0, %v4760
        %v4762 = vpop.f32.mrb[0].mxu0
        %v4763 = vpop.f32.mrb[0].mxu0
        %v4764 = vadd.f32 0.0, %v4763
        %v4765 = vpop.f32.mrb[0].mxu0
        %4766 = vmatprep.mubr.bf16.mxu0 %v3907
        %4767 = vmatmul.mubr.bf16.gmra.mrb[0].mxu0 %v3906
        %v4768 = vpop.f32.mrb[0].mxu0
        %v4769 = vadd.f32 0.0, %v4768
        %v4770 = vpop.f32.mrb[0].mxu0
        %v4771 = vpop.f32.mrb[0].mxu0
        %v4772 = vadd.f32 0.0, %v4771
        %v4773 = vpop.f32.mrb[0].mxu0
        %4774 = vmatprep.mubr.bf16.mxu0 %v3909
        %4775 = vmatmul.mubr.bf16.gmra.mrb[0].mxu0 %v3908
        %v4776 = vpop.f32.mrb[0].mxu0
        %v4777 = vadd.f32 0.0, %v4776
        %v4778 = vpop.f32.mrb[0].mxu0
        %v4779 = vpop.f32.mrb[0].mxu0
        %v4780 = vadd.f32 0.0, %v4779
        %v4781 = vpop.f32.mrb[0].mxu0
        %4782 = vdwg.mxu0
        %s4783 = scalar_lea.vmem %s10, 128
        %v4784 = vld [vmem:[%s4783] sm:$0xf]
        %v4785 = vld [vmem:[%s4783 + $0x4] sm:$0xf]
        %v4786 = vld [vmem:[%s4783 + $0x8] sm:$0xf]
        %v4787 = vld [vmem:[%s4783 + $0xc] sm:$0xf]
        %v4788 = vld [vmem:[%s4783 + $0x10] sm:$0xf]
        %v4789 = vld [vmem:[%s4783 + $0x14] sm:$0xf]
        %v4790 = vld [vmem:[%s4783 + $0x18] sm:$0xf]
        %v4791 = vld [vmem:[%s4783 + $0x1c] sm:$0xf]
        %v4792 = vld [vmem:[%s4783 + $0x20] sm:$0xf]
        %v4793 = vld [vmem:[%s4783 + $0x24] sm:$0xf]
        %v4794 = vld [vmem:[%s4783 + $0x28] sm:$0xf]
        %v4795 = vld [vmem:[%s4783 + $0x2c] sm:$0xf]
        %v4796 = vld [vmem:[%s4783 + $0x30] sm:$0xf]
        %v4797 = vld [vmem:[%s4783 + $0x34] sm:$0xf]
        %v4798 = vld [vmem:[%s4783 + $0x38] sm:$0xf]
        %v4799 = vld [vmem:[%s4783 + $0x3c] sm:$0xf]
        %v4800 = vpack.c.bf16 %v4724, %v4721
        %v4801 = vpack.c.bf16 %v4732, %v4729
        %v4802 = vpack.c.bf16 %v4740, %v4737
        %v4803 = vpack.c.bf16 %v4748, %v4745
        %v4804 = vpack.c.bf16 %v4756, %v4753
        %v4805 = vpack.c.bf16 %v4764, %v4761
        %v4806 = vpack.c.bf16 %v4772, %v4769
        %v4807 = vpack.c.bf16 %v4780, %v4777
        %v4824 = vunpack.c.l.b16 %v4784
        %v4825 = vunpack.c.l.b16 %v4785
        %v4826 = vunpack.c.l.b16 %v4786
        %v4827 = vunpack.c.l.b16 %v4787
        %v4828 = vunpack.c.l.b16 %v4788
        %v4829 = vunpack.c.l.b16 %v4789
        %v4830 = vunpack.c.l.b16 %v4790
        %v4831 = vunpack.c.l.b16 %v4791
        %v4832 = vunpack.c.l.b16 %v4792
        %v4833 = vunpack.c.l.b16 %v4793
        %v4834 = vunpack.c.l.b16 %v4794
        %v4835 = vunpack.c.l.b16 %v4795
        %v4836 = vunpack.c.l.b16 %v4796
        %v4837 = vunpack.c.l.b16 %v4797
        %v4838 = vunpack.c.l.b16 %v4798
        %v4839 = vunpack.c.l.b16 %v4799
        %v4840 = vpack.c.b16 %v4825, %v4824
        %v4841 = vpack.c.b16 %v4827, %v4826
        %v4842 = vpack.c.b16 %v4829, %v4828
        %v4843 = vpack.c.b16 %v4831, %v4830
        %v4844 = vpack.c.b16 %v4833, %v4832
        %v4845 = vpack.c.b16 %v4835, %v4834
        %v4846 = vpack.c.b16 %v4837, %v4836
        %v4847 = vpack.c.b16 %v4839, %v4838
        %4856 = vmatprep.subr.bf16.mxu0 0
        %4857 = vmatpush1.bf16.msra.mxu0 %v4800
        %4858 = vmatprep.subr.bf16.mxu0 0
        %4859 = vmatpush1.bf16.msra.mxu0 %v4801
        %4860 = vmatprep.subr.bf16.mxu0 0
        %4861 = vmatpush1.bf16.msra.mxu0 %v4802
        %4862 = vmatprep.subr.bf16.mxu0 0
        %4863 = vmatpush1.bf16.msra.mxu0 %v4803
        %4864 = vmatprep.subr.bf16.mxu0 0
        %4865 = vmatpush1.bf16.msra.mxu0 %v4804
        %4866 = vmatprep.subr.bf16.mxu0 0
        %4867 = vmatpush1.bf16.msra.mxu0 %v4805
        %4868 = vmatprep.subr.bf16.mxu0 0
        %4869 = vmatpush1.bf16.msra.mxu0 %v4806
        %4870 = vmatprep.subr.bf16.mxu0 0
        %4871 = vmatpush1.bf16.msra.mxu0 %v4807
        %4872 = vmatprep.subr.bf16.mxu0 0
        %4873 = vmatpush1.bf16.msra.mxu0 0
        %4874 = vmatprep.subr.bf16.mxu0 0
        %4875 = vmatpush1.bf16.msra.mxu0 0
        %4876 = vmatprep.subr.bf16.mxu0 0
        %4877 = vmatpush1.bf16.msra.mxu0 0
        %4878 = vmatprep.subr.bf16.mxu0 0
        %4879 = vmatpush1.bf16.msra.mxu0 0
        %4880 = vmatprep.subr.bf16.mxu0 0
        %4881 = vmatpush1.bf16.msra.mxu0 0
        %4882 = vmatprep.subr.bf16.mxu0 0
        %4883 = vmatpush1.bf16.msra.mxu0 0
        %4884 = vmatprep.subr.bf16.mxu0 0
        %4885 = vmatpush1.bf16.msra.mxu0 0
        %4886 = vmatprep.subr.bf16.mxu0 0
        %4887 = vmatpush1.bf16.msra.mxu0 0
        %4888 = vmatprep.mubr.bf16.mxu0 0
        %4889 = vmatmul.mubr.bf16.gmra.mrb[0].mxu0 %v4840
        %v4890 = vpop.f32.mrb[0].mxu0
        %v4891 = vadd.f32 0.0, %v4890
        %v4892 = vpop.f32.mrb[0].mxu0
        %v4893 = vpop.f32.mrb[0].mxu0
        %v4894 = vadd.f32 0.0, %v4893
        %v4895 = vpop.f32.mrb[0].mxu0
        %4896 = vmatprep.mubr.bf16.mxu0 0
        %4897 = vmatmul.mubr.bf16.gmra.mrb[0].mxu0 %v4841
        %v4898 = vpop.f32.mrb[0].mxu0
        %v4899 = vadd.f32 0.0, %v4898
        %v4900 = vpop.f32.mrb[0].mxu0
        %v4901 = vpop.f32.mrb[0].mxu0
        %v4902 = vadd.f32 0.0, %v4901
        %v4903 = vpop.f32.mrb[0].mxu0
        %4904 = vmatprep.mubr.bf16.mxu0 0
        %4905 = vmatmul.mubr.bf16.gmra.mrb[0].mxu0 %v4842
        %v4906 = vpop.f32.mrb[0].mxu0
        %v4907 = vadd.f32 0.0, %v4906
        %v4908 = vpop.f32.mrb[0].mxu0
        %v4909 = vpop.f32.mrb[0].mxu0
        %v4910 = vadd.f32 0.0, %v4909
        %v4911 = vpop.f32.mrb[0].mxu0
        %4912 = vmatprep.mubr.bf16.mxu0 0
        %4913 = vmatmul.mubr.bf16.gmra.mrb[0].mxu0 %v4843
        %v4914 = vpop.f32.mrb[0].mxu0
        %v4915 = vadd.f32 0.0, %v4914
        %v4916 = vpop.f32.mrb[0].mxu0
        %v4917 = vpop.f32.mrb[0].mxu0
        %v4918 = vadd.f32 0.0, %v4917
        %v4919 = vpop.f32.mrb[0].mxu0
        %4920 = vmatprep.mubr.bf16.mxu0 0
        %4921 = vmatmul.mubr.bf16.gmra.mrb[0].mxu0 %v4844
        %v4922 = vpop.f32.mrb[0].mxu0
        %v4923 = vadd.f32 0.0, %v4922
        %v4924 = vpop.f32.mrb[0].mxu0
        %v4925 = vpop.f32.mrb[0].mxu0
        %v4926 = vadd.f32 0.0, %v4925
        %v4927 = vpop.f32.mrb[0].mxu0
        %4928 = vmatprep.mubr.bf16.mxu0 0
        %4929 = vmatmul.mubr.bf16.gmra.mrb[0].mxu0 %v4845
        %v4930 = vpop.f32.mrb[0].mxu0
        %v4931 = vadd.f32 0.0, %v4930
        %v4932 = vpop.f32.mrb[0].mxu0
        %v4933 = vpop.f32.mrb[0].mxu0
        %v4934 = vadd.f32 0.0, %v4933
        %v4935 = vpop.f32.mrb[0].mxu0
        %4936 = vmatprep.mubr.bf16.mxu0 0
        %4937 = vmatmul.mubr.bf16.gmra.mrb[0].mxu0 %v4846
        %v4938 = vpop.f32.mrb[0].mxu0
        %v4939 = vadd.f32 0.0, %v4938
        %v4940 = vpop.f32.mrb[0].mxu0
        %v4941 = vpop.f32.mrb[0].mxu0
        %v4942 = vadd.f32 0.0, %v4941
        %v4943 = vpop.f32.mrb[0].mxu0
        %4944 = vmatprep.mubr.bf16.mxu0 0
        %4945 = vmatmul.mubr.bf16.gmra.mrb[0].mxu0 %v4847
        %v4946 = vpop.f32.mrb[0].mxu0
        %v4947 = vadd.f32 0.0, %v4946
        %v4948 = vpop.f32.mrb[0].mxu0
        %v4949 = vpop.f32.mrb[0].mxu0
        %v4950 = vadd.f32 0.0, %v4949
        %v4951 = vpop.f32.mrb[0].mxu0
        %4952 = vdwg.mxu0
        %v4953 = vadd.f32 %v4543, %v4891
        %v4954 = vadd.f32 %v4546, %v4894
        %v4955 = vadd.f32 %v4551, %v4899
        %v4956 = vadd.f32 %v4554, %v4902
        %v4957 = vadd.f32 %v4559, %v4907
        %v4958 = vadd.f32 %v4562, %v4910
        %v4959 = vadd.f32 %v4567, %v4915
        %v4960 = vadd.f32 %v4570, %v4918
        %v4961 = vadd.f32 %v4575, %v4923
        %v4962 = vadd.f32 %v4578, %v4926
        %v4963 = vadd.f32 %v4583, %v4931
        %v4964 = vadd.f32 %v4586, %v4934
        %v4965 = vadd.f32 %v4591, %v4939
        %v4966 = vadd.f32 %v4594, %v4942
        %v4967 = vadd.f32 %v4599, %v4947
        %v4968 = vadd.f32 %v4602, %v4950
        %v4969 = vadd.s32 %v3910, 24
        %vm4970 = vcmp.eq.s32.totalorder %v3862, %v4969
        %vm4971 = vcmp.eq.s32.totalorder %v3863, %v4969
        %vm4972 = vcmp.eq.s32.totalorder %v3864, %v4969
        %vm4973 = vcmp.eq.s32.totalorder %v3865, %v4969
        %vm4974 = vcmp.eq.s32.totalorder %v3866, %v4969
        %vm4975 = vcmp.eq.s32.totalorder %v3867, %v4969
        %vm4976 = vcmp.eq.s32.totalorder %v3868, %v4969
        %vm4977 = vcmp.eq.s32.totalorder %v3869, %v4969
        %vm4978 = vcmp.eq.s32.totalorder %v3870, %v4969
        %vm4979 = vcmp.eq.s32.totalorder %v3871, %v4969
        %vm4980 = vcmp.eq.s32.totalorder %v3872, %v4969
        %vm4981 = vcmp.eq.s32.totalorder %v3873, %v4969
        %vm4982 = vcmp.eq.s32.totalorder %v3874, %v4969
        %vm4983 = vcmp.eq.s32.totalorder %v3875, %v4969
        %vm4984 = vcmp.eq.s32.totalorder %v3876, %v4969
        %vm4985 = vcmp.eq.s32.totalorder %v3877, %v4969
        %vm4986 = vcmp.eq.s32.totalorder %v3878, %v4969
        %vm4987 = vcmp.eq.s32.totalorder %v3879, %v4969
        %vm4988 = vcmp.eq.s32.totalorder %v3880, %v4969
        %vm4989 = vcmp.eq.s32.totalorder %v3881, %v4969
        %vm4990 = vcmp.eq.s32.totalorder %v3882, %v4969
        %vm4991 = vcmp.eq.s32.totalorder %v3883, %v4969
        %vm4992 = vcmp.eq.s32.totalorder %v3884, %v4969
        %vm4993 = vcmp.eq.s32.totalorder %v3885, %v4969
        %vm4994 = vcmp.eq.s32.totalorder %v3886, %v4969
        %vm4995 = vcmp.eq.s32.totalorder %v3887, %v4969
        %vm4996 = vcmp.eq.s32.totalorder %v3888, %v4969
        %vm4997 = vcmp.eq.s32.totalorder %v3889, %v4969
        %vm4998 = vcmp.eq.s32.totalorder %v3890, %v4969
        %vm4999 = vcmp.eq.s32.totalorder %v3891, %v4969
        %vm5000 = vcmp.eq.s32.totalorder %v3892, %v4969
        %vm5001 = vcmp.eq.s32.totalorder %v3893, %v4969
        %v5002 = vsel %vm4970, 1.0, 0.0
        %v5003 = vsel %vm4971, 1.0, 0.0
        %v5004 = vsel %vm4972, 1.0, 0.0
        %v5005 = vsel %vm4973, 1.0, 0.0
        %v5006 = vsel %vm4974, 1.0, 0.0
        %v5007 = vsel %vm4975, 1.0, 0.0
        %v5008 = vsel %vm4976, 1.0, 0.0
        %v5009 = vsel %vm4977, 1.0, 0.0
        %v5010 = vsel %vm4978, 1.0, 0.0
        %v5011 = vsel %vm4979, 1.0, 0.0
        %v5012 = vsel %vm4980, 1.0, 0.0
        %v5013 = vsel %vm4981, 1.0, 0.0
        %v5014 = vsel %vm4982, 1.0, 0.0
        %v5015 = vsel %vm4983, 1.0, 0.0
        %v5016 = vsel %vm4984, 1.0, 0.0
        %v5017 = vsel %vm4985, 1.0, 0.0
        %v5018 = vsel %vm4986, 1.0, 0.0
        %v5019 = vsel %vm4987, 1.0, 0.0
        %v5020 = vsel %vm4988, 1.0, 0.0
        %v5021 = vsel %vm4989, 1.0, 0.0
        %v5022 = vsel %vm4990, 1.0, 0.0
        %v5023 = vsel %vm4991, 1.0, 0.0
        %v5024 = vsel %vm4992, 1.0, 0.0
        %v5025 = vsel %vm4993, 1.0, 0.0
        %v5026 = vsel %vm4994, 1.0, 0.0
        %v5027 = vsel %vm4995, 1.0, 0.0
        %v5028 = vsel %vm4996, 1.0, 0.0
        %v5029 = vsel %vm4997, 1.0, 0.0
        %v5030 = vsel %vm4998, 1.0, 0.0
        %v5031 = vsel %vm4999, 1.0, 0.0
        %v5032 = vsel %vm5000, 1.0, 0.0
        %v5033 = vsel %vm5001, 1.0, 0.0
        %v5034 = vpack.c.bf16 %v5003, %v5002
        %v5035 = vpack.c.bf16 %v5005, %v5004
        %v5036 = vpack.c.bf16 %v5007, %v5006
        %v5037 = vpack.c.bf16 %v5009, %v5008
        %v5038 = vpack.c.bf16 %v5011, %v5010
        %v5039 = vpack.c.bf16 %v5013, %v5012
        %v5040 = vpack.c.bf16 %v5015, %v5014
        %v5041 = vpack.c.bf16 %v5017, %v5016
        %v5042 = vpack.c.bf16 %v5019, %v5018
        %v5043 = vpack.c.bf16 %v5021, %v5020
        %v5044 = vpack.c.bf16 %v5023, %v5022
        %v5045 = vpack.c.bf16 %v5025, %v5024
        %v5046 = vpack.c.bf16 %v5027, %v5026
        %v5047 = vpack.c.bf16 %v5029, %v5028
        %v5048 = vpack.c.bf16 %v5031, %v5030
        %v5049 = vpack.c.bf16 %v5033, %v5032
        %5050 = vmatprep.subr.bf16.mxu0 0
        %5051 = vmatpush1.bf16.msra.mxu0 %v5034
        %5052 = vmatprep.subr.bf16.mxu0 0
        %5053 = vmatpush1.bf16.msra.mxu0 %v5035
        %5054 = vmatprep.subr.bf16.mxu0 0
        %5055 = vmatpush1.bf16.msra.mxu0 %v5036
        %5056 = vmatprep.subr.bf16.mxu0 0
        %5057 = vmatpush1.bf16.msra.mxu0 %v5037
        %5058 = vmatprep.subr.bf16.mxu0 0
        %5059 = vmatpush1.bf16.msra.mxu0 %v5038
        %5060 = vmatprep.subr.bf16.mxu0 0
        %5061 = vmatpush1.bf16.msra.mxu0 %v5039
        %5062 = vmatprep.subr.bf16.mxu0 0
        %5063 = vmatpush1.bf16.msra.mxu0 %v5040
        %5064 = vmatprep.subr.bf16.mxu0 0
        %5065 = vmatpush1.bf16.msra.mxu0 %v5041
        %5066 = vmatprep.subr.bf16.mxu0 0
        %5067 = vmatpush1.bf16.msra.mxu0 %v5042
        %5068 = vmatprep.subr.bf16.mxu0 0
        %5069 = vmatpush1.bf16.msra.mxu0 %v5043
        %5070 = vmatprep.subr.bf16.mxu0 0
        %5071 = vmatpush1.bf16.msra.mxu0 %v5044
        %5072 = vmatprep.subr.bf16.mxu0 0
        %5073 = vmatpush1.bf16.msra.mxu0 %v5045
        %5074 = vmatprep.subr.bf16.mxu0 0
        %5075 = vmatpush1.bf16.msra.mxu0 %v5046
        %5076 = vmatprep.subr.bf16.mxu0 0
        %5077 = vmatpush1.bf16.msra.mxu0 %v5047
        %5078 = vmatprep.subr.bf16.mxu0 0
        %5079 = vmatpush1.bf16.msra.mxu0 %v5048
        %5080 = vmatprep.subr.bf16.mxu0 0
        %5081 = vmatpush1.bf16.msra.mxu0 %v5049
        %5082 = vmatprep.mubr.bf16.mxu0 %v3895
        %5083 = vmatmul.mubr.bf16.gmra.mrb[0].mxu0 %v3894
        %v5084 = vpop.f32.mrb[0].mxu0
        %v5085 = vadd.f32 0.0, %v5084
        %v5086 = vpop.f32.mrb[0].mxu0
        %v5087 = vpop.f32.mrb[0].mxu0
        %v5088 = vadd.f32 0.0, %v5087
        %v5089 = vpop.f32.mrb[0].mxu0
        %5090 = vmatprep.mubr.bf16.mxu0 %v3897
        %5091 = vmatmul.mubr.bf16.gmra.mrb[0].mxu0 %v3896
        %v5092 = vpop.f32.mrb[0].mxu0
        %v5093 = vadd.f32 0.0, %v5092
        %v5094 = vpop.f32.mrb[0].mxu0
        %v5095 = vpop.f32.mrb[0].mxu0
        %v5096 = vadd.f32 0.0, %v5095
        %v5097 = vpop.f32.mrb[0].mxu0
        %5098 = vmatprep.mubr.bf16.mxu0 %v3899
        %5099 = vmatmul.mubr.bf16.gmra.mrb[0].mxu0 %v3898
        %v5100 = vpop.f32.mrb[0].mxu0
        %v5101 = vadd.f32 0.0, %v5100
        %v5102 = vpop.f32.mrb[0].mxu0
        %v5103 = vpop.f32.mrb[0].mxu0
        %v5104 = vadd.f32 0.0, %v5103
        %v5105 = vpop.f32.mrb[0].mxu0
        %5106 = vmatprep.mubr.bf16.mxu0 %v3901
        %5107 = vmatmul.mubr.bf16.gmra.mrb[0].mxu0 %v3900
        %v5108 = vpop.f32.mrb[0].mxu0
        %v5109 = vadd.f32 0.0, %v5108
        %v5110 = vpop.f32.mrb[0].mxu0
        %v5111 = vpop.f32.mrb[0].mxu0
        %v5112 = vadd.f32 0.0, %v5111
        %v5113 = vpop.f32.mrb[0].mxu0
        %5114 = vmatprep.mubr.bf16.mxu0 %v3903
        %5115 = vmatmul.mubr.bf16.gmra.mrb[0].mxu0 %v3902
        %v5116 = vpop.f32.mrb[0].mxu0
        %v5117 = vadd.f32 0.0, %v5116
        %v5118 = vpop.f32.mrb[0].mxu0
        %v5119 = vpop.f32.mrb[0].mxu0
        %v5120 = vadd.f32 0.0, %v5119
        %v5121 = vpop.f32.mrb[0].mxu0
        %5122 = vmatprep.mubr.bf16.mxu0 %v3905
        %5123 = vmatmul.mubr.bf16.gmra.mrb[0].mxu0 %v3904
        %v5124 = vpop.f32.mrb[0].mxu0
        %v5125 = vadd.f32 0.0, %v5124
        %v5126 = vpop.f32.mrb[0].mxu0
        %v5127 = vpop.f32.mrb[0].mxu0
        %v5128 = vadd.f32 0.0, %v5127
        %v5129 = vpop.f32.mrb[0].mxu0
        %5130 = vmatprep.mubr.bf16.mxu0 %v3907
        %5131 = vmatmul.mubr.bf16.gmra.mrb[0].mxu0 %v3906
        %v5132 = vpop.f32.mrb[0].mxu0
        %v5133 = vadd.f32 0.0, %v5132
        %v5134 = vpop.f32.mrb[0].mxu0
        %v5135 = vpop.f32.mrb[0].mxu0
        %v5136 = vadd.f32 0.0, %v5135
        %v5137 = vpop.f32.mrb[0].mxu0
        %5138 = vmatprep.mubr.bf16.mxu0 %v3909
        %5139 = vmatmul.mubr.bf16.gmra.mrb[0].mxu0 %v3908
        %v5140 = vpop.f32.mrb[0].mxu0
        %v5141 = vadd.f32 0.0, %v5140
        %v5142 = vpop.f32.mrb[0].mxu0
        %v5143 = vpop.f32.mrb[0].mxu0
        %v5144 = vadd.f32 0.0, %v5143
        %v5145 = vpop.f32.mrb[0].mxu0
        %5146 = vdwg.mxu0
        %s5147 = scalar_lea.vmem %s10, 192
        %v5148 = vld [vmem:[%s5147] sm:$0xf]
        %v5149 = vld [vmem:[%s5147 + $0x4] sm:$0xf]
        %v5150 = vld [vmem:[%s5147 + $0x8] sm:$0xf]
        %v5151 = vld [vmem:[%s5147 + $0xc] sm:$0xf]
        %v5152 = vld [vmem:[%s5147 + $0x10] sm:$0xf]
        %v5153 = vld [vmem:[%s5147 + $0x14] sm:$0xf]
        %v5154 = vld [vmem:[%s5147 + $0x18] sm:$0xf]
        %v5155 = vld [vmem:[%s5147 + $0x1c] sm:$0xf]
        %v5156 = vld [vmem:[%s5147 + $0x20] sm:$0xf]
        %v5157 = vld [vmem:[%s5147 + $0x24] sm:$0xf]
        %v5158 = vld [vmem:[%s5147 + $0x28] sm:$0xf]
        %v5159 = vld [vmem:[%s5147 + $0x2c] sm:$0xf]
        %v5160 = vld [vmem:[%s5147 + $0x30] sm:$0xf]
        %v5161 = vld [vmem:[%s5147 + $0x34] sm:$0xf]
        %v5162 = vld [vmem:[%s5147 + $0x38] sm:$0xf]
        %v5163 = vld [vmem:[%s5147 + $0x3c] sm:$0xf]
        %v5164 = vpack.c.bf16 %v5088, %v5085
        %v5165 = vpack.c.bf16 %v5096, %v5093
        %v5166 = vpack.c.bf16 %v5104, %v5101
        %v5167 = vpack.c.bf16 %v5112, %v5109
        %v5168 = vpack.c.bf16 %v5120, %v5117
        %v5169 = vpack.c.bf16 %v5128, %v5125
        %v5170 = vpack.c.bf16 %v5136, %v5133
        %v5171 = vpack.c.bf16 %v5144, %v5141
        %v5188 = vunpack.c.l.b16 %v5148
        %v5189 = vunpack.c.l.b16 %v5149
        %v5190 = vunpack.c.l.b16 %v5150
        %v5191 = vunpack.c.l.b16 %v5151
        %v5192 = vunpack.c.l.b16 %v5152
        %v5193 = vunpack.c.l.b16 %v5153
        %v5194 = vunpack.c.l.b16 %v5154
        %v5195 = vunpack.c.l.b16 %v5155
        %v5196 = vunpack.c.l.b16 %v5156
        %v5197 = vunpack.c.l.b16 %v5157
        %v5198 = vunpack.c.l.b16 %v5158
        %v5199 = vunpack.c.l.b16 %v5159
        %v5200 = vunpack.c.l.b16 %v5160
        %v5201 = vunpack.c.l.b16 %v5161
        %v5202 = vunpack.c.l.b16 %v5162
        %v5203 = vunpack.c.l.b16 %v5163
        %v5204 = vpack.c.b16 %v5189, %v5188
        %v5205 = vpack.c.b16 %v5191, %v5190
        %v5206 = vpack.c.b16 %v5193, %v5192
        %v5207 = vpack.c.b16 %v5195, %v5194
        %v5208 = vpack.c.b16 %v5197, %v5196
        %v5209 = vpack.c.b16 %v5199, %v5198
        %v5210 = vpack.c.b16 %v5201, %v5200
        %v5211 = vpack.c.b16 %v5203, %v5202
        %5220 = vmatprep.subr.bf16.mxu0 0
        %5221 = vmatpush1.bf16.msra.mxu0 %v5164
        %5222 = vmatprep.subr.bf16.mxu0 0
        %5223 = vmatpush1.bf16.msra.mxu0 %v5165
        %5224 = vmatprep.subr.bf16.mxu0 0
        %5225 = vmatpush1.bf16.msra.mxu0 %v5166
        %5226 = vmatprep.subr.bf16.mxu0 0
        %5227 = vmatpush1.bf16.msra.mxu0 %v5167
        %5228 = vmatprep.subr.bf16.mxu0 0
        %5229 = vmatpush1.bf16.msra.mxu0 %v5168
        %5230 = vmatprep.subr.bf16.mxu0 0
        %5231 = vmatpush1.bf16.msra.mxu0 %v5169
        %5232 = vmatprep.subr.bf16.mxu0 0
        %5233 = vmatpush1.bf16.msra.mxu0 %v5170
        %5234 = vmatprep.subr.bf16.mxu0 0
        %5235 = vmatpush1.bf16.msra.mxu0 %v5171
        %5236 = vmatprep.subr.bf16.mxu0 0
        %5237 = vmatpush1.bf16.msra.mxu0 0
        %5238 = vmatprep.subr.bf16.mxu0 0
        %5239 = vmatpush1.bf16.msra.mxu0 0
        %5240 = vmatprep.subr.bf16.mxu0 0
        %5241 = vmatpush1.bf16.msra.mxu0 0
        %5242 = vmatprep.subr.bf16.mxu0 0
        %5243 = vmatpush1.bf16.msra.mxu0 0
        %5244 = vmatprep.subr.bf16.mxu0 0
        %5245 = vmatpush1.bf16.msra.mxu0 0
        %5246 = vmatprep.subr.bf16.mxu0 0
        %5247 = vmatpush1.bf16.msra.mxu0 0
        %5248 = vmatprep.subr.bf16.mxu0 0
        %5249 = vmatpush1.bf16.msra.mxu0 0
        %5250 = vmatprep.subr.bf16.mxu0 0
        %5251 = vmatpush1.bf16.msra.mxu0 0
        %5252 = vmatprep.mubr.bf16.mxu0 0
        %5253 = vmatmul.mubr.bf16.gmra.mrb[0].mxu0 %v5204
        %v5254 = vpop.f32.mrb[0].mxu0
        %v5255 = vadd.f32 0.0, %v5254
        %v5256 = vpop.f32.mrb[0].mxu0
        %v5257 = vpop.f32.mrb[0].mxu0
        %v5258 = vadd.f32 0.0, %v5257
        %v5259 = vpop.f32.mrb[0].mxu0
        %5260 = vmatprep.mubr.bf16.mxu0 0
        %5261 = vmatmul.mubr.bf16.gmra.mrb[0].mxu0 %v5205
        %v5262 = vpop.f32.mrb[0].mxu0
        %v5263 = vadd.f32 0.0, %v5262
        %v5264 = vpop.f32.mrb[0].mxu0
        %v5265 = vpop.f32.mrb[0].mxu0
        %v5266 = vadd.f32 0.0, %v5265
        %v5267 = vpop.f32.mrb[0].mxu0
        %5268 = vmatprep.mubr.bf16.mxu0 0
        %5269 = vmatmul.mubr.bf16.gmra.mrb[0].mxu0 %v5206
        %v5270 = vpop.f32.mrb[0].mxu0
        %v5271 = vadd.f32 0.0, %v5270
        %v5272 = vpop.f32.mrb[0].mxu0
        %v5273 = vpop.f32.mrb[0].mxu0
        %v5274 = vadd.f32 0.0, %v5273
        %v5275 = vpop.f32.mrb[0].mxu0
        %5276 = vmatprep.mubr.bf16.mxu0 0
        %5277 = vmatmul.mubr.bf16.gmra.mrb[0].mxu0 %v5207
        %v5278 = vpop.f32.mrb[0].mxu0
        %v5279 = vadd.f32 0.0, %v5278
        %v5280 = vpop.f32.mrb[0].mxu0
        %v5281 = vpop.f32.mrb[0].mxu0
        %v5282 = vadd.f32 0.0, %v5281
        %v5283 = vpop.f32.mrb[0].mxu0
        %5284 = vmatprep.mubr.bf16.mxu0 0
        %5285 = vmatmul.mubr.bf16.gmra.mrb[0].mxu0 %v5208
        %v5286 = vpop.f32.mrb[0].mxu0
        %v5287 = vadd.f32 0.0, %v5286
        %v5288 = vpop.f32.mrb[0].mxu0
        %v5289 = vpop.f32.mrb[0].mxu0
        %v5290 = vadd.f32 0.0, %v5289
        %v5291 = vpop.f32.mrb[0].mxu0
        %5292 = vmatprep.mubr.bf16.mxu0 0
        %5293 = vmatmul.mubr.bf16.gmra.mrb[0].mxu0 %v5209
        %v5294 = vpop.f32.mrb[0].mxu0
        %v5295 = vadd.f32 0.0, %v5294
        %v5296 = vpop.f32.mrb[0].mxu0
        %v5297 = vpop.f32.mrb[0].mxu0
        %v5298 = vadd.f32 0.0, %v5297
        %v5299 = vpop.f32.mrb[0].mxu0
        %5300 = vmatprep.mubr.bf16.mxu0 0
        %5301 = vmatmul.mubr.bf16.gmra.mrb[0].mxu0 %v5210
        %v5302 = vpop.f32.mrb[0].mxu0
        %v5303 = vadd.f32 0.0, %v5302
        %v5304 = vpop.f32.mrb[0].mxu0
        %v5305 = vpop.f32.mrb[0].mxu0
        %v5306 = vadd.f32 0.0, %v5305
        %v5307 = vpop.f32.mrb[0].mxu0
        %5308 = vmatprep.mubr.bf16.mxu0 0
        %5309 = vmatmul.mubr.bf16.gmra.mrb[0].mxu0 %v5211
        %v5310 = vpop.f32.mrb[0].mxu0
        %v5311 = vadd.f32 0.0, %v5310
        %v5312 = vpop.f32.mrb[0].mxu0
        %v5313 = vpop.f32.mrb[0].mxu0
        %v5314 = vadd.f32 0.0, %v5313
        %v5315 = vpop.f32.mrb[0].mxu0
        %5316 = vdwg.mxu0
        %v5317 = vadd.f32 %v4953, %v5255
        %v5318 = vadd.f32 %v4954, %v5258
        %v5319 = vadd.f32 %v4955, %v5263
        %v5320 = vadd.f32 %v4956, %v5266
        %v5321 = vadd.f32 %v4957, %v5271
        %v5322 = vadd.f32 %v4958, %v5274
        %v5323 = vadd.f32 %v4959, %v5279
        %v5324 = vadd.f32 %v4960, %v5282
        %v5325 = vadd.f32 %v4961, %v5287
        %v5326 = vadd.f32 %v4962, %v5290
        %v5327 = vadd.f32 %v4963, %v5295
        %v5328 = vadd.f32 %v4964, %v5298
        %v5329 = vadd.f32 %v4965, %v5303
        %v5330 = vadd.f32 %v4966, %v5306
        %v5331 = vadd.f32 %v4967, %v5311
        %v5332 = vadd.f32 %v4968, %v5314
        %v5333 = vld [vmem:[%s11] sm:$0xff]
        %v5334 = vld [vmem:[%s11 + $0x8] sm:$0xff]
        %v5335 = vld [vmem:[%s11 + $0x10] sm:$0xff]
        %v5336 = vld [vmem:[%s11 + $0x18] sm:$0xff]
        %v5337 = vld [vmem:[%s11 + $0x20] sm:$0xff]
        %v5338 = vld [vmem:[%s11 + $0x28] sm:$0xff]
        %v5339 = vld [vmem:[%s11 + $0x30] sm:$0xff]
        %v5340 = vld [vmem:[%s11 + $0x38] sm:$0xff]
        %v5341 = vld [vmem:[%s11 + $0x40] sm:$0xff]
        %v5342 = vld [vmem:[%s11 + $0x48] sm:$0xff]
        %v5343 = vld [vmem:[%s11 + $0x50] sm:$0xff]
        %v5344 = vld [vmem:[%s11 + $0x58] sm:$0xff]
        %v5345 = vld [vmem:[%s11 + $0x60] sm:$0xff]
        %v5346 = vld [vmem:[%s11 + $0x68] sm:$0xff]
        %v5347 = vld [vmem:[%s11 + $0x70] sm:$0xff]
        %v5348 = vld [vmem:[%s11 + $0x78] sm:$0xff]
        %5350 = vset.pattern.permute.xlu0 0
        %5351 = vperm.xlu0 %5350, %v5333
        %v5352 = vpop.permute.xlu0 %5351
        %5355 = vset.pattern.permute.xlu0 0
        %5356 = vperm.xlu0 %5355, %v5334
        %v5357 = vpop.permute.xlu0 %5356
        %5360 = vset.pattern.permute.xlu0 0
        %5361 = vperm.xlu0 %5360, %v5335
        %v5362 = vpop.permute.xlu0 %5361
        %5365 = vset.pattern.permute.xlu0 0
        %5366 = vperm.xlu0 %5365, %v5336
        %v5367 = vpop.permute.xlu0 %5366
        %5370 = vset.pattern.permute.xlu0 0
        %5371 = vperm.xlu0 %5370, %v5337
        %v5372 = vpop.permute.xlu0 %5371
        %5375 = vset.pattern.permute.xlu0 0
        %5376 = vperm.xlu0 %5375, %v5338
        %v5377 = vpop.permute.xlu0 %5376
        %5380 = vset.pattern.permute.xlu0 0
        %5381 = vperm.xlu0 %5380, %v5339
        %v5382 = vpop.permute.xlu0 %5381
        %5385 = vset.pattern.permute.xlu0 0
        %5386 = vperm.xlu0 %5385, %v5340
        %v5387 = vpop.permute.xlu0 %5386
        %5390 = vset.pattern.permute.xlu0 0
        %5391 = vperm.xlu0 %5390, %v5341
        %v5392 = vpop.permute.xlu0 %5391
        %5395 = vset.pattern.permute.xlu0 0
        %5396 = vperm.xlu0 %5395, %v5342
        %v5397 = vpop.permute.xlu0 %5396
        %5400 = vset.pattern.permute.xlu0 0
        %5401 = vperm.xlu0 %5400, %v5343
        %v5402 = vpop.permute.xlu0 %5401
        %5405 = vset.pattern.permute.xlu0 0
        %5406 = vperm.xlu0 %5405, %v5344
        %v5407 = vpop.permute.xlu0 %5406
        %5410 = vset.pattern.permute.xlu0 0
        %5411 = vperm.xlu0 %5410, %v5345
        %v5412 = vpop.permute.xlu0 %5411
        %5415 = vset.pattern.permute.xlu0 0
        %5416 = vperm.xlu0 %5415, %v5346
        %v5417 = vpop.permute.xlu0 %5416
        %5420 = vset.pattern.permute.xlu0 0
        %5421 = vperm.xlu0 %5420, %v5347
        %v5422 = vpop.permute.xlu0 %5421
        %5425 = vset.pattern.permute.xlu0 0
        %5426 = vperm.xlu0 %5425, %v5348
        %v5427 = vpop.permute.xlu0 %5426
        %v5429 = vadd.f32 %v5317, %v5352
        %v5430 = vadd.f32 %v5318, %v5357
        %v5431 = vadd.f32 %v5319, %v5362
        %v5432 = vadd.f32 %v5320, %v5367
        %v5433 = vadd.f32 %v5321, %v5372
        %v5434 = vadd.f32 %v5322, %v5377
        %v5435 = vadd.f32 %v5323, %v5382
        %v5436 = vadd.f32 %v5324, %v5387
        %v5437 = vadd.f32 %v5325, %v5392
        %v5438 = vadd.f32 %v5326, %v5397
        %v5439 = vadd.f32 %v5327, %v5402
        %v5440 = vadd.f32 %v5328, %v5407
        %v5441 = vadd.f32 %v5329, %v5412
        %v5442 = vadd.f32 %v5330, %v5417
        %v5443 = vadd.f32 %v5331, %v5422
        %v5444 = vadd.f32 %v5332, %v5427
        %v5445 = vmax.f32 %v5429, 0.0
        %v5446 = vmax.f32 %v5430, 0.0
        %v5447 = vmax.f32 %v5431, 0.0
        %v5448 = vmax.f32 %v5432, 0.0
        %v5449 = vmax.f32 %v5433, 0.0
        %v5450 = vmax.f32 %v5434, 0.0
        %v5451 = vmax.f32 %v5435, 0.0
        %v5452 = vmax.f32 %v5436, 0.0
        %v5453 = vmax.f32 %v5437, 0.0
        %v5454 = vmax.f32 %v5438, 0.0
        %v5455 = vmax.f32 %v5439, 0.0
        %v5456 = vmax.f32 %v5440, 0.0
        %v5457 = vmax.f32 %v5441, 0.0
        %v5458 = vmax.f32 %v5442, 0.0
        %v5459 = vmax.f32 %v5443, 0.0
        %v5460 = vmax.f32 %v5444, 0.0
        %vm5461 = vcmask 64512
        %5462 = vst.msk [vmem:[%s496] sm:$0xff] %vm5461, %v5445
        %5463 = vst.msk [vmem:[%s496 + $0x8] sm:$0xff] %vm5461, %v5446
        %5464 = vst.msk [vmem:[%s496 + $0x10] sm:$0xff] %vm5461, %v5447
        %5465 = vst.msk [vmem:[%s496 + $0x18] sm:$0xff] %vm5461, %v5448
        %5466 = vst.msk [vmem:[%s496 + $0x20] sm:$0xff] %vm5461, %v5449
        %5467 = vst.msk [vmem:[%s496 + $0x28] sm:$0xff] %vm5461, %v5450
        %5468 = vst.msk [vmem:[%s496 + $0x30] sm:$0xff] %vm5461, %v5451
        %5469 = vst.msk [vmem:[%s496 + $0x38] sm:$0xff] %vm5461, %v5452
        %5470 = vst.msk [vmem:[%s496 + $0x40] sm:$0xff] %vm5461, %v5453
        %5471 = vst.msk [vmem:[%s496 + $0x48] sm:$0xff] %vm5461, %v5454
        %5472 = vst.msk [vmem:[%s496 + $0x50] sm:$0xff] %vm5461, %v5455
        %5473 = vst.msk [vmem:[%s496 + $0x58] sm:$0xff] %vm5461, %v5456
        %5474 = vst.msk [vmem:[%s496 + $0x60] sm:$0xff] %vm5461, %v5457
        %5475 = vst.msk [vmem:[%s496 + $0x68] sm:$0xff] %vm5461, %v5458
        %5476 = vst.msk [vmem:[%s496 + $0x70] sm:$0xff] %vm5461, %v5459
        %5477 = vst.msk [vmem:[%s496 + $0x78] sm:$0xff] %vm5461, %v5460
        %p5478 = scmp.lt.s32.totalorder %s23, 1
        %s5479 = scalar_select %p5478, %s23, 1
        %s5480 = smul.addr %s5479, 16
        %s5481 = smul.addr %s5480, 8
        %s5482 = scalar_lea.vmem %s12, %s5481
        // Predicated region
        $region92: #{mssa_forward.5} parent=86 // pred_check
          %p5483 = pneg %p298
        $region93: #{mssa_forward.5} parent=86 // pred_check_branch
          %5485 = sbr.rel (%p5483) target = $region95
        $region94: #{mssa_forward.5} parent=86 // pred_region
          _
        $region95: #{mssa_forward.5} parent=86 // pred_fallthru
          _
      $region87: #{mssa_forward.5} parent=5 // pred_fallthru
        _
      %p5486 = scmp.le.s32.totalorder 2, %s18
      // Predicated region
      $region96: #{mssa_forward.5} parent=5 // pred_check
        %p5487 = pneg %p5486
      $region97: #{mssa_forward.5} parent=5 // pred_check_branch
        %5489 = sbr.rel (%p5487) target = $region99
      $region98: #{mssa_forward.5} parent=5 // pred_region
        %s5490 = ssub.s32 %s18, 2
        // Predicated region
        $region100: #{mssa_forward.5} parent=98 // pred_check
          %p5491 = pneg %p304
        $region101: #{mssa_forward.5} parent=98 // pred_check_branch
          %5493 = sbr.rel (%p5491) target = $region103
        $region102: #{mssa_forward.5} parent=98 // pred_region
          %p5494 = scmp.lt.s32.totalorder %s24, 1
          %s5495 = scalar_select %p5494, %s24, 1
          %s5496 = smul.addr %s5495, 16
          %s5497 = smul.addr %s5496, 8
          %s5498 = scalar_lea.vmem %s12, %s5497
        $region103: #{mssa_forward.5} parent=98 // pred_fallthru
          _
      $region99: #{mssa_forward.5} parent=5 // pred_fallthru
        _
    $region6: #{mssa_forward.5} parent=1 // loop_footer
      %s22 = sadd.s32 1, %s18
    $region7: #{mssa_forward.5} parent=1 // loop_footer_branch
      %17 = sbr.rel target = $region3
    $region8: #{mssa_forward.5} parent=1 // loop_exit
      _

</llo_original>
